<compile_context>
chip_gen: v7x
topology: tpu7x:2x2x1
jax: 0.10.0
libtpu: 0.0.40
codegen_flags: <defaults>
</compile_context>

<pallas_src>
import jax
import jax.numpy as jnp
from jax.experimental import pallas as pl
from jax.experimental.pallas import tpu as pltpu


def _round_up(x, m):
    return ((x + m - 1) // m) * m


def _vmem_capacity_bytes():
    """Physical per-core VMEM (128 MiB v5e/v6e, 64 MiB v7x); conservative fallback."""
    try:
        info = pltpu.get_tpu_info()
        for attr in ("vmem_capacity_bytes", "vmem_bytes", "vmem_size_bytes"):
            v = getattr(info, attr, None)
            if v:
                return int(v)
    except Exception:
        pass
    return 64 << 20


def _choose_tiling(H, W, Cin, Cout_p, in_bytes, out_bytes, vmem_cap):
    """Pick the band height TH from an explicit per-grid-step working-set model."""
    Wp2 = W + 2
    budget = (vmem_cap * 7) // 10          # ~45 MiB on v7x, ~90 MiB on v5e/v6e
    row_cap = 8192                         # review: allow TH*W up to ~8k matmul rows

    def working_set(th):
        in_blk = 2 * th * Wp2 * Cin * in_bytes            # main band, double-buffered
        halo = 2 * 2 * Wp2 * Cin * in_bytes               # two 1-row halo streams
        out_blk = 2 * th * 4 * W * Cout_p * out_bytes     # output band, double-buffered
        cols = 3 * (th + 2) * W * Cin * in_bytes          # shifted-band scratch
        acc = th * W * Cout_p * 4                         # f32 accumulator scratch
        wgt = 2 * 16 * Cin * Cout_p * in_bytes            # resident weights (x2 slack)
        return int(1.15 * (in_blk + halo + out_blk + cols + acc + wgt))

    th_max = 1
    for th in range(1, H + 1):
        if th * W > row_cap:
            break
        if working_set(th) <= budget:
            th_max = th
    nb = -(-H // th_max)                  # ceil(H / th_max)
    th = -(-H // nb)                      # balanced bands: total row pad < nb
    return th, nb, th * nb, working_set(th)


def upsample_conv_transpose2d(x, weight, bias, *, use_bf16=True):
    """nn.ConvTranspose2d(dim, dim, 4, stride=2, padding=1)(x) via a Pallas TPU kernel.

    x:      (B, Cin, H, W)     NCHW (PyTorch layout)
    weight: (Cin, Cout, 4, 4)  PyTorch ConvTranspose2d weight layout
    bias:   (Cout,)
    returns (B, Cout, 2H, 2W)
    """
    B, Cin, H, W = x.shape
    Cout = weight.shape[1]
    out_dtype = x.dtype
    cdt = jnp.bfloat16 if use_bf16 else x.dtype
    in_bytes = jnp.dtype(cdt).itemsize
    out_bytes = jnp.dtype(out_dtype).itemsize

    Wp2 = W + 2
    # Lane-dense output stores: pad Cout to a multiple of 128 (stripped in epilogue).
    Cout_p = _round_up(Cout, 128)

    vmem_cap = _vmem_capacity_bytes()
    TH, nb, Hp, ws = _choose_tiling(H, W, Cin, Cout_p, in_bytes, out_bytes, vmem_cap)
    vmem_limit = min(int(vmem_cap * 0.9), max(32 << 20, 2 * ws))

    # ---- host-side prep (input-sized only; XLA fuses transpose + pad + cast) -------
    # NHWC + zero pad 1 on each spatial side; rows additionally padded to Hp so the
    # grid never needs a short/masked last band (extra rows feed discarded outputs).
    x_pad = jnp.pad(jnp.transpose(x, (0, 2, 3, 1)),
                    ((0, 0), (1, 1 + Hp - H), (1, 1), (0, 0))).astype(cdt)
    # (B, Hp + 2, Wp2, Cin)

    # Tap (rh, dh, rw, dw) uses kernel element (3-rh-2dh, 3-rw-2dw).
    # Packed as (16, Cin, Cout_p), index t = ((rh*2+dh)*2+rw)*2+dw.
    taps = []
    for rh in range(2):
        for dh in range(2):
            for rw in range(2):
                for dw in range(2):
                    taps.append(weight[:, :, 3 - rh - 2 * dh, 3 - rw - 2 * dw])
    wk = jnp.pad(jnp.stack(taps, axis=0),
                 ((0, 0), (0, 0), (0, Cout_p - Cout))).astype(cdt)      # (16, Cin, Cout_p)
    b2 = jnp.pad(bias, (0, Cout_p - Cout)).reshape(1, Cout_p).astype(jnp.float32)

    def kernel(xa_ref, xb0_ref, xb1_ref, w_ref, b_ref, o_ref, cols_ref, acc_ref):
        # Build the 3 column-shifted halo bands once per grid step (dedupes v2's 16
        # misaligned window materializations and folds the halo stitch into the same
        # writes).  Every tap LHS below is then a free row-slice + reshape.
        for sw in range(3):
            cols_ref[sw, 0:TH, :, :] = xa_ref[:, sw:sw + W, :]
            cols_ref[sw, TH:TH + 1, :, :] = xb0_ref[:, sw:sw + W, :]
            cols_ref[sw, TH + 1:TH + 2, :, :] = xb1_ref[:, sw:sw + W, :]

        # One f32 VMEM accumulator reused across the 4 output phases.  The 4 tap
        # matmuls of a phase are adjacent and accumulate in place (v7x can chain
        # them through the MRB); bias added once in f32; one full lane-dense store
        # per phase (last dim Cout_p % 128 == 0 -> unmasked vst).
        for rh in range(2):            # output row parity
            for rw in range(2):        # output col parity
                acc_ref[...] = jnp.zeros_like(acc_ref)
                for dh in range(2):
                    for dw in range(2):
                        lhs = cols_ref[rw + dw, rh + dh:rh + dh + TH, :, :]
                        t = ((rh * 2 + dh) * 2 + rw) * 2 + dw
                        acc_ref[...] += jnp.dot(lhs.reshape(TH * W, Cin), w_ref[t],
                                                preferred_element_type=jnp.float32)
                o_ref[:, rh * 2 + rw, :, :] = (
                    (acc_ref[...] + b_ref[...])
                    .reshape(TH, W, Cout_p).astype(o_ref.dtype))

    flops = 32 * B * Hp * W * Cin * Cout_p       # 4 phases x 4 taps x 2*Cin*Cout_p / px
    bytes_accessed = int(
        B * nb * (TH + 2) * Wp2 * Cin * in_bytes         # band reads incl. halo overlap
        + wk.size * in_bytes + b2.size * 4
        + B * Hp * 4 * W * Cout_p * out_bytes)

    out5 = pl.pallas_call(
        kernel,
        out_shape=jax.ShapeDtypeStruct((B, Hp, 4, W, Cout_p), out_dtype),
        grid=(B, nb),
        in_specs=[
            # band body: TH padded rows starting at i*TH
            pl.BlockSpec((None, TH, Wp2, Cin), lambda b, i: (b, i, 0, 0)),
            # two halo rows (row-block size 1 => returned index is the element row)
            pl.BlockSpec((None, 1, Wp2, Cin), lambda b, i: (b, (i + 1) * TH, 0, 0)),
            pl.BlockSpec((None, 1, Wp2, Cin), lambda b, i: (b, (i + 1) * TH + 1, 0, 0)),
            pl.BlockSpec((16, Cin, Cout_p), lambda b, i: (0, 0, 0)),    # weights (resident)
            pl.BlockSpec((1, Cout_p), lambda b, i: (0, 0)),             # bias
        ],
        out_specs=pl.BlockSpec((None, TH, 4, W, Cout_p), lambda b, i: (b, i, 0, 0, 0)),
        scratch_shapes=[pltpu.VMEM((3, TH + 2, W, Cin), cdt),           # shifted bands
                        pltpu.VMEM((TH * W, Cout_p), jnp.float32)],     # f32 accumulator
        compiler_params=pltpu.CompilerParams(
            dimension_semantics=("parallel", "parallel"),
            vmem_limit_bytes=vmem_limit),
        cost_estimate=pl.CostEstimate(flops=flops, transcendentals=0,
                                      bytes_accessed=bytes_accessed),
    )(x_pad, x_pad, x_pad, wk, b2)

    # Epilogue: strip row/channel padding and go back to NCHW.  This transpose is a
    # full-output HBM round trip; if the consumer can take the phase-major NHWC
    # layout it should be skipped (review note).
    y = out5[:, :H, :, :, :Cout].reshape(B, H, 2, 2, W, Cout)    # [b, h, rh, rw, w, c]
    return jnp.transpose(y, (0, 5, 1, 2, 4, 3)).reshape(B, Cout, 2 * H, 2 * W)


def _reference_conv_transpose(x, weight, bias):
    # ConvTranspose2d == lhs-dilated cross-correlation with spatially-flipped,
    # channel-transposed weights.
    Cout = weight.shape[1]
    w_conv = jnp.transpose(weight[:, :, ::-1, ::-1], (1, 0, 2, 3))   # (O, I, kH, kW)
    y = jax.lax.conv_general_dilated(
        x, w_conv,
        window_strides=(1, 1),
        padding=((2, 2), (2, 2)),
        lhs_dilation=(2, 2),
        rhs_dilation=(1, 1),
        dimension_numbers=('NCHW', 'OIHW', 'NCHW'))
    return y + bias.reshape(1, Cout, 1, 1)


if __name__ == "__main__":
    key = jax.random.PRNGKey(0)
    k_x, k_w, k_b = jax.random.split(key, 3)

    B, dim, H, W = 2, 4, 16, 16
    x = jax.random.normal(k_x, (B, dim, H, W), dtype=jnp.float32)

    # deterministic synthetic parameters (ConvTranspose2d(dim, dim, 4) shapes)
    fan = dim * 4 * 4
    bound = 1.0 / (fan ** 0.5)
    weight = jax.random.uniform(k_w, (dim, dim, 4, 4), jnp.float32, -bound, bound)
    bias = jax.random.uniform(k_b, (dim,), jnp.float32, -bound, bound)

    up = jax.jit(upsample_conv_transpose2d)
    out = jax.block_until_ready(up(x, weight, bias))
    assert out.shape == (B, dim, 2 * H, 2 * W), out.shape

    # Kernel uses bf16 MXU operands with f32 accumulation -> compare against a
    # reference computed on bf16-quantized operands.
    x_q = x.astype(jnp.bfloat16).astype(jnp.float32)
    w_q = weight.astype(jnp.bfloat16).astype(jnp.float32)
    ref = _reference_conv_transpose(x_q, w_q, bias)
    max_err = float(jnp.max(jnp.abs(out - ref)))
    assert jnp.allclose(out, ref, rtol=1e-2, atol=1e-2), max_err

    print("KERNEL_OK")
</pallas_src>

<mosaic_0001>
module attributes {stable_mosaic.version = 11 : i64} {
  func.func @kernel(%arg0: i32, %arg1: i32, %arg2: memref<1x16x18x4xbf16, #tpu.memory_space<vmem>>, %arg3: memref<1x1x18x4xbf16, #tpu.memory_space<vmem>>, %arg4: memref<1x1x18x4xbf16, #tpu.memory_space<vmem>>, %arg5: memref<16x4x128xbf16, #tpu.memory_space<vmem>>, %arg6: memref<1x128xf32, #tpu.memory_space<vmem>>, %arg7: memref<1x16x4x16x128xf32, #tpu.memory_space<vmem>>, %arg8: memref<3x18x16x4xbf16, #tpu.memory_space<vmem>>, %arg9: memref<256x128xf32, #tpu.memory_space<vmem>>) attributes {dimension_semantics = [#tpu.dimension_semantics<parallel>, #tpu.dimension_semantics<parallel>], iteration_bounds = array<i64: 2, 1>, scalar_prefetch = 0 : i64, scratch_operands = 2 : i64, tpu.core_type = #tpu.core_type<tc>, window_params = [{transform_indices = @transform_0, window_bounds = array<i64: 1, 16, 18, 4>}, {transform_indices = @transform_1, window_bounds = array<i64: 1, 1, 18, 4>}, {transform_indices = @transform_2, window_bounds = array<i64: 1, 1, 18, 4>}, {pipeline_mode = #tpu.pipeline_mode<synchronous>, transform_indices = @transform_3, window_bounds = array<i64: 16, 4, 128>}, {pipeline_mode = #tpu.pipeline_mode<synchronous>, transform_indices = @transform_4, window_bounds = array<i64: 1, 128>}, {transform_indices = @transform_5, window_bounds = array<i64: 1, 16, 4, 16, 128>}]} {
    %c0 = arith.constant 0 : index
    %c0_0 = arith.constant 0 : index
    %c0_1 = arith.constant 0 : index
    %c0_2 = arith.constant 0 : index
    %0 = vector.load %arg2[%c0, %c0_0, %c0_1, %c0_2] : memref<1x16x18x4xbf16, #tpu.memory_space<vmem>>, vector<1x16x16x4xbf16>
    %1 = vector.shape_cast %0 : vector<1x16x16x4xbf16> to vector<16x16x4xbf16>
    %c0_3 = arith.constant 0 : index
    %c0_4 = arith.constant 0 : index
    %c0_5 = arith.constant 0 : index
    %c0_6 = arith.constant 0 : index
    %2 = vector.load %arg8[%c0_3, %c0_4, %c0_5, %c0_6] : memref<3x18x16x4xbf16, #tpu.memory_space<vmem>>, vector<1x16x16x4xbf16>
    %3 = vector.shape_cast %2 : vector<1x16x16x4xbf16> to vector<16x16x4xbf16>
    %4 = vector.shape_cast %1 : vector<16x16x4xbf16> to vector<1x16x16x4xbf16>
    tpu.vector_store %arg8[%c0_3, %c0_4, %c0_5, %c0_6], %4 {strides = array<i32>} : memref<3x18x16x4xbf16, #tpu.memory_space<vmem>>, vector<1x16x16x4xbf16>,
    %c0_7 = arith.constant 0 : index
    %c0_8 = arith.constant 0 : index
    %c0_9 = arith.constant 0 : index
    %c0_10 = arith.constant 0 : index
    %5 = vector.load %arg3[%c0_7, %c0_8, %c0_9, %c0_10] : memref<1x1x18x4xbf16, #tpu.memory_space<vmem>>, vector<1x1x16x4xbf16>
    %6 = vector.shape_cast %5 : vector<1x1x16x4xbf16> to vector<1x16x4xbf16>
    %c0_11 = arith.constant 0 : index
    %c16 = arith.constant 16 : index
    %c0_12 = arith.constant 0 : index
    %c0_13 = arith.constant 0 : index
    %7 = vector.load %arg8[%c0_11, %c16, %c0_12, %c0_13] : memref<3x18x16x4xbf16, #tpu.memory_space<vmem>>, vector<1x1x16x4xbf16>
    %8 = vector.shape_cast %7 : vector<1x1x16x4xbf16> to vector<1x16x4xbf16>
    %9 = vector.shape_cast %6 : vector<1x16x4xbf16> to vector<1x1x16x4xbf16>
    tpu.vector_store %arg8[%c0_11, %c16, %c0_12, %c0_13], %9 {strides = array<i32>} : memref<3x18x16x4xbf16, #tpu.memory_space<vmem>>, vector<1x1x16x4xbf16>,
    %c0_14 = arith.constant 0 : index
    %c0_15 = arith.constant 0 : index
    %c0_16 = arith.constant 0 : index
    %c0_17 = arith.constant 0 : index
    %10 = vector.load %arg4[%c0_14, %c0_15, %c0_16, %c0_17] : memref<1x1x18x4xbf16, #tpu.memory_space<vmem>>, vector<1x1x16x4xbf16>
    %11 = vector.shape_cast %10 : vector<1x1x16x4xbf16> to vector<1x16x4xbf16>
    %c0_18 = arith.constant 0 : index
    %c17 = arith.constant 17 : index
    %c0_19 = arith.constant 0 : index
    %c0_20 = arith.constant 0 : index
    %12 = vector.load %arg8[%c0_18, %c17, %c0_19, %c0_20] : memref<3x18x16x4xbf16, #tpu.memory_space<vmem>>, vector<1x1x16x4xbf16>
    %13 = vector.shape_cast %12 : vector<1x1x16x4xbf16> to vector<1x16x4xbf16>
    %14 = vector.shape_cast %11 : vector<1x16x4xbf16> to vector<1x1x16x4xbf16>
    tpu.vector_store %arg8[%c0_18, %c17, %c0_19, %c0_20], %14 {strides = array<i32>} : memref<3x18x16x4xbf16, #tpu.memory_space<vmem>>, vector<1x1x16x4xbf16>,
    %c0_21 = arith.constant 0 : index
    %c0_22 = arith.constant 0 : index
    %c1 = arith.constant 1 : index
    %c0_23 = arith.constant 0 : index
    %15 = vector.load %arg2[%c0_21, %c0_22, %c1, %c0_23] : memref<1x16x18x4xbf16, #tpu.memory_space<vmem>>, vector<1x16x16x4xbf16>
    %16 = vector.shape_cast %15 : vector<1x16x16x4xbf16> to vector<16x16x4xbf16>
    %c1_24 = arith.constant 1 : index
    %c0_25 = arith.constant 0 : index
    %c0_26 = arith.constant 0 : index
    %c0_27 = arith.constant 0 : index
    %17 = vector.load %arg8[%c1_24, %c0_25, %c0_26, %c0_27] : memref<3x18x16x4xbf16, #tpu.memory_space<vmem>>, vector<1x16x16x4xbf16>
    %18 = vector.shape_cast %17 : vector<1x16x16x4xbf16> to vector<16x16x4xbf16>
    %19 = vector.shape_cast %16 : vector<16x16x4xbf16> to vector<1x16x16x4xbf16>
    tpu.vector_store %arg8[%c1_24, %c0_25, %c0_26, %c0_27], %19 {strides = array<i32>} : memref<3x18x16x4xbf16, #tpu.memory_space<vmem>>, vector<1x16x16x4xbf16>,
    %c0_28 = arith.constant 0 : index
    %c0_29 = arith.constant 0 : index
    %c1_30 = arith.constant 1 : index
    %c0_31 = arith.constant 0 : index
    %20 = vector.load %arg3[%c0_28, %c0_29, %c1_30, %c0_31] : memref<1x1x18x4xbf16, #tpu.memory_space<vmem>>, vector<1x1x16x4xbf16>
    %21 = vector.shape_cast %20 : vector<1x1x16x4xbf16> to vector<1x16x4xbf16>
    %c1_32 = arith.constant 1 : index
    %c16_33 = arith.constant 16 : index
    %c0_34 = arith.constant 0 : index
    %c0_35 = arith.constant 0 : index
    %22 = vector.load %arg8[%c1_32, %c16_33, %c0_34, %c0_35] : memref<3x18x16x4xbf16, #tpu.memory_space<vmem>>, vector<1x1x16x4xbf16>
    %23 = vector.shape_cast %22 : vector<1x1x16x4xbf16> to vector<1x16x4xbf16>
    %24 = vector.shape_cast %21 : vector<1x16x4xbf16> to vector<1x1x16x4xbf16>
    tpu.vector_store %arg8[%c1_32, %c16_33, %c0_34, %c0_35], %24 {strides = array<i32>} : memref<3x18x16x4xbf16, #tpu.memory_space<vmem>>, vector<1x1x16x4xbf16>,
    %c0_36 = arith.constant 0 : index
    %c0_37 = arith.constant 0 : index
    %c1_38 = arith.constant 1 : index
    %c0_39 = arith.constant 0 : index
    %25 = vector.load %arg4[%c0_36, %c0_37, %c1_38, %c0_39] : memref<1x1x18x4xbf16, #tpu.memory_space<vmem>>, vector<1x1x16x4xbf16>
    %26 = vector.shape_cast %25 : vector<1x1x16x4xbf16> to vector<1x16x4xbf16>
    %c1_40 = arith.constant 1 : index
    %c17_41 = arith.constant 17 : index
    %c0_42 = arith.constant 0 : index
    %c0_43 = arith.constant 0 : index
    %27 = vector.load %arg8[%c1_40, %c17_41, %c0_42, %c0_43] : memref<3x18x16x4xbf16, #tpu.memory_space<vmem>>, vector<1x1x16x4xbf16>
    %28 = vector.shape_cast %27 : vector<1x1x16x4xbf16> to vector<1x16x4xbf16>
    %29 = vector.shape_cast %26 : vector<1x16x4xbf16> to vector<1x1x16x4xbf16>
    tpu.vector_store %arg8[%c1_40, %c17_41, %c0_42, %c0_43], %29 {strides = array<i32>} : memref<3x18x16x4xbf16, #tpu.memory_space<vmem>>, vector<1x1x16x4xbf16>,
    %c0_44 = arith.constant 0 : index
    %c0_45 = arith.constant 0 : index
    %c2 = arith.constant 2 : index
    %c0_46 = arith.constant 0 : index
    %30 = vector.load %arg2[%c0_44, %c0_45, %c2, %c0_46] : memref<1x16x18x4xbf16, #tpu.memory_space<vmem>>, vector<1x16x16x4xbf16>
    %31 = vector.shape_cast %30 : vector<1x16x16x4xbf16> to vector<16x16x4xbf16>
    %c2_47 = arith.constant 2 : index
    %c0_48 = arith.constant 0 : index
    %c0_49 = arith.constant 0 : index
    %c0_50 = arith.constant 0 : index
    %32 = vector.load %arg8[%c2_47, %c0_48, %c0_49, %c0_50] : memref<3x18x16x4xbf16, #tpu.memory_space<vmem>>, vector<1x16x16x4xbf16>
    %33 = vector.shape_cast %32 : vector<1x16x16x4xbf16> to vector<16x16x4xbf16>
    %34 = vector.shape_cast %31 : vector<16x16x4xbf16> to vector<1x16x16x4xbf16>
    tpu.vector_store %arg8[%c2_47, %c0_48, %c0_49, %c0_50], %34 {strides = array<i32>} : memref<3x18x16x4xbf16, #tpu.memory_space<vmem>>, vector<1x16x16x4xbf16>,
    %c0_51 = arith.constant 0 : index
    %c0_52 = arith.constant 0 : index
    %c2_53 = arith.constant 2 : index
    %c0_54 = arith.constant 0 : index
    %35 = vector.load %arg3[%c0_51, %c0_52, %c2_53, %c0_54] : memref<1x1x18x4xbf16, #tpu.memory_space<vmem>>, vector<1x1x16x4xbf16>
    %36 = vector.shape_cast %35 : vector<1x1x16x4xbf16> to vector<1x16x4xbf16>
    %c2_55 = arith.constant 2 : index
    %c16_56 = arith.constant 16 : index
    %c0_57 = arith.constant 0 : index
    %c0_58 = arith.constant 0 : index
    %37 = vector.load %arg8[%c2_55, %c16_56, %c0_57, %c0_58] : memref<3x18x16x4xbf16, #tpu.memory_space<vmem>>, vector<1x1x16x4xbf16>
    %38 = vector.shape_cast %37 : vector<1x1x16x4xbf16> to vector<1x16x4xbf16>
    %39 = vector.shape_cast %36 : vector<1x16x4xbf16> to vector<1x1x16x4xbf16>
    tpu.vector_store %arg8[%c2_55, %c16_56, %c0_57, %c0_58], %39 {strides = array<i32>} : memref<3x18x16x4xbf16, #tpu.memory_space<vmem>>, vector<1x1x16x4xbf16>,
    %c0_59 = arith.constant 0 : index
    %c0_60 = arith.constant 0 : index
    %c2_61 = arith.constant 2 : index
    %c0_62 = arith.constant 0 : index
    %40 = vector.load %arg4[%c0_59, %c0_60, %c2_61, %c0_62] : memref<1x1x18x4xbf16, #tpu.memory_space<vmem>>, vector<1x1x16x4xbf16>
    %41 = vector.shape_cast %40 : vector<1x1x16x4xbf16> to vector<1x16x4xbf16>
    %c2_63 = arith.constant 2 : index
    %c17_64 = arith.constant 17 : index
    %c0_65 = arith.constant 0 : index
    %c0_66 = arith.constant 0 : index
    %42 = vector.load %arg8[%c2_63, %c17_64, %c0_65, %c0_66] : memref<3x18x16x4xbf16, #tpu.memory_space<vmem>>, vector<1x1x16x4xbf16>
    %43 = vector.shape_cast %42 : vector<1x1x16x4xbf16> to vector<1x16x4xbf16>
    %44 = vector.shape_cast %41 : vector<1x16x4xbf16> to vector<1x1x16x4xbf16>
    tpu.vector_store %arg8[%c2_63, %c17_64, %c0_65, %c0_66], %44 {strides = array<i32>} : memref<3x18x16x4xbf16, #tpu.memory_space<vmem>>, vector<1x1x16x4xbf16>,
    %cst = arith.constant 0.000000e+00 : f32
    %45 = vector.broadcast %cst : f32 to vector<256x128xf32>
    %c0_67 = arith.constant 0 : index
    %c0_68 = arith.constant 0 : index
    %46 = vector.load %arg9[%c0_67, %c0_68] : memref<256x128xf32, #tpu.memory_space<vmem>>, vector<256x128xf32>
    tpu.vector_store %arg9[%c0_67, %c0_68], %45 {strides = array<i32>} : memref<256x128xf32, #tpu.memory_space<vmem>>, vector<256x128xf32>,
    %c0_69 = arith.constant 0 : index
    %c0_70 = arith.constant 0 : index
    %c0_71 = arith.constant 0 : index
    %c0_72 = arith.constant 0 : index
    %47 = vector.load %arg8[%c0_69, %c0_70, %c0_71, %c0_72] : memref<3x18x16x4xbf16, #tpu.memory_space<vmem>>, vector<1x16x16x4xbf16>
    %48 = vector.shape_cast %47 : vector<1x16x16x4xbf16> to vector<16x16x4xbf16>
    %c0_73 = arith.constant 0 : index
    %c0_74 = arith.constant 0 : index
    %49 = vector.load %arg9[%c0_73, %c0_74] : memref<256x128xf32, #tpu.memory_space<vmem>>, vector<256x128xf32>
    %50 = vector.shape_cast %48 : vector<16x16x4xbf16> to vector<256x4xbf16>
    %c0_75 = arith.constant 0 : index
    %c0_76 = arith.constant 0 : index
    %c0_77 = arith.constant 0 : index
    %51 = vector.load %arg5[%c0_75, %c0_76, %c0_77] : memref<16x4x128xbf16, #tpu.memory_space<vmem>>, vector<1x4x128xbf16>
    %52 = vector.shape_cast %51 : vector<1x4x128xbf16> to vector<4x128xbf16>
    %cst_78 = arith.constant dense<0.000000e+00> : vector<256x128xf32>
    %53 = tpu.matmul %50, %52, %cst_78 {dimension_numbers = #tpu.dot_dimension_numbers<[1], [0], [0], [1], [0, 0, 1, 1], [], []>} : vector<256x4xbf16>, vector<4x128xbf16>, vector<256x128xf32> -> vector<256x128xf32>
    %54 = arith.addf %49, %53 : vector<256x128xf32>
    %c0_79 = arith.constant 0 : index
    %c0_80 = arith.constant 0 : index
    %55 = vector.load %arg9[%c0_79, %c0_80] : memref<256x128xf32, #tpu.memory_space<vmem>>, vector<256x128xf32>
    tpu.vector_store %arg9[%c0_79, %c0_80], %54 {strides = array<i32>} : memref<256x128xf32, #tpu.memory_space<vmem>>, vector<256x128xf32>,
    %c1_81 = arith.constant 1 : index
    %c0_82 = arith.constant 0 : index
    %c0_83 = arith.constant 0 : index
    %c0_84 = arith.constant 0 : index
    %56 = vector.load %arg8[%c1_81, %c0_82, %c0_83, %c0_84] : memref<3x18x16x4xbf16, #tpu.memory_space<vmem>>, vector<1x16x16x4xbf16>
    %57 = vector.shape_cast %56 : vector<1x16x16x4xbf16> to vector<16x16x4xbf16>
    %c0_85 = arith.constant 0 : index
    %c0_86 = arith.constant 0 : index
    %58 = vector.load %arg9[%c0_85, %c0_86] : memref<256x128xf32, #tpu.memory_space<vmem>>, vector<256x128xf32>
    %59 = vector.shape_cast %57 : vector<16x16x4xbf16> to vector<256x4xbf16>
    %c1_87 = arith.constant 1 : index
    %c0_88 = arith.constant 0 : index
    %c0_89 = arith.constant 0 : index
    %60 = vector.load %arg5[%c1_87, %c0_88, %c0_89] : memref<16x4x128xbf16, #tpu.memory_space<vmem>>, vector<1x4x128xbf16>
    %61 = vector.shape_cast %60 : vector<1x4x128xbf16> to vector<4x128xbf16>
    %cst_90 = arith.constant dense<0.000000e+00> : vector<256x128xf32>
    %62 = tpu.matmul %59, %61, %cst_90 {dimension_numbers = #tpu.dot_dimension_numbers<[1], [0], [0], [1], [0, 0, 1, 1], [], []>} : vector<256x4xbf16>, vector<4x128xbf16>, vector<256x128xf32> -> vector<256x128xf32>
    %63 = arith.addf %58, %62 : vector<256x128xf32>
    %c0_91 = arith.constant 0 : index
    %c0_92 = arith.constant 0 : index
    %64 = vector.load %arg9[%c0_91, %c0_92] : memref<256x128xf32, #tpu.memory_space<vmem>>, vector<256x128xf32>
    tpu.vector_store %arg9[%c0_91, %c0_92], %63 {strides = array<i32>} : memref<256x128xf32, #tpu.memory_space<vmem>>, vector<256x128xf32>,
    %c0_93 = arith.constant 0 : index
    %c1_94 = arith.constant 1 : index
    %c0_95 = arith.constant 0 : index
    %c0_96 = arith.constant 0 : index
    %65 = vector.load %arg8[%c0_93, %c1_94, %c0_95, %c0_96] : memref<3x18x16x4xbf16, #tpu.memory_space<vmem>>, vector<1x16x16x4xbf16>
    %66 = vector.shape_cast %65 : vector<1x16x16x4xbf16> to vector<16x16x4xbf16>
    %c0_97 = arith.constant 0 : index
    %c0_98 = arith.constant 0 : index
    %67 = vector.load %arg9[%c0_97, %c0_98] : memref<256x128xf32, #tpu.memory_space<vmem>>, vector<256x128xf32>
    %68 = vector.shape_cast %66 : vector<16x16x4xbf16> to vector<256x4xbf16>
    %c4 = arith.constant 4 : index
    %c0_99 = arith.constant 0 : index
    %c0_100 = arith.constant 0 : index
    %69 = vector.load %arg5[%c4, %c0_99, %c0_100] : memref<16x4x128xbf16, #tpu.memory_space<vmem>>, vector<1x4x128xbf16>
    %70 = vector.shape_cast %69 : vector<1x4x128xbf16> to vector<4x128xbf16>
    %cst_101 = arith.constant dense<0.000000e+00> : vector<256x128xf32>
    %71 = tpu.matmul %68, %70, %cst_101 {dimension_numbers = #tpu.dot_dimension_numbers<[1], [0], [0], [1], [0, 0, 1, 1], [], []>} : vector<256x4xbf16>, vector<4x128xbf16>, vector<256x128xf32> -> vector<256x128xf32>
    %72 = arith.addf %67, %71 : vector<256x128xf32>
    %c0_102 = arith.constant 0 : index
    %c0_103 = arith.constant 0 : index
    %73 = vector.load %arg9[%c0_102, %c0_103] : memref<256x128xf32, #tpu.memory_space<vmem>>, vector<256x128xf32>
    tpu.vector_store %arg9[%c0_102, %c0_103], %72 {strides = array<i32>} : memref<256x128xf32, #tpu.memory_space<vmem>>, vector<256x128xf32>,
    %c1_104 = arith.constant 1 : index
    %c1_105 = arith.constant 1 : index
    %c0_106 = arith.constant 0 : index
    %c0_107 = arith.constant 0 : index
    %74 = vector.load %arg8[%c1_104, %c1_105, %c0_106, %c0_107] : memref<3x18x16x4xbf16, #tpu.memory_space<vmem>>, vector<1x16x16x4xbf16>
    %75 = vector.shape_cast %74 : vector<1x16x16x4xbf16> to vector<16x16x4xbf16>
    %c0_108 = arith.constant 0 : index
    %c0_109 = arith.constant 0 : index
    %76 = vector.load %arg9[%c0_108, %c0_109] : memref<256x128xf32, #tpu.memory_space<vmem>>, vector<256x128xf32>
    %77 = vector.shape_cast %75 : vector<16x16x4xbf16> to vector<256x4xbf16>
    %c5 = arith.constant 5 : index
    %c0_110 = arith.constant 0 : index
    %c0_111 = arith.constant 0 : index
    %78 = vector.load %arg5[%c5, %c0_110, %c0_111] : memref<16x4x128xbf16, #tpu.memory_space<vmem>>, vector<1x4x128xbf16>
    %79 = vector.shape_cast %78 : vector<1x4x128xbf16> to vector<4x128xbf16>
    %cst_112 = arith.constant dense<0.000000e+00> : vector<256x128xf32>
    %80 = tpu.matmul %77, %79, %cst_112 {dimension_numbers = #tpu.dot_dimension_numbers<[1], [0], [0], [1], [0, 0, 1, 1], [], []>} : vector<256x4xbf16>, vector<4x128xbf16>, vector<256x128xf32> -> vector<256x128xf32>
    %81 = arith.addf %76, %80 : vector<256x128xf32>
    %c0_113 = arith.constant 0 : index
    %c0_114 = arith.constant 0 : index
    %82 = vector.load %arg9[%c0_113, %c0_114] : memref<256x128xf32, #tpu.memory_space<vmem>>, vector<256x128xf32>
    tpu.vector_store %arg9[%c0_113, %c0_114], %81 {strides = array<i32>} : memref<256x128xf32, #tpu.memory_space<vmem>>, vector<256x128xf32>,
    %c0_115 = arith.constant 0 : index
    %c0_116 = arith.constant 0 : index
    %83 = vector.load %arg9[%c0_115, %c0_116] : memref<256x128xf32, #tpu.memory_space<vmem>>, vector<256x128xf32>
    %c0_117 = arith.constant 0 : index
    %c0_118 = arith.constant 0 : index
    %84 = vector.load %arg6[%c0_117, %c0_118] : memref<1x128xf32, #tpu.memory_space<vmem>>, vector<1x128xf32>
    %85 = vector.broadcast %84 : vector<1x128xf32> to vector<256x128xf32>
    %86 = arith.addf %83, %85 : vector<256x128xf32>
    %87 = vector.shape_cast %86 : vector<256x128xf32> to vector<16x16x128xf32>
    %c0_119 = arith.constant 0 : index
    %c0_120 = arith.constant 0 : index
    %c0_121 = arith.constant 0 : index
    %c0_122 = arith.constant 0 : index
    %c0_123 = arith.constant 0 : index
    %88 = vector.load %arg7[%c0_119, %c0_120, %c0_121, %c0_122, %c0_123] : memref<1x16x4x16x128xf32, #tpu.memory_space<vmem>>, vector<1x16x1x16x128xf32>
    %89 = vector.shape_cast %88 : vector<1x16x1x16x128xf32> to vector<16x16x128xf32>
    %90 = vector.shape_cast %87 : vector<16x16x128xf32> to vector<1x16x1x16x128xf32>
    tpu.vector_store %arg7[%c0_119, %c0_120, %c0_121, %c0_122, %c0_123], %90 {strides = array<i32>} : memref<1x16x4x16x128xf32, #tpu.memory_space<vmem>>, vector<1x16x1x16x128xf32>,
    %cst_124 = arith.constant 0.000000e+00 : f32
    %91 = vector.broadcast %cst_124 : f32 to vector<256x128xf32>
    %c0_125 = arith.constant 0 : index
    %c0_126 = arith.constant 0 : index
    %92 = vector.load %arg9[%c0_125, %c0_126] : memref<256x128xf32, #tpu.memory_space<vmem>>, vector<256x128xf32>
    tpu.vector_store %arg9[%c0_125, %c0_126], %91 {strides = array<i32>} : memref<256x128xf32, #tpu.memory_space<vmem>>, vector<256x128xf32>,
    %c1_127 = arith.constant 1 : index
    %c0_128 = arith.constant 0 : index
    %c0_129 = arith.constant 0 : index
    %c0_130 = arith.constant 0 : index
    %93 = vector.load %arg8[%c1_127, %c0_128, %c0_129, %c0_130] : memref<3x18x16x4xbf16, #tpu.memory_space<vmem>>, vector<1x16x16x4xbf16>
    %94 = vector.shape_cast %93 : vector<1x16x16x4xbf16> to vector<16x16x4xbf16>
    %c0_131 = arith.constant 0 : index
    %c0_132 = arith.constant 0 : index
    %95 = vector.load %arg9[%c0_131, %c0_132] : memref<256x128xf32, #tpu.memory_space<vmem>>, vector<256x128xf32>
    %96 = vector.shape_cast %94 : vector<16x16x4xbf16> to vector<256x4xbf16>
    %c2_133 = arith.constant 2 : index
    %c0_134 = arith.constant 0 : index
    %c0_135 = arith.constant 0 : index
    %97 = vector.load %arg5[%c2_133, %c0_134, %c0_135] : memref<16x4x128xbf16, #tpu.memory_space<vmem>>, vector<1x4x128xbf16>
    %98 = vector.shape_cast %97 : vector<1x4x128xbf16> to vector<4x128xbf16>
    %cst_136 = arith.constant dense<0.000000e+00> : vector<256x128xf32>
    %99 = tpu.matmul %96, %98, %cst_136 {dimension_numbers = #tpu.dot_dimension_numbers<[1], [0], [0], [1], [0, 0, 1, 1], [], []>} : vector<256x4xbf16>, vector<4x128xbf16>, vector<256x128xf32> -> vector<256x128xf32>
    %100 = arith.addf %95, %99 : vector<256x128xf32>
    %c0_137 = arith.constant 0 : index
    %c0_138 = arith.constant 0 : index
    %101 = vector.load %arg9[%c0_137, %c0_138] : memref<256x128xf32, #tpu.memory_space<vmem>>, vector<256x128xf32>
    tpu.vector_store %arg9[%c0_137, %c0_138], %100 {strides = array<i32>} : memref<256x128xf32, #tpu.memory_space<vmem>>, vector<256x128xf32>,
    %c2_139 = arith.constant 2 : index
    %c0_140 = arith.constant 0 : index
    %c0_141 = arith.constant 0 : index
    %c0_142 = arith.constant 0 : index
    %102 = vector.load %arg8[%c2_139, %c0_140, %c0_141, %c0_142] : memref<3x18x16x4xbf16, #tpu.memory_space<vmem>>, vector<1x16x16x4xbf16>
    %103 = vector.shape_cast %102 : vector<1x16x16x4xbf16> to vector<16x16x4xbf16>
    %c0_143 = arith.constant 0 : index
    %c0_144 = arith.constant 0 : index
    %104 = vector.load %arg9[%c0_143, %c0_144] : memref<256x128xf32, #tpu.memory_space<vmem>>, vector<256x128xf32>
    %105 = vector.shape_cast %103 : vector<16x16x4xbf16> to vector<256x4xbf16>
    %c3 = arith.constant 3 : index
    %c0_145 = arith.constant 0 : index
    %c0_146 = arith.constant 0 : index
    %106 = vector.load %arg5[%c3, %c0_145, %c0_146] : memref<16x4x128xbf16, #tpu.memory_space<vmem>>, vector<1x4x128xbf16>
    %107 = vector.shape_cast %106 : vector<1x4x128xbf16> to vector<4x128xbf16>
    %cst_147 = arith.constant dense<0.000000e+00> : vector<256x128xf32>
    %108 = tpu.matmul %105, %107, %cst_147 {dimension_numbers = #tpu.dot_dimension_numbers<[1], [0], [0], [1], [0, 0, 1, 1], [], []>} : vector<256x4xbf16>, vector<4x128xbf16>, vector<256x128xf32> -> vector<256x128xf32>
    %109 = arith.addf %104, %108 : vector<256x128xf32>
    %c0_148 = arith.constant 0 : index
    %c0_149 = arith.constant 0 : index
    %110 = vector.load %arg9[%c0_148, %c0_149] : memref<256x128xf32, #tpu.memory_space<vmem>>, vector<256x128xf32>
    tpu.vector_store %arg9[%c0_148, %c0_149], %109 {strides = array<i32>} : memref<256x128xf32, #tpu.memory_space<vmem>>, vector<256x128xf32>,
    %c1_150 = arith.constant 1 : index
    %c1_151 = arith.constant 1 : index
    %c0_152 = arith.constant 0 : index
    %c0_153 = arith.constant 0 : index
    %111 = vector.load %arg8[%c1_150, %c1_151, %c0_152, %c0_153] : memref<3x18x16x4xbf16, #tpu.memory_space<vmem>>, vector<1x16x16x4xbf16>
    %112 = vector.shape_cast %111 : vector<1x16x16x4xbf16> to vector<16x16x4xbf16>
    %c0_154 = arith.constant 0 : index
    %c0_155 = arith.constant 0 : index
    %113 = vector.load %arg9[%c0_154, %c0_155] : memref<256x128xf32, #tpu.memory_space<vmem>>, vector<256x128xf32>
    %114 = vector.shape_cast %112 : vector<16x16x4xbf16> to vector<256x4xbf16>
    %c6 = arith.constant 6 : index
    %c0_156 = arith.constant 0 : index
    %c0_157 = arith.constant 0 : index
    %115 = vector.load %arg5[%c6, %c0_156, %c0_157] : memref<16x4x128xbf16, #tpu.memory_space<vmem>>, vector<1x4x128xbf16>
    %116 = vector.shape_cast %115 : vector<1x4x128xbf16> to vector<4x128xbf16>
    %cst_158 = arith.constant dense<0.000000e+00> : vector<256x128xf32>
    %117 = tpu.matmul %114, %116, %cst_158 {dimension_numbers = #tpu.dot_dimension_numbers<[1], [0], [0], [1], [0, 0, 1, 1], [], []>} : vector<256x4xbf16>, vector<4x128xbf16>, vector<256x128xf32> -> vector<256x128xf32>
    %118 = arith.addf %113, %117 : vector<256x128xf32>
    %c0_159 = arith.constant 0 : index
    %c0_160 = arith.constant 0 : index
    %119 = vector.load %arg9[%c0_159, %c0_160] : memref<256x128xf32, #tpu.memory_space<vmem>>, vector<256x128xf32>
    tpu.vector_store %arg9[%c0_159, %c0_160], %118 {strides = array<i32>} : memref<256x128xf32, #tpu.memory_space<vmem>>, vector<256x128xf32>,
    %c2_161 = arith.constant 2 : index
    %c1_162 = arith.constant 1 : index
    %c0_163 = arith.constant 0 : index
    %c0_164 = arith.constant 0 : index
    %120 = vector.load %arg8[%c2_161, %c1_162, %c0_163, %c0_164] : memref<3x18x16x4xbf16, #tpu.memory_space<vmem>>, vector<1x16x16x4xbf16>
    %121 = vector.shape_cast %120 : vector<1x16x16x4xbf16> to vector<16x16x4xbf16>
    %c0_165 = arith.constant 0 : index
    %c0_166 = arith.constant 0 : index
    %122 = vector.load %arg9[%c0_165, %c0_166] : memref<256x128xf32, #tpu.memory_space<vmem>>, vector<256x128xf32>
    %123 = vector.shape_cast %121 : vector<16x16x4xbf16> to vector<256x4xbf16>
    %c7 = arith.constant 7 : index
    %c0_167 = arith.constant 0 : index
    %c0_168 = arith.constant 0 : index
    %124 = vector.load %arg5[%c7, %c0_167, %c0_168] : memref<16x4x128xbf16, #tpu.memory_space<vmem>>, vector<1x4x128xbf16>
    %125 = vector.shape_cast %124 : vector<1x4x128xbf16> to vector<4x128xbf16>
    %cst_169 = arith.constant dense<0.000000e+00> : vector<256x128xf32>
    %126 = tpu.matmul %123, %125, %cst_169 {dimension_numbers = #tpu.dot_dimension_numbers<[1], [0], [0], [1], [0, 0, 1, 1], [], []>} : vector<256x4xbf16>, vector<4x128xbf16>, vector<256x128xf32> -> vector<256x128xf32>
    %127 = arith.addf %122, %126 : vector<256x128xf32>
    %c0_170 = arith.constant 0 : index
    %c0_171 = arith.constant 0 : index
    %128 = vector.load %arg9[%c0_170, %c0_171] : memref<256x128xf32, #tpu.memory_space<vmem>>, vector<256x128xf32>
    tpu.vector_store %arg9[%c0_170, %c0_171], %127 {strides = array<i32>} : memref<256x128xf32, #tpu.memory_space<vmem>>, vector<256x128xf32>,
    %c0_172 = arith.constant 0 : index
    %c0_173 = arith.constant 0 : index
    %129 = vector.load %arg9[%c0_172, %c0_173] : memref<256x128xf32, #tpu.memory_space<vmem>>, vector<256x128xf32>
    %c0_174 = arith.constant 0 : index
    %c0_175 = arith.constant 0 : index
    %130 = vector.load %arg6[%c0_174, %c0_175] : memref<1x128xf32, #tpu.memory_space<vmem>>, vector<1x128xf32>
    %131 = vector.broadcast %130 : vector<1x128xf32> to vector<256x128xf32>
    %132 = arith.addf %129, %131 : vector<256x128xf32>
    %133 = vector.shape_cast %132 : vector<256x128xf32> to vector<16x16x128xf32>
    %c0_176 = arith.constant 0 : index
    %c0_177 = arith.constant 0 : index
    %c1_178 = arith.constant 1 : index
    %c0_179 = arith.constant 0 : index
    %c0_180 = arith.constant 0 : index
    %134 = vector.load %arg7[%c0_176, %c0_177, %c1_178, %c0_179, %c0_180] : memref<1x16x4x16x128xf32, #tpu.memory_space<vmem>>, vector<1x16x1x16x128xf32>
    %135 = vector.shape_cast %134 : vector<1x16x1x16x128xf32> to vector<16x16x128xf32>
    %136 = vector.shape_cast %133 : vector<16x16x128xf32> to vector<1x16x1x16x128xf32>
    tpu.vector_store %arg7[%c0_176, %c0_177, %c1_178, %c0_179, %c0_180], %136 {strides = array<i32>} : memref<1x16x4x16x128xf32, #tpu.memory_space<vmem>>, vector<1x16x1x16x128xf32>,
    %cst_181 = arith.constant 0.000000e+00 : f32
    %137 = vector.broadcast %cst_181 : f32 to vector<256x128xf32>
    %c0_182 = arith.constant 0 : index
    %c0_183 = arith.constant 0 : index
    %138 = vector.load %arg9[%c0_182, %c0_183] : memref<256x128xf32, #tpu.memory_space<vmem>>, vector<256x128xf32>
    tpu.vector_store %arg9[%c0_182, %c0_183], %137 {strides = array<i32>} : memref<256x128xf32, #tpu.memory_space<vmem>>, vector<256x128xf32>,
    %c0_184 = arith.constant 0 : index
    %c1_185 = arith.constant 1 : index
    %c0_186 = arith.constant 0 : index
    %c0_187 = arith.constant 0 : index
    %139 = vector.load %arg8[%c0_184, %c1_185, %c0_186, %c0_187] : memref<3x18x16x4xbf16, #tpu.memory_space<vmem>>, vector<1x16x16x4xbf16>
    %140 = vector.shape_cast %139 : vector<1x16x16x4xbf16> to vector<16x16x4xbf16>
    %c0_188 = arith.constant 0 : index
    %c0_189 = arith.constant 0 : index
    %141 = vector.load %arg9[%c0_188, %c0_189] : memref<256x128xf32, #tpu.memory_space<vmem>>, vector<256x128xf32>
    %142 = vector.shape_cast %140 : vector<16x16x4xbf16> to vector<256x4xbf16>
    %c8 = arith.constant 8 : index
    %c0_190 = arith.constant 0 : index
    %c0_191 = arith.constant 0 : index
    %143 = vector.load %arg5[%c8, %c0_190, %c0_191] : memref<16x4x128xbf16, #tpu.memory_space<vmem>>, vector<1x4x128xbf16>
    %144 = vector.shape_cast %143 : vector<1x4x128xbf16> to vector<4x128xbf16>
    %cst_192 = arith.constant dense<0.000000e+00> : vector<256x128xf32>
    %145 = tpu.matmul %142, %144, %cst_192 {dimension_numbers = #tpu.dot_dimension_numbers<[1], [0], [0], [1], [0, 0, 1, 1], [], []>} : vector<256x4xbf16>, vector<4x128xbf16>, vector<256x128xf32> -> vector<256x128xf32>
    %146 = arith.addf %141, %145 : vector<256x128xf32>
    %c0_193 = arith.constant 0 : index
    %c0_194 = arith.constant 0 : index
    %147 = vector.load %arg9[%c0_193, %c0_194] : memref<256x128xf32, #tpu.memory_space<vmem>>, vector<256x128xf32>
    tpu.vector_store %arg9[%c0_193, %c0_194], %146 {strides = array<i32>} : memref<256x128xf32, #tpu.memory_space<vmem>>, vector<256x128xf32>,
    %c1_195 = arith.constant 1 : index
    %c1_196 = arith.constant 1 : index
    %c0_197 = arith.constant 0 : index
    %c0_198 = arith.constant 0 : index
    %148 = vector.load %arg8[%c1_195, %c1_196, %c0_197, %c0_198] : memref<3x18x16x4xbf16, #tpu.memory_space<vmem>>, vector<1x16x16x4xbf16>
    %149 = vector.shape_cast %148 : vector<1x16x16x4xbf16> to vector<16x16x4xbf16>
    %c0_199 = arith.constant 0 : index
    %c0_200 = arith.constant 0 : index
    %150 = vector.load %arg9[%c0_199, %c0_200] : memref<256x128xf32, #tpu.memory_space<vmem>>, vector<256x128xf32>
    %151 = vector.shape_cast %149 : vector<16x16x4xbf16> to vector<256x4xbf16>
    %c9 = arith.constant 9 : index
    %c0_201 = arith.constant 0 : index
    %c0_202 = arith.constant 0 : index
    %152 = vector.load %arg5[%c9, %c0_201, %c0_202] : memref<16x4x128xbf16, #tpu.memory_space<vmem>>, vector<1x4x128xbf16>
    %153 = vector.shape_cast %152 : vector<1x4x128xbf16> to vector<4x128xbf16>
    %cst_203 = arith.constant dense<0.000000e+00> : vector<256x128xf32>
    %154 = tpu.matmul %151, %153, %cst_203 {dimension_numbers = #tpu.dot_dimension_numbers<[1], [0], [0], [1], [0, 0, 1, 1], [], []>} : vector<256x4xbf16>, vector<4x128xbf16>, vector<256x128xf32> -> vector<256x128xf32>
    %155 = arith.addf %150, %154 : vector<256x128xf32>
    %c0_204 = arith.constant 0 : index
    %c0_205 = arith.constant 0 : index
    %156 = vector.load %arg9[%c0_204, %c0_205] : memref<256x128xf32, #tpu.memory_space<vmem>>, vector<256x128xf32>
    tpu.vector_store %arg9[%c0_204, %c0_205], %155 {strides = array<i32>} : memref<256x128xf32, #tpu.memory_space<vmem>>, vector<256x128xf32>,
    %c0_206 = arith.constant 0 : index
    %c2_207 = arith.constant 2 : index
    %c0_208 = arith.constant 0 : index
    %c0_209 = arith.constant 0 : index
    %157 = vector.load %arg8[%c0_206, %c2_207, %c0_208, %c0_209] : memref<3x18x16x4xbf16, #tpu.memory_space<vmem>>, vector<1x16x16x4xbf16>
    %158 = vector.shape_cast %157 : vector<1x16x16x4xbf16> to vector<16x16x4xbf16>
    %c0_210 = arith.constant 0 : index
    %c0_211 = arith.constant 0 : index
    %159 = vector.load %arg9[%c0_210, %c0_211] : memref<256x128xf32, #tpu.memory_space<vmem>>, vector<256x128xf32>
    %160 = vector.shape_cast %158 : vector<16x16x4xbf16> to vector<256x4xbf16>
    %c12 = arith.constant 12 : index
    %c0_212 = arith.constant 0 : index
    %c0_213 = arith.constant 0 : index
    %161 = vector.load %arg5[%c12, %c0_212, %c0_213] : memref<16x4x128xbf16, #tpu.memory_space<vmem>>, vector<1x4x128xbf16>
    %162 = vector.shape_cast %161 : vector<1x4x128xbf16> to vector<4x128xbf16>
    %cst_214 = arith.constant dense<0.000000e+00> : vector<256x128xf32>
    %163 = tpu.matmul %160, %162, %cst_214 {dimension_numbers = #tpu.dot_dimension_numbers<[1], [0], [0], [1], [0, 0, 1, 1], [], []>} : vector<256x4xbf16>, vector<4x128xbf16>, vector<256x128xf32> -> vector<256x128xf32>
    %164 = arith.addf %159, %163 : vector<256x128xf32>
    %c0_215 = arith.constant 0 : index
    %c0_216 = arith.constant 0 : index
    %165 = vector.load %arg9[%c0_215, %c0_216] : memref<256x128xf32, #tpu.memory_space<vmem>>, vector<256x128xf32>
    tpu.vector_store %arg9[%c0_215, %c0_216], %164 {strides = array<i32>} : memref<256x128xf32, #tpu.memory_space<vmem>>, vector<256x128xf32>,
    %c1_217 = arith.constant 1 : index
    %c2_218 = arith.constant 2 : index
    %c0_219 = arith.constant 0 : index
    %c0_220 = arith.constant 0 : index
    %166 = vector.load %arg8[%c1_217, %c2_218, %c0_219, %c0_220] : memref<3x18x16x4xbf16, #tpu.memory_space<vmem>>, vector<1x16x16x4xbf16>
    %167 = vector.shape_cast %166 : vector<1x16x16x4xbf16> to vector<16x16x4xbf16>
    %c0_221 = arith.constant 0 : index
    %c0_222 = arith.constant 0 : index
    %168 = vector.load %arg9[%c0_221, %c0_222] : memref<256x128xf32, #tpu.memory_space<vmem>>, vector<256x128xf32>
    %169 = vector.shape_cast %167 : vector<16x16x4xbf16> to vector<256x4xbf16>
    %c13 = arith.constant 13 : index
    %c0_223 = arith.constant 0 : index
    %c0_224 = arith.constant 0 : index
    %170 = vector.load %arg5[%c13, %c0_223, %c0_224] : memref<16x4x128xbf16, #tpu.memory_space<vmem>>, vector<1x4x128xbf16>
    %171 = vector.shape_cast %170 : vector<1x4x128xbf16> to vector<4x128xbf16>
    %cst_225 = arith.constant dense<0.000000e+00> : vector<256x128xf32>
    %172 = tpu.matmul %169, %171, %cst_225 {dimension_numbers = #tpu.dot_dimension_numbers<[1], [0], [0], [1], [0, 0, 1, 1], [], []>} : vector<256x4xbf16>, vector<4x128xbf16>, vector<256x128xf32> -> vector<256x128xf32>
    %173 = arith.addf %168, %172 : vector<256x128xf32>
    %c0_226 = arith.constant 0 : index
    %c0_227 = arith.constant 0 : index
    %174 = vector.load %arg9[%c0_226, %c0_227] : memref<256x128xf32, #tpu.memory_space<vmem>>, vector<256x128xf32>
    tpu.vector_store %arg9[%c0_226, %c0_227], %173 {strides = array<i32>} : memref<256x128xf32, #tpu.memory_space<vmem>>, vector<256x128xf32>,
    %c0_228 = arith.constant 0 : index
    %c0_229 = arith.constant 0 : index
    %175 = vector.load %arg9[%c0_228, %c0_229] : memref<256x128xf32, #tpu.memory_space<vmem>>, vector<256x128xf32>
    %c0_230 = arith.constant 0 : index
    %c0_231 = arith.constant 0 : index
    %176 = vector.load %arg6[%c0_230, %c0_231] : memref<1x128xf32, #tpu.memory_space<vmem>>, vector<1x128xf32>
    %177 = vector.broadcast %176 : vector<1x128xf32> to vector<256x128xf32>
    %178 = arith.addf %175, %177 : vector<256x128xf32>
    %179 = vector.shape_cast %178 : vector<256x128xf32> to vector<16x16x128xf32>
    %c0_232 = arith.constant 0 : index
    %c0_233 = arith.constant 0 : index
    %c2_234 = arith.constant 2 : index
    %c0_235 = arith.constant 0 : index
    %c0_236 = arith.constant 0 : index
    %180 = vector.load %arg7[%c0_232, %c0_233, %c2_234, %c0_235, %c0_236] : memref<1x16x4x16x128xf32, #tpu.memory_space<vmem>>, vector<1x16x1x16x128xf32>
    %181 = vector.shape_cast %180 : vector<1x16x1x16x128xf32> to vector<16x16x128xf32>
    %182 = vector.shape_cast %179 : vector<16x16x128xf32> to vector<1x16x1x16x128xf32>
    tpu.vector_store %arg7[%c0_232, %c0_233, %c2_234, %c0_235, %c0_236], %182 {strides = array<i32>} : memref<1x16x4x16x128xf32, #tpu.memory_space<vmem>>, vector<1x16x1x16x128xf32>,
    %cst_237 = arith.constant 0.000000e+00 : f32
    %183 = vector.broadcast %cst_237 : f32 to vector<256x128xf32>
    %c0_238 = arith.constant 0 : index
    %c0_239 = arith.constant 0 : index
    %184 = vector.load %arg9[%c0_238, %c0_239] : memref<256x128xf32, #tpu.memory_space<vmem>>, vector<256x128xf32>
    tpu.vector_store %arg9[%c0_238, %c0_239], %183 {strides = array<i32>} : memref<256x128xf32, #tpu.memory_space<vmem>>, vector<256x128xf32>,
    %c1_240 = arith.constant 1 : index
    %c1_241 = arith.constant 1 : index
    %c0_242 = arith.constant 0 : index
    %c0_243 = arith.constant 0 : index
    %185 = vector.load %arg8[%c1_240, %c1_241, %c0_242, %c0_243] : memref<3x18x16x4xbf16, #tpu.memory_space<vmem>>, vector<1x16x16x4xbf16>
    %186 = vector.shape_cast %185 : vector<1x16x16x4xbf16> to vector<16x16x4xbf16>
    %c0_244 = arith.constant 0 : index
    %c0_245 = arith.constant 0 : index
    %187 = vector.load %arg9[%c0_244, %c0_245] : memref<256x128xf32, #tpu.memory_space<vmem>>, vector<256x128xf32>
    %188 = vector.shape_cast %186 : vector<16x16x4xbf16> to vector<256x4xbf16>
    %c10 = arith.constant 10 : index
    %c0_246 = arith.constant 0 : index
    %c0_247 = arith.constant 0 : index
    %189 = vector.load %arg5[%c10, %c0_246, %c0_247] : memref<16x4x128xbf16, #tpu.memory_space<vmem>>, vector<1x4x128xbf16>
    %190 = vector.shape_cast %189 : vector<1x4x128xbf16> to vector<4x128xbf16>
    %cst_248 = arith.constant dense<0.000000e+00> : vector<256x128xf32>
    %191 = tpu.matmul %188, %190, %cst_248 {dimension_numbers = #tpu.dot_dimension_numbers<[1], [0], [0], [1], [0, 0, 1, 1], [], []>} : vector<256x4xbf16>, vector<4x128xbf16>, vector<256x128xf32> -> vector<256x128xf32>
    %192 = arith.addf %187, %191 : vector<256x128xf32>
    %c0_249 = arith.constant 0 : index
    %c0_250 = arith.constant 0 : index
    %193 = vector.load %arg9[%c0_249, %c0_250] : memref<256x128xf32, #tpu.memory_space<vmem>>, vector<256x128xf32>
    tpu.vector_store %arg9[%c0_249, %c0_250], %192 {strides = array<i32>} : memref<256x128xf32, #tpu.memory_space<vmem>>, vector<256x128xf32>,
    %c2_251 = arith.constant 2 : index
    %c1_252 = arith.constant 1 : index
    %c0_253 = arith.constant 0 : index
    %c0_254 = arith.constant 0 : index
    %194 = vector.load %arg8[%c2_251, %c1_252, %c0_253, %c0_254] : memref<3x18x16x4xbf16, #tpu.memory_space<vmem>>, vector<1x16x16x4xbf16>
    %195 = vector.shape_cast %194 : vector<1x16x16x4xbf16> to vector<16x16x4xbf16>
    %c0_255 = arith.constant 0 : index
    %c0_256 = arith.constant 0 : index
    %196 = vector.load %arg9[%c0_255, %c0_256] : memref<256x128xf32, #tpu.memory_space<vmem>>, vector<256x128xf32>
    %197 = vector.shape_cast %195 : vector<16x16x4xbf16> to vector<256x4xbf16>
    %c11 = arith.constant 11 : index
    %c0_257 = arith.constant 0 : index
    %c0_258 = arith.constant 0 : index
    %198 = vector.load %arg5[%c11, %c0_257, %c0_258] : memref<16x4x128xbf16, #tpu.memory_space<vmem>>, vector<1x4x128xbf16>
    %199 = vector.shape_cast %198 : vector<1x4x128xbf16> to vector<4x128xbf16>
    %cst_259 = arith.constant dense<0.000000e+00> : vector<256x128xf32>
    %200 = tpu.matmul %197, %199, %cst_259 {dimension_numbers = #tpu.dot_dimension_numbers<[1], [0], [0], [1], [0, 0, 1, 1], [], []>} : vector<256x4xbf16>, vector<4x128xbf16>, vector<256x128xf32> -> vector<256x128xf32>
    %201 = arith.addf %196, %200 : vector<256x128xf32>
    %c0_260 = arith.constant 0 : index
    %c0_261 = arith.constant 0 : index
    %202 = vector.load %arg9[%c0_260, %c0_261] : memref<256x128xf32, #tpu.memory_space<vmem>>, vector<256x128xf32>
    tpu.vector_store %arg9[%c0_260, %c0_261], %201 {strides = array<i32>} : memref<256x128xf32, #tpu.memory_space<vmem>>, vector<256x128xf32>,
    %c1_262 = arith.constant 1 : index
    %c2_263 = arith.constant 2 : index
    %c0_264 = arith.constant 0 : index
    %c0_265 = arith.constant 0 : index
    %203 = vector.load %arg8[%c1_262, %c2_263, %c0_264, %c0_265] : memref<3x18x16x4xbf16, #tpu.memory_space<vmem>>, vector<1x16x16x4xbf16>
    %204 = vector.shape_cast %203 : vector<1x16x16x4xbf16> to vector<16x16x4xbf16>
    %c0_266 = arith.constant 0 : index
    %c0_267 = arith.constant 0 : index
    %205 = vector.load %arg9[%c0_266, %c0_267] : memref<256x128xf32, #tpu.memory_space<vmem>>, vector<256x128xf32>
    %206 = vector.shape_cast %204 : vector<16x16x4xbf16> to vector<256x4xbf16>
    %c14 = arith.constant 14 : index
    %c0_268 = arith.constant 0 : index
    %c0_269 = arith.constant 0 : index
    %207 = vector.load %arg5[%c14, %c0_268, %c0_269] : memref<16x4x128xbf16, #tpu.memory_space<vmem>>, vector<1x4x128xbf16>
    %208 = vector.shape_cast %207 : vector<1x4x128xbf16> to vector<4x128xbf16>
    %cst_270 = arith.constant dense<0.000000e+00> : vector<256x128xf32>
    %209 = tpu.matmul %206, %208, %cst_270 {dimension_numbers = #tpu.dot_dimension_numbers<[1], [0], [0], [1], [0, 0, 1, 1], [], []>} : vector<256x4xbf16>, vector<4x128xbf16>, vector<256x128xf32> -> vector<256x128xf32>
    %210 = arith.addf %205, %209 : vector<256x128xf32>
    %c0_271 = arith.constant 0 : index
    %c0_272 = arith.constant 0 : index
    %211 = vector.load %arg9[%c0_271, %c0_272] : memref<256x128xf32, #tpu.memory_space<vmem>>, vector<256x128xf32>
    tpu.vector_store %arg9[%c0_271, %c0_272], %210 {strides = array<i32>} : memref<256x128xf32, #tpu.memory_space<vmem>>, vector<256x128xf32>,
    %c2_273 = arith.constant 2 : index
    %c2_274 = arith.constant 2 : index
    %c0_275 = arith.constant 0 : index
    %c0_276 = arith.constant 0 : index
    %212 = vector.load %arg8[%c2_273, %c2_274, %c0_275, %c0_276] : memref<3x18x16x4xbf16, #tpu.memory_space<vmem>>, vector<1x16x16x4xbf16>
    %213 = vector.shape_cast %212 : vector<1x16x16x4xbf16> to vector<16x16x4xbf16>
    %c0_277 = arith.constant 0 : index
    %c0_278 = arith.constant 0 : index
    %214 = vector.load %arg9[%c0_277, %c0_278] : memref<256x128xf32, #tpu.memory_space<vmem>>, vector<256x128xf32>
    %215 = vector.shape_cast %213 : vector<16x16x4xbf16> to vector<256x4xbf16>
    %c15 = arith.constant 15 : index
    %c0_279 = arith.constant 0 : index
    %c0_280 = arith.constant 0 : index
    %216 = vector.load %arg5[%c15, %c0_279, %c0_280] : memref<16x4x128xbf16, #tpu.memory_space<vmem>>, vector<1x4x128xbf16>
    %217 = vector.shape_cast %216 : vector<1x4x128xbf16> to vector<4x128xbf16>
    %cst_281 = arith.constant dense<0.000000e+00> : vector<256x128xf32>
    %218 = tpu.matmul %215, %217, %cst_281 {dimension_numbers = #tpu.dot_dimension_numbers<[1], [0], [0], [1], [0, 0, 1, 1], [], []>} : vector<256x4xbf16>, vector<4x128xbf16>, vector<256x128xf32> -> vector<256x128xf32>
    %219 = arith.addf %214, %218 : vector<256x128xf32>
    %c0_282 = arith.constant 0 : index
    %c0_283 = arith.constant 0 : index
    %220 = vector.load %arg9[%c0_282, %c0_283] : memref<256x128xf32, #tpu.memory_space<vmem>>, vector<256x128xf32>
    tpu.vector_store %arg9[%c0_282, %c0_283], %219 {strides = array<i32>} : memref<256x128xf32, #tpu.memory_space<vmem>>, vector<256x128xf32>,
    %c0_284 = arith.constant 0 : index
    %c0_285 = arith.constant 0 : index
    %221 = vector.load %arg9[%c0_284, %c0_285] : memref<256x128xf32, #tpu.memory_space<vmem>>, vector<256x128xf32>
    %c0_286 = arith.constant 0 : index
    %c0_287 = arith.constant 0 : index
    %222 = vector.load %arg6[%c0_286, %c0_287] : memref<1x128xf32, #tpu.memory_space<vmem>>, vector<1x128xf32>
    %223 = vector.broadcast %222 : vector<1x128xf32> to vector<256x128xf32>
    %224 = arith.addf %221, %223 : vector<256x128xf32>
    %225 = vector.shape_cast %224 : vector<256x128xf32> to vector<16x16x128xf32>
    %c0_288 = arith.constant 0 : index
    %c0_289 = arith.constant 0 : index
    %c3_290 = arith.constant 3 : index
    %c0_291 = arith.constant 0 : index
    %c0_292 = arith.constant 0 : index
    %226 = vector.load %arg7[%c0_288, %c0_289, %c3_290, %c0_291, %c0_292] : memref<1x16x4x16x128xf32, #tpu.memory_space<vmem>>, vector<1x16x1x16x128xf32>
    %227 = vector.shape_cast %226 : vector<1x16x1x16x128xf32> to vector<16x16x128xf32>
    %228 = vector.shape_cast %225 : vector<16x16x128xf32> to vector<1x16x1x16x128xf32>
    tpu.vector_store %arg7[%c0_288, %c0_289, %c3_290, %c0_291, %c0_292], %228 {strides = array<i32>} : memref<1x16x4x16x128xf32, #tpu.memory_space<vmem>>, vector<1x16x1x16x128xf32>,
    return
  }
  func.func @transform_0(%arg0: i32, %arg1: i32) -> (i32, i32, i32, i32) {
    %c0_i32 = arith.constant 0 : i32
    %c0_i32_0 = arith.constant 0 : i32
    %c0_i32_1 = arith.constant 0 : i32
    return %arg0, %arg1, %c0_i32, %c0_i32_0 : i32, i32, i32, i32
  }
  func.func @transform_1(%arg0: i32, %arg1: i32) -> (i32, i32, i32, i32) {
    %c1_i32 = arith.constant 1 : i32
    %0 = arith.addi %arg1, %c1_i32 : i32
    %c16_i32 = arith.constant 16 : i32
    %1 = arith.muli %0, %c16_i32 : i32
    %c0_i32 = arith.constant 0 : i32
    %c0_i32_0 = arith.constant 0 : i32
    %c0_i32_1 = arith.constant 0 : i32
    return %arg0, %1, %c0_i32, %c0_i32_0 : i32, i32, i32, i32
  }
  func.func @transform_2(%arg0: i32, %arg1: i32) -> (i32, i32, i32, i32) {
    %c1_i32 = arith.constant 1 : i32
    %0 = arith.addi %arg1, %c1_i32 : i32
    %c16_i32 = arith.constant 16 : i32
    %1 = arith.muli %0, %c16_i32 : i32
    %c1_i32_0 = arith.constant 1 : i32
    %2 = arith.addi %1, %c1_i32_0 : i32
    %c0_i32 = arith.constant 0 : i32
    %c0_i32_1 = arith.constant 0 : i32
    %c0_i32_2 = arith.constant 0 : i32
    return %arg0, %2, %c0_i32, %c0_i32_1 : i32, i32, i32, i32
  }
  func.func @transform_3(%arg0: i32, %arg1: i32) -> (i32, i32, i32) {
    %c0_i32 = arith.constant 0 : i32
    %c0_i32_0 = arith.constant 0 : i32
    %c0_i32_1 = arith.constant 0 : i32
    %c0_i32_2 = arith.constant 0 : i32
    return %c0_i32, %c0_i32_0, %c0_i32_1 : i32, i32, i32
  }
  func.func @transform_4(%arg0: i32, %arg1: i32) -> (i32, i32) {
    %c0_i32 = arith.constant 0 : i32
    %c0_i32_0 = arith.constant 0 : i32
    %c0_i32_1 = arith.constant 0 : i32
    return %c0_i32, %c0_i32_0 : i32, i32
  }
  func.func @transform_5(%arg0: i32, %arg1: i32) -> (i32, i32, i32, i32, i32) {
    %c0_i32 = arith.constant 0 : i32
    %c0_i32_0 = arith.constant 0 : i32
    %c0_i32_1 = arith.constant 0 : i32
    %c0_i32_2 = arith.constant 0 : i32
    return %arg0, %arg1, %c0_i32, %c0_i32_0, %c0_i32_1 : i32, i32, i32, i32, i32
  }
}

</mosaic_0001>

<llo_original>
// kernel: upsample_conv_transpose2d.1
$region0: #{upsample_conv_transpose2d.1}
  #allocation0 [shape = 'u32[]', space=smem, size = 0x4, offset = 0x4, fixed_abs, tag = 'smem constant byte address 0x4 - core index']
  #allocation1 [shape = 'u32[144,128]{1,0:T(1,128)}', space=vmem, size = 0x12000, scoped, tag = 'internal scratch']
  #allocation2 [shape = 'bf16[3,18,16,4]{3,2,1,0:T(16,128)(2,1)}', space=vmem, size = 0x36000, scoped, tag = 'scratch operand']
  #allocation3 [shape = 'f32[256,128]{1,0:T(8,128)}', space=vmem, size = 0x20000, scoped, tag = 'scratch operand']
  %s0 = inlined_call_operand.vmem [shape: bf16[2,18,18,4], index: 0, kind: input, shape index: {}, may-alias: {0,1,2}]
  %s1 = inlined_call_operand.vmem [shape: bf16[2,18,18,4], index: 1, kind: input, shape index: {}, may-alias: {0,1,2}]
  %s2 = inlined_call_operand.vmem [shape: bf16[2,18,18,4], index: 2, kind: input, shape index: {}, may-alias: {0,1,2}]
  %s3 = inlined_call_operand.vmem [shape: bf16[16,4,128], index: 3, kind: input, shape index: {}]
  %s4 = inlined_call_operand.vmem [shape: f32[1,128], index: 4, kind: input, shape index: {}]
  %s5 = inlined_call_operand.vmem [shape: f32[2,16,4,16,128], index: 5, kind: output, shape index: {}]
  %s6 = sld [smem:[#allocation0]]
  $region53: #{upsample_conv_transpose2d.1} parent=0
    _
  %s8 = ssub.s32 1, %s6
  %s9 = scalar_select 0, %s8, %s6
  loop: start=0, step=1, limit=4
  $region2: #{upsample_conv_transpose2d.1} parent=0 // loop_pre_header
    _
  $region3: #{upsample_conv_transpose2d.1} parent=0 // loop_header
    %s11 = sphi 0, %s15
    %p12 = scmp.ge.s32.totalorder %s11, 4
    %s18 = sphi 0, %s30
    %s19 = sphi 0, %s26
    %s20 = sphi 0, %s18
    %s21 = sphi 0, %s19
    %s22 = sphi 0, %s20
    %s23 = sphi 0, %s21
    %s35 = sphi 0, %s37
    %s38 = sphi 0, %s35
    %s39 = sphi 0, %s38
    %s55 = sphi 0, %s39
    %s67 = sphi 0, %s69
    %s70 = sphi 0, %s67
    %s71 = sphi 0, %s70
    %s87 = sphi 0, %s71
    %s101 = sphi 0, %s103
    %s104 = sphi 0, %s101
    %s105 = sphi 0, %s104
    %s121 = sphi 0, %s105
    %s125 = sphi 0, %s125
    %s127 = sphi 0, %s125
    %s128 = sphi 0, %s127
    %s142 = sphi 0, %s128
    %s146 = sphi 0, %s146
    %s148 = sphi 0, %s146
    %s149 = sphi 0, %s148
    %s163 = sphi 0, %s149
    %s171 = sphi 0, %s173
    %s174 = sphi 0, %s171
    %s175 = sphi 0, %s174
    %s191 = sphi 0, %s175
  $region4: #{upsample_conv_transpose2d.1} parent=0 // loop_header_branch
    %14 = sbr.rel (%p12) target = $region8
  $region5: #{upsample_conv_transpose2d.1} parent=0 // loop_body
    %s16 = ssub.s32 %s11, 1
    %s17 = ssub.s32 %s11, 2
    %s24 = sadd.s32 1, %s19
    %p25 = scmp.ge.s32.totalorder %s24, 1
    %s26 = scalar_select %p25, 0, %s24
    %s27 = sadd.s32 1, %s18
    %s28 = scalar_select %p25, %s27, %s18
    %p29 = scmp.ge.s32.totalorder %s28, 2
    %s30 = scalar_select %p29, 0, %s28
    %s31 = ssub.s32 %s18, %s30
    %s32 = ssub.s32 %s19, %s26
    %s33 = sor.u32 %s31, %s32
    %p34 = scmp.eq.s32.totalorder %s33, 0
    %s36 = sadd.s32 %s35, 1
    %s37 = scalar_select %p34, %s35, %s36
    %p40 = pneg %p34
    %p41 = scmp.eq.s32.totalorder %s11, 1
    %p42 = por %p40, %p41
    %p43 = scmp.ne.s32.totalorder %s35, %s38
    %p44 = scmp.eq.s32.totalorder %s11, 0
    %p45 = por %p43, %p44
    %p46 = scmp.ne.s32.totalorder %s35, %s38
    %p47 = scmp.eq.s32.totalorder %s16, 1
    %p48 = por %p46, %p47
    %p49 = scmp.ne.s32.totalorder %s38, %s39
    %p50 = scmp.eq.s32.totalorder %s16, 0
    %p51 = por %p49, %p50
    %p52 = scmp.ne.s32.totalorder %s38, %s39
    %p53 = scmp.eq.s32.totalorder %s17, 1
    %p54 = por %p52, %p53
    %p56 = scmp.ne.s32.totalorder %s39, %s55
    %p57 = scmp.eq.s32.totalorder %s17, 0
    %p58 = por %p56, %p57
    %s59 = sadd.s32 %s19, 1
    %s60 = smul.u32 %s59, 16
    %s61 = sadd.s32 %s26, 1
    %s62 = smul.u32 %s61, 16
    %s63 = ssub.s32 %s18, %s30
    %s64 = ssub.s32 %s60, %s62
    %s65 = sor.u32 %s63, %s64
    %p66 = scmp.eq.s32.totalorder %s65, 0
    %s68 = sadd.s32 %s67, 1
    %s69 = scalar_select %p66, %s67, %s68
    %p72 = pneg %p66
    %p73 = scmp.eq.s32.totalorder %s11, 1
    %p74 = por %p72, %p73
    %p75 = scmp.ne.s32.totalorder %s67, %s70
    %p76 = scmp.eq.s32.totalorder %s11, 0
    %p77 = por %p75, %p76
    %p78 = scmp.ne.s32.totalorder %s67, %s70
    %p79 = scmp.eq.s32.totalorder %s16, 1
    %p80 = por %p78, %p79
    %p81 = scmp.ne.s32.totalorder %s70, %s71
    %p82 = scmp.eq.s32.totalorder %s16, 0
    %p83 = por %p81, %p82
    %p84 = scmp.ne.s32.totalorder %s70, %s71
    %p85 = scmp.eq.s32.totalorder %s17, 1
    %p86 = por %p84, %p85
    %p88 = scmp.ne.s32.totalorder %s71, %s87
    %p89 = scmp.eq.s32.totalorder %s17, 0
    %p90 = por %p88, %p89
    %s91 = sadd.s32 %s19, 1
    %s92 = smul.u32 %s91, 16
    %s93 = sadd.s32 %s92, 1
    %s94 = sadd.s32 %s26, 1
    %s95 = smul.u32 %s94, 16
    %s96 = sadd.s32 %s95, 1
    %s97 = ssub.s32 %s18, %s30
    %s98 = ssub.s32 %s93, %s96
    %s99 = sor.u32 %s97, %s98
    %p100 = scmp.eq.s32.totalorder %s99, 0
    %s102 = sadd.s32 %s101, 1
    %s103 = scalar_select %p100, %s101, %s102
    %p106 = pneg %p100
    %p107 = scmp.eq.s32.totalorder %s11, 1
    %p108 = por %p106, %p107
    %p109 = scmp.ne.s32.totalorder %s101, %s104
    %p110 = scmp.eq.s32.totalorder %s11, 0
    %p111 = por %p109, %p110
    %p112 = scmp.ne.s32.totalorder %s101, %s104
    %p113 = scmp.eq.s32.totalorder %s16, 1
    %p114 = por %p112, %p113
    %p115 = scmp.ne.s32.totalorder %s104, %s105
    %p116 = scmp.eq.s32.totalorder %s16, 0
    %p117 = por %p115, %p116
    %p118 = scmp.ne.s32.totalorder %s104, %s105
    %p119 = scmp.eq.s32.totalorder %s17, 1
    %p120 = por %p118, %p119
    %p122 = scmp.ne.s32.totalorder %s105, %s121
    %p123 = scmp.eq.s32.totalorder %s17, 0
    %p124 = por %p122, %p123
    %s126 = sadd.s32 %s125, 1
    %p129 = scmp.eq.s32.totalorder %s11, 1
    %p130 = scmp.ne.s32.totalorder %s125, %s127
    %p131 = scmp.eq.s32.totalorder %s11, 0
    %p132 = por %p130, %p131
    %p133 = scmp.ne.s32.totalorder %s125, %s127
    %p134 = scmp.eq.s32.totalorder %s16, 1
    %p135 = por %p133, %p134
    %p136 = scmp.ne.s32.totalorder %s127, %s128
    %p137 = scmp.eq.s32.totalorder %s16, 0
    %p138 = por %p136, %p137
    %p139 = scmp.ne.s32.totalorder %s127, %s128
    %p140 = scmp.eq.s32.totalorder %s17, 1
    %p141 = por %p139, %p140
    %p143 = scmp.ne.s32.totalorder %s128, %s142
    %p144 = scmp.eq.s32.totalorder %s17, 0
    %p145 = por %p143, %p144
    %s147 = sadd.s32 %s146, 1
    %p150 = scmp.eq.s32.totalorder %s11, 1
    %p151 = scmp.ne.s32.totalorder %s146, %s148
    %p152 = scmp.eq.s32.totalorder %s11, 0
    %p153 = por %p151, %p152
    %p154 = scmp.ne.s32.totalorder %s146, %s148
    %p155 = scmp.eq.s32.totalorder %s16, 1
    %p156 = por %p154, %p155
    %p157 = scmp.ne.s32.totalorder %s148, %s149
    %p158 = scmp.eq.s32.totalorder %s16, 0
    %p159 = por %p157, %p158
    %p160 = scmp.ne.s32.totalorder %s148, %s149
    %p161 = scmp.eq.s32.totalorder %s17, 1
    %p162 = por %p160, %p161
    %p164 = scmp.ne.s32.totalorder %s149, %s163
    %p165 = scmp.eq.s32.totalorder %s17, 0
    %p166 = por %p164, %p165
    %s167 = ssub.s32 %s18, %s30
    %s168 = ssub.s32 %s19, %s26
    %s169 = sor.u32 %s167, %s168
    %p170 = scmp.eq.s32.totalorder %s169, 0
    %s172 = sadd.s32 %s171, 1
    %s173 = scalar_select %p170, %s171, %s172
    %p176 = pneg %p170
    %p177 = scmp.eq.s32.totalorder %s11, 1
    %p178 = por %p176, %p177
    %p179 = scmp.ne.s32.totalorder %s171, %s174
    %p180 = scmp.eq.s32.totalorder %s11, 0
    %p181 = por %p179, %p180
    %p182 = scmp.ne.s32.totalorder %s171, %s174
    %p183 = scmp.eq.s32.totalorder %s16, 1
    %p184 = por %p182, %p183
    %p185 = scmp.ne.s32.totalorder %s174, %s175
    %p186 = scmp.eq.s32.totalorder %s16, 0
    %p187 = por %p185, %p186
    %p188 = scmp.ne.s32.totalorder %s174, %s175
    %p189 = scmp.eq.s32.totalorder %s17, 1
    %p190 = por %p188, %p189
    %p192 = scmp.ne.s32.totalorder %s175, %s191
    %p193 = scmp.eq.s32.totalorder %s17, 0
    %p194 = por %p192, %p193
    %p195 = scmp.le.s32.totalorder 1, %s11
    %p196 = scmp.lt.s32.totalorder %s11, 3
    %p197 = pnand %p195, %p196
    %p198 = pneg %p197
    // Predicated region
    $region9: #{upsample_conv_transpose2d.1} parent=5 // pred_check
      _
    $region10: #{upsample_conv_transpose2d.1} parent=5 // pred_check_branch
      %200 = sbr.rel (%p197) target = $region12
    $region11: #{upsample_conv_transpose2d.1} parent=5 // pred_region
      %s201 = ssub.s32 %s11, 1
      // Predicated region
      $region13: #{upsample_conv_transpose2d.1} parent=11 // pred_check
        %p202 = pneg %p138
      $region14: #{upsample_conv_transpose2d.1} parent=11 // pred_check_branch
        %204 = sbr.rel (%p202) target = $region16
      $region15: #{upsample_conv_transpose2d.1} parent=11 // pred_region
        _
      $region16: #{upsample_conv_transpose2d.1} parent=11 // pred_fallthru
        _
      // Predicated region
      $region17: #{upsample_conv_transpose2d.1} parent=11 // pred_check
        %p205 = pneg %p159
      $region18: #{upsample_conv_transpose2d.1} parent=11 // pred_check_branch
        %207 = sbr.rel (%p205) target = $region20
      $region19: #{upsample_conv_transpose2d.1} parent=11 // pred_region
        _
      $region20: #{upsample_conv_transpose2d.1} parent=11 // pred_fallthru
        _
    $region12: #{upsample_conv_transpose2d.1} parent=5 // pred_fallthru
      _
    %p208 = scmp.lt.s32.totalorder %s11, 2
    // Predicated region
    $region21: #{upsample_conv_transpose2d.1} parent=5 // pred_check
      %p209 = pneg %p208
    $region22: #{upsample_conv_transpose2d.1} parent=5 // pred_check_branch
      %211 = sbr.rel (%p209) target = $region24
    $region23: #{upsample_conv_transpose2d.1} parent=5 // pred_region
      // Predicated region
      $region25: #{upsample_conv_transpose2d.1} parent=23 // pred_check
        %p212 = pneg %p45
      $region26: #{upsample_conv_transpose2d.1} parent=23 // pred_check_branch
        %214 = sbr.rel (%p212) target = $region28
      $region27: #{upsample_conv_transpose2d.1} parent=23 // pred_region
        %s215 = smul.u32 16, %s19
        %s216 = ssub.s32 18, %s215
        %p217 = scmp.lt.s32.totalorder %s216, 16
        %s218 = scalar_select %p217, %s216, 16
        %s219 = smul.u32 64, %s218
        %s220 = smul.u32 %s219, 3
        %p221 = scmp.lt.s32.totalorder %s18, 1
        %s222 = scalar_select %p221, %s18, 1
        %p223 = scmp.lt.s32.totalorder %s215, 17
        %s224 = scalar_select %p223, %s215, 17
        %s225 = smul.addr %s224, 3
        %s226 = smul.addr %s222, 54
        %s227 = sadd.s32 %s225, %s226
        %s228 = smul.addr %s227, 4
        %s229 = scalar_lea.vmem %s0, %s228
        %s230 = smul.u32 16, %s19
        %s231 = ssub.s32 18, %s230
        %p232 = scmp.lt.s32.totalorder %s231, 16
        %s233 = scalar_select %p232, %s231, 16
        %s234 = smul.u32 64, %s233
        %s235 = smul.u32 %s234, 3
      $region28: #{upsample_conv_transpose2d.1} parent=23 // pred_fallthru
        _
      // Predicated region
      $region29: #{upsample_conv_transpose2d.1} parent=23 // pred_check
        %p236 = pneg %p77
      $region30: #{upsample_conv_transpose2d.1} parent=23 // pred_check_branch
        %238 = sbr.rel (%p236) target = $region32
      $region31: #{upsample_conv_transpose2d.1} parent=23 // pred_region
        %s239 = sadd.s32 %s19, 1
        %s240 = smul.u32 %s239, 16
        %p241 = scmp.lt.s32.totalorder %s18, 1
        %s242 = scalar_select %p241, %s18, 1
        %p243 = scmp.lt.s32.totalorder %s240, 17
        %s244 = scalar_select %p243, %s240, 17
        %s245 = smul.addr %s244, 3
        %s246 = smul.addr %s242, 54
        %s247 = sadd.s32 %s245, %s246
        %s248 = smul.addr %s247, 4
        %s249 = scalar_lea.vmem %s1, %s248
        %s250 = sadd.s32 %s19, 1
        %s251 = smul.u32 %s250, 16
      $region32: #{upsample_conv_transpose2d.1} parent=23 // pred_fallthru
        _
      // Predicated region
      $region33: #{upsample_conv_transpose2d.1} parent=23 // pred_check
        %p252 = pneg %p111
      $region34: #{upsample_conv_transpose2d.1} parent=23 // pred_check_branch
        %254 = sbr.rel (%p252) target = $region36
      $region35: #{upsample_conv_transpose2d.1} parent=23 // pred_region
        %s255 = sadd.s32 %s19, 1
        %s256 = smul.u32 %s255, 16
        %s257 = sadd.s32 %s256, 1
        %p258 = scmp.lt.s32.totalorder %s18, 1
        %s259 = scalar_select %p258, %s18, 1
        %p260 = scmp.lt.s32.totalorder %s257, 17
        %s261 = scalar_select %p260, %s257, 17
        %s262 = smul.addr %s261, 3
        %s263 = smul.addr %s259, 54
        %s264 = sadd.s32 %s262, %s263
        %s265 = smul.addr %s264, 4
        %s266 = scalar_lea.vmem %s2, %s265
        %s267 = sadd.s32 %s19, 1
        %s268 = smul.u32 %s267, 16
        %s269 = sadd.s32 %s268, 1
      $region36: #{upsample_conv_transpose2d.1} parent=23 // pred_fallthru
        _
    $region24: #{upsample_conv_transpose2d.1} parent=5 // pred_fallthru
      _
    %p270 = scmp.le.s32.totalorder 1, %s11
    %p271 = scmp.lt.s32.totalorder %s11, 3
    %p272 = pnand %p270, %p271
    %p273 = pneg %p272
    // Predicated region
    $region37: #{upsample_conv_transpose2d.1} parent=5 // pred_check
      _
    $region38: #{upsample_conv_transpose2d.1} parent=5 // pred_check_branch
      %275 = sbr.rel (%p272) target = $region40
    $region39: #{upsample_conv_transpose2d.1} parent=5 // pred_region
      %s276 = ssub.s32 %s11, 1
      %s277 = smul.u32 16, %s21
      %s278 = ssub.s32 18, %s277
      %p279 = scmp.lt.s32.totalorder %s278, 16
      %s280 = scalar_select %p279, %s278, 16
      %s281 = smul.u32 64, %s280
      %s282 = smul.u32 %s281, 3
      %p283 = scmp.lt.s32.totalorder %s20, 1
      %s284 = scalar_select %p283, %s20, 1
      %p285 = scmp.lt.s32.totalorder %s277, 17
      %s286 = scalar_select %p285, %s277, 17
      %s287 = smul.addr %s286, 3
      %s288 = smul.addr %s284, 54
      %s289 = sadd.s32 %s287, %s288
      %s290 = smul.addr %s289, 4
      %s291 = scalar_lea.vmem %s0, %s290
      %p292 = pneg %p51
      %p293 = pneg %p48
      %s294 = sadd.s32 %s21, 1
      %s295 = smul.u32 %s294, 16
      %p296 = scmp.lt.s32.totalorder %s20, 1
      %s297 = scalar_select %p296, %s20, 1
      %p298 = scmp.lt.s32.totalorder %s295, 17
      %s299 = scalar_select %p298, %s295, 17
      %s300 = smul.addr %s299, 3
      %s301 = smul.addr %s297, 54
      %s302 = sadd.s32 %s300, %s301
      %s303 = smul.addr %s302, 4
      %s304 = scalar_lea.vmem %s1, %s303
      %p305 = pneg %p83
      %p306 = pneg %p80
      %s307 = sadd.s32 %s21, 1
      %s308 = smul.u32 %s307, 16
      %s309 = sadd.s32 %s308, 1
      %p310 = scmp.lt.s32.totalorder %s20, 1
      %s311 = scalar_select %p310, %s20, 1
      %p312 = scmp.lt.s32.totalorder %s309, 17
      %s313 = scalar_select %p312, %s309, 17
      %s314 = smul.addr %s313, 3
      %s315 = smul.addr %s311, 54
      %s316 = sadd.s32 %s314, %s315
      %s317 = smul.addr %s316, 4
      %s318 = scalar_lea.vmem %s2, %s317
      %p319 = pneg %p117
      %p320 = pneg %p114
      %p321 = pneg %p138
      %p322 = pneg %p135
      %p323 = pneg %p159
      %p324 = pneg %p156
      %p325 = pneg %p187
      %p326 = pneg %p184
      %s327 = smul.u32 16, %s21
      %p328 = scmp.lt.s32.totalorder %s20, 1
      %s329 = scalar_select %p328, %s20, 1
      %p330 = scmp.lt.s32.totalorder %s327, 15
      %s331 = scalar_select %p330, %s327, 15
      %s332 = smul.addr %s331, 8
      %s333 = smul.addr %s329, 128
      %s334 = sadd.s32 %s332, %s333
      %s335 = smul.addr %s334, 8
      %s336 = scalar_lea.vmem %s5, %s335
      %s337 = smul.u32 16, %s21
      %s338 = ssub.s32 18, %s337
      %p339 = scmp.lt.s32.totalorder %s338, 16
      %s340 = scalar_select %p339, %s338, 16
      %s341 = smul.u32 64, %s340
      %s342 = smul.u32 %s341, 3
      %p343 = scmp.lt.s32.totalorder %s20, 1
      %s344 = scalar_select %p343, %s20, 1
      %p345 = scmp.lt.s32.totalorder %s337, 17
      %s346 = scalar_select %p345, %s337, 17
      %s347 = smul.addr %s346, 3
      %s348 = smul.addr %s344, 54
      %s349 = sadd.s32 %s347, %s348
      %s350 = smul.addr %s349, 4
      %s351 = scalar_lea.vmem %s0, %s350
      %s352 = smul.u32 16, %s21
      %s353 = ssub.s32 18, %s352
      %p354 = scmp.lt.s32.totalorder %s353, 16
      %s355 = scalar_select %p354, %s353, 16
      %s356 = smul.u32 64, %s355
      %s357 = smul.u32 %s356, 3
      %s358 = sadd.s32 %s21, 1
      %s359 = smul.u32 %s358, 16
      %p360 = scmp.lt.s32.totalorder %s20, 1
      %s361 = scalar_select %p360, %s20, 1
      %p362 = scmp.lt.s32.totalorder %s359, 17
      %s363 = scalar_select %p362, %s359, 17
      %s364 = smul.addr %s363, 3
      %s365 = smul.addr %s361, 54
      %s366 = sadd.s32 %s364, %s365
      %s367 = smul.addr %s366, 4
      %s368 = scalar_lea.vmem %s1, %s367
      %s369 = sadd.s32 %s21, 1
      %s370 = smul.u32 %s369, 16
      %s371 = sadd.s32 %s21, 1
      %s372 = smul.u32 %s371, 16
      %s373 = sadd.s32 %s372, 1
      %p374 = scmp.lt.s32.totalorder %s20, 1
      %s375 = scalar_select %p374, %s20, 1
      %p376 = scmp.lt.s32.totalorder %s373, 17
      %s377 = scalar_select %p376, %s373, 17
      %s378 = smul.addr %s377, 3
      %s379 = smul.addr %s375, 54
      %s380 = sadd.s32 %s378, %s379
      %s381 = smul.addr %s380, 4
      %s382 = scalar_lea.vmem %s2, %s381
      %s383 = sadd.s32 %s21, 1
      %s384 = smul.u32 %s383, 16
      %s385 = sadd.s32 %s384, 1
      %s386 = smul.u32 16, %s21
      %p387 = scmp.lt.s32.totalorder %s20, 1
      %s388 = scalar_select %p387, %s20, 1
      %p389 = scmp.lt.s32.totalorder %s386, 15
      %s390 = scalar_select %p389, %s386, 15
      %s391 = smul.addr %s390, 8
      %s392 = smul.addr %s388, 128
      %s393 = sadd.s32 %s391, %s392
      %s394 = smul.addr %s393, 8
      %s395 = scalar_lea.vmem %s5, %s394
      %s396 = smul.u32 16, %s21
      %v398 = vld [vmem:[%s351] sm:$0xf]
      %v399 = vld [vmem:[%s351 + $0x4] sm:$0xf]
      %v400 = vld [vmem:[%s351 + $0xc] sm:$0xf]
      %v401 = vld [vmem:[%s351 + $0x10] sm:$0xf]
      %v402 = vld [vmem:[%s351 + $0x18] sm:$0xf]
      %v403 = vld [vmem:[%s351 + $0x1c] sm:$0xf]
      %v404 = vld [vmem:[%s351 + $0x24] sm:$0xf]
      %v405 = vld [vmem:[%s351 + $0x28] sm:$0xf]
      %v406 = vld [vmem:[%s351 + $0x30] sm:$0xf]
      %v407 = vld [vmem:[%s351 + $0x34] sm:$0xf]
      %v408 = vld [vmem:[%s351 + $0x3c] sm:$0xf]
      %v409 = vld [vmem:[%s351 + $0x40] sm:$0xf]
      %v410 = vld [vmem:[%s351 + $0x48] sm:$0xf]
      %v411 = vld [vmem:[%s351 + $0x4c] sm:$0xf]
      %v412 = vld [vmem:[%s351 + $0x54] sm:$0xf]
      %v413 = vld [vmem:[%s351 + $0x58] sm:$0xf]
      %v414 = vld [vmem:[%s351 + $0x60] sm:$0xf]
      %v415 = vld [vmem:[%s351 + $0x64] sm:$0xf]
      %v416 = vld [vmem:[%s351 + $0x6c] sm:$0xf]
      %v417 = vld [vmem:[%s351 + $0x70] sm:$0xf]
      %v418 = vld [vmem:[%s351 + $0x78] sm:$0xf]
      %v419 = vld [vmem:[%s351 + $0x7c] sm:$0xf]
      %v420 = vld [vmem:[%s351 + $0x84] sm:$0xf]
      %v421 = vld [vmem:[%s351 + $0x88] sm:$0xf]
      %v422 = vld [vmem:[%s351 + $0x90] sm:$0xf]
      %v423 = vld [vmem:[%s351 + $0x94] sm:$0xf]
      %v424 = vld [vmem:[%s351 + $0x9c] sm:$0xf]
      %v425 = vld [vmem:[%s351 + $0xa0] sm:$0xf]
      %v426 = vld [vmem:[%s351 + $0xa8] sm:$0xf]
      %v427 = vld [vmem:[%s351 + $0xac] sm:$0xf]
      %v428 = vld [vmem:[%s351 + $0xb4] sm:$0xf]
      %v429 = vld [vmem:[%s351 + $0xb8] sm:$0xf]
      %v462 = vunpack.c.l.b16 %v398
      %v463 = vunpack.c.l.b16 %v399
      %v464 = vunpack.c.l.b16 %v400
      %v465 = vunpack.c.l.b16 %v401
      %v466 = vunpack.c.l.b16 %v402
      %v467 = vunpack.c.l.b16 %v403
      %v468 = vunpack.c.l.b16 %v404
      %v469 = vunpack.c.l.b16 %v405
      %v470 = vunpack.c.l.b16 %v406
      %v471 = vunpack.c.l.b16 %v407
      %v472 = vunpack.c.l.b16 %v408
      %v473 = vunpack.c.l.b16 %v409
      %v474 = vunpack.c.l.b16 %v410
      %v475 = vunpack.c.l.b16 %v411
      %v476 = vunpack.c.l.b16 %v412
      %v477 = vunpack.c.l.b16 %v413
      %v478 = vunpack.c.l.b16 %v414
      %v479 = vunpack.c.l.b16 %v415
      %v480 = vunpack.c.l.b16 %v416
      %v481 = vunpack.c.l.b16 %v417
      %v482 = vunpack.c.l.b16 %v418
      %v483 = vunpack.c.l.b16 %v419
      %v484 = vunpack.c.l.b16 %v420
      %v485 = vunpack.c.l.b16 %v421
      %v486 = vunpack.c.l.b16 %v422
      %v487 = vunpack.c.l.b16 %v423
      %v488 = vunpack.c.l.b16 %v424
      %v489 = vunpack.c.l.b16 %v425
      %v490 = vunpack.c.l.b16 %v426
      %v491 = vunpack.c.l.b16 %v427
      %v492 = vunpack.c.l.b16 %v428
      %v493 = vunpack.c.l.b16 %v429
      %v494 = vpack.c.b16 %v463, %v462
      %v495 = vpack.c.b16 %v465, %v464
      %v496 = vpack.c.b16 %v467, %v466
      %v497 = vpack.c.b16 %v469, %v468
      %v498 = vpack.c.b16 %v471, %v470
      %v499 = vpack.c.b16 %v473, %v472
      %v500 = vpack.c.b16 %v475, %v474
      %v501 = vpack.c.b16 %v477, %v476
      %v502 = vpack.c.b16 %v479, %v478
      %v503 = vpack.c.b16 %v481, %v480
      %v504 = vpack.c.b16 %v483, %v482
      %v505 = vpack.c.b16 %v485, %v484
      %v506 = vpack.c.b16 %v487, %v486
      %v507 = vpack.c.b16 %v489, %v488
      %v508 = vpack.c.b16 %v491, %v490
      %v509 = vpack.c.b16 %v493, %v492
      %vm526 = vcmask 31744
      %527 = vst.msk [vmem:[#allocation2] sm:$0xff] %vm526, %v494
      %528 = vst.msk [vmem:[#allocation2 + $0x8] sm:$0xff] %vm526, %v495
      %529 = vst.msk [vmem:[#allocation2 + $0x10] sm:$0xff] %vm526, %v496
      %530 = vst.msk [vmem:[#allocation2 + $0x18] sm:$0xff] %vm526, %v497
      %531 = vst.msk [vmem:[#allocation2 + $0x20] sm:$0xff] %vm526, %v498
      %532 = vst.msk [vmem:[#allocation2 + $0x28] sm:$0xff] %vm526, %v499
      %533 = vst.msk [vmem:[#allocation2 + $0x30] sm:$0xff] %vm526, %v500
      %534 = vst.msk [vmem:[#allocation2 + $0x38] sm:$0xff] %vm526, %v501
      %535 = vst.msk [vmem:[#allocation2 + $0x40] sm:$0xff] %vm526, %v502
      %536 = vst.msk [vmem:[#allocation2 + $0x48] sm:$0xff] %vm526, %v503
      %537 = vst.msk [vmem:[#allocation2 + $0x50] sm:$0xff] %vm526, %v504
      %538 = vst.msk [vmem:[#allocation2 + $0x58] sm:$0xff] %vm526, %v505
      %539 = vst.msk [vmem:[#allocation2 + $0x60] sm:$0xff] %vm526, %v506
      %540 = vst.msk [vmem:[#allocation2 + $0x68] sm:$0xff] %vm526, %v507
      %541 = vst.msk [vmem:[#allocation2 + $0x70] sm:$0xff] %vm526, %v508
      %542 = vst.msk [vmem:[#allocation2 + $0x78] sm:$0xff] %vm526, %v509
      %v543 = vld [vmem:[%s368] sm:$0xf]
      %v544 = vld [vmem:[%s368 + $0x4] sm:$0xf]
      %v547 = vunpack.c.l.b16 %v543
      %v548 = vunpack.c.l.b16 %v544
      %v549 = vpack.c.b16 %v548, %v547
      %s551 = scalar_lea.vmem [#allocation2], 128
      %552 = vst.msk [vmem:[%s551] sm:$0xff] %vm526, %v549
      %v553 = vld [vmem:[%s382] sm:$0xf]
      %v554 = vld [vmem:[%s382 + $0x4] sm:$0xf]
      %v557 = vunpack.c.l.b16 %v553
      %v558 = vunpack.c.l.b16 %v554
      %v559 = vpack.c.b16 %v558, %v557
      %s561 = scalar_lea.vmem [#allocation2], 136
      %562 = vst.msk [vmem:[%s561] sm:$0xff] %vm526, %v559
      %v563 = vld [vmem:[%s351] sm:$0xf]
      %v564 = vld [vmem:[%s351 + $0x4] sm:$0xf]
      %v565 = vld [vmem:[%s351 + $0x8] sm:$0x1]
      %v566 = vld [vmem:[%s351 + $0xc] sm:$0xf]
      %v567 = vld [vmem:[%s351 + $0x10] sm:$0xf]
      %v568 = vld [vmem:[%s351 + $0x14] sm:$0x1]
      %v569 = vld [vmem:[%s351 + $0x18] sm:$0xf]
      %v570 = vld [vmem:[%s351 + $0x1c] sm:$0xf]
      %v571 = vld [vmem:[%s351 + $0x20] sm:$0x1]
      %v572 = vld [vmem:[%s351 + $0x24] sm:$0xf]
      %v573 = vld [vmem:[%s351 + $0x28] sm:$0xf]
      %v574 = vld [vmem:[%s351 + $0x2c] sm:$0x1]
      %v575 = vld [vmem:[%s351 + $0x30] sm:$0xf]
      %v576 = vld [vmem:[%s351 + $0x34] sm:$0xf]
      %v577 = vld [vmem:[%s351 + $0x38] sm:$0x1]
      %v578 = vld [vmem:[%s351 + $0x3c] sm:$0xf]
      %v579 = vld [vmem:[%s351 + $0x40] sm:$0xf]
      %v580 = vld [vmem:[%s351 + $0x44] sm:$0x1]
      %v581 = vld [vmem:[%s351 + $0x48] sm:$0xf]
      %v582 = vld [vmem:[%s351 + $0x4c] sm:$0xf]
      %v583 = vld [vmem:[%s351 + $0x50] sm:$0x1]
      %v584 = vld [vmem:[%s351 + $0x54] sm:$0xf]
      %v585 = vld [vmem:[%s351 + $0x58] sm:$0xf]
      %v586 = vld [vmem:[%s351 + $0x5c] sm:$0x1]
      %v587 = vld [vmem:[%s351 + $0x60] sm:$0xf]
      %v588 = vld [vmem:[%s351 + $0x64] sm:$0xf]
      %v589 = vld [vmem:[%s351 + $0x68] sm:$0x1]
      %v590 = vld [vmem:[%s351 + $0x6c] sm:$0xf]
      %v591 = vld [vmem:[%s351 + $0x70] sm:$0xf]
      %v592 = vld [vmem:[%s351 + $0x74] sm:$0x1]
      %v593 = vld [vmem:[%s351 + $0x78] sm:$0xf]
      %v594 = vld [vmem:[%s351 + $0x7c] sm:$0xf]
      %v595 = vld [vmem:[%s351 + $0x80] sm:$0x1]
      %v596 = vld [vmem:[%s351 + $0x84] sm:$0xf]
      %v597 = vld [vmem:[%s351 + $0x88] sm:$0xf]
      %v598 = vld [vmem:[%s351 + $0x8c] sm:$0x1]
      %v599 = vld [vmem:[%s351 + $0x90] sm:$0xf]
      %v600 = vld [vmem:[%s351 + $0x94] sm:$0xf]
      %v601 = vld [vmem:[%s351 + $0x98] sm:$0x1]
      %v602 = vld [vmem:[%s351 + $0x9c] sm:$0xf]
      %v603 = vld [vmem:[%s351 + $0xa0] sm:$0xf]
      %v604 = vld [vmem:[%s351 + $0xa4] sm:$0x1]
      %v605 = vld [vmem:[%s351 + $0xa8] sm:$0xf]
      %v606 = vld [vmem:[%s351 + $0xac] sm:$0xf]
      %v607 = vld [vmem:[%s351 + $0xb0] sm:$0x1]
      %v608 = vld [vmem:[%s351 + $0xb4] sm:$0xf]
      %v609 = vld [vmem:[%s351 + $0xb8] sm:$0xf]
      %v610 = vld [vmem:[%s351 + $0xbc] sm:$0x1]
      %v659 = vunpack.c.l.b16 %v563
      %v660 = vunpack.c.l.b16 %v564
      %v661 = vunpack.c.l.b16 %v565
      %v662 = vunpack.c.l.b16 %v566
      %v663 = vunpack.c.l.b16 %v567
      %v664 = vunpack.c.l.b16 %v568
      %v665 = vunpack.c.l.b16 %v569
      %v666 = vunpack.c.l.b16 %v570
      %v667 = vunpack.c.l.b16 %v571
      %v668 = vunpack.c.l.b16 %v572
      %v669 = vunpack.c.l.b16 %v573
      %v670 = vunpack.c.l.b16 %v574
      %v671 = vunpack.c.l.b16 %v575
      %v672 = vunpack.c.l.b16 %v576
      %v673 = vunpack.c.l.b16 %v577
      %v674 = vunpack.c.l.b16 %v578
      %v675 = vunpack.c.l.b16 %v579
      %v676 = vunpack.c.l.b16 %v580
      %v677 = vunpack.c.l.b16 %v581
      %v678 = vunpack.c.l.b16 %v582
      %v679 = vunpack.c.l.b16 %v583
      %v680 = vunpack.c.l.b16 %v584
      %v681 = vunpack.c.l.b16 %v585
      %v682 = vunpack.c.l.b16 %v586
      %v683 = vunpack.c.l.b16 %v587
      %v684 = vunpack.c.l.b16 %v588
      %v685 = vunpack.c.l.b16 %v589
      %v686 = vunpack.c.l.b16 %v590
      %v687 = vunpack.c.l.b16 %v591
      %v688 = vunpack.c.l.b16 %v592
      %v689 = vunpack.c.l.b16 %v593
      %v690 = vunpack.c.l.b16 %v594
      %v691 = vunpack.c.l.b16 %v595
      %v692 = vunpack.c.l.b16 %v596
      %v693 = vunpack.c.l.b16 %v597
      %v694 = vunpack.c.l.b16 %v598
      %v695 = vunpack.c.l.b16 %v599
      %v696 = vunpack.c.l.b16 %v600
      %v697 = vunpack.c.l.b16 %v601
      %v698 = vunpack.c.l.b16 %v602
      %v699 = vunpack.c.l.b16 %v603
      %v700 = vunpack.c.l.b16 %v604
      %v701 = vunpack.c.l.b16 %v605
      %v702 = vunpack.c.l.b16 %v606
      %v703 = vunpack.c.l.b16 %v607
      %v704 = vunpack.c.l.b16 %v608
      %v705 = vunpack.c.l.b16 %v609
      %v706 = vunpack.c.l.b16 %v610
      %v707 = vpack.c.b16 %v660, %v659
      %v708 = vpack.c.b16 %v661, %v661
      %v709 = vpack.c.b16 %v663, %v662
      %v710 = vpack.c.b16 %v664, %v664
      %v711 = vpack.c.b16 %v666, %v665
      %v712 = vpack.c.b16 %v667, %v667
      %v713 = vpack.c.b16 %v669, %v668
      %v714 = vpack.c.b16 %v670, %v670
      %v715 = vpack.c.b16 %v672, %v671
      %v716 = vpack.c.b16 %v673, %v673
      %v717 = vpack.c.b16 %v675, %v674
      %v718 = vpack.c.b16 %v676, %v676
      %v719 = vpack.c.b16 %v678, %v677
      %v720 = vpack.c.b16 %v679, %v679
      %v721 = vpack.c.b16 %v681, %v680
      %v722 = vpack.c.b16 %v682, %v682
      %v723 = vpack.c.b16 %v684, %v683
      %v724 = vpack.c.b16 %v685, %v685
      %v725 = vpack.c.b16 %v687, %v686
      %v726 = vpack.c.b16 %v688, %v688
      %v727 = vpack.c.b16 %v690, %v689
      %v728 = vpack.c.b16 %v691, %v691
      %v729 = vpack.c.b16 %v693, %v692
      %v730 = vpack.c.b16 %v694, %v694
      %v731 = vpack.c.b16 %v696, %v695
      %v732 = vpack.c.b16 %v697, %v697
      %v733 = vpack.c.b16 %v699, %v698
      %v734 = vpack.c.b16 %v700, %v700
      %v735 = vpack.c.b16 %v702, %v701
      %v736 = vpack.c.b16 %v703, %v703
      %v737 = vpack.c.b16 %v705, %v704
      %v738 = vpack.c.b16 %v706, %v706
      %vm739 = vsmask.f32 7424
      %v741 = vshrl.u32 %v707, 16
      %v743 = vshll.u32 %v707, 16
      %v745 = vrot.slane %v743, 1
      %v746 = vor.u32 %v741, %v745
      %v748 = vshll.u32 %v708, 16
      %v750 = vrot.slane %v748, 1
      %v751 = vsel %vm739, %v746, %v750
      %v753 = vshrl.u32 %v709, 16
      %v755 = vshll.u32 %v709, 16
      %v757 = vrot.slane %v755, 1
      %v758 = vor.u32 %v753, %v757
      %v760 = vshll.u32 %v710, 16
      %v762 = vrot.slane %v760, 1
      %v763 = vsel %vm739, %v758, %v762
      %v765 = vshrl.u32 %v711, 16
      %v767 = vshll.u32 %v711, 16
      %v769 = vrot.slane %v767, 1
      %v770 = vor.u32 %v765, %v769
      %v772 = vshll.u32 %v712, 16
      %v774 = vrot.slane %v772, 1
      %v775 = vsel %vm739, %v770, %v774
      %v777 = vshrl.u32 %v713, 16
      %v779 = vshll.u32 %v713, 16
      %v781 = vrot.slane %v779, 1
      %v782 = vor.u32 %v777, %v781
      %v784 = vshll.u32 %v714, 16
      %v786 = vrot.slane %v784, 1
      %v787 = vsel %vm739, %v782, %v786
      %v789 = vshrl.u32 %v715, 16
      %v791 = vshll.u32 %v715, 16
      %v793 = vrot.slane %v791, 1
      %v794 = vor.u32 %v789, %v793
      %v796 = vshll.u32 %v716, 16
      %v798 = vrot.slane %v796, 1
      %v799 = vsel %vm739, %v794, %v798
      %v801 = vshrl.u32 %v717, 16
      %v803 = vshll.u32 %v717, 16
      %v805 = vrot.slane %v803, 1
      %v806 = vor.u32 %v801, %v805
      %v808 = vshll.u32 %v718, 16
      %v810 = vrot.slane %v808, 1
      %v811 = vsel %vm739, %v806, %v810
      %v813 = vshrl.u32 %v719, 16
      %v815 = vshll.u32 %v719, 16
      %v817 = vrot.slane %v815, 1
      %v818 = vor.u32 %v813, %v817
      %v820 = vshll.u32 %v720, 16
      %v822 = vrot.slane %v820, 1
      %v823 = vsel %vm739, %v818, %v822
      %v825 = vshrl.u32 %v721, 16
      %v827 = vshll.u32 %v721, 16
      %v829 = vrot.slane %v827, 1
      %v830 = vor.u32 %v825, %v829
      %v832 = vshll.u32 %v722, 16
      %v834 = vrot.slane %v832, 1
      %v835 = vsel %vm739, %v830, %v834
      %v837 = vshrl.u32 %v723, 16
      %v839 = vshll.u32 %v723, 16
      %v841 = vrot.slane %v839, 1
      %v842 = vor.u32 %v837, %v841
      %v844 = vshll.u32 %v724, 16
      %v846 = vrot.slane %v844, 1
      %v847 = vsel %vm739, %v842, %v846
      %v849 = vshrl.u32 %v725, 16
      %v851 = vshll.u32 %v725, 16
      %v853 = vrot.slane %v851, 1
      %v854 = vor.u32 %v849, %v853
      %v856 = vshll.u32 %v726, 16
      %v858 = vrot.slane %v856, 1
      %v859 = vsel %vm739, %v854, %v858
      %v861 = vshrl.u32 %v727, 16
      %v863 = vshll.u32 %v727, 16
      %v865 = vrot.slane %v863, 1
      %v866 = vor.u32 %v861, %v865
      %v868 = vshll.u32 %v728, 16
      %v870 = vrot.slane %v868, 1
      %v871 = vsel %vm739, %v866, %v870
      %v873 = vshrl.u32 %v729, 16
      %v875 = vshll.u32 %v729, 16
      %v877 = vrot.slane %v875, 1
      %v878 = vor.u32 %v873, %v877
      %v880 = vshll.u32 %v730, 16
      %v882 = vrot.slane %v880, 1
      %v883 = vsel %vm739, %v878, %v882
      %v885 = vshrl.u32 %v731, 16
      %v887 = vshll.u32 %v731, 16
      %v889 = vrot.slane %v887, 1
      %v890 = vor.u32 %v885, %v889
      %v892 = vshll.u32 %v732, 16
      %v894 = vrot.slane %v892, 1
      %v895 = vsel %vm739, %v890, %v894
      %v897 = vshrl.u32 %v733, 16
      %v899 = vshll.u32 %v733, 16
      %v901 = vrot.slane %v899, 1
      %v902 = vor.u32 %v897, %v901
      %v904 = vshll.u32 %v734, 16
      %v906 = vrot.slane %v904, 1
      %v907 = vsel %vm739, %v902, %v906
      %v909 = vshrl.u32 %v735, 16
      %v911 = vshll.u32 %v735, 16
      %v913 = vrot.slane %v911, 1
      %v914 = vor.u32 %v909, %v913
      %v916 = vshll.u32 %v736, 16
      %v918 = vrot.slane %v916, 1
      %v919 = vsel %vm739, %v914, %v918
      %v921 = vshrl.u32 %v737, 16
      %v923 = vshll.u32 %v737, 16
      %v925 = vrot.slane %v923, 1
      %v926 = vor.u32 %v921, %v925
      %v928 = vshll.u32 %v738, 16
      %v930 = vrot.slane %v928, 1
      %v931 = vsel %vm739, %v926, %v930
      %s948 = scalar_lea.vmem [#allocation2], 144
      %949 = vst.msk [vmem:[%s948] sm:$0xff] %vm526, %v751
      %950 = vst.msk [vmem:[%s948 + $0x8] sm:$0xff] %vm526, %v763
      %951 = vst.msk [vmem:[%s948 + $0x10] sm:$0xff] %vm526, %v775
      %952 = vst.msk [vmem:[%s948 + $0x18] sm:$0xff] %vm526, %v787
      %953 = vst.msk [vmem:[%s948 + $0x20] sm:$0xff] %vm526, %v799
      %954 = vst.msk [vmem:[%s948 + $0x28] sm:$0xff] %vm526, %v811
      %955 = vst.msk [vmem:[%s948 + $0x30] sm:$0xff] %vm526, %v823
      %956 = vst.msk [vmem:[%s948 + $0x38] sm:$0xff] %vm526, %v835
      %957 = vst.msk [vmem:[%s948 + $0x40] sm:$0xff] %vm526, %v847
      %958 = vst.msk [vmem:[%s948 + $0x48] sm:$0xff] %vm526, %v859
      %959 = vst.msk [vmem:[%s948 + $0x50] sm:$0xff] %vm526, %v871
      %960 = vst.msk [vmem:[%s948 + $0x58] sm:$0xff] %vm526, %v883
      %961 = vst.msk [vmem:[%s948 + $0x60] sm:$0xff] %vm526, %v895
      %962 = vst.msk [vmem:[%s948 + $0x68] sm:$0xff] %vm526, %v907
      %963 = vst.msk [vmem:[%s948 + $0x70] sm:$0xff] %vm526, %v919
      %964 = vst.msk [vmem:[%s948 + $0x78] sm:$0xff] %vm526, %v931
      %v965 = vld [vmem:[%s368] sm:$0xf]
      %v966 = vld [vmem:[%s368 + $0x4] sm:$0xf]
      %v967 = vld [vmem:[%s368 + $0x8] sm:$0x1]
      %v971 = vunpack.c.l.b16 %v965
      %v972 = vunpack.c.l.b16 %v966
      %v973 = vunpack.c.l.b16 %v967
      %v974 = vpack.c.b16 %v972, %v971
      %v975 = vpack.c.b16 %v973, %v973
      %v977 = vshrl.u32 %v974, 16
      %v979 = vshll.u32 %v974, 16
      %v981 = vrot.slane %v979, 1
      %v982 = vor.u32 %v977, %v981
      %v984 = vshll.u32 %v975, 16
      %v986 = vrot.slane %v984, 1
      %v987 = vsel %vm739, %v982, %v986
      %s989 = scalar_lea.vmem [#allocation2], 272
      %990 = vst.msk [vmem:[%s989] sm:$0xff] %vm526, %v987
      %v991 = vld [vmem:[%s382] sm:$0xf]
      %v992 = vld [vmem:[%s382 + $0x4] sm:$0xf]
      %v993 = vld [vmem:[%s382 + $0x8] sm:$0x1]
      %v997 = vunpack.c.l.b16 %v991
      %v998 = vunpack.c.l.b16 %v992
      %v999 = vunpack.c.l.b16 %v993
      %v1000 = vpack.c.b16 %v998, %v997
      %v1001 = vpack.c.b16 %v999, %v999
      %v1003 = vshrl.u32 %v1000, 16
      %v1005 = vshll.u32 %v1000, 16
      %v1007 = vrot.slane %v1005, 1
      %v1008 = vor.u32 %v1003, %v1007
      %v1010 = vshll.u32 %v1001, 16
      %v1012 = vrot.slane %v1010, 1
      %v1013 = vsel %vm739, %v1008, %v1012
      %s1015 = scalar_lea.vmem [#allocation2], 280
      %1016 = vst.msk [vmem:[%s1015] sm:$0xff] %vm526, %v1013
      %v1017 = vld [vmem:[%s351] sm:$0xe]
      %v1018 = vld [vmem:[%s351 + $0x4] sm:$0xf]
      %v1019 = vld [vmem:[%s351 + $0x8] sm:$0x1]
      %v1020 = vld [vmem:[%s351 + $0xc] sm:$0xe]
      %v1021 = vld [vmem:[%s351 + $0x10] sm:$0xf]
      %v1022 = vld [vmem:[%s351 + $0x14] sm:$0x1]
      %v1023 = vld [vmem:[%s351 + $0x18] sm:$0xe]
      %v1024 = vld [vmem:[%s351 + $0x1c] sm:$0xf]
      %v1025 = vld [vmem:[%s351 + $0x20] sm:$0x1]
      %v1026 = vld [vmem:[%s351 + $0x24] sm:$0xe]
      %v1027 = vld [vmem:[%s351 + $0x28] sm:$0xf]
      %v1028 = vld [vmem:[%s351 + $0x2c] sm:$0x1]
      %v1029 = vld [vmem:[%s351 + $0x30] sm:$0xe]
      %v1030 = vld [vmem:[%s351 + $0x34] sm:$0xf]
      %v1031 = vld [vmem:[%s351 + $0x38] sm:$0x1]
      %v1032 = vld [vmem:[%s351 + $0x3c] sm:$0xe]
      %v1033 = vld [vmem:[%s351 + $0x40] sm:$0xf]
      %v1034 = vld [vmem:[%s351 + $0x44] sm:$0x1]
      %v1035 = vld [vmem:[%s351 + $0x48] sm:$0xe]
      %v1036 = vld [vmem:[%s351 + $0x4c] sm:$0xf]
      %v1037 = vld [vmem:[%s351 + $0x50] sm:$0x1]
      %v1038 = vld [vmem:[%s351 + $0x54] sm:$0xe]
      %v1039 = vld [vmem:[%s351 + $0x58] sm:$0xf]
      %v1040 = vld [vmem:[%s351 + $0x5c] sm:$0x1]
      %v1041 = vld [vmem:[%s351 + $0x60] sm:$0xe]
      %v1042 = vld [vmem:[%s351 + $0x64] sm:$0xf]
      %v1043 = vld [vmem:[%s351 + $0x68] sm:$0x1]
      %v1044 = vld [vmem:[%s351 + $0x6c] sm:$0xe]
      %v1045 = vld [vmem:[%s351 + $0x70] sm:$0xf]
      %v1046 = vld [vmem:[%s351 + $0x74] sm:$0x1]
      %v1047 = vld [vmem:[%s351 + $0x78] sm:$0xe]
      %v1048 = vld [vmem:[%s351 + $0x7c] sm:$0xf]
      %v1049 = vld [vmem:[%s351 + $0x80] sm:$0x1]
      %v1050 = vld [vmem:[%s351 + $0x84] sm:$0xe]
      %v1051 = vld [vmem:[%s351 + $0x88] sm:$0xf]
      %v1052 = vld [vmem:[%s351 + $0x8c] sm:$0x1]
      %v1053 = vld [vmem:[%s351 + $0x90] sm:$0xe]
      %v1054 = vld [vmem:[%s351 + $0x94] sm:$0xf]
      %v1055 = vld [vmem:[%s351 + $0x98] sm:$0x1]
      %v1056 = vld [vmem:[%s351 + $0x9c] sm:$0xe]
      %v1057 = vld [vmem:[%s351 + $0xa0] sm:$0xf]
      %v1058 = vld [vmem:[%s351 + $0xa4] sm:$0x1]
      %v1059 = vld [vmem:[%s351 + $0xa8] sm:$0xe]
      %v1060 = vld [vmem:[%s351 + $0xac] sm:$0xf]
      %v1061 = vld [vmem:[%s351 + $0xb0] sm:$0x1]
      %v1062 = vld [vmem:[%s351 + $0xb4] sm:$0xe]
      %v1063 = vld [vmem:[%s351 + $0xb8] sm:$0xf]
      %v1064 = vld [vmem:[%s351 + $0xbc] sm:$0x1]
      %v1113 = vunpack.c.l.b16 %v1017
      %v1114 = vunpack.c.l.b16 %v1018
      %v1115 = vunpack.c.l.b16 %v1019
      %v1116 = vunpack.c.l.b16 %v1020
      %v1117 = vunpack.c.l.b16 %v1021
      %v1118 = vunpack.c.l.b16 %v1022
      %v1119 = vunpack.c.l.b16 %v1023
      %v1120 = vunpack.c.l.b16 %v1024
      %v1121 = vunpack.c.l.b16 %v1025
      %v1122 = vunpack.c.l.b16 %v1026
      %v1123 = vunpack.c.l.b16 %v1027
      %v1124 = vunpack.c.l.b16 %v1028
      %v1125 = vunpack.c.l.b16 %v1029
      %v1126 = vunpack.c.l.b16 %v1030
      %v1127 = vunpack.c.l.b16 %v1031
      %v1128 = vunpack.c.l.b16 %v1032
      %v1129 = vunpack.c.l.b16 %v1033
      %v1130 = vunpack.c.l.b16 %v1034
      %v1131 = vunpack.c.l.b16 %v1035
      %v1132 = vunpack.c.l.b16 %v1036
      %v1133 = vunpack.c.l.b16 %v1037
      %v1134 = vunpack.c.l.b16 %v1038
      %v1135 = vunpack.c.l.b16 %v1039
      %v1136 = vunpack.c.l.b16 %v1040
      %v1137 = vunpack.c.l.b16 %v1041
      %v1138 = vunpack.c.l.b16 %v1042
      %v1139 = vunpack.c.l.b16 %v1043
      %v1140 = vunpack.c.l.b16 %v1044
      %v1141 = vunpack.c.l.b16 %v1045
      %v1142 = vunpack.c.l.b16 %v1046
      %v1143 = vunpack.c.l.b16 %v1047
      %v1144 = vunpack.c.l.b16 %v1048
      %v1145 = vunpack.c.l.b16 %v1049
      %v1146 = vunpack.c.l.b16 %v1050
      %v1147 = vunpack.c.l.b16 %v1051
      %v1148 = vunpack.c.l.b16 %v1052
      %v1149 = vunpack.c.l.b16 %v1053
      %v1150 = vunpack.c.l.b16 %v1054
      %v1151 = vunpack.c.l.b16 %v1055
      %v1152 = vunpack.c.l.b16 %v1056
      %v1153 = vunpack.c.l.b16 %v1057
      %v1154 = vunpack.c.l.b16 %v1058
      %v1155 = vunpack.c.l.b16 %v1059
      %v1156 = vunpack.c.l.b16 %v1060
      %v1157 = vunpack.c.l.b16 %v1061
      %v1158 = vunpack.c.l.b16 %v1062
      %v1159 = vunpack.c.l.b16 %v1063
      %v1160 = vunpack.c.l.b16 %v1064
      %v1161 = vpack.c.b16 %v1114, %v1113
      %v1162 = vpack.c.b16 %v1115, %v1115
      %v1163 = vpack.c.b16 %v1117, %v1116
      %v1164 = vpack.c.b16 %v1118, %v1118
      %v1165 = vpack.c.b16 %v1120, %v1119
      %v1166 = vpack.c.b16 %v1121, %v1121
      %v1167 = vpack.c.b16 %v1123, %v1122
      %v1168 = vpack.c.b16 %v1124, %v1124
      %v1169 = vpack.c.b16 %v1126, %v1125
      %v1170 = vpack.c.b16 %v1127, %v1127
      %v1171 = vpack.c.b16 %v1129, %v1128
      %v1172 = vpack.c.b16 %v1130, %v1130
      %v1173 = vpack.c.b16 %v1132, %v1131
      %v1174 = vpack.c.b16 %v1133, %v1133
      %v1175 = vpack.c.b16 %v1135, %v1134
      %v1176 = vpack.c.b16 %v1136, %v1136
      %v1177 = vpack.c.b16 %v1138, %v1137
      %v1178 = vpack.c.b16 %v1139, %v1139
      %v1179 = vpack.c.b16 %v1141, %v1140
      %v1180 = vpack.c.b16 %v1142, %v1142
      %v1181 = vpack.c.b16 %v1144, %v1143
      %v1182 = vpack.c.b16 %v1145, %v1145
      %v1183 = vpack.c.b16 %v1147, %v1146
      %v1184 = vpack.c.b16 %v1148, %v1148
      %v1185 = vpack.c.b16 %v1150, %v1149
      %v1186 = vpack.c.b16 %v1151, %v1151
      %v1187 = vpack.c.b16 %v1153, %v1152
      %v1188 = vpack.c.b16 %v1154, %v1154
      %v1189 = vpack.c.b16 %v1156, %v1155
      %v1190 = vpack.c.b16 %v1157, %v1157
      %v1191 = vpack.c.b16 %v1159, %v1158
      %v1192 = vpack.c.b16 %v1160, %v1160
      %vm1193 = vcmask 1046528
      %v1194 = vrot.slane %v1161, 1
      %v1195 = vrot.slane %v1162, 1
      %v1196 = vsel %vm1193, %v1194, %v1195
      %v1197 = vrot.slane %v1163, 1
      %v1198 = vrot.slane %v1164, 1
      %v1199 = vsel %vm1193, %v1197, %v1198
      %v1200 = vrot.slane %v1165, 1
      %v1201 = vrot.slane %v1166, 1
      %v1202 = vsel %vm1193, %v1200, %v1201
      %v1203 = vrot.slane %v1167, 1
      %v1204 = vrot.slane %v1168, 1
      %v1205 = vsel %vm1193, %v1203, %v1204
      %v1206 = vrot.slane %v1169, 1
      %v1207 = vrot.slane %v1170, 1
      %v1208 = vsel %vm1193, %v1206, %v1207
      %v1209 = vrot.slane %v1171, 1
      %v1210 = vrot.slane %v1172, 1
      %v1211 = vsel %vm1193, %v1209, %v1210
      %v1212 = vrot.slane %v1173, 1
      %v1213 = vrot.slane %v1174, 1
      %v1214 = vsel %vm1193, %v1212, %v1213
      %v1215 = vrot.slane %v1175, 1
      %v1216 = vrot.slane %v1176, 1
      %v1217 = vsel %vm1193, %v1215, %v1216
      %v1218 = vrot.slane %v1177, 1
      %v1219 = vrot.slane %v1178, 1
      %v1220 = vsel %vm1193, %v1218, %v1219
      %v1221 = vrot.slane %v1179, 1
      %v1222 = vrot.slane %v1180, 1
      %v1223 = vsel %vm1193, %v1221, %v1222
      %v1224 = vrot.slane %v1181, 1
      %v1225 = vrot.slane %v1182, 1
      %v1226 = vsel %vm1193, %v1224, %v1225
      %v1227 = vrot.slane %v1183, 1
      %v1228 = vrot.slane %v1184, 1
      %v1229 = vsel %vm1193, %v1227, %v1228
      %v1230 = vrot.slane %v1185, 1
      %v1231 = vrot.slane %v1186, 1
      %v1232 = vsel %vm1193, %v1230, %v1231
      %v1233 = vrot.slane %v1187, 1
      %v1234 = vrot.slane %v1188, 1
      %v1235 = vsel %vm1193, %v1233, %v1234
      %v1236 = vrot.slane %v1189, 1
      %v1237 = vrot.slane %v1190, 1
      %v1238 = vsel %vm1193, %v1236, %v1237
      %v1239 = vrot.slane %v1191, 1
      %v1240 = vrot.slane %v1192, 1
      %v1241 = vsel %vm1193, %v1239, %v1240
      %s1258 = scalar_lea.vmem [#allocation2], 288
      %1259 = vst.msk [vmem:[%s1258] sm:$0xff] %vm526, %v1196
      %1260 = vst.msk [vmem:[%s1258 + $0x8] sm:$0xff] %vm526, %v1199
      %1261 = vst.msk [vmem:[%s1258 + $0x10] sm:$0xff] %vm526, %v1202
      %1262 = vst.msk [vmem:[%s1258 + $0x18] sm:$0xff] %vm526, %v1205
      %1263 = vst.msk [vmem:[%s1258 + $0x20] sm:$0xff] %vm526, %v1208
      %1264 = vst.msk [vmem:[%s1258 + $0x28] sm:$0xff] %vm526, %v1211
      %1265 = vst.msk [vmem:[%s1258 + $0x30] sm:$0xff] %vm526, %v1214
      %1266 = vst.msk [vmem:[%s1258 + $0x38] sm:$0xff] %vm526, %v1217
      %1267 = vst.msk [vmem:[%s1258 + $0x40] sm:$0xff] %vm526, %v1220
      %1268 = vst.msk [vmem:[%s1258 + $0x48] sm:$0xff] %vm526, %v1223
      %1269 = vst.msk [vmem:[%s1258 + $0x50] sm:$0xff] %vm526, %v1226
      %1270 = vst.msk [vmem:[%s1258 + $0x58] sm:$0xff] %vm526, %v1229
      %1271 = vst.msk [vmem:[%s1258 + $0x60] sm:$0xff] %vm526, %v1232
      %1272 = vst.msk [vmem:[%s1258 + $0x68] sm:$0xff] %vm526, %v1235
      %1273 = vst.msk [vmem:[%s1258 + $0x70] sm:$0xff] %vm526, %v1238
      %1274 = vst.msk [vmem:[%s1258 + $0x78] sm:$0xff] %vm526, %v1241
      %v1275 = vld [vmem:[%s368] sm:$0xe]
      %v1276 = vld [vmem:[%s368 + $0x4] sm:$0xf]
      %v1277 = vld [vmem:[%s368 + $0x8] sm:$0x1]
      %v1281 = vunpack.c.l.b16 %v1275
      %v1282 = vunpack.c.l.b16 %v1276
      %v1283 = vunpack.c.l.b16 %v1277
      %v1284 = vpack.c.b16 %v1282, %v1281
      %v1285 = vpack.c.b16 %v1283, %v1283
      %v1286 = vrot.slane %v1284, 1
      %v1287 = vrot.slane %v1285, 1
      %v1288 = vsel %vm1193, %v1286, %v1287
      %s1290 = scalar_lea.vmem [#allocation2], 416
      %1291 = vst.msk [vmem:[%s1290] sm:$0xff] %vm526, %v1288
      %v1292 = vld [vmem:[%s382] sm:$0xe]
      %v1293 = vld [vmem:[%s382 + $0x4] sm:$0xf]
      %v1294 = vld [vmem:[%s382 + $0x8] sm:$0x1]
      %v1298 = vunpack.c.l.b16 %v1292
      %v1299 = vunpack.c.l.b16 %v1293
      %v1300 = vunpack.c.l.b16 %v1294
      %v1301 = vpack.c.b16 %v1299, %v1298
      %v1302 = vpack.c.b16 %v1300, %v1300
      %v1303 = vrot.slane %v1301, 1
      %v1304 = vrot.slane %v1302, 1
      %v1305 = vsel %vm1193, %v1303, %v1304
      %s1307 = scalar_lea.vmem [#allocation2], 424
      %1308 = vst.msk [vmem:[%s1307] sm:$0xff] %vm526, %v1305
      %1309 = vst [vmem:[#allocation3] sm:$0xff] 0.0
      %1310 = vst [vmem:[#allocation3 + $0x8] sm:$0xff] 0.0
      %1311 = vst [vmem:[#allocation3 + $0x10] sm:$0xff] 0.0
      %1312 = vst [vmem:[#allocation3 + $0x18] sm:$0xff] 0.0
      %1313 = vst [vmem:[#allocation3 + $0x20] sm:$0xff] 0.0
      %1314 = vst [vmem:[#allocation3 + $0x28] sm:$0xff] 0.0
      %1315 = vst [vmem:[#allocation3 + $0x30] sm:$0xff] 0.0
      %1316 = vst [vmem:[#allocation3 + $0x38] sm:$0xff] 0.0
      %1317 = vst [vmem:[#allocation3 + $0x40] sm:$0xff] 0.0
      %1318 = vst [vmem:[#allocation3 + $0x48] sm:$0xff] 0.0
      %1319 = vst [vmem:[#allocation3 + $0x50] sm:$0xff] 0.0
      %1320 = vst [vmem:[#allocation3 + $0x58] sm:$0xff] 0.0
      %1321 = vst [vmem:[#allocation3 + $0x60] sm:$0xff] 0.0
      %1322 = vst [vmem:[#allocation3 + $0x68] sm:$0xff] 0.0
      %1323 = vst [vmem:[#allocation3 + $0x70] sm:$0xff] 0.0
      %1324 = vst [vmem:[#allocation3 + $0x78] sm:$0xff] 0.0
      %1325 = vst [vmem:[#allocation3 + $0x80] sm:$0xff] 0.0
      %1326 = vst [vmem:[#allocation3 + $0x88] sm:$0xff] 0.0
      %1327 = vst [vmem:[#allocation3 + $0x90] sm:$0xff] 0.0
      %1328 = vst [vmem:[#allocation3 + $0x98] sm:$0xff] 0.0
      %1329 = vst [vmem:[#allocation3 + $0xa0] sm:$0xff] 0.0
      %1330 = vst [vmem:[#allocation3 + $0xa8] sm:$0xff] 0.0
      %1331 = vst [vmem:[#allocation3 + $0xb0] sm:$0xff] 0.0
      %1332 = vst [vmem:[#allocation3 + $0xb8] sm:$0xff] 0.0
      %1333 = vst [vmem:[#allocation3 + $0xc0] sm:$0xff] 0.0
      %1334 = vst [vmem:[#allocation3 + $0xc8] sm:$0xff] 0.0
      %1335 = vst [vmem:[#allocation3 + $0xd0] sm:$0xff] 0.0
      %1336 = vst [vmem:[#allocation3 + $0xd8] sm:$0xff] 0.0
      %1337 = vst [vmem:[#allocation3 + $0xe0] sm:$0xff] 0.0
      %1338 = vst [vmem:[#allocation3 + $0xe8] sm:$0xff] 0.0
      %1339 = vst [vmem:[#allocation3 + $0xf0] sm:$0xff] 0.0
      %1340 = vst [vmem:[#allocation3 + $0xf8] sm:$0xff] 0.0
      %v1341 = vld [vmem:[#allocation2] sm:$0xff]
      %v1342 = vld [vmem:[#allocation2 + $0x8] sm:$0xff]
      %v1343 = vld [vmem:[#allocation2 + $0x10] sm:$0xff]
      %v1344 = vld [vmem:[#allocation2 + $0x18] sm:$0xff]
      %v1345 = vld [vmem:[#allocation2 + $0x20] sm:$0xff]
      %v1346 = vld [vmem:[#allocation2 + $0x28] sm:$0xff]
      %v1347 = vld [vmem:[#allocation2 + $0x30] sm:$0xff]
      %v1348 = vld [vmem:[#allocation2 + $0x38] sm:$0xff]
      %v1349 = vld [vmem:[#allocation2 + $0x40] sm:$0xff]
      %v1350 = vld [vmem:[#allocation2 + $0x48] sm:$0xff]
      %v1351 = vld [vmem:[#allocation2 + $0x50] sm:$0xff]
      %v1352 = vld [vmem:[#allocation2 + $0x58] sm:$0xff]
      %v1353 = vld [vmem:[#allocation2 + $0x60] sm:$0xff]
      %v1354 = vld [vmem:[#allocation2 + $0x68] sm:$0xff]
      %v1355 = vld [vmem:[#allocation2 + $0x70] sm:$0xff]
      %v1356 = vld [vmem:[#allocation2 + $0x78] sm:$0xff]
      %v1357 = vld [vmem:[#allocation3] sm:$0xff]
      %v1358 = vld [vmem:[#allocation3 + $0x8] sm:$0xff]
      %v1359 = vld [vmem:[#allocation3 + $0x10] sm:$0xff]
      %v1360 = vld [vmem:[#allocation3 + $0x18] sm:$0xff]
      %v1361 = vld [vmem:[#allocation3 + $0x20] sm:$0xff]
      %v1362 = vld [vmem:[#allocation3 + $0x28] sm:$0xff]
      %v1363 = vld [vmem:[#allocation3 + $0x30] sm:$0xff]
      %v1364 = vld [vmem:[#allocation3 + $0x38] sm:$0xff]
      %v1365 = vld [vmem:[#allocation3 + $0x40] sm:$0xff]
      %v1366 = vld [vmem:[#allocation3 + $0x48] sm:$0xff]
      %v1367 = vld [vmem:[#allocation3 + $0x50] sm:$0xff]
      %v1368 = vld [vmem:[#allocation3 + $0x58] sm:$0xff]
      %v1369 = vld [vmem:[#allocation3 + $0x60] sm:$0xff]
      %v1370 = vld [vmem:[#allocation3 + $0x68] sm:$0xff]
      %v1371 = vld [vmem:[#allocation3 + $0x70] sm:$0xff]
      %v1372 = vld [vmem:[#allocation3 + $0x78] sm:$0xff]
      %v1373 = vld [vmem:[#allocation3 + $0x80] sm:$0xff]
      %v1374 = vld [vmem:[#allocation3 + $0x88] sm:$0xff]
      %v1375 = vld [vmem:[#allocation3 + $0x90] sm:$0xff]
      %v1376 = vld [vmem:[#allocation3 + $0x98] sm:$0xff]
      %v1377 = vld [vmem:[#allocation3 + $0xa0] sm:$0xff]
      %v1378 = vld [vmem:[#allocation3 + $0xa8] sm:$0xff]
      %v1379 = vld [vmem:[#allocation3 + $0xb0] sm:$0xff]
      %v1380 = vld [vmem:[#allocation3 + $0xb8] sm:$0xff]
      %v1381 = vld [vmem:[#allocation3 + $0xc0] sm:$0xff]
      %v1382 = vld [vmem:[#allocation3 + $0xc8] sm:$0xff]
      %v1383 = vld [vmem:[#allocation3 + $0xd0] sm:$0xff]
      %v1384 = vld [vmem:[#allocation3 + $0xd8] sm:$0xff]
      %v1385 = vld [vmem:[#allocation3 + $0xe0] sm:$0xff]
      %v1386 = vld [vmem:[#allocation3 + $0xe8] sm:$0xff]
      %v1387 = vld [vmem:[#allocation3 + $0xf0] sm:$0xff]
      %v1388 = vld [vmem:[#allocation3 + $0xf8] sm:$0xff]
      %v1389 = vld [vmem:[%s3] sm:$0x3]
      %v1391 = vsel %vm526, %v1341, 0
      %v1394 = vsel %vm526, %v1342, 0
      %v1397 = vsel %vm526, %v1343, 0
      %v1400 = vsel %vm526, %v1344, 0
      %v1403 = vsel %vm526, %v1345, 0
      %v1406 = vsel %vm526, %v1346, 0
      %v1409 = vsel %vm526, %v1347, 0
      %v1412 = vsel %vm526, %v1348, 0
      %v1415 = vsel %vm526, %v1349, 0
      %v1418 = vsel %vm526, %v1350, 0
      %v1421 = vsel %vm526, %v1351, 0
      %v1424 = vsel %vm526, %v1352, 0
      %v1427 = vsel %vm526, %v1353, 0
      %v1430 = vsel %vm526, %v1354, 0
      %v1433 = vsel %vm526, %v1355, 0
      %v1436 = vsel %vm526, %v1356, 0
      %vm1438 = vcmask 1041408
      %v1440 = vsel %vm1438, %v1389, 0
      %1442 = vmatprep.subr.bf16.mxu0 0
      %1443 = vmatpush1.bf16.msra.mxu0 %v1440
      %1444 = vmatprep.subr.bf16.mxu0 0
      %1445 = vmatpush1.bf16.msra.mxu0 0
      %1446 = vmatprep.subr.bf16.mxu0 0
      %1447 = vmatpush1.bf16.msra.mxu0 0
      %1448 = vmatprep.subr.bf16.mxu0 0
      %1449 = vmatpush1.bf16.msra.mxu0 0
      %1450 = vmatprep.subr.bf16.mxu0 0
      %1451 = vmatpush1.bf16.msra.mxu0 0
      %1452 = vmatprep.subr.bf16.mxu0 0
      %1453 = vmatpush1.bf16.msra.mxu0 0
      %1454 = vmatprep.subr.bf16.mxu0 0
      %1455 = vmatpush1.bf16.msra.mxu0 0
      %1456 = vmatprep.subr.bf16.mxu0 0
      %1457 = vmatpush1.bf16.msra.mxu0 0
      %1458 = vmatprep.subr.bf16.mxu0 0
      %1459 = vmatpush1.bf16.msra.mxu0 0
      %1460 = vmatprep.subr.bf16.mxu0 0
      %1461 = vmatpush1.bf16.msra.mxu0 0
      %1462 = vmatprep.subr.bf16.mxu0 0
      %1463 = vmatpush1.bf16.msra.mxu0 0
      %1464 = vmatprep.subr.bf16.mxu0 0
      %1465 = vmatpush1.bf16.msra.mxu0 0
      %1466 = vmatprep.subr.bf16.mxu0 0
      %1467 = vmatpush1.bf16.msra.mxu0 0
      %1468 = vmatprep.subr.bf16.mxu0 0
      %1469 = vmatpush1.bf16.msra.mxu0 0
      %1470 = vmatprep.subr.bf16.mxu0 0
      %1471 = vmatpush1.bf16.msra.mxu0 0
      %1472 = vmatprep.subr.bf16.mxu0 0
      %1473 = vmatpush1.bf16.msra.mxu0 0
      %1474 = vmatprep.mubr.bf16.mxu0 0
      %1475 = vmatmul.mubr.bf16.gmra.mrb[0].mxu0 %v1391
      %v1476 = vpop.f32.mrb[0].mxu0
      %v1477 = vadd.f32 0.0, %v1476
      %v1478 = vpop.f32.mrb[0].mxu0
      %v1479 = vpop.f32.mrb[0].mxu0
      %v1480 = vadd.f32 0.0, %v1479
      %v1481 = vpop.f32.mrb[0].mxu0
      %1482 = vmatprep.mubr.bf16.mxu0 0
      %1483 = vmatmul.mubr.bf16.gmra.mrb[0].mxu0 %v1394
      %v1484 = vpop.f32.mrb[0].mxu0
      %v1485 = vadd.f32 0.0, %v1484
      %v1486 = vpop.f32.mrb[0].mxu0
      %v1487 = vpop.f32.mrb[0].mxu0
      %v1488 = vadd.f32 0.0, %v1487
      %v1489 = vpop.f32.mrb[0].mxu0
      %1490 = vmatprep.mubr.bf16.mxu0 0
      %1491 = vmatmul.mubr.bf16.gmra.mrb[0].mxu0 %v1397
      %v1492 = vpop.f32.mrb[0].mxu0
      %v1493 = vadd.f32 0.0, %v1492
      %v1494 = vpop.f32.mrb[0].mxu0
      %v1495 = vpop.f32.mrb[0].mxu0
      %v1496 = vadd.f32 0.0, %v1495
      %v1497 = vpop.f32.mrb[0].mxu0
      %1498 = vmatprep.mubr.bf16.mxu0 0
      %1499 = vmatmul.mubr.bf16.gmra.mrb[0].mxu0 %v1400
      %v1500 = vpop.f32.mrb[0].mxu0
      %v1501 = vadd.f32 0.0, %v1500
      %v1502 = vpop.f32.mrb[0].mxu0
      %v1503 = vpop.f32.mrb[0].mxu0
      %v1504 = vadd.f32 0.0, %v1503
      %v1505 = vpop.f32.mrb[0].mxu0
      %1506 = vmatprep.mubr.bf16.mxu0 0
      %1507 = vmatmul.mubr.bf16.gmra.mrb[0].mxu0 %v1403
      %v1508 = vpop.f32.mrb[0].mxu0
      %v1509 = vadd.f32 0.0, %v1508
      %v1510 = vpop.f32.mrb[0].mxu0
      %v1511 = vpop.f32.mrb[0].mxu0
      %v1512 = vadd.f32 0.0, %v1511
      %v1513 = vpop.f32.mrb[0].mxu0
      %1514 = vmatprep.mubr.bf16.mxu0 0
      %1515 = vmatmul.mubr.bf16.gmra.mrb[0].mxu0 %v1406
      %v1516 = vpop.f32.mrb[0].mxu0
      %v1517 = vadd.f32 0.0, %v1516
      %v1518 = vpop.f32.mrb[0].mxu0
      %v1519 = vpop.f32.mrb[0].mxu0
      %v1520 = vadd.f32 0.0, %v1519
      %v1521 = vpop.f32.mrb[0].mxu0
      %1522 = vmatprep.mubr.bf16.mxu0 0
      %1523 = vmatmul.mubr.bf16.gmra.mrb[0].mxu0 %v1409
      %v1524 = vpop.f32.mrb[0].mxu0
      %v1525 = vadd.f32 0.0, %v1524
      %v1526 = vpop.f32.mrb[0].mxu0
      %v1527 = vpop.f32.mrb[0].mxu0
      %v1528 = vadd.f32 0.0, %v1527
      %v1529 = vpop.f32.mrb[0].mxu0
      %1530 = vmatprep.mubr.bf16.mxu0 0
      %1531 = vmatmul.mubr.bf16.gmra.mrb[0].mxu0 %v1412
      %v1532 = vpop.f32.mrb[0].mxu0
      %v1533 = vadd.f32 0.0, %v1532
      %v1534 = vpop.f32.mrb[0].mxu0
      %v1535 = vpop.f32.mrb[0].mxu0
      %v1536 = vadd.f32 0.0, %v1535
      %v1537 = vpop.f32.mrb[0].mxu0
      %1538 = vmatprep.mubr.bf16.mxu0 0
      %1539 = vmatmul.mubr.bf16.gmra.mrb[0].mxu0 %v1415
      %v1540 = vpop.f32.mrb[0].mxu0
      %v1541 = vadd.f32 0.0, %v1540
      %v1542 = vpop.f32.mrb[0].mxu0
      %v1543 = vpop.f32.mrb[0].mxu0
      %v1544 = vadd.f32 0.0, %v1543
      %v1545 = vpop.f32.mrb[0].mxu0
      %1546 = vmatprep.mubr.bf16.mxu0 0
      %1547 = vmatmul.mubr.bf16.gmra.mrb[0].mxu0 %v1418
      %v1548 = vpop.f32.mrb[0].mxu0
      %v1549 = vadd.f32 0.0, %v1548
      %v1550 = vpop.f32.mrb[0].mxu0
      %v1551 = vpop.f32.mrb[0].mxu0
      %v1552 = vadd.f32 0.0, %v1551
      %v1553 = vpop.f32.mrb[0].mxu0
      %1554 = vmatprep.mubr.bf16.mxu0 0
      %1555 = vmatmul.mubr.bf16.gmra.mrb[0].mxu0 %v1421
      %v1556 = vpop.f32.mrb[0].mxu0
      %v1557 = vadd.f32 0.0, %v1556
      %v1558 = vpop.f32.mrb[0].mxu0
      %v1559 = vpop.f32.mrb[0].mxu0
      %v1560 = vadd.f32 0.0, %v1559
      %v1561 = vpop.f32.mrb[0].mxu0
      %1562 = vmatprep.mubr.bf16.mxu0 0
      %1563 = vmatmul.mubr.bf16.gmra.mrb[0].mxu0 %v1424
      %v1564 = vpop.f32.mrb[0].mxu0
      %v1565 = vadd.f32 0.0, %v1564
      %v1566 = vpop.f32.mrb[0].mxu0
      %v1567 = vpop.f32.mrb[0].mxu0
      %v1568 = vadd.f32 0.0, %v1567
      %v1569 = vpop.f32.mrb[0].mxu0
      %1570 = vmatprep.mubr.bf16.mxu0 0
      %1571 = vmatmul.mubr.bf16.gmra.mrb[0].mxu0 %v1427
      %v1572 = vpop.f32.mrb[0].mxu0
      %v1573 = vadd.f32 0.0, %v1572
      %v1574 = vpop.f32.mrb[0].mxu0
      %v1575 = vpop.f32.mrb[0].mxu0
      %v1576 = vadd.f32 0.0, %v1575
      %v1577 = vpop.f32.mrb[0].mxu0
      %1578 = vmatprep.mubr.bf16.mxu0 0
      %1579 = vmatmul.mubr.bf16.gmra.mrb[0].mxu0 %v1430
      %v1580 = vpop.f32.mrb[0].mxu0
      %v1581 = vadd.f32 0.0, %v1580
      %v1582 = vpop.f32.mrb[0].mxu0
      %v1583 = vpop.f32.mrb[0].mxu0
      %v1584 = vadd.f32 0.0, %v1583
      %v1585 = vpop.f32.mrb[0].mxu0
      %1586 = vmatprep.mubr.bf16.mxu0 0
      %1587 = vmatmul.mubr.bf16.gmra.mrb[0].mxu0 %v1433
      %v1588 = vpop.f32.mrb[0].mxu0
      %v1589 = vadd.f32 0.0, %v1588
      %v1590 = vpop.f32.mrb[0].mxu0
      %v1591 = vpop.f32.mrb[0].mxu0
      %v1592 = vadd.f32 0.0, %v1591
      %v1593 = vpop.f32.mrb[0].mxu0
      %1594 = vmatprep.mubr.bf16.mxu0 0
      %1595 = vmatmul.mubr.bf16.gmra.mrb[0].mxu0 %v1436
      %v1596 = vpop.f32.mrb[0].mxu0
      %v1597 = vadd.f32 0.0, %v1596
      %v1598 = vpop.f32.mrb[0].mxu0
      %v1599 = vpop.f32.mrb[0].mxu0
      %v1600 = vadd.f32 0.0, %v1599
      %v1601 = vpop.f32.mrb[0].mxu0
      %1602 = vdwg.mxu0
      %v1603 = vadd.f32 %v1357, %v1477
      %v1604 = vadd.f32 %v1358, %v1480
      %v1605 = vadd.f32 %v1359, %v1485
      %v1606 = vadd.f32 %v1360, %v1488
      %v1607 = vadd.f32 %v1361, %v1493
      %v1608 = vadd.f32 %v1362, %v1496
      %v1609 = vadd.f32 %v1363, %v1501
      %v1610 = vadd.f32 %v1364, %v1504
      %v1611 = vadd.f32 %v1365, %v1509
      %v1612 = vadd.f32 %v1366, %v1512
      %v1613 = vadd.f32 %v1367, %v1517
      %v1614 = vadd.f32 %v1368, %v1520
      %v1615 = vadd.f32 %v1369, %v1525
      %v1616 = vadd.f32 %v1370, %v1528
      %v1617 = vadd.f32 %v1371, %v1533
      %v1618 = vadd.f32 %v1372, %v1536
      %v1619 = vadd.f32 %v1373, %v1541
      %v1620 = vadd.f32 %v1374, %v1544
      %v1621 = vadd.f32 %v1375, %v1549
      %v1622 = vadd.f32 %v1376, %v1552
      %v1623 = vadd.f32 %v1377, %v1557
      %v1624 = vadd.f32 %v1378, %v1560
      %v1625 = vadd.f32 %v1379, %v1565
      %v1626 = vadd.f32 %v1380, %v1568
      %v1627 = vadd.f32 %v1381, %v1573
      %v1628 = vadd.f32 %v1382, %v1576
      %v1629 = vadd.f32 %v1383, %v1581
      %v1630 = vadd.f32 %v1384, %v1584
      %v1631 = vadd.f32 %v1385, %v1589
      %v1632 = vadd.f32 %v1386, %v1592
      %v1633 = vadd.f32 %v1387, %v1597
      %v1634 = vadd.f32 %v1388, %v1600
      %1635 = vst [vmem:[#allocation3] sm:$0xff] %v1603
      %1636 = vst [vmem:[#allocation3 + $0x8] sm:$0xff] %v1604
      %1637 = vst [vmem:[#allocation3 + $0x10] sm:$0xff] %v1605
      %1638 = vst [vmem:[#allocation3 + $0x18] sm:$0xff] %v1606
      %1639 = vst [vmem:[#allocation3 + $0x20] sm:$0xff] %v1607
      %1640 = vst [vmem:[#allocation3 + $0x28] sm:$0xff] %v1608
      %1641 = vst [vmem:[#allocation3 + $0x30] sm:$0xff] %v1609
      %1642 = vst [vmem:[#allocation3 + $0x38] sm:$0xff] %v1610
      %1643 = vst [vmem:[#allocation3 + $0x40] sm:$0xff] %v1611
      %1644 = vst [vmem:[#allocation3 + $0x48] sm:$0xff] %v1612
      %1645 = vst [vmem:[#allocation3 + $0x50] sm:$0xff] %v1613
      %1646 = vst [vmem:[#allocation3 + $0x58] sm:$0xff] %v1614
      %1647 = vst [vmem:[#allocation3 + $0x60] sm:$0xff] %v1615
      %1648 = vst [vmem:[#allocation3 + $0x68] sm:$0xff] %v1616
      %1649 = vst [vmem:[#allocation3 + $0x70] sm:$0xff] %v1617
      %1650 = vst [vmem:[#allocation3 + $0x78] sm:$0xff] %v1618
      %1651 = vst [vmem:[#allocation3 + $0x80] sm:$0xff] %v1619
      %1652 = vst [vmem:[#allocation3 + $0x88] sm:$0xff] %v1620
      %1653 = vst [vmem:[#allocation3 + $0x90] sm:$0xff] %v1621
      %1654 = vst [vmem:[#allocation3 + $0x98] sm:$0xff] %v1622
      %1655 = vst [vmem:[#allocation3 + $0xa0] sm:$0xff] %v1623
      %1656 = vst [vmem:[#allocation3 + $0xa8] sm:$0xff] %v1624
      %1657 = vst [vmem:[#allocation3 + $0xb0] sm:$0xff] %v1625
      %1658 = vst [vmem:[#allocation3 + $0xb8] sm:$0xff] %v1626
      %1659 = vst [vmem:[#allocation3 + $0xc0] sm:$0xff] %v1627
      %1660 = vst [vmem:[#allocation3 + $0xc8] sm:$0xff] %v1628
      %1661 = vst [vmem:[#allocation3 + $0xd0] sm:$0xff] %v1629
      %1662 = vst [vmem:[#allocation3 + $0xd8] sm:$0xff] %v1630
      %1663 = vst [vmem:[#allocation3 + $0xe0] sm:$0xff] %v1631
      %1664 = vst [vmem:[#allocation3 + $0xe8] sm:$0xff] %v1632
      %1665 = vst [vmem:[#allocation3 + $0xf0] sm:$0xff] %v1633
      %1666 = vst [vmem:[#allocation3 + $0xf8] sm:$0xff] %v1634
      %v1667 = vld [vmem:[%s948] sm:$0xff]
      %v1668 = vld [vmem:[%s948 + $0x8] sm:$0xff]
      %v1669 = vld [vmem:[%s948 + $0x10] sm:$0xff]
      %v1670 = vld [vmem:[%s948 + $0x18] sm:$0xff]
      %v1671 = vld [vmem:[%s948 + $0x20] sm:$0xff]
      %v1672 = vld [vmem:[%s948 + $0x28] sm:$0xff]
      %v1673 = vld [vmem:[%s948 + $0x30] sm:$0xff]
      %v1674 = vld [vmem:[%s948 + $0x38] sm:$0xff]
      %v1675 = vld [vmem:[%s948 + $0x40] sm:$0xff]
      %v1676 = vld [vmem:[%s948 + $0x48] sm:$0xff]
      %v1677 = vld [vmem:[%s948 + $0x50] sm:$0xff]
      %v1678 = vld [vmem:[%s948 + $0x58] sm:$0xff]
      %v1679 = vld [vmem:[%s948 + $0x60] sm:$0xff]
      %v1680 = vld [vmem:[%s948 + $0x68] sm:$0xff]
      %v1681 = vld [vmem:[%s948 + $0x70] sm:$0xff]
      %v1682 = vld [vmem:[%s948 + $0x78] sm:$0xff]
      %v1683 = vld [vmem:[#allocation3] sm:$0xff]
      %v1684 = vld [vmem:[#allocation3 + $0x8] sm:$0xff]
      %v1685 = vld [vmem:[#allocation3 + $0x10] sm:$0xff]
      %v1686 = vld [vmem:[#allocation3 + $0x18] sm:$0xff]
      %v1687 = vld [vmem:[#allocation3 + $0x20] sm:$0xff]
      %v1688 = vld [vmem:[#allocation3 + $0x28] sm:$0xff]
      %v1689 = vld [vmem:[#allocation3 + $0x30] sm:$0xff]
      %v1690 = vld [vmem:[#allocation3 + $0x38] sm:$0xff]
      %v1691 = vld [vmem:[#allocation3 + $0x40] sm:$0xff]
      %v1692 = vld [vmem:[#allocation3 + $0x48] sm:$0xff]
      %v1693 = vld [vmem:[#allocation3 + $0x50] sm:$0xff]
      %v1694 = vld [vmem:[#allocation3 + $0x58] sm:$0xff]
      %v1695 = vld [vmem:[#allocation3 + $0x60] sm:$0xff]
      %v1696 = vld [vmem:[#allocation3 + $0x68] sm:$0xff]
      %v1697 = vld [vmem:[#allocation3 + $0x70] sm:$0xff]
      %v1698 = vld [vmem:[#allocation3 + $0x78] sm:$0xff]
      %v1699 = vld [vmem:[#allocation3 + $0x80] sm:$0xff]
      %v1700 = vld [vmem:[#allocation3 + $0x88] sm:$0xff]
      %v1701 = vld [vmem:[#allocation3 + $0x90] sm:$0xff]
      %v1702 = vld [vmem:[#allocation3 + $0x98] sm:$0xff]
      %v1703 = vld [vmem:[#allocation3 + $0xa0] sm:$0xff]
      %v1704 = vld [vmem:[#allocation3 + $0xa8] sm:$0xff]
      %v1705 = vld [vmem:[#allocation3 + $0xb0] sm:$0xff]
      %v1706 = vld [vmem:[#allocation3 + $0xb8] sm:$0xff]
      %v1707 = vld [vmem:[#allocation3 + $0xc0] sm:$0xff]
      %v1708 = vld [vmem:[#allocation3 + $0xc8] sm:$0xff]
      %v1709 = vld [vmem:[#allocation3 + $0xd0] sm:$0xff]
      %v1710 = vld [vmem:[#allocation3 + $0xd8] sm:$0xff]
      %v1711 = vld [vmem:[#allocation3 + $0xe0] sm:$0xff]
      %v1712 = vld [vmem:[#allocation3 + $0xe8] sm:$0xff]
      %v1713 = vld [vmem:[#allocation3 + $0xf0] sm:$0xff]
      %v1714 = vld [vmem:[#allocation3 + $0xf8] sm:$0xff]
      %s1715 = scalar_lea.vmem %s3, 2
      %v1716 = vld [vmem:[%s1715] sm:$0x3]
      %v1718 = vsel %vm526, %v1667, 0
      %v1721 = vsel %vm526, %v1668, 0
      %v1724 = vsel %vm526, %v1669, 0
      %v1727 = vsel %vm526, %v1670, 0
      %v1730 = vsel %vm526, %v1671, 0
      %v1733 = vsel %vm526, %v1672, 0
      %v1736 = vsel %vm526, %v1673, 0
      %v1739 = vsel %vm526, %v1674, 0
      %v1742 = vsel %vm526, %v1675, 0
      %v1745 = vsel %vm526, %v1676, 0
      %v1748 = vsel %vm526, %v1677, 0
      %v1751 = vsel %vm526, %v1678, 0
      %v1754 = vsel %vm526, %v1679, 0
      %v1757 = vsel %vm526, %v1680, 0
      %v1760 = vsel %vm526, %v1681, 0
      %v1763 = vsel %vm526, %v1682, 0
      %v1766 = vsel %vm1438, %v1716, 0
      %1768 = vmatprep.subr.bf16.mxu0 0
      %1769 = vmatpush1.bf16.msra.mxu0 %v1766
      %1770 = vmatprep.subr.bf16.mxu0 0
      %1771 = vmatpush1.bf16.msra.mxu0 0
      %1772 = vmatprep.subr.bf16.mxu0 0
      %1773 = vmatpush1.bf16.msra.mxu0 0
      %1774 = vmatprep.subr.bf16.mxu0 0
      %1775 = vmatpush1.bf16.msra.mxu0 0
      %1776 = vmatprep.subr.bf16.mxu0 0
      %1777 = vmatpush1.bf16.msra.mxu0 0
      %1778 = vmatprep.subr.bf16.mxu0 0
      %1779 = vmatpush1.bf16.msra.mxu0 0
      %1780 = vmatprep.subr.bf16.mxu0 0
      %1781 = vmatpush1.bf16.msra.mxu0 0
      %1782 = vmatprep.subr.bf16.mxu0 0
      %1783 = vmatpush1.bf16.msra.mxu0 0
      %1784 = vmatprep.subr.bf16.mxu0 0
      %1785 = vmatpush1.bf16.msra.mxu0 0
      %1786 = vmatprep.subr.bf16.mxu0 0
      %1787 = vmatpush1.bf16.msra.mxu0 0
      %1788 = vmatprep.subr.bf16.mxu0 0
      %1789 = vmatpush1.bf16.msra.mxu0 0
      %1790 = vmatprep.subr.bf16.mxu0 0
      %1791 = vmatpush1.bf16.msra.mxu0 0
      %1792 = vmatprep.subr.bf16.mxu0 0
      %1793 = vmatpush1.bf16.msra.mxu0 0
      %1794 = vmatprep.subr.bf16.mxu0 0
      %1795 = vmatpush1.bf16.msra.mxu0 0
      %1796 = vmatprep.subr.bf16.mxu0 0
      %1797 = vmatpush1.bf16.msra.mxu0 0
      %1798 = vmatprep.subr.bf16.mxu0 0
      %1799 = vmatpush1.bf16.msra.mxu0 0
      %1800 = vmatprep.mubr.bf16.mxu0 0
      %1801 = vmatmul.mubr.bf16.gmra.mrb[0].mxu0 %v1718
      %v1802 = vpop.f32.mrb[0].mxu0
      %v1803 = vadd.f32 0.0, %v1802
      %v1804 = vpop.f32.mrb[0].mxu0
      %v1805 = vpop.f32.mrb[0].mxu0
      %v1806 = vadd.f32 0.0, %v1805
      %v1807 = vpop.f32.mrb[0].mxu0
      %1808 = vmatprep.mubr.bf16.mxu0 0
      %1809 = vmatmul.mubr.bf16.gmra.mrb[0].mxu0 %v1721
      %v1810 = vpop.f32.mrb[0].mxu0
      %v1811 = vadd.f32 0.0, %v1810
      %v1812 = vpop.f32.mrb[0].mxu0
      %v1813 = vpop.f32.mrb[0].mxu0
      %v1814 = vadd.f32 0.0, %v1813
      %v1815 = vpop.f32.mrb[0].mxu0
      %1816 = vmatprep.mubr.bf16.mxu0 0
      %1817 = vmatmul.mubr.bf16.gmra.mrb[0].mxu0 %v1724
      %v1818 = vpop.f32.mrb[0].mxu0
      %v1819 = vadd.f32 0.0, %v1818
      %v1820 = vpop.f32.mrb[0].mxu0
      %v1821 = vpop.f32.mrb[0].mxu0
      %v1822 = vadd.f32 0.0, %v1821
      %v1823 = vpop.f32.mrb[0].mxu0
      %1824 = vmatprep.mubr.bf16.mxu0 0
      %1825 = vmatmul.mubr.bf16.gmra.mrb[0].mxu0 %v1727
      %v1826 = vpop.f32.mrb[0].mxu0
      %v1827 = vadd.f32 0.0, %v1826
      %v1828 = vpop.f32.mrb[0].mxu0
      %v1829 = vpop.f32.mrb[0].mxu0
      %v1830 = vadd.f32 0.0, %v1829
      %v1831 = vpop.f32.mrb[0].mxu0
      %1832 = vmatprep.mubr.bf16.mxu0 0
      %1833 = vmatmul.mubr.bf16.gmra.mrb[0].mxu0 %v1730
      %v1834 = vpop.f32.mrb[0].mxu0
      %v1835 = vadd.f32 0.0, %v1834
      %v1836 = vpop.f32.mrb[0].mxu0
      %v1837 = vpop.f32.mrb[0].mxu0
      %v1838 = vadd.f32 0.0, %v1837
      %v1839 = vpop.f32.mrb[0].mxu0
      %1840 = vmatprep.mubr.bf16.mxu0 0
      %1841 = vmatmul.mubr.bf16.gmra.mrb[0].mxu0 %v1733
      %v1842 = vpop.f32.mrb[0].mxu0
      %v1843 = vadd.f32 0.0, %v1842
      %v1844 = vpop.f32.mrb[0].mxu0
      %v1845 = vpop.f32.mrb[0].mxu0
      %v1846 = vadd.f32 0.0, %v1845
      %v1847 = vpop.f32.mrb[0].mxu0
      %1848 = vmatprep.mubr.bf16.mxu0 0
      %1849 = vmatmul.mubr.bf16.gmra.mrb[0].mxu0 %v1736
      %v1850 = vpop.f32.mrb[0].mxu0
      %v1851 = vadd.f32 0.0, %v1850
      %v1852 = vpop.f32.mrb[0].mxu0
      %v1853 = vpop.f32.mrb[0].mxu0
      %v1854 = vadd.f32 0.0, %v1853
      %v1855 = vpop.f32.mrb[0].mxu0
      %1856 = vmatprep.mubr.bf16.mxu0 0
      %1857 = vmatmul.mubr.bf16.gmra.mrb[0].mxu0 %v1739
      %v1858 = vpop.f32.mrb[0].mxu0
      %v1859 = vadd.f32 0.0, %v1858
      %v1860 = vpop.f32.mrb[0].mxu0
      %v1861 = vpop.f32.mrb[0].mxu0
      %v1862 = vadd.f32 0.0, %v1861
      %v1863 = vpop.f32.mrb[0].mxu0
      %1864 = vmatprep.mubr.bf16.mxu0 0
      %1865 = vmatmul.mubr.bf16.gmra.mrb[0].mxu0 %v1742
      %v1866 = vpop.f32.mrb[0].mxu0
      %v1867 = vadd.f32 0.0, %v1866
      %v1868 = vpop.f32.mrb[0].mxu0
      %v1869 = vpop.f32.mrb[0].mxu0
      %v1870 = vadd.f32 0.0, %v1869
      %v1871 = vpop.f32.mrb[0].mxu0
      %1872 = vmatprep.mubr.bf16.mxu0 0
      %1873 = vmatmul.mubr.bf16.gmra.mrb[0].mxu0 %v1745
      %v1874 = vpop.f32.mrb[0].mxu0
      %v1875 = vadd.f32 0.0, %v1874
      %v1876 = vpop.f32.mrb[0].mxu0
      %v1877 = vpop.f32.mrb[0].mxu0
      %v1878 = vadd.f32 0.0, %v1877
      %v1879 = vpop.f32.mrb[0].mxu0
      %1880 = vmatprep.mubr.bf16.mxu0 0
      %1881 = vmatmul.mubr.bf16.gmra.mrb[0].mxu0 %v1748
      %v1882 = vpop.f32.mrb[0].mxu0
      %v1883 = vadd.f32 0.0, %v1882
      %v1884 = vpop.f32.mrb[0].mxu0
      %v1885 = vpop.f32.mrb[0].mxu0
      %v1886 = vadd.f32 0.0, %v1885
      %v1887 = vpop.f32.mrb[0].mxu0
      %1888 = vmatprep.mubr.bf16.mxu0 0
      %1889 = vmatmul.mubr.bf16.gmra.mrb[0].mxu0 %v1751
      %v1890 = vpop.f32.mrb[0].mxu0
      %v1891 = vadd.f32 0.0, %v1890
      %v1892 = vpop.f32.mrb[0].mxu0
      %v1893 = vpop.f32.mrb[0].mxu0
      %v1894 = vadd.f32 0.0, %v1893
      %v1895 = vpop.f32.mrb[0].mxu0
      %1896 = vmatprep.mubr.bf16.mxu0 0
      %1897 = vmatmul.mubr.bf16.gmra.mrb[0].mxu0 %v1754
      %v1898 = vpop.f32.mrb[0].mxu0
      %v1899 = vadd.f32 0.0, %v1898
      %v1900 = vpop.f32.mrb[0].mxu0
      %v1901 = vpop.f32.mrb[0].mxu0
      %v1902 = vadd.f32 0.0, %v1901
      %v1903 = vpop.f32.mrb[0].mxu0
      %1904 = vmatprep.mubr.bf16.mxu0 0
      %1905 = vmatmul.mubr.bf16.gmra.mrb[0].mxu0 %v1757
      %v1906 = vpop.f32.mrb[0].mxu0
      %v1907 = vadd.f32 0.0, %v1906
      %v1908 = vpop.f32.mrb[0].mxu0
      %v1909 = vpop.f32.mrb[0].mxu0
      %v1910 = vadd.f32 0.0, %v1909
      %v1911 = vpop.f32.mrb[0].mxu0
      %1912 = vmatprep.mubr.bf16.mxu0 0
      %1913 = vmatmul.mubr.bf16.gmra.mrb[0].mxu0 %v1760
      %v1914 = vpop.f32.mrb[0].mxu0
      %v1915 = vadd.f32 0.0, %v1914
      %v1916 = vpop.f32.mrb[0].mxu0
      %v1917 = vpop.f32.mrb[0].mxu0
      %v1918 = vadd.f32 0.0, %v1917
      %v1919 = vpop.f32.mrb[0].mxu0
      %1920 = vmatprep.mubr.bf16.mxu0 0
      %1921 = vmatmul.mubr.bf16.gmra.mrb[0].mxu0 %v1763
      %v1922 = vpop.f32.mrb[0].mxu0
      %v1923 = vadd.f32 0.0, %v1922
      %v1924 = vpop.f32.mrb[0].mxu0
      %v1925 = vpop.f32.mrb[0].mxu0
      %v1926 = vadd.f32 0.0, %v1925
      %v1927 = vpop.f32.mrb[0].mxu0
      %1928 = vdwg.mxu0
      %v1929 = vadd.f32 %v1683, %v1803
      %v1930 = vadd.f32 %v1684, %v1806
      %v1931 = vadd.f32 %v1685, %v1811
      %v1932 = vadd.f32 %v1686, %v1814
      %v1933 = vadd.f32 %v1687, %v1819
      %v1934 = vadd.f32 %v1688, %v1822
      %v1935 = vadd.f32 %v1689, %v1827
      %v1936 = vadd.f32 %v1690, %v1830
      %v1937 = vadd.f32 %v1691, %v1835
      %v1938 = vadd.f32 %v1692, %v1838
      %v1939 = vadd.f32 %v1693, %v1843
      %v1940 = vadd.f32 %v1694, %v1846
      %v1941 = vadd.f32 %v1695, %v1851
      %v1942 = vadd.f32 %v1696, %v1854
      %v1943 = vadd.f32 %v1697, %v1859
      %v1944 = vadd.f32 %v1698, %v1862
      %v1945 = vadd.f32 %v1699, %v1867
      %v1946 = vadd.f32 %v1700, %v1870
      %v1947 = vadd.f32 %v1701, %v1875
      %v1948 = vadd.f32 %v1702, %v1878
      %v1949 = vadd.f32 %v1703, %v1883
      %v1950 = vadd.f32 %v1704, %v1886
      %v1951 = vadd.f32 %v1705, %v1891
      %v1952 = vadd.f32 %v1706, %v1894
      %v1953 = vadd.f32 %v1707, %v1899
      %v1954 = vadd.f32 %v1708, %v1902
      %v1955 = vadd.f32 %v1709, %v1907
      %v1956 = vadd.f32 %v1710, %v1910
      %v1957 = vadd.f32 %v1711, %v1915
      %v1958 = vadd.f32 %v1712, %v1918
      %v1959 = vadd.f32 %v1713, %v1923
      %v1960 = vadd.f32 %v1714, %v1926
      %1961 = vst [vmem:[#allocation3] sm:$0xff] %v1929
      %1962 = vst [vmem:[#allocation3 + $0x8] sm:$0xff] %v1930
      %1963 = vst [vmem:[#allocation3 + $0x10] sm:$0xff] %v1931
      %1964 = vst [vmem:[#allocation3 + $0x18] sm:$0xff] %v1932
      %1965 = vst [vmem:[#allocation3 + $0x20] sm:$0xff] %v1933
      %1966 = vst [vmem:[#allocation3 + $0x28] sm:$0xff] %v1934
      %1967 = vst [vmem:[#allocation3 + $0x30] sm:$0xff] %v1935
      %1968 = vst [vmem:[#allocation3 + $0x38] sm:$0xff] %v1936
      %1969 = vst [vmem:[#allocation3 + $0x40] sm:$0xff] %v1937
      %1970 = vst [vmem:[#allocation3 + $0x48] sm:$0xff] %v1938
      %1971 = vst [vmem:[#allocation3 + $0x50] sm:$0xff] %v1939
      %1972 = vst [vmem:[#allocation3 + $0x58] sm:$0xff] %v1940
      %1973 = vst [vmem:[#allocation3 + $0x60] sm:$0xff] %v1941
      %1974 = vst [vmem:[#allocation3 + $0x68] sm:$0xff] %v1942
      %1975 = vst [vmem:[#allocation3 + $0x70] sm:$0xff] %v1943
      %1976 = vst [vmem:[#allocation3 + $0x78] sm:$0xff] %v1944
      %1977 = vst [vmem:[#allocation3 + $0x80] sm:$0xff] %v1945
      %1978 = vst [vmem:[#allocation3 + $0x88] sm:$0xff] %v1946
      %1979 = vst [vmem:[#allocation3 + $0x90] sm:$0xff] %v1947
      %1980 = vst [vmem:[#allocation3 + $0x98] sm:$0xff] %v1948
      %1981 = vst [vmem:[#allocation3 + $0xa0] sm:$0xff] %v1949
      %1982 = vst [vmem:[#allocation3 + $0xa8] sm:$0xff] %v1950
      %1983 = vst [vmem:[#allocation3 + $0xb0] sm:$0xff] %v1951
      %1984 = vst [vmem:[#allocation3 + $0xb8] sm:$0xff] %v1952
      %1985 = vst [vmem:[#allocation3 + $0xc0] sm:$0xff] %v1953
      %1986 = vst [vmem:[#allocation3 + $0xc8] sm:$0xff] %v1954
      %1987 = vst [vmem:[#allocation3 + $0xd0] sm:$0xff] %v1955
      %1988 = vst [vmem:[#allocation3 + $0xd8] sm:$0xff] %v1956
      %1989 = vst [vmem:[#allocation3 + $0xe0] sm:$0xff] %v1957
      %1990 = vst [vmem:[#allocation3 + $0xe8] sm:$0xff] %v1958
      %1991 = vst [vmem:[#allocation3 + $0xf0] sm:$0xff] %v1959
      %1992 = vst [vmem:[#allocation3 + $0xf8] sm:$0xff] %v1960
      %s1993 = scalar_lea.vmem [#allocation2], 8
      %v1994 = vld [vmem:[%s1993] sm:$0xff]
      %v1995 = vld [vmem:[%s1993 + $0x8] sm:$0xff]
      %v1996 = vld [vmem:[%s1993 + $0x10] sm:$0xff]
      %v1997 = vld [vmem:[%s1993 + $0x18] sm:$0xff]
      %v1998 = vld [vmem:[%s1993 + $0x20] sm:$0xff]
      %v1999 = vld [vmem:[%s1993 + $0x28] sm:$0xff]
      %v2000 = vld [vmem:[%s1993 + $0x30] sm:$0xff]
      %v2001 = vld [vmem:[%s1993 + $0x38] sm:$0xff]
      %v2002 = vld [vmem:[%s1993 + $0x40] sm:$0xff]
      %v2003 = vld [vmem:[%s1993 + $0x48] sm:$0xff]
      %v2004 = vld [vmem:[%s1993 + $0x50] sm:$0xff]
      %v2005 = vld [vmem:[%s1993 + $0x58] sm:$0xff]
      %v2006 = vld [vmem:[%s1993 + $0x60] sm:$0xff]
      %v2007 = vld [vmem:[%s1993 + $0x68] sm:$0xff]
      %v2008 = vld [vmem:[%s1993 + $0x70] sm:$0xff]
      %v2009 = vld [vmem:[%s1993 + $0x78] sm:$0xff]
      %v2010 = vld [vmem:[#allocation3] sm:$0xff]
      %v2011 = vld [vmem:[#allocation3 + $0x8] sm:$0xff]
      %v2012 = vld [vmem:[#allocation3 + $0x10] sm:$0xff]
      %v2013 = vld [vmem:[#allocation3 + $0x18] sm:$0xff]
      %v2014 = vld [vmem:[#allocation3 + $0x20] sm:$0xff]
      %v2015 = vld [vmem:[#allocation3 + $0x28] sm:$0xff]
      %v2016 = vld [vmem:[#allocation3 + $0x30] sm:$0xff]
      %v2017 = vld [vmem:[#allocation3 + $0x38] sm:$0xff]
      %v2018 = vld [vmem:[#allocation3 + $0x40] sm:$0xff]
      %v2019 = vld [vmem:[#allocation3 + $0x48] sm:$0xff]
      %v2020 = vld [vmem:[#allocation3 + $0x50] sm:$0xff]
      %v2021 = vld [vmem:[#allocation3 + $0x58] sm:$0xff]
      %v2022 = vld [vmem:[#allocation3 + $0x60] sm:$0xff]
      %v2023 = vld [vmem:[#allocation3 + $0x68] sm:$0xff]
      %v2024 = vld [vmem:[#allocation3 + $0x70] sm:$0xff]
      %v2025 = vld [vmem:[#allocation3 + $0x78] sm:$0xff]
      %v2026 = vld [vmem:[#allocation3 + $0x80] sm:$0xff]
      %v2027 = vld [vmem:[#allocation3 + $0x88] sm:$0xff]
      %v2028 = vld [vmem:[#allocation3 + $0x90] sm:$0xff]
      %v2029 = vld [vmem:[#allocation3 + $0x98] sm:$0xff]
      %v2030 = vld [vmem:[#allocation3 + $0xa0] sm:$0xff]
      %v2031 = vld [vmem:[#allocation3 + $0xa8] sm:$0xff]
      %v2032 = vld [vmem:[#allocation3 + $0xb0] sm:$0xff]
      %v2033 = vld [vmem:[#allocation3 + $0xb8] sm:$0xff]
      %v2034 = vld [vmem:[#allocation3 + $0xc0] sm:$0xff]
      %v2035 = vld [vmem:[#allocation3 + $0xc8] sm:$0xff]
      %v2036 = vld [vmem:[#allocation3 + $0xd0] sm:$0xff]
      %v2037 = vld [vmem:[#allocation3 + $0xd8] sm:$0xff]
      %v2038 = vld [vmem:[#allocation3 + $0xe0] sm:$0xff]
      %v2039 = vld [vmem:[#allocation3 + $0xe8] sm:$0xff]
      %v2040 = vld [vmem:[#allocation3 + $0xf0] sm:$0xff]
      %v2041 = vld [vmem:[#allocation3 + $0xf8] sm:$0xff]
      %s2042 = scalar_lea.vmem %s3, 8
      %v2043 = vld [vmem:[%s2042] sm:$0x3]
      %v2045 = vsel %vm526, %v1994, 0
      %v2048 = vsel %vm526, %v1995, 0
      %v2051 = vsel %vm526, %v1996, 0
      %v2054 = vsel %vm526, %v1997, 0
      %v2057 = vsel %vm526, %v1998, 0
      %v2060 = vsel %vm526, %v1999, 0
      %v2063 = vsel %vm526, %v2000, 0
      %v2066 = vsel %vm526, %v2001, 0
      %v2069 = vsel %vm526, %v2002, 0
      %v2072 = vsel %vm526, %v2003, 0
      %v2075 = vsel %vm526, %v2004, 0
      %v2078 = vsel %vm526, %v2005, 0
      %v2081 = vsel %vm526, %v2006, 0
      %v2084 = vsel %vm526, %v2007, 0
      %v2087 = vsel %vm526, %v2008, 0
      %v2090 = vsel %vm526, %v2009, 0
      %v2093 = vsel %vm1438, %v2043, 0
      %2095 = vmatprep.subr.bf16.mxu0 0
      %2096 = vmatpush1.bf16.msra.mxu0 %v2093
      %2097 = vmatprep.subr.bf16.mxu0 0
      %2098 = vmatpush1.bf16.msra.mxu0 0
      %2099 = vmatprep.subr.bf16.mxu0 0
      %2100 = vmatpush1.bf16.msra.mxu0 0
      %2101 = vmatprep.subr.bf16.mxu0 0
      %2102 = vmatpush1.bf16.msra.mxu0 0
      %2103 = vmatprep.subr.bf16.mxu0 0
      %2104 = vmatpush1.bf16.msra.mxu0 0
      %2105 = vmatprep.subr.bf16.mxu0 0
      %2106 = vmatpush1.bf16.msra.mxu0 0
      %2107 = vmatprep.subr.bf16.mxu0 0
      %2108 = vmatpush1.bf16.msra.mxu0 0
      %2109 = vmatprep.subr.bf16.mxu0 0
      %2110 = vmatpush1.bf16.msra.mxu0 0
      %2111 = vmatprep.subr.bf16.mxu0 0
      %2112 = vmatpush1.bf16.msra.mxu0 0
      %2113 = vmatprep.subr.bf16.mxu0 0
      %2114 = vmatpush1.bf16.msra.mxu0 0
      %2115 = vmatprep.subr.bf16.mxu0 0
      %2116 = vmatpush1.bf16.msra.mxu0 0
      %2117 = vmatprep.subr.bf16.mxu0 0
      %2118 = vmatpush1.bf16.msra.mxu0 0
      %2119 = vmatprep.subr.bf16.mxu0 0
      %2120 = vmatpush1.bf16.msra.mxu0 0
      %2121 = vmatprep.subr.bf16.mxu0 0
      %2122 = vmatpush1.bf16.msra.mxu0 0
      %2123 = vmatprep.subr.bf16.mxu0 0
      %2124 = vmatpush1.bf16.msra.mxu0 0
      %2125 = vmatprep.subr.bf16.mxu0 0
      %2126 = vmatpush1.bf16.msra.mxu0 0
      %2127 = vmatprep.mubr.bf16.mxu0 0
      %2128 = vmatmul.mubr.bf16.gmra.mrb[0].mxu0 %v2045
      %v2129 = vpop.f32.mrb[0].mxu0
      %v2130 = vadd.f32 0.0, %v2129
      %v2131 = vpop.f32.mrb[0].mxu0
      %v2132 = vpop.f32.mrb[0].mxu0
      %v2133 = vadd.f32 0.0, %v2132
      %v2134 = vpop.f32.mrb[0].mxu0
      %2135 = vmatprep.mubr.bf16.mxu0 0
      %2136 = vmatmul.mubr.bf16.gmra.mrb[0].mxu0 %v2048
      %v2137 = vpop.f32.mrb[0].mxu0
      %v2138 = vadd.f32 0.0, %v2137
      %v2139 = vpop.f32.mrb[0].mxu0
      %v2140 = vpop.f32.mrb[0].mxu0
      %v2141 = vadd.f32 0.0, %v2140
      %v2142 = vpop.f32.mrb[0].mxu0
      %2143 = vmatprep.mubr.bf16.mxu0 0
      %2144 = vmatmul.mubr.bf16.gmra.mrb[0].mxu0 %v2051
      %v2145 = vpop.f32.mrb[0].mxu0
      %v2146 = vadd.f32 0.0, %v2145
      %v2147 = vpop.f32.mrb[0].mxu0
      %v2148 = vpop.f32.mrb[0].mxu0
      %v2149 = vadd.f32 0.0, %v2148
      %v2150 = vpop.f32.mrb[0].mxu0
      %2151 = vmatprep.mubr.bf16.mxu0 0
      %2152 = vmatmul.mubr.bf16.gmra.mrb[0].mxu0 %v2054
      %v2153 = vpop.f32.mrb[0].mxu0
      %v2154 = vadd.f32 0.0, %v2153
      %v2155 = vpop.f32.mrb[0].mxu0
      %v2156 = vpop.f32.mrb[0].mxu0
      %v2157 = vadd.f32 0.0, %v2156
      %v2158 = vpop.f32.mrb[0].mxu0
      %2159 = vmatprep.mubr.bf16.mxu0 0
      %2160 = vmatmul.mubr.bf16.gmra.mrb[0].mxu0 %v2057
      %v2161 = vpop.f32.mrb[0].mxu0
      %v2162 = vadd.f32 0.0, %v2161
      %v2163 = vpop.f32.mrb[0].mxu0
      %v2164 = vpop.f32.mrb[0].mxu0
      %v2165 = vadd.f32 0.0, %v2164
      %v2166 = vpop.f32.mrb[0].mxu0
      %2167 = vmatprep.mubr.bf16.mxu0 0
      %2168 = vmatmul.mubr.bf16.gmra.mrb[0].mxu0 %v2060
      %v2169 = vpop.f32.mrb[0].mxu0
      %v2170 = vadd.f32 0.0, %v2169
      %v2171 = vpop.f32.mrb[0].mxu0
      %v2172 = vpop.f32.mrb[0].mxu0
      %v2173 = vadd.f32 0.0, %v2172
      %v2174 = vpop.f32.mrb[0].mxu0
      %2175 = vmatprep.mubr.bf16.mxu0 0
      %2176 = vmatmul.mubr.bf16.gmra.mrb[0].mxu0 %v2063
      %v2177 = vpop.f32.mrb[0].mxu0
      %v2178 = vadd.f32 0.0, %v2177
      %v2179 = vpop.f32.mrb[0].mxu0
      %v2180 = vpop.f32.mrb[0].mxu0
      %v2181 = vadd.f32 0.0, %v2180
      %v2182 = vpop.f32.mrb[0].mxu0
      %2183 = vmatprep.mubr.bf16.mxu0 0
      %2184 = vmatmul.mubr.bf16.gmra.mrb[0].mxu0 %v2066
      %v2185 = vpop.f32.mrb[0].mxu0
      %v2186 = vadd.f32 0.0, %v2185
      %v2187 = vpop.f32.mrb[0].mxu0
      %v2188 = vpop.f32.mrb[0].mxu0
      %v2189 = vadd.f32 0.0, %v2188
      %v2190 = vpop.f32.mrb[0].mxu0
      %2191 = vmatprep.mubr.bf16.mxu0 0
      %2192 = vmatmul.mubr.bf16.gmra.mrb[0].mxu0 %v2069
      %v2193 = vpop.f32.mrb[0].mxu0
      %v2194 = vadd.f32 0.0, %v2193
      %v2195 = vpop.f32.mrb[0].mxu0
      %v2196 = vpop.f32.mrb[0].mxu0
      %v2197 = vadd.f32 0.0, %v2196
      %v2198 = vpop.f32.mrb[0].mxu0
      %2199 = vmatprep.mubr.bf16.mxu0 0
      %2200 = vmatmul.mubr.bf16.gmra.mrb[0].mxu0 %v2072
      %v2201 = vpop.f32.mrb[0].mxu0
      %v2202 = vadd.f32 0.0, %v2201
      %v2203 = vpop.f32.mrb[0].mxu0
      %v2204 = vpop.f32.mrb[0].mxu0
      %v2205 = vadd.f32 0.0, %v2204
      %v2206 = vpop.f32.mrb[0].mxu0
      %2207 = vmatprep.mubr.bf16.mxu0 0
      %2208 = vmatmul.mubr.bf16.gmra.mrb[0].mxu0 %v2075
      %v2209 = vpop.f32.mrb[0].mxu0
      %v2210 = vadd.f32 0.0, %v2209
      %v2211 = vpop.f32.mrb[0].mxu0
      %v2212 = vpop.f32.mrb[0].mxu0
      %v2213 = vadd.f32 0.0, %v2212
      %v2214 = vpop.f32.mrb[0].mxu0
      %2215 = vmatprep.mubr.bf16.mxu0 0
      %2216 = vmatmul.mubr.bf16.gmra.mrb[0].mxu0 %v2078
      %v2217 = vpop.f32.mrb[0].mxu0
      %v2218 = vadd.f32 0.0, %v2217
      %v2219 = vpop.f32.mrb[0].mxu0
      %v2220 = vpop.f32.mrb[0].mxu0
      %v2221 = vadd.f32 0.0, %v2220
      %v2222 = vpop.f32.mrb[0].mxu0
      %2223 = vmatprep.mubr.bf16.mxu0 0
      %2224 = vmatmul.mubr.bf16.gmra.mrb[0].mxu0 %v2081
      %v2225 = vpop.f32.mrb[0].mxu0
      %v2226 = vadd.f32 0.0, %v2225
      %v2227 = vpop.f32.mrb[0].mxu0
      %v2228 = vpop.f32.mrb[0].mxu0
      %v2229 = vadd.f32 0.0, %v2228
      %v2230 = vpop.f32.mrb[0].mxu0
      %2231 = vmatprep.mubr.bf16.mxu0 0
      %2232 = vmatmul.mubr.bf16.gmra.mrb[0].mxu0 %v2084
      %v2233 = vpop.f32.mrb[0].mxu0
      %v2234 = vadd.f32 0.0, %v2233
      %v2235 = vpop.f32.mrb[0].mxu0
      %v2236 = vpop.f32.mrb[0].mxu0
      %v2237 = vadd.f32 0.0, %v2236
      %v2238 = vpop.f32.mrb[0].mxu0
      %2239 = vmatprep.mubr.bf16.mxu0 0
      %2240 = vmatmul.mubr.bf16.gmra.mrb[0].mxu0 %v2087
      %v2241 = vpop.f32.mrb[0].mxu0
      %v2242 = vadd.f32 0.0, %v2241
      %v2243 = vpop.f32.mrb[0].mxu0
      %v2244 = vpop.f32.mrb[0].mxu0
      %v2245 = vadd.f32 0.0, %v2244
      %v2246 = vpop.f32.mrb[0].mxu0
      %2247 = vmatprep.mubr.bf16.mxu0 0
      %2248 = vmatmul.mubr.bf16.gmra.mrb[0].mxu0 %v2090
      %v2249 = vpop.f32.mrb[0].mxu0
      %v2250 = vadd.f32 0.0, %v2249
      %v2251 = vpop.f32.mrb[0].mxu0
      %v2252 = vpop.f32.mrb[0].mxu0
      %v2253 = vadd.f32 0.0, %v2252
      %v2254 = vpop.f32.mrb[0].mxu0
      %2255 = vdwg.mxu0
      %v2256 = vadd.f32 %v2010, %v2130
      %v2257 = vadd.f32 %v2011, %v2133
      %v2258 = vadd.f32 %v2012, %v2138
      %v2259 = vadd.f32 %v2013, %v2141
      %v2260 = vadd.f32 %v2014, %v2146
      %v2261 = vadd.f32 %v2015, %v2149
      %v2262 = vadd.f32 %v2016, %v2154
      %v2263 = vadd.f32 %v2017, %v2157
      %v2264 = vadd.f32 %v2018, %v2162
      %v2265 = vadd.f32 %v2019, %v2165
      %v2266 = vadd.f32 %v2020, %v2170
      %v2267 = vadd.f32 %v2021, %v2173
      %v2268 = vadd.f32 %v2022, %v2178
      %v2269 = vadd.f32 %v2023, %v2181
      %v2270 = vadd.f32 %v2024, %v2186
      %v2271 = vadd.f32 %v2025, %v2189
      %v2272 = vadd.f32 %v2026, %v2194
      %v2273 = vadd.f32 %v2027, %v2197
      %v2274 = vadd.f32 %v2028, %v2202
      %v2275 = vadd.f32 %v2029, %v2205
      %v2276 = vadd.f32 %v2030, %v2210
      %v2277 = vadd.f32 %v2031, %v2213
      %v2278 = vadd.f32 %v2032, %v2218
      %v2279 = vadd.f32 %v2033, %v2221
      %v2280 = vadd.f32 %v2034, %v2226
      %v2281 = vadd.f32 %v2035, %v2229
      %v2282 = vadd.f32 %v2036, %v2234
      %v2283 = vadd.f32 %v2037, %v2237
      %v2284 = vadd.f32 %v2038, %v2242
      %v2285 = vadd.f32 %v2039, %v2245
      %v2286 = vadd.f32 %v2040, %v2250
      %v2287 = vadd.f32 %v2041, %v2253
      %2288 = vst [vmem:[#allocation3] sm:$0xff] %v2256
      %2289 = vst [vmem:[#allocation3 + $0x8] sm:$0xff] %v2257
      %2290 = vst [vmem:[#allocation3 + $0x10] sm:$0xff] %v2258
      %2291 = vst [vmem:[#allocation3 + $0x18] sm:$0xff] %v2259
      %2292 = vst [vmem:[#allocation3 + $0x20] sm:$0xff] %v2260
      %2293 = vst [vmem:[#allocation3 + $0x28] sm:$0xff] %v2261
      %2294 = vst [vmem:[#allocation3 + $0x30] sm:$0xff] %v2262
      %2295 = vst [vmem:[#allocation3 + $0x38] sm:$0xff] %v2263
      %2296 = vst [vmem:[#allocation3 + $0x40] sm:$0xff] %v2264
      %2297 = vst [vmem:[#allocation3 + $0x48] sm:$0xff] %v2265
      %2298 = vst [vmem:[#allocation3 + $0x50] sm:$0xff] %v2266
      %2299 = vst [vmem:[#allocation3 + $0x58] sm:$0xff] %v2267
      %2300 = vst [vmem:[#allocation3 + $0x60] sm:$0xff] %v2268
      %2301 = vst [vmem:[#allocation3 + $0x68] sm:$0xff] %v2269
      %2302 = vst [vmem:[#allocation3 + $0x70] sm:$0xff] %v2270
      %2303 = vst [vmem:[#allocation3 + $0x78] sm:$0xff] %v2271
      %2304 = vst [vmem:[#allocation3 + $0x80] sm:$0xff] %v2272
      %2305 = vst [vmem:[#allocation3 + $0x88] sm:$0xff] %v2273
      %2306 = vst [vmem:[#allocation3 + $0x90] sm:$0xff] %v2274
      %2307 = vst [vmem:[#allocation3 + $0x98] sm:$0xff] %v2275
      %2308 = vst [vmem:[#allocation3 + $0xa0] sm:$0xff] %v2276
      %2309 = vst [vmem:[#allocation3 + $0xa8] sm:$0xff] %v2277
      %2310 = vst [vmem:[#allocation3 + $0xb0] sm:$0xff] %v2278
      %2311 = vst [vmem:[#allocation3 + $0xb8] sm:$0xff] %v2279
      %2312 = vst [vmem:[#allocation3 + $0xc0] sm:$0xff] %v2280
      %2313 = vst [vmem:[#allocation3 + $0xc8] sm:$0xff] %v2281
      %2314 = vst [vmem:[#allocation3 + $0xd0] sm:$0xff] %v2282
      %2315 = vst [vmem:[#allocation3 + $0xd8] sm:$0xff] %v2283
      %2316 = vst [vmem:[#allocation3 + $0xe0] sm:$0xff] %v2284
      %2317 = vst [vmem:[#allocation3 + $0xe8] sm:$0xff] %v2285
      %2318 = vst [vmem:[#allocation3 + $0xf0] sm:$0xff] %v2286
      %2319 = vst [vmem:[#allocation3 + $0xf8] sm:$0xff] %v2287
      %s2320 = scalar_lea.vmem [#allocation2], 152
      %v2321 = vld [vmem:[%s2320] sm:$0xff]
      %v2322 = vld [vmem:[%s2320 + $0x8] sm:$0xff]
      %v2323 = vld [vmem:[%s2320 + $0x10] sm:$0xff]
      %v2324 = vld [vmem:[%s2320 + $0x18] sm:$0xff]
      %v2325 = vld [vmem:[%s2320 + $0x20] sm:$0xff]
      %v2326 = vld [vmem:[%s2320 + $0x28] sm:$0xff]
      %v2327 = vld [vmem:[%s2320 + $0x30] sm:$0xff]
      %v2328 = vld [vmem:[%s2320 + $0x38] sm:$0xff]
      %v2329 = vld [vmem:[%s2320 + $0x40] sm:$0xff]
      %v2330 = vld [vmem:[%s2320 + $0x48] sm:$0xff]
      %v2331 = vld [vmem:[%s2320 + $0x50] sm:$0xff]
      %v2332 = vld [vmem:[%s2320 + $0x58] sm:$0xff]
      %v2333 = vld [vmem:[%s2320 + $0x60] sm:$0xff]
      %v2334 = vld [vmem:[%s2320 + $0x68] sm:$0xff]
      %v2335 = vld [vmem:[%s2320 + $0x70] sm:$0xff]
      %v2336 = vld [vmem:[%s2320 + $0x78] sm:$0xff]
      %v2337 = vld [vmem:[#allocation3] sm:$0xff]
      %v2338 = vld [vmem:[#allocation3 + $0x8] sm:$0xff]
      %v2339 = vld [vmem:[#allocation3 + $0x10] sm:$0xff]
      %v2340 = vld [vmem:[#allocation3 + $0x18] sm:$0xff]
      %v2341 = vld [vmem:[#allocation3 + $0x20] sm:$0xff]
      %v2342 = vld [vmem:[#allocation3 + $0x28] sm:$0xff]
      %v2343 = vld [vmem:[#allocation3 + $0x30] sm:$0xff]
      %v2344 = vld [vmem:[#allocation3 + $0x38] sm:$0xff]
      %v2345 = vld [vmem:[#allocation3 + $0x40] sm:$0xff]
      %v2346 = vld [vmem:[#allocation3 + $0x48] sm:$0xff]
      %v2347 = vld [vmem:[#allocation3 + $0x50] sm:$0xff]
      %v2348 = vld [vmem:[#allocation3 + $0x58] sm:$0xff]
      %v2349 = vld [vmem:[#allocation3 + $0x60] sm:$0xff]
      %v2350 = vld [vmem:[#allocation3 + $0x68] sm:$0xff]
      %v2351 = vld [vmem:[#allocation3 + $0x70] sm:$0xff]
      %v2352 = vld [vmem:[#allocation3 + $0x78] sm:$0xff]
      %v2353 = vld [vmem:[#allocation3 + $0x80] sm:$0xff]
      %v2354 = vld [vmem:[#allocation3 + $0x88] sm:$0xff]
      %v2355 = vld [vmem:[#allocation3 + $0x90] sm:$0xff]
      %v2356 = vld [vmem:[#allocation3 + $0x98] sm:$0xff]
      %v2357 = vld [vmem:[#allocation3 + $0xa0] sm:$0xff]
      %v2358 = vld [vmem:[#allocation3 + $0xa8] sm:$0xff]
      %v2359 = vld [vmem:[#allocation3 + $0xb0] sm:$0xff]
      %v2360 = vld [vmem:[#allocation3 + $0xb8] sm:$0xff]
      %v2361 = vld [vmem:[#allocation3 + $0xc0] sm:$0xff]
      %v2362 = vld [vmem:[#allocation3 + $0xc8] sm:$0xff]
      %v2363 = vld [vmem:[#allocation3 + $0xd0] sm:$0xff]
      %v2364 = vld [vmem:[#allocation3 + $0xd8] sm:$0xff]
      %v2365 = vld [vmem:[#allocation3 + $0xe0] sm:$0xff]
      %v2366 = vld [vmem:[#allocation3 + $0xe8] sm:$0xff]
      %v2367 = vld [vmem:[#allocation3 + $0xf0] sm:$0xff]
      %v2368 = vld [vmem:[#allocation3 + $0xf8] sm:$0xff]
      %s2369 = scalar_lea.vmem %s3, 10
      %v2370 = vld [vmem:[%s2369] sm:$0x3]
      %v2372 = vsel %vm526, %v2321, 0
      %v2375 = vsel %vm526, %v2322, 0
      %v2378 = vsel %vm526, %v2323, 0
      %v2381 = vsel %vm526, %v2324, 0
      %v2384 = vsel %vm526, %v2325, 0
      %v2387 = vsel %vm526, %v2326, 0
      %v2390 = vsel %vm526, %v2327, 0
      %v2393 = vsel %vm526, %v2328, 0
      %v2396 = vsel %vm526, %v2329, 0
      %v2399 = vsel %vm526, %v2330, 0
      %v2402 = vsel %vm526, %v2331, 0
      %v2405 = vsel %vm526, %v2332, 0
      %v2408 = vsel %vm526, %v2333, 0
      %v2411 = vsel %vm526, %v2334, 0
      %v2414 = vsel %vm526, %v2335, 0
      %v2417 = vsel %vm526, %v2336, 0
      %v2420 = vsel %vm1438, %v2370, 0
      %2422 = vmatprep.subr.bf16.mxu0 0
      %2423 = vmatpush1.bf16.msra.mxu0 %v2420
      %2424 = vmatprep.subr.bf16.mxu0 0
      %2425 = vmatpush1.bf16.msra.mxu0 0
      %2426 = vmatprep.subr.bf16.mxu0 0
      %2427 = vmatpush1.bf16.msra.mxu0 0
      %2428 = vmatprep.subr.bf16.mxu0 0
      %2429 = vmatpush1.bf16.msra.mxu0 0
      %2430 = vmatprep.subr.bf16.mxu0 0
      %2431 = vmatpush1.bf16.msra.mxu0 0
      %2432 = vmatprep.subr.bf16.mxu0 0
      %2433 = vmatpush1.bf16.msra.mxu0 0
      %2434 = vmatprep.subr.bf16.mxu0 0
      %2435 = vmatpush1.bf16.msra.mxu0 0
      %2436 = vmatprep.subr.bf16.mxu0 0
      %2437 = vmatpush1.bf16.msra.mxu0 0
      %2438 = vmatprep.subr.bf16.mxu0 0
      %2439 = vmatpush1.bf16.msra.mxu0 0
      %2440 = vmatprep.subr.bf16.mxu0 0
      %2441 = vmatpush1.bf16.msra.mxu0 0
      %2442 = vmatprep.subr.bf16.mxu0 0
      %2443 = vmatpush1.bf16.msra.mxu0 0
      %2444 = vmatprep.subr.bf16.mxu0 0
      %2445 = vmatpush1.bf16.msra.mxu0 0
      %2446 = vmatprep.subr.bf16.mxu0 0
      %2447 = vmatpush1.bf16.msra.mxu0 0
      %2448 = vmatprep.subr.bf16.mxu0 0
      %2449 = vmatpush1.bf16.msra.mxu0 0
      %2450 = vmatprep.subr.bf16.mxu0 0
      %2451 = vmatpush1.bf16.msra.mxu0 0
      %2452 = vmatprep.subr.bf16.mxu0 0
      %2453 = vmatpush1.bf16.msra.mxu0 0
      %2454 = vmatprep.mubr.bf16.mxu0 0
      %2455 = vmatmul.mubr.bf16.gmra.mrb[0].mxu0 %v2372
      %v2456 = vpop.f32.mrb[0].mxu0
      %v2457 = vadd.f32 0.0, %v2456
      %v2458 = vpop.f32.mrb[0].mxu0
      %v2459 = vpop.f32.mrb[0].mxu0
      %v2460 = vadd.f32 0.0, %v2459
      %v2461 = vpop.f32.mrb[0].mxu0
      %2462 = vmatprep.mubr.bf16.mxu0 0
      %2463 = vmatmul.mubr.bf16.gmra.mrb[0].mxu0 %v2375
      %v2464 = vpop.f32.mrb[0].mxu0
      %v2465 = vadd.f32 0.0, %v2464
      %v2466 = vpop.f32.mrb[0].mxu0
      %v2467 = vpop.f32.mrb[0].mxu0
      %v2468 = vadd.f32 0.0, %v2467
      %v2469 = vpop.f32.mrb[0].mxu0
      %2470 = vmatprep.mubr.bf16.mxu0 0
      %2471 = vmatmul.mubr.bf16.gmra.mrb[0].mxu0 %v2378
      %v2472 = vpop.f32.mrb[0].mxu0
      %v2473 = vadd.f32 0.0, %v2472
      %v2474 = vpop.f32.mrb[0].mxu0
      %v2475 = vpop.f32.mrb[0].mxu0
      %v2476 = vadd.f32 0.0, %v2475
      %v2477 = vpop.f32.mrb[0].mxu0
      %2478 = vmatprep.mubr.bf16.mxu0 0
      %2479 = vmatmul.mubr.bf16.gmra.mrb[0].mxu0 %v2381
      %v2480 = vpop.f32.mrb[0].mxu0
      %v2481 = vadd.f32 0.0, %v2480
      %v2482 = vpop.f32.mrb[0].mxu0
      %v2483 = vpop.f32.mrb[0].mxu0
      %v2484 = vadd.f32 0.0, %v2483
      %v2485 = vpop.f32.mrb[0].mxu0
      %2486 = vmatprep.mubr.bf16.mxu0 0
      %2487 = vmatmul.mubr.bf16.gmra.mrb[0].mxu0 %v2384
      %v2488 = vpop.f32.mrb[0].mxu0
      %v2489 = vadd.f32 0.0, %v2488
      %v2490 = vpop.f32.mrb[0].mxu0
      %v2491 = vpop.f32.mrb[0].mxu0
      %v2492 = vadd.f32 0.0, %v2491
      %v2493 = vpop.f32.mrb[0].mxu0
      %2494 = vmatprep.mubr.bf16.mxu0 0
      %2495 = vmatmul.mubr.bf16.gmra.mrb[0].mxu0 %v2387
      %v2496 = vpop.f32.mrb[0].mxu0
      %v2497 = vadd.f32 0.0, %v2496
      %v2498 = vpop.f32.mrb[0].mxu0
      %v2499 = vpop.f32.mrb[0].mxu0
      %v2500 = vadd.f32 0.0, %v2499
      %v2501 = vpop.f32.mrb[0].mxu0
      %2502 = vmatprep.mubr.bf16.mxu0 0
      %2503 = vmatmul.mubr.bf16.gmra.mrb[0].mxu0 %v2390
      %v2504 = vpop.f32.mrb[0].mxu0
      %v2505 = vadd.f32 0.0, %v2504
      %v2506 = vpop.f32.mrb[0].mxu0
      %v2507 = vpop.f32.mrb[0].mxu0
      %v2508 = vadd.f32 0.0, %v2507
      %v2509 = vpop.f32.mrb[0].mxu0
      %2510 = vmatprep.mubr.bf16.mxu0 0
      %2511 = vmatmul.mubr.bf16.gmra.mrb[0].mxu0 %v2393
      %v2512 = vpop.f32.mrb[0].mxu0
      %v2513 = vadd.f32 0.0, %v2512
      %v2514 = vpop.f32.mrb[0].mxu0
      %v2515 = vpop.f32.mrb[0].mxu0
      %v2516 = vadd.f32 0.0, %v2515
      %v2517 = vpop.f32.mrb[0].mxu0
      %2518 = vmatprep.mubr.bf16.mxu0 0
      %2519 = vmatmul.mubr.bf16.gmra.mrb[0].mxu0 %v2396
      %v2520 = vpop.f32.mrb[0].mxu0
      %v2521 = vadd.f32 0.0, %v2520
      %v2522 = vpop.f32.mrb[0].mxu0
      %v2523 = vpop.f32.mrb[0].mxu0
      %v2524 = vadd.f32 0.0, %v2523
      %v2525 = vpop.f32.mrb[0].mxu0
      %2526 = vmatprep.mubr.bf16.mxu0 0
      %2527 = vmatmul.mubr.bf16.gmra.mrb[0].mxu0 %v2399
      %v2528 = vpop.f32.mrb[0].mxu0
      %v2529 = vadd.f32 0.0, %v2528
      %v2530 = vpop.f32.mrb[0].mxu0
      %v2531 = vpop.f32.mrb[0].mxu0
      %v2532 = vadd.f32 0.0, %v2531
      %v2533 = vpop.f32.mrb[0].mxu0
      %2534 = vmatprep.mubr.bf16.mxu0 0
      %2535 = vmatmul.mubr.bf16.gmra.mrb[0].mxu0 %v2402
      %v2536 = vpop.f32.mrb[0].mxu0
      %v2537 = vadd.f32 0.0, %v2536
      %v2538 = vpop.f32.mrb[0].mxu0
      %v2539 = vpop.f32.mrb[0].mxu0
      %v2540 = vadd.f32 0.0, %v2539
      %v2541 = vpop.f32.mrb[0].mxu0
      %2542 = vmatprep.mubr.bf16.mxu0 0
      %2543 = vmatmul.mubr.bf16.gmra.mrb[0].mxu0 %v2405
      %v2544 = vpop.f32.mrb[0].mxu0
      %v2545 = vadd.f32 0.0, %v2544
      %v2546 = vpop.f32.mrb[0].mxu0
      %v2547 = vpop.f32.mrb[0].mxu0
      %v2548 = vadd.f32 0.0, %v2547
      %v2549 = vpop.f32.mrb[0].mxu0
      %2550 = vmatprep.mubr.bf16.mxu0 0
      %2551 = vmatmul.mubr.bf16.gmra.mrb[0].mxu0 %v2408
      %v2552 = vpop.f32.mrb[0].mxu0
      %v2553 = vadd.f32 0.0, %v2552
      %v2554 = vpop.f32.mrb[0].mxu0
      %v2555 = vpop.f32.mrb[0].mxu0
      %v2556 = vadd.f32 0.0, %v2555
      %v2557 = vpop.f32.mrb[0].mxu0
      %2558 = vmatprep.mubr.bf16.mxu0 0
      %2559 = vmatmul.mubr.bf16.gmra.mrb[0].mxu0 %v2411
      %v2560 = vpop.f32.mrb[0].mxu0
      %v2561 = vadd.f32 0.0, %v2560
      %v2562 = vpop.f32.mrb[0].mxu0
      %v2563 = vpop.f32.mrb[0].mxu0
      %v2564 = vadd.f32 0.0, %v2563
      %v2565 = vpop.f32.mrb[0].mxu0
      %2566 = vmatprep.mubr.bf16.mxu0 0
      %2567 = vmatmul.mubr.bf16.gmra.mrb[0].mxu0 %v2414
      %v2568 = vpop.f32.mrb[0].mxu0
      %v2569 = vadd.f32 0.0, %v2568
      %v2570 = vpop.f32.mrb[0].mxu0
      %v2571 = vpop.f32.mrb[0].mxu0
      %v2572 = vadd.f32 0.0, %v2571
      %v2573 = vpop.f32.mrb[0].mxu0
      %2574 = vmatprep.mubr.bf16.mxu0 0
      %2575 = vmatmul.mubr.bf16.gmra.mrb[0].mxu0 %v2417
      %v2576 = vpop.f32.mrb[0].mxu0
      %v2577 = vadd.f32 0.0, %v2576
      %v2578 = vpop.f32.mrb[0].mxu0
      %v2579 = vpop.f32.mrb[0].mxu0
      %v2580 = vadd.f32 0.0, %v2579
      %v2581 = vpop.f32.mrb[0].mxu0
      %2582 = vdwg.mxu0
      %v2583 = vadd.f32 %v2337, %v2457
      %v2584 = vadd.f32 %v2338, %v2460
      %v2585 = vadd.f32 %v2339, %v2465
      %v2586 = vadd.f32 %v2340, %v2468
      %v2587 = vadd.f32 %v2341, %v2473
      %v2588 = vadd.f32 %v2342, %v2476
      %v2589 = vadd.f32 %v2343, %v2481
      %v2590 = vadd.f32 %v2344, %v2484
      %v2591 = vadd.f32 %v2345, %v2489
      %v2592 = vadd.f32 %v2346, %v2492
      %v2593 = vadd.f32 %v2347, %v2497
      %v2594 = vadd.f32 %v2348, %v2500
      %v2595 = vadd.f32 %v2349, %v2505
      %v2596 = vadd.f32 %v2350, %v2508
      %v2597 = vadd.f32 %v2351, %v2513
      %v2598 = vadd.f32 %v2352, %v2516
      %v2599 = vadd.f32 %v2353, %v2521
      %v2600 = vadd.f32 %v2354, %v2524
      %v2601 = vadd.f32 %v2355, %v2529
      %v2602 = vadd.f32 %v2356, %v2532
      %v2603 = vadd.f32 %v2357, %v2537
      %v2604 = vadd.f32 %v2358, %v2540
      %v2605 = vadd.f32 %v2359, %v2545
      %v2606 = vadd.f32 %v2360, %v2548
      %v2607 = vadd.f32 %v2361, %v2553
      %v2608 = vadd.f32 %v2362, %v2556
      %v2609 = vadd.f32 %v2363, %v2561
      %v2610 = vadd.f32 %v2364, %v2564
      %v2611 = vadd.f32 %v2365, %v2569
      %v2612 = vadd.f32 %v2366, %v2572
      %v2613 = vadd.f32 %v2367, %v2577
      %v2614 = vadd.f32 %v2368, %v2580
      %2615 = vst [vmem:[#allocation3] sm:$0xff] %v2583
      %2616 = vst [vmem:[#allocation3 + $0x8] sm:$0xff] %v2584
      %2617 = vst [vmem:[#allocation3 + $0x10] sm:$0xff] %v2585
      %2618 = vst [vmem:[#allocation3 + $0x18] sm:$0xff] %v2586
      %2619 = vst [vmem:[#allocation3 + $0x20] sm:$0xff] %v2587
      %2620 = vst [vmem:[#allocation3 + $0x28] sm:$0xff] %v2588
      %2621 = vst [vmem:[#allocation3 + $0x30] sm:$0xff] %v2589
      %2622 = vst [vmem:[#allocation3 + $0x38] sm:$0xff] %v2590
      %2623 = vst [vmem:[#allocation3 + $0x40] sm:$0xff] %v2591
      %2624 = vst [vmem:[#allocation3 + $0x48] sm:$0xff] %v2592
      %2625 = vst [vmem:[#allocation3 + $0x50] sm:$0xff] %v2593
      %2626 = vst [vmem:[#allocation3 + $0x58] sm:$0xff] %v2594
      %2627 = vst [vmem:[#allocation3 + $0x60] sm:$0xff] %v2595
      %2628 = vst [vmem:[#allocation3 + $0x68] sm:$0xff] %v2596
      %2629 = vst [vmem:[#allocation3 + $0x70] sm:$0xff] %v2597
      %2630 = vst [vmem:[#allocation3 + $0x78] sm:$0xff] %v2598
      %2631 = vst [vmem:[#allocation3 + $0x80] sm:$0xff] %v2599
      %2632 = vst [vmem:[#allocation3 + $0x88] sm:$0xff] %v2600
      %2633 = vst [vmem:[#allocation3 + $0x90] sm:$0xff] %v2601
      %2634 = vst [vmem:[#allocation3 + $0x98] sm:$0xff] %v2602
      %2635 = vst [vmem:[#allocation3 + $0xa0] sm:$0xff] %v2603
      %2636 = vst [vmem:[#allocation3 + $0xa8] sm:$0xff] %v2604
      %2637 = vst [vmem:[#allocation3 + $0xb0] sm:$0xff] %v2605
      %2638 = vst [vmem:[#allocation3 + $0xb8] sm:$0xff] %v2606
      %2639 = vst [vmem:[#allocation3 + $0xc0] sm:$0xff] %v2607
      %2640 = vst [vmem:[#allocation3 + $0xc8] sm:$0xff] %v2608
      %2641 = vst [vmem:[#allocation3 + $0xd0] sm:$0xff] %v2609
      %2642 = vst [vmem:[#allocation3 + $0xd8] sm:$0xff] %v2610
      %2643 = vst [vmem:[#allocation3 + $0xe0] sm:$0xff] %v2611
      %2644 = vst [vmem:[#allocation3 + $0xe8] sm:$0xff] %v2612
      %2645 = vst [vmem:[#allocation3 + $0xf0] sm:$0xff] %v2613
      %2646 = vst [vmem:[#allocation3 + $0xf8] sm:$0xff] %v2614
      %v2647 = vld [vmem:[#allocation3] sm:$0xff]
      %v2648 = vld [vmem:[#allocation3 + $0x8] sm:$0xff]
      %v2649 = vld [vmem:[#allocation3 + $0x10] sm:$0xff]
      %v2650 = vld [vmem:[#allocation3 + $0x18] sm:$0xff]
      %v2651 = vld [vmem:[#allocation3 + $0x20] sm:$0xff]
      %v2652 = vld [vmem:[#allocation3 + $0x28] sm:$0xff]
      %v2653 = vld [vmem:[#allocation3 + $0x30] sm:$0xff]
      %v2654 = vld [vmem:[#allocation3 + $0x38] sm:$0xff]
      %v2655 = vld [vmem:[#allocation3 + $0x40] sm:$0xff]
      %v2656 = vld [vmem:[#allocation3 + $0x48] sm:$0xff]
      %v2657 = vld [vmem:[#allocation3 + $0x50] sm:$0xff]
      %v2658 = vld [vmem:[#allocation3 + $0x58] sm:$0xff]
      %v2659 = vld [vmem:[#allocation3 + $0x60] sm:$0xff]
      %v2660 = vld [vmem:[#allocation3 + $0x68] sm:$0xff]
      %v2661 = vld [vmem:[#allocation3 + $0x70] sm:$0xff]
      %v2662 = vld [vmem:[#allocation3 + $0x78] sm:$0xff]
      %v2663 = vld [vmem:[#allocation3 + $0x80] sm:$0xff]
      %v2664 = vld [vmem:[#allocation3 + $0x88] sm:$0xff]
      %v2665 = vld [vmem:[#allocation3 + $0x90] sm:$0xff]
      %v2666 = vld [vmem:[#allocation3 + $0x98] sm:$0xff]
      %v2667 = vld [vmem:[#allocation3 + $0xa0] sm:$0xff]
      %v2668 = vld [vmem:[#allocation3 + $0xa8] sm:$0xff]
      %v2669 = vld [vmem:[#allocation3 + $0xb0] sm:$0xff]
      %v2670 = vld [vmem:[#allocation3 + $0xb8] sm:$0xff]
      %v2671 = vld [vmem:[#allocation3 + $0xc0] sm:$0xff]
      %v2672 = vld [vmem:[#allocation3 + $0xc8] sm:$0xff]
      %v2673 = vld [vmem:[#allocation3 + $0xd0] sm:$0xff]
      %v2674 = vld [vmem:[#allocation3 + $0xd8] sm:$0xff]
      %v2675 = vld [vmem:[#allocation3 + $0xe0] sm:$0xff]
      %v2676 = vld [vmem:[#allocation3 + $0xe8] sm:$0xff]
      %v2677 = vld [vmem:[#allocation3 + $0xf0] sm:$0xff]
      %v2678 = vld [vmem:[#allocation3 + $0xf8] sm:$0xff]
      %v2679 = vld [vmem:[%s4] sm:$0x1]
      %v2681 = vlaneseq
      %v2682 = vshrl.u32 %v2681, 7
      %v2683 = vsub.s32 0, %v2682
      %v2684 = vrot.slane %v2679, %v2683
      %v2686 = vadd.f32 %v2647, %v2684
      %v2687 = vadd.f32 %v2648, %v2684
      %v2688 = vadd.f32 %v2649, %v2684
      %v2689 = vadd.f32 %v2650, %v2684
      %v2690 = vadd.f32 %v2651, %v2684
      %v2691 = vadd.f32 %v2652, %v2684
      %v2692 = vadd.f32 %v2653, %v2684
      %v2693 = vadd.f32 %v2654, %v2684
      %v2694 = vadd.f32 %v2655, %v2684
      %v2695 = vadd.f32 %v2656, %v2684
      %v2696 = vadd.f32 %v2657, %v2684
      %v2697 = vadd.f32 %v2658, %v2684
      %v2698 = vadd.f32 %v2659, %v2684
      %v2699 = vadd.f32 %v2660, %v2684
      %v2700 = vadd.f32 %v2661, %v2684
      %v2701 = vadd.f32 %v2662, %v2684
      %v2702 = vadd.f32 %v2663, %v2684
      %v2703 = vadd.f32 %v2664, %v2684
      %v2704 = vadd.f32 %v2665, %v2684
      %v2705 = vadd.f32 %v2666, %v2684
      %v2706 = vadd.f32 %v2667, %v2684
      %v2707 = vadd.f32 %v2668, %v2684
      %v2708 = vadd.f32 %v2669, %v2684
      %v2709 = vadd.f32 %v2670, %v2684
      %v2710 = vadd.f32 %v2671, %v2684
      %v2711 = vadd.f32 %v2672, %v2684
      %v2712 = vadd.f32 %v2673, %v2684
      %v2713 = vadd.f32 %v2674, %v2684
      %v2714 = vadd.f32 %v2675, %v2684
      %v2715 = vadd.f32 %v2676, %v2684
      %v2716 = vadd.f32 %v2677, %v2684
      %v2717 = vadd.f32 %v2678, %v2684
      %2718 = vst [vmem:[%s395] sm:$0xff] %v2686
      %2719 = vst [vmem:[%s395 + $0x8] sm:$0xff] %v2687
      %2720 = vst [vmem:[%s395 + $0x40] sm:$0xff] %v2688
      %2721 = vst [vmem:[%s395 + $0x48] sm:$0xff] %v2689
      %2722 = vst [vmem:[%s395 + $0x80] sm:$0xff] %v2690
      %2723 = vst [vmem:[%s395 + $0x88] sm:$0xff] %v2691
      %2724 = vst [vmem:[%s395 + $0xc0] sm:$0xff] %v2692
      %2725 = vst [vmem:[%s395 + $0xc8] sm:$0xff] %v2693
      %2726 = vst [vmem:[%s395 + $0x100] sm:$0xff] %v2694
      %2727 = vst [vmem:[%s395 + $0x108] sm:$0xff] %v2695
      %2728 = vst [vmem:[%s395 + $0x140] sm:$0xff] %v2696
      %2729 = vst [vmem:[%s395 + $0x148] sm:$0xff] %v2697
      %2730 = vst [vmem:[%s395 + $0x180] sm:$0xff] %v2698
      %2731 = vst [vmem:[%s395 + $0x188] sm:$0xff] %v2699
      %2732 = vst [vmem:[%s395 + $0x1c0] sm:$0xff] %v2700
      %2733 = vst [vmem:[%s395 + $0x1c8] sm:$0xff] %v2701
      %2734 = vst [vmem:[%s395 + $0x200] sm:$0xff] %v2702
      %2735 = vst [vmem:[%s395 + $0x208] sm:$0xff] %v2703
      %2736 = vst [vmem:[%s395 + $0x240] sm:$0xff] %v2704
      %2737 = vst [vmem:[%s395 + $0x248] sm:$0xff] %v2705
      %2738 = vst [vmem:[%s395 + $0x280] sm:$0xff] %v2706
      %2739 = vst [vmem:[%s395 + $0x288] sm:$0xff] %v2707
      %2740 = vst [vmem:[%s395 + $0x2c0] sm:$0xff] %v2708
      %2741 = vst [vmem:[%s395 + $0x2c8] sm:$0xff] %v2709
      %2742 = vst [vmem:[%s395 + $0x300] sm:$0xff] %v2710
      %2743 = vst [vmem:[%s395 + $0x308] sm:$0xff] %v2711
      %2744 = vst [vmem:[%s395 + $0x340] sm:$0xff] %v2712
      %2745 = vst [vmem:[%s395 + $0x348] sm:$0xff] %v2713
      %2746 = vst [vmem:[%s395 + $0x380] sm:$0xff] %v2714
      %2747 = vst [vmem:[%s395 + $0x388] sm:$0xff] %v2715
      %2748 = vst [vmem:[%s395 + $0x3c0] sm:$0xff] %v2716
      %2749 = vst [vmem:[%s395 + $0x3c8] sm:$0xff] %v2717
      %2750 = vst [vmem:[#allocation3] sm:$0xff] 0.0
      %2751 = vst [vmem:[#allocation3 + $0x8] sm:$0xff] 0.0
      %2752 = vst [vmem:[#allocation3 + $0x10] sm:$0xff] 0.0
      %2753 = vst [vmem:[#allocation3 + $0x18] sm:$0xff] 0.0
      %2754 = vst [vmem:[#allocation3 + $0x20] sm:$0xff] 0.0
      %2755 = vst [vmem:[#allocation3 + $0x28] sm:$0xff] 0.0
      %2756 = vst [vmem:[#allocation3 + $0x30] sm:$0xff] 0.0
      %2757 = vst [vmem:[#allocation3 + $0x38] sm:$0xff] 0.0
      %2758 = vst [vmem:[#allocation3 + $0x40] sm:$0xff] 0.0
      %2759 = vst [vmem:[#allocation3 + $0x48] sm:$0xff] 0.0
      %2760 = vst [vmem:[#allocation3 + $0x50] sm:$0xff] 0.0
      %2761 = vst [vmem:[#allocation3 + $0x58] sm:$0xff] 0.0
      %2762 = vst [vmem:[#allocation3 + $0x60] sm:$0xff] 0.0
      %2763 = vst [vmem:[#allocation3 + $0x68] sm:$0xff] 0.0
      %2764 = vst [vmem:[#allocation3 + $0x70] sm:$0xff] 0.0
      %2765 = vst [vmem:[#allocation3 + $0x78] sm:$0xff] 0.0
      %2766 = vst [vmem:[#allocation3 + $0x80] sm:$0xff] 0.0
      %2767 = vst [vmem:[#allocation3 + $0x88] sm:$0xff] 0.0
      %2768 = vst [vmem:[#allocation3 + $0x90] sm:$0xff] 0.0
      %2769 = vst [vmem:[#allocation3 + $0x98] sm:$0xff] 0.0
      %2770 = vst [vmem:[#allocation3 + $0xa0] sm:$0xff] 0.0
      %2771 = vst [vmem:[#allocation3 + $0xa8] sm:$0xff] 0.0
      %2772 = vst [vmem:[#allocation3 + $0xb0] sm:$0xff] 0.0
      %2773 = vst [vmem:[#allocation3 + $0xb8] sm:$0xff] 0.0
      %2774 = vst [vmem:[#allocation3 + $0xc0] sm:$0xff] 0.0
      %2775 = vst [vmem:[#allocation3 + $0xc8] sm:$0xff] 0.0
      %2776 = vst [vmem:[#allocation3 + $0xd0] sm:$0xff] 0.0
      %2777 = vst [vmem:[#allocation3 + $0xd8] sm:$0xff] 0.0
      %2778 = vst [vmem:[#allocation3 + $0xe0] sm:$0xff] 0.0
      %2779 = vst [vmem:[#allocation3 + $0xe8] sm:$0xff] 0.0
      %2780 = vst [vmem:[#allocation3 + $0xf0] sm:$0xff] 0.0
      %2781 = vst [vmem:[#allocation3 + $0xf8] sm:$0xff] 0.0
      %v2782 = vld [vmem:[%s948] sm:$0xff]
      %v2783 = vld [vmem:[%s948 + $0x8] sm:$0xff]
      %v2784 = vld [vmem:[%s948 + $0x10] sm:$0xff]
      %v2785 = vld [vmem:[%s948 + $0x18] sm:$0xff]
      %v2786 = vld [vmem:[%s948 + $0x20] sm:$0xff]
      %v2787 = vld [vmem:[%s948 + $0x28] sm:$0xff]
      %v2788 = vld [vmem:[%s948 + $0x30] sm:$0xff]
      %v2789 = vld [vmem:[%s948 + $0x38] sm:$0xff]
      %v2790 = vld [vmem:[%s948 + $0x40] sm:$0xff]
      %v2791 = vld [vmem:[%s948 + $0x48] sm:$0xff]
      %v2792 = vld [vmem:[%s948 + $0x50] sm:$0xff]
      %v2793 = vld [vmem:[%s948 + $0x58] sm:$0xff]
      %v2794 = vld [vmem:[%s948 + $0x60] sm:$0xff]
      %v2795 = vld [vmem:[%s948 + $0x68] sm:$0xff]
      %v2796 = vld [vmem:[%s948 + $0x70] sm:$0xff]
      %v2797 = vld [vmem:[%s948 + $0x78] sm:$0xff]
      %v2798 = vld [vmem:[#allocation3] sm:$0xff]
      %v2799 = vld [vmem:[#allocation3 + $0x8] sm:$0xff]
      %v2800 = vld [vmem:[#allocation3 + $0x10] sm:$0xff]
      %v2801 = vld [vmem:[#allocation3 + $0x18] sm:$0xff]
      %v2802 = vld [vmem:[#allocation3 + $0x20] sm:$0xff]
      %v2803 = vld [vmem:[#allocation3 + $0x28] sm:$0xff]
      %v2804 = vld [vmem:[#allocation3 + $0x30] sm:$0xff]
      %v2805 = vld [vmem:[#allocation3 + $0x38] sm:$0xff]
      %v2806 = vld [vmem:[#allocation3 + $0x40] sm:$0xff]
      %v2807 = vld [vmem:[#allocation3 + $0x48] sm:$0xff]
      %v2808 = vld [vmem:[#allocation3 + $0x50] sm:$0xff]
      %v2809 = vld [vmem:[#allocation3 + $0x58] sm:$0xff]
      %v2810 = vld [vmem:[#allocation3 + $0x60] sm:$0xff]
      %v2811 = vld [vmem:[#allocation3 + $0x68] sm:$0xff]
      %v2812 = vld [vmem:[#allocation3 + $0x70] sm:$0xff]
      %v2813 = vld [vmem:[#allocation3 + $0x78] sm:$0xff]
      %v2814 = vld [vmem:[#allocation3 + $0x80] sm:$0xff]
      %v2815 = vld [vmem:[#allocation3 + $0x88] sm:$0xff]
      %v2816 = vld [vmem:[#allocation3 + $0x90] sm:$0xff]
      %v2817 = vld [vmem:[#allocation3 + $0x98] sm:$0xff]
      %v2818 = vld [vmem:[#allocation3 + $0xa0] sm:$0xff]
      %v2819 = vld [vmem:[#allocation3 + $0xa8] sm:$0xff]
      %v2820 = vld [vmem:[#allocation3 + $0xb0] sm:$0xff]
      %v2821 = vld [vmem:[#allocation3 + $0xb8] sm:$0xff]
      %v2822 = vld [vmem:[#allocation3 + $0xc0] sm:$0xff]
      %v2823 = vld [vmem:[#allocation3 + $0xc8] sm:$0xff]
      %v2824 = vld [vmem:[#allocation3 + $0xd0] sm:$0xff]
      %v2825 = vld [vmem:[#allocation3 + $0xd8] sm:$0xff]
      %v2826 = vld [vmem:[#allocation3 + $0xe0] sm:$0xff]
      %v2827 = vld [vmem:[#allocation3 + $0xe8] sm:$0xff]
      %v2828 = vld [vmem:[#allocation3 + $0xf0] sm:$0xff]
      %v2829 = vld [vmem:[#allocation3 + $0xf8] sm:$0xff]
      %s2830 = scalar_lea.vmem %s3, 4
      %v2831 = vld [vmem:[%s2830] sm:$0x3]
      %v2833 = vsel %vm526, %v2782, 0
      %v2836 = vsel %vm526, %v2783, 0
      %v2839 = vsel %vm526, %v2784, 0
      %v2842 = vsel %vm526, %v2785, 0
      %v2845 = vsel %vm526, %v2786, 0
      %v2848 = vsel %vm526, %v2787, 0
      %v2851 = vsel %vm526, %v2788, 0
      %v2854 = vsel %vm526, %v2789, 0
      %v2857 = vsel %vm526, %v2790, 0
      %v2860 = vsel %vm526, %v2791, 0
      %v2863 = vsel %vm526, %v2792, 0
      %v2866 = vsel %vm526, %v2793, 0
      %v2869 = vsel %vm526, %v2794, 0
      %v2872 = vsel %vm526, %v2795, 0
      %v2875 = vsel %vm526, %v2796, 0
      %v2878 = vsel %vm526, %v2797, 0
      %v2881 = vsel %vm1438, %v2831, 0
      %2883 = vmatprep.subr.bf16.mxu0 0
      %2884 = vmatpush1.bf16.msra.mxu0 %v2881
      %2885 = vmatprep.subr.bf16.mxu0 0
      %2886 = vmatpush1.bf16.msra.mxu0 0
      %2887 = vmatprep.subr.bf16.mxu0 0
      %2888 = vmatpush1.bf16.msra.mxu0 0
      %2889 = vmatprep.subr.bf16.mxu0 0
      %2890 = vmatpush1.bf16.msra.mxu0 0
      %2891 = vmatprep.subr.bf16.mxu0 0
      %2892 = vmatpush1.bf16.msra.mxu0 0
      %2893 = vmatprep.subr.bf16.mxu0 0
      %2894 = vmatpush1.bf16.msra.mxu0 0
      %2895 = vmatprep.subr.bf16.mxu0 0
      %2896 = vmatpush1.bf16.msra.mxu0 0
      %2897 = vmatprep.subr.bf16.mxu0 0
      %2898 = vmatpush1.bf16.msra.mxu0 0
      %2899 = vmatprep.subr.bf16.mxu0 0
      %2900 = vmatpush1.bf16.msra.mxu0 0
      %2901 = vmatprep.subr.bf16.mxu0 0
      %2902 = vmatpush1.bf16.msra.mxu0 0
      %2903 = vmatprep.subr.bf16.mxu0 0
      %2904 = vmatpush1.bf16.msra.mxu0 0
      %2905 = vmatprep.subr.bf16.mxu0 0
      %2906 = vmatpush1.bf16.msra.mxu0 0
      %2907 = vmatprep.subr.bf16.mxu0 0
      %2908 = vmatpush1.bf16.msra.mxu0 0
      %2909 = vmatprep.subr.bf16.mxu0 0
      %2910 = vmatpush1.bf16.msra.mxu0 0
      %2911 = vmatprep.subr.bf16.mxu0 0
      %2912 = vmatpush1.bf16.msra.mxu0 0
      %2913 = vmatprep.subr.bf16.mxu0 0
      %2914 = vmatpush1.bf16.msra.mxu0 0
      %2915 = vmatprep.mubr.bf16.mxu0 0
      %2916 = vmatmul.mubr.bf16.gmra.mrb[0].mxu0 %v2833
      %v2917 = vpop.f32.mrb[0].mxu0
      %v2918 = vadd.f32 0.0, %v2917
      %v2919 = vpop.f32.mrb[0].mxu0
      %v2920 = vpop.f32.mrb[0].mxu0
      %v2921 = vadd.f32 0.0, %v2920
      %v2922 = vpop.f32.mrb[0].mxu0
      %2923 = vmatprep.mubr.bf16.mxu0 0
      %2924 = vmatmul.mubr.bf16.gmra.mrb[0].mxu0 %v2836
      %v2925 = vpop.f32.mrb[0].mxu0
      %v2926 = vadd.f32 0.0, %v2925
      %v2927 = vpop.f32.mrb[0].mxu0
      %v2928 = vpop.f32.mrb[0].mxu0
      %v2929 = vadd.f32 0.0, %v2928
      %v2930 = vpop.f32.mrb[0].mxu0
      %2931 = vmatprep.mubr.bf16.mxu0 0
      %2932 = vmatmul.mubr.bf16.gmra.mrb[0].mxu0 %v2839
      %v2933 = vpop.f32.mrb[0].mxu0
      %v2934 = vadd.f32 0.0, %v2933
      %v2935 = vpop.f32.mrb[0].mxu0
      %v2936 = vpop.f32.mrb[0].mxu0
      %v2937 = vadd.f32 0.0, %v2936
      %v2938 = vpop.f32.mrb[0].mxu0
      %2939 = vmatprep.mubr.bf16.mxu0 0
      %2940 = vmatmul.mubr.bf16.gmra.mrb[0].mxu0 %v2842
      %v2941 = vpop.f32.mrb[0].mxu0
      %v2942 = vadd.f32 0.0, %v2941
      %v2943 = vpop.f32.mrb[0].mxu0
      %v2944 = vpop.f32.mrb[0].mxu0
      %v2945 = vadd.f32 0.0, %v2944
      %v2946 = vpop.f32.mrb[0].mxu0
      %2947 = vmatprep.mubr.bf16.mxu0 0
      %2948 = vmatmul.mubr.bf16.gmra.mrb[0].mxu0 %v2845
      %v2949 = vpop.f32.mrb[0].mxu0
      %v2950 = vadd.f32 0.0, %v2949
      %v2951 = vpop.f32.mrb[0].mxu0
      %v2952 = vpop.f32.mrb[0].mxu0
      %v2953 = vadd.f32 0.0, %v2952
      %v2954 = vpop.f32.mrb[0].mxu0
      %2955 = vmatprep.mubr.bf16.mxu0 0
      %2956 = vmatmul.mubr.bf16.gmra.mrb[0].mxu0 %v2848
      %v2957 = vpop.f32.mrb[0].mxu0
      %v2958 = vadd.f32 0.0, %v2957
      %v2959 = vpop.f32.mrb[0].mxu0
      %v2960 = vpop.f32.mrb[0].mxu0
      %v2961 = vadd.f32 0.0, %v2960
      %v2962 = vpop.f32.mrb[0].mxu0
      %2963 = vmatprep.mubr.bf16.mxu0 0
      %2964 = vmatmul.mubr.bf16.gmra.mrb[0].mxu0 %v2851
      %v2965 = vpop.f32.mrb[0].mxu0
      %v2966 = vadd.f32 0.0, %v2965
      %v2967 = vpop.f32.mrb[0].mxu0
      %v2968 = vpop.f32.mrb[0].mxu0
      %v2969 = vadd.f32 0.0, %v2968
      %v2970 = vpop.f32.mrb[0].mxu0
      %2971 = vmatprep.mubr.bf16.mxu0 0
      %2972 = vmatmul.mubr.bf16.gmra.mrb[0].mxu0 %v2854
      %v2973 = vpop.f32.mrb[0].mxu0
      %v2974 = vadd.f32 0.0, %v2973
      %v2975 = vpop.f32.mrb[0].mxu0
      %v2976 = vpop.f32.mrb[0].mxu0
      %v2977 = vadd.f32 0.0, %v2976
      %v2978 = vpop.f32.mrb[0].mxu0
      %2979 = vmatprep.mubr.bf16.mxu0 0
      %2980 = vmatmul.mubr.bf16.gmra.mrb[0].mxu0 %v2857
      %v2981 = vpop.f32.mrb[0].mxu0
      %v2982 = vadd.f32 0.0, %v2981
      %v2983 = vpop.f32.mrb[0].mxu0
      %v2984 = vpop.f32.mrb[0].mxu0
      %v2985 = vadd.f32 0.0, %v2984
      %v2986 = vpop.f32.mrb[0].mxu0
      %2987 = vmatprep.mubr.bf16.mxu0 0
      %2988 = vmatmul.mubr.bf16.gmra.mrb[0].mxu0 %v2860
      %v2989 = vpop.f32.mrb[0].mxu0
      %v2990 = vadd.f32 0.0, %v2989
      %v2991 = vpop.f32.mrb[0].mxu0
      %v2992 = vpop.f32.mrb[0].mxu0
      %v2993 = vadd.f32 0.0, %v2992
      %v2994 = vpop.f32.mrb[0].mxu0
      %2995 = vmatprep.mubr.bf16.mxu0 0
      %2996 = vmatmul.mubr.bf16.gmra.mrb[0].mxu0 %v2863
      %v2997 = vpop.f32.mrb[0].mxu0
      %v2998 = vadd.f32 0.0, %v2997
      %v2999 = vpop.f32.mrb[0].mxu0
      %v3000 = vpop.f32.mrb[0].mxu0
      %v3001 = vadd.f32 0.0, %v3000
      %v3002 = vpop.f32.mrb[0].mxu0
      %3003 = vmatprep.mubr.bf16.mxu0 0
      %3004 = vmatmul.mubr.bf16.gmra.mrb[0].mxu0 %v2866
      %v3005 = vpop.f32.mrb[0].mxu0
      %v3006 = vadd.f32 0.0, %v3005
      %v3007 = vpop.f32.mrb[0].mxu0
      %v3008 = vpop.f32.mrb[0].mxu0
      %v3009 = vadd.f32 0.0, %v3008
      %v3010 = vpop.f32.mrb[0].mxu0
      %3011 = vmatprep.mubr.bf16.mxu0 0
      %3012 = vmatmul.mubr.bf16.gmra.mrb[0].mxu0 %v2869
      %v3013 = vpop.f32.mrb[0].mxu0
      %v3014 = vadd.f32 0.0, %v3013
      %v3015 = vpop.f32.mrb[0].mxu0
      %v3016 = vpop.f32.mrb[0].mxu0
      %v3017 = vadd.f32 0.0, %v3016
      %v3018 = vpop.f32.mrb[0].mxu0
      %3019 = vmatprep.mubr.bf16.mxu0 0
      %3020 = vmatmul.mubr.bf16.gmra.mrb[0].mxu0 %v2872
      %v3021 = vpop.f32.mrb[0].mxu0
      %v3022 = vadd.f32 0.0, %v3021
      %v3023 = vpop.f32.mrb[0].mxu0
      %v3024 = vpop.f32.mrb[0].mxu0
      %v3025 = vadd.f32 0.0, %v3024
      %v3026 = vpop.f32.mrb[0].mxu0
      %3027 = vmatprep.mubr.bf16.mxu0 0
      %3028 = vmatmul.mubr.bf16.gmra.mrb[0].mxu0 %v2875
      %v3029 = vpop.f32.mrb[0].mxu0
      %v3030 = vadd.f32 0.0, %v3029
      %v3031 = vpop.f32.mrb[0].mxu0
      %v3032 = vpop.f32.mrb[0].mxu0
      %v3033 = vadd.f32 0.0, %v3032
      %v3034 = vpop.f32.mrb[0].mxu0
      %3035 = vmatprep.mubr.bf16.mxu0 0
      %3036 = vmatmul.mubr.bf16.gmra.mrb[0].mxu0 %v2878
      %v3037 = vpop.f32.mrb[0].mxu0
      %v3038 = vadd.f32 0.0, %v3037
      %v3039 = vpop.f32.mrb[0].mxu0
      %v3040 = vpop.f32.mrb[0].mxu0
      %v3041 = vadd.f32 0.0, %v3040
      %v3042 = vpop.f32.mrb[0].mxu0
      %3043 = vdwg.mxu0
      %v3044 = vadd.f32 %v2798, %v2918
      %v3045 = vadd.f32 %v2799, %v2921
      %v3046 = vadd.f32 %v2800, %v2926
      %v3047 = vadd.f32 %v2801, %v2929
      %v3048 = vadd.f32 %v2802, %v2934
      %v3049 = vadd.f32 %v2803, %v2937
      %v3050 = vadd.f32 %v2804, %v2942
      %v3051 = vadd.f32 %v2805, %v2945
      %v3052 = vadd.f32 %v2806, %v2950
      %v3053 = vadd.f32 %v2807, %v2953
      %v3054 = vadd.f32 %v2808, %v2958
      %v3055 = vadd.f32 %v2809, %v2961
      %v3056 = vadd.f32 %v2810, %v2966
      %v3057 = vadd.f32 %v2811, %v2969
      %v3058 = vadd.f32 %v2812, %v2974
      %v3059 = vadd.f32 %v2813, %v2977
      %v3060 = vadd.f32 %v2814, %v2982
      %v3061 = vadd.f32 %v2815, %v2985
      %v3062 = vadd.f32 %v2816, %v2990
      %v3063 = vadd.f32 %v2817, %v2993
      %v3064 = vadd.f32 %v2818, %v2998
      %v3065 = vadd.f32 %v2819, %v3001
      %v3066 = vadd.f32 %v2820, %v3006
      %v3067 = vadd.f32 %v2821, %v3009
      %v3068 = vadd.f32 %v2822, %v3014
      %v3069 = vadd.f32 %v2823, %v3017
      %v3070 = vadd.f32 %v2824, %v3022
      %v3071 = vadd.f32 %v2825, %v3025
      %v3072 = vadd.f32 %v2826, %v3030
      %v3073 = vadd.f32 %v2827, %v3033
      %v3074 = vadd.f32 %v2828, %v3038
      %v3075 = vadd.f32 %v2829, %v3041
      %3076 = vst [vmem:[#allocation3] sm:$0xff] %v3044
      %3077 = vst [vmem:[#allocation3 + $0x8] sm:$0xff] %v3045
      %3078 = vst [vmem:[#allocation3 + $0x10] sm:$0xff] %v3046
      %3079 = vst [vmem:[#allocation3 + $0x18] sm:$0xff] %v3047
      %3080 = vst [vmem:[#allocation3 + $0x20] sm:$0xff] %v3048
      %3081 = vst [vmem:[#allocation3 + $0x28] sm:$0xff] %v3049
      %3082 = vst [vmem:[#allocation3 + $0x30] sm:$0xff] %v3050
      %3083 = vst [vmem:[#allocation3 + $0x38] sm:$0xff] %v3051
      %3084 = vst [vmem:[#allocation3 + $0x40] sm:$0xff] %v3052
      %3085 = vst [vmem:[#allocation3 + $0x48] sm:$0xff] %v3053
      %3086 = vst [vmem:[#allocation3 + $0x50] sm:$0xff] %v3054
      %3087 = vst [vmem:[#allocation3 + $0x58] sm:$0xff] %v3055
      %3088 = vst [vmem:[#allocation3 + $0x60] sm:$0xff] %v3056
      %3089 = vst [vmem:[#allocation3 + $0x68] sm:$0xff] %v3057
      %3090 = vst [vmem:[#allocation3 + $0x70] sm:$0xff] %v3058
      %3091 = vst [vmem:[#allocation3 + $0x78] sm:$0xff] %v3059
      %3092 = vst [vmem:[#allocation3 + $0x80] sm:$0xff] %v3060
      %3093 = vst [vmem:[#allocation3 + $0x88] sm:$0xff] %v3061
      %3094 = vst [vmem:[#allocation3 + $0x90] sm:$0xff] %v3062
      %3095 = vst [vmem:[#allocation3 + $0x98] sm:$0xff] %v3063
      %3096 = vst [vmem:[#allocation3 + $0xa0] sm:$0xff] %v3064
      %3097 = vst [vmem:[#allocation3 + $0xa8] sm:$0xff] %v3065
      %3098 = vst [vmem:[#allocation3 + $0xb0] sm:$0xff] %v3066
      %3099 = vst [vmem:[#allocation3 + $0xb8] sm:$0xff] %v3067
      %3100 = vst [vmem:[#allocation3 + $0xc0] sm:$0xff] %v3068
      %3101 = vst [vmem:[#allocation3 + $0xc8] sm:$0xff] %v3069
      %3102 = vst [vmem:[#allocation3 + $0xd0] sm:$0xff] %v3070
      %3103 = vst [vmem:[#allocation3 + $0xd8] sm:$0xff] %v3071
      %3104 = vst [vmem:[#allocation3 + $0xe0] sm:$0xff] %v3072
      %3105 = vst [vmem:[#allocation3 + $0xe8] sm:$0xff] %v3073
      %3106 = vst [vmem:[#allocation3 + $0xf0] sm:$0xff] %v3074
      %3107 = vst [vmem:[#allocation3 + $0xf8] sm:$0xff] %v3075
      %v3108 = vld [vmem:[%s1258] sm:$0xff]
      %v3109 = vld [vmem:[%s1258 + $0x8] sm:$0xff]
      %v3110 = vld [vmem:[%s1258 + $0x10] sm:$0xff]
      %v3111 = vld [vmem:[%s1258 + $0x18] sm:$0xff]
      %v3112 = vld [vmem:[%s1258 + $0x20] sm:$0xff]
      %v3113 = vld [vmem:[%s1258 + $0x28] sm:$0xff]
      %v3114 = vld [vmem:[%s1258 + $0x30] sm:$0xff]
      %v3115 = vld [vmem:[%s1258 + $0x38] sm:$0xff]
      %v3116 = vld [vmem:[%s1258 + $0x40] sm:$0xff]
      %v3117 = vld [vmem:[%s1258 + $0x48] sm:$0xff]
      %v3118 = vld [vmem:[%s1258 + $0x50] sm:$0xff]
      %v3119 = vld [vmem:[%s1258 + $0x58] sm:$0xff]
      %v3120 = vld [vmem:[%s1258 + $0x60] sm:$0xff]
      %v3121 = vld [vmem:[%s1258 + $0x68] sm:$0xff]
      %v3122 = vld [vmem:[%s1258 + $0x70] sm:$0xff]
      %v3123 = vld [vmem:[%s1258 + $0x78] sm:$0xff]
      %v3124 = vld [vmem:[#allocation3] sm:$0xff]
      %v3125 = vld [vmem:[#allocation3 + $0x8] sm:$0xff]
      %v3126 = vld [vmem:[#allocation3 + $0x10] sm:$0xff]
      %v3127 = vld [vmem:[#allocation3 + $0x18] sm:$0xff]
      %v3128 = vld [vmem:[#allocation3 + $0x20] sm:$0xff]
      %v3129 = vld [vmem:[#allocation3 + $0x28] sm:$0xff]
      %v3130 = vld [vmem:[#allocation3 + $0x30] sm:$0xff]
      %v3131 = vld [vmem:[#allocation3 + $0x38] sm:$0xff]
      %v3132 = vld [vmem:[#allocation3 + $0x40] sm:$0xff]
      %v3133 = vld [vmem:[#allocation3 + $0x48] sm:$0xff]
      %v3134 = vld [vmem:[#allocation3 + $0x50] sm:$0xff]
      %v3135 = vld [vmem:[#allocation3 + $0x58] sm:$0xff]
      %v3136 = vld [vmem:[#allocation3 + $0x60] sm:$0xff]
      %v3137 = vld [vmem:[#allocation3 + $0x68] sm:$0xff]
      %v3138 = vld [vmem:[#allocation3 + $0x70] sm:$0xff]
      %v3139 = vld [vmem:[#allocation3 + $0x78] sm:$0xff]
      %v3140 = vld [vmem:[#allocation3 + $0x80] sm:$0xff]
      %v3141 = vld [vmem:[#allocation3 + $0x88] sm:$0xff]
      %v3142 = vld [vmem:[#allocation3 + $0x90] sm:$0xff]
      %v3143 = vld [vmem:[#allocation3 + $0x98] sm:$0xff]
      %v3144 = vld [vmem:[#allocation3 + $0xa0] sm:$0xff]
      %v3145 = vld [vmem:[#allocation3 + $0xa8] sm:$0xff]
      %v3146 = vld [vmem:[#allocation3 + $0xb0] sm:$0xff]
      %v3147 = vld [vmem:[#allocation3 + $0xb8] sm:$0xff]
      %v3148 = vld [vmem:[#allocation3 + $0xc0] sm:$0xff]
      %v3149 = vld [vmem:[#allocation3 + $0xc8] sm:$0xff]
      %v3150 = vld [vmem:[#allocation3 + $0xd0] sm:$0xff]
      %v3151 = vld [vmem:[#allocation3 + $0xd8] sm:$0xff]
      %v3152 = vld [vmem:[#allocation3 + $0xe0] sm:$0xff]
      %v3153 = vld [vmem:[#allocation3 + $0xe8] sm:$0xff]
      %v3154 = vld [vmem:[#allocation3 + $0xf0] sm:$0xff]
      %v3155 = vld [vmem:[#allocation3 + $0xf8] sm:$0xff]
      %s3156 = scalar_lea.vmem %s3, 6
      %v3157 = vld [vmem:[%s3156] sm:$0x3]
      %v3159 = vsel %vm526, %v3108, 0
      %v3162 = vsel %vm526, %v3109, 0
      %v3165 = vsel %vm526, %v3110, 0
      %v3168 = vsel %vm526, %v3111, 0
      %v3171 = vsel %vm526, %v3112, 0
      %v3174 = vsel %vm526, %v3113, 0
      %v3177 = vsel %vm526, %v3114, 0
      %v3180 = vsel %vm526, %v3115, 0
      %v3183 = vsel %vm526, %v3116, 0
      %v3186 = vsel %vm526, %v3117, 0
      %v3189 = vsel %vm526, %v3118, 0
      %v3192 = vsel %vm526, %v3119, 0
      %v3195 = vsel %vm526, %v3120, 0
      %v3198 = vsel %vm526, %v3121, 0
      %v3201 = vsel %vm526, %v3122, 0
      %v3204 = vsel %vm526, %v3123, 0
      %v3207 = vsel %vm1438, %v3157, 0
      %3209 = vmatprep.subr.bf16.mxu0 0
      %3210 = vmatpush1.bf16.msra.mxu0 %v3207
      %3211 = vmatprep.subr.bf16.mxu0 0
      %3212 = vmatpush1.bf16.msra.mxu0 0
      %3213 = vmatprep.subr.bf16.mxu0 0
      %3214 = vmatpush1.bf16.msra.mxu0 0
      %3215 = vmatprep.subr.bf16.mxu0 0
      %3216 = vmatpush1.bf16.msra.mxu0 0
      %3217 = vmatprep.subr.bf16.mxu0 0
      %3218 = vmatpush1.bf16.msra.mxu0 0
      %3219 = vmatprep.subr.bf16.mxu0 0
      %3220 = vmatpush1.bf16.msra.mxu0 0
      %3221 = vmatprep.subr.bf16.mxu0 0
      %3222 = vmatpush1.bf16.msra.mxu0 0
      %3223 = vmatprep.subr.bf16.mxu0 0
      %3224 = vmatpush1.bf16.msra.mxu0 0
      %3225 = vmatprep.subr.bf16.mxu0 0
      %3226 = vmatpush1.bf16.msra.mxu0 0
      %3227 = vmatprep.subr.bf16.mxu0 0
      %3228 = vmatpush1.bf16.msra.mxu0 0
      %3229 = vmatprep.subr.bf16.mxu0 0
      %3230 = vmatpush1.bf16.msra.mxu0 0
      %3231 = vmatprep.subr.bf16.mxu0 0
      %3232 = vmatpush1.bf16.msra.mxu0 0
      %3233 = vmatprep.subr.bf16.mxu0 0
      %3234 = vmatpush1.bf16.msra.mxu0 0
      %3235 = vmatprep.subr.bf16.mxu0 0
      %3236 = vmatpush1.bf16.msra.mxu0 0
      %3237 = vmatprep.subr.bf16.mxu0 0
      %3238 = vmatpush1.bf16.msra.mxu0 0
      %3239 = vmatprep.subr.bf16.mxu0 0
      %3240 = vmatpush1.bf16.msra.mxu0 0
      %3241 = vmatprep.mubr.bf16.mxu0 0
      %3242 = vmatmul.mubr.bf16.gmra.mrb[0].mxu0 %v3159
      %v3243 = vpop.f32.mrb[0].mxu0
      %v3244 = vadd.f32 0.0, %v3243
      %v3245 = vpop.f32.mrb[0].mxu0
      %v3246 = vpop.f32.mrb[0].mxu0
      %v3247 = vadd.f32 0.0, %v3246
      %v3248 = vpop.f32.mrb[0].mxu0
      %3249 = vmatprep.mubr.bf16.mxu0 0
      %3250 = vmatmul.mubr.bf16.gmra.mrb[0].mxu0 %v3162
      %v3251 = vpop.f32.mrb[0].mxu0
      %v3252 = vadd.f32 0.0, %v3251
      %v3253 = vpop.f32.mrb[0].mxu0
      %v3254 = vpop.f32.mrb[0].mxu0
      %v3255 = vadd.f32 0.0, %v3254
      %v3256 = vpop.f32.mrb[0].mxu0
      %3257 = vmatprep.mubr.bf16.mxu0 0
      %3258 = vmatmul.mubr.bf16.gmra.mrb[0].mxu0 %v3165
      %v3259 = vpop.f32.mrb[0].mxu0
      %v3260 = vadd.f32 0.0, %v3259
      %v3261 = vpop.f32.mrb[0].mxu0
      %v3262 = vpop.f32.mrb[0].mxu0
      %v3263 = vadd.f32 0.0, %v3262
      %v3264 = vpop.f32.mrb[0].mxu0
      %3265 = vmatprep.mubr.bf16.mxu0 0
      %3266 = vmatmul.mubr.bf16.gmra.mrb[0].mxu0 %v3168
      %v3267 = vpop.f32.mrb[0].mxu0
      %v3268 = vadd.f32 0.0, %v3267
      %v3269 = vpop.f32.mrb[0].mxu0
      %v3270 = vpop.f32.mrb[0].mxu0
      %v3271 = vadd.f32 0.0, %v3270
      %v3272 = vpop.f32.mrb[0].mxu0
      %3273 = vmatprep.mubr.bf16.mxu0 0
      %3274 = vmatmul.mubr.bf16.gmra.mrb[0].mxu0 %v3171
      %v3275 = vpop.f32.mrb[0].mxu0
      %v3276 = vadd.f32 0.0, %v3275
      %v3277 = vpop.f32.mrb[0].mxu0
      %v3278 = vpop.f32.mrb[0].mxu0
      %v3279 = vadd.f32 0.0, %v3278
      %v3280 = vpop.f32.mrb[0].mxu0
      %3281 = vmatprep.mubr.bf16.mxu0 0
      %3282 = vmatmul.mubr.bf16.gmra.mrb[0].mxu0 %v3174
      %v3283 = vpop.f32.mrb[0].mxu0
      %v3284 = vadd.f32 0.0, %v3283
      %v3285 = vpop.f32.mrb[0].mxu0
      %v3286 = vpop.f32.mrb[0].mxu0
      %v3287 = vadd.f32 0.0, %v3286
      %v3288 = vpop.f32.mrb[0].mxu0
      %3289 = vmatprep.mubr.bf16.mxu0 0
      %3290 = vmatmul.mubr.bf16.gmra.mrb[0].mxu0 %v3177
      %v3291 = vpop.f32.mrb[0].mxu0
      %v3292 = vadd.f32 0.0, %v3291
      %v3293 = vpop.f32.mrb[0].mxu0
      %v3294 = vpop.f32.mrb[0].mxu0
      %v3295 = vadd.f32 0.0, %v3294
      %v3296 = vpop.f32.mrb[0].mxu0
      %3297 = vmatprep.mubr.bf16.mxu0 0
      %3298 = vmatmul.mubr.bf16.gmra.mrb[0].mxu0 %v3180
      %v3299 = vpop.f32.mrb[0].mxu0
      %v3300 = vadd.f32 0.0, %v3299
      %v3301 = vpop.f32.mrb[0].mxu0
      %v3302 = vpop.f32.mrb[0].mxu0
      %v3303 = vadd.f32 0.0, %v3302
      %v3304 = vpop.f32.mrb[0].mxu0
      %3305 = vmatprep.mubr.bf16.mxu0 0
      %3306 = vmatmul.mubr.bf16.gmra.mrb[0].mxu0 %v3183
      %v3307 = vpop.f32.mrb[0].mxu0
      %v3308 = vadd.f32 0.0, %v3307
      %v3309 = vpop.f32.mrb[0].mxu0
      %v3310 = vpop.f32.mrb[0].mxu0
      %v3311 = vadd.f32 0.0, %v3310
      %v3312 = vpop.f32.mrb[0].mxu0
      %3313 = vmatprep.mubr.bf16.mxu0 0
      %3314 = vmatmul.mubr.bf16.gmra.mrb[0].mxu0 %v3186
      %v3315 = vpop.f32.mrb[0].mxu0
      %v3316 = vadd.f32 0.0, %v3315
      %v3317 = vpop.f32.mrb[0].mxu0
      %v3318 = vpop.f32.mrb[0].mxu0
      %v3319 = vadd.f32 0.0, %v3318
      %v3320 = vpop.f32.mrb[0].mxu0
      %3321 = vmatprep.mubr.bf16.mxu0 0
      %3322 = vmatmul.mubr.bf16.gmra.mrb[0].mxu0 %v3189
      %v3323 = vpop.f32.mrb[0].mxu0
      %v3324 = vadd.f32 0.0, %v3323
      %v3325 = vpop.f32.mrb[0].mxu0
      %v3326 = vpop.f32.mrb[0].mxu0
      %v3327 = vadd.f32 0.0, %v3326
      %v3328 = vpop.f32.mrb[0].mxu0
      %3329 = vmatprep.mubr.bf16.mxu0 0
      %3330 = vmatmul.mubr.bf16.gmra.mrb[0].mxu0 %v3192
      %v3331 = vpop.f32.mrb[0].mxu0
      %v3332 = vadd.f32 0.0, %v3331
      %v3333 = vpop.f32.mrb[0].mxu0
      %v3334 = vpop.f32.mrb[0].mxu0
      %v3335 = vadd.f32 0.0, %v3334
      %v3336 = vpop.f32.mrb[0].mxu0
      %3337 = vmatprep.mubr.bf16.mxu0 0
      %3338 = vmatmul.mubr.bf16.gmra.mrb[0].mxu0 %v3195
      %v3339 = vpop.f32.mrb[0].mxu0
      %v3340 = vadd.f32 0.0, %v3339
      %v3341 = vpop.f32.mrb[0].mxu0
      %v3342 = vpop.f32.mrb[0].mxu0
      %v3343 = vadd.f32 0.0, %v3342
      %v3344 = vpop.f32.mrb[0].mxu0
      %3345 = vmatprep.mubr.bf16.mxu0 0
      %3346 = vmatmul.mubr.bf16.gmra.mrb[0].mxu0 %v3198
      %v3347 = vpop.f32.mrb[0].mxu0
      %v3348 = vadd.f32 0.0, %v3347
      %v3349 = vpop.f32.mrb[0].mxu0
      %v3350 = vpop.f32.mrb[0].mxu0
      %v3351 = vadd.f32 0.0, %v3350
      %v3352 = vpop.f32.mrb[0].mxu0
      %3353 = vmatprep.mubr.bf16.mxu0 0
      %3354 = vmatmul.mubr.bf16.gmra.mrb[0].mxu0 %v3201
      %v3355 = vpop.f32.mrb[0].mxu0
      %v3356 = vadd.f32 0.0, %v3355
      %v3357 = vpop.f32.mrb[0].mxu0
      %v3358 = vpop.f32.mrb[0].mxu0
      %v3359 = vadd.f32 0.0, %v3358
      %v3360 = vpop.f32.mrb[0].mxu0
      %3361 = vmatprep.mubr.bf16.mxu0 0
      %3362 = vmatmul.mubr.bf16.gmra.mrb[0].mxu0 %v3204
      %v3363 = vpop.f32.mrb[0].mxu0
      %v3364 = vadd.f32 0.0, %v3363
      %v3365 = vpop.f32.mrb[0].mxu0
      %v3366 = vpop.f32.mrb[0].mxu0
      %v3367 = vadd.f32 0.0, %v3366
      %v3368 = vpop.f32.mrb[0].mxu0
      %3369 = vdwg.mxu0
      %v3370 = vadd.f32 %v3124, %v3244
      %v3371 = vadd.f32 %v3125, %v3247
      %v3372 = vadd.f32 %v3126, %v3252
      %v3373 = vadd.f32 %v3127, %v3255
      %v3374 = vadd.f32 %v3128, %v3260
      %v3375 = vadd.f32 %v3129, %v3263
      %v3376 = vadd.f32 %v3130, %v3268
      %v3377 = vadd.f32 %v3131, %v3271
      %v3378 = vadd.f32 %v3132, %v3276
      %v3379 = vadd.f32 %v3133, %v3279
      %v3380 = vadd.f32 %v3134, %v3284
      %v3381 = vadd.f32 %v3135, %v3287
      %v3382 = vadd.f32 %v3136, %v3292
      %v3383 = vadd.f32 %v3137, %v3295
      %v3384 = vadd.f32 %v3138, %v3300
      %v3385 = vadd.f32 %v3139, %v3303
      %v3386 = vadd.f32 %v3140, %v3308
      %v3387 = vadd.f32 %v3141, %v3311
      %v3388 = vadd.f32 %v3142, %v3316
      %v3389 = vadd.f32 %v3143, %v3319
      %v3390 = vadd.f32 %v3144, %v3324
      %v3391 = vadd.f32 %v3145, %v3327
      %v3392 = vadd.f32 %v3146, %v3332
      %v3393 = vadd.f32 %v3147, %v3335
      %v3394 = vadd.f32 %v3148, %v3340
      %v3395 = vadd.f32 %v3149, %v3343
      %v3396 = vadd.f32 %v3150, %v3348
      %v3397 = vadd.f32 %v3151, %v3351
      %v3398 = vadd.f32 %v3152, %v3356
      %v3399 = vadd.f32 %v3153, %v3359
      %v3400 = vadd.f32 %v3154, %v3364
      %v3401 = vadd.f32 %v3155, %v3367
      %3402 = vst [vmem:[#allocation3] sm:$0xff] %v3370
      %3403 = vst [vmem:[#allocation3 + $0x8] sm:$0xff] %v3371
      %3404 = vst [vmem:[#allocation3 + $0x10] sm:$0xff] %v3372
      %3405 = vst [vmem:[#allocation3 + $0x18] sm:$0xff] %v3373
      %3406 = vst [vmem:[#allocation3 + $0x20] sm:$0xff] %v3374
      %3407 = vst [vmem:[#allocation3 + $0x28] sm:$0xff] %v3375
      %3408 = vst [vmem:[#allocation3 + $0x30] sm:$0xff] %v3376
      %3409 = vst [vmem:[#allocation3 + $0x38] sm:$0xff] %v3377
      %3410 = vst [vmem:[#allocation3 + $0x40] sm:$0xff] %v3378
      %3411 = vst [vmem:[#allocation3 + $0x48] sm:$0xff] %v3379
      %3412 = vst [vmem:[#allocation3 + $0x50] sm:$0xff] %v3380
      %3413 = vst [vmem:[#allocation3 + $0x58] sm:$0xff] %v3381
      %3414 = vst [vmem:[#allocation3 + $0x60] sm:$0xff] %v3382
      %3415 = vst [vmem:[#allocation3 + $0x68] sm:$0xff] %v3383
      %3416 = vst [vmem:[#allocation3 + $0x70] sm:$0xff] %v3384
      %3417 = vst [vmem:[#allocation3 + $0x78] sm:$0xff] %v3385
      %3418 = vst [vmem:[#allocation3 + $0x80] sm:$0xff] %v3386
      %3419 = vst [vmem:[#allocation3 + $0x88] sm:$0xff] %v3387
      %3420 = vst [vmem:[#allocation3 + $0x90] sm:$0xff] %v3388
      %3421 = vst [vmem:[#allocation3 + $0x98] sm:$0xff] %v3389
      %3422 = vst [vmem:[#allocation3 + $0xa0] sm:$0xff] %v3390
      %3423 = vst [vmem:[#allocation3 + $0xa8] sm:$0xff] %v3391
      %3424 = vst [vmem:[#allocation3 + $0xb0] sm:$0xff] %v3392
      %3425 = vst [vmem:[#allocation3 + $0xb8] sm:$0xff] %v3393
      %3426 = vst [vmem:[#allocation3 + $0xc0] sm:$0xff] %v3394
      %3427 = vst [vmem:[#allocation3 + $0xc8] sm:$0xff] %v3395
      %3428 = vst [vmem:[#allocation3 + $0xd0] sm:$0xff] %v3396
      %3429 = vst [vmem:[#allocation3 + $0xd8] sm:$0xff] %v3397
      %3430 = vst [vmem:[#allocation3 + $0xe0] sm:$0xff] %v3398
      %3431 = vst [vmem:[#allocation3 + $0xe8] sm:$0xff] %v3399
      %3432 = vst [vmem:[#allocation3 + $0xf0] sm:$0xff] %v3400
      %3433 = vst [vmem:[#allocation3 + $0xf8] sm:$0xff] %v3401
      %v3434 = vld [vmem:[%s2320] sm:$0xff]
      %v3435 = vld [vmem:[%s2320 + $0x8] sm:$0xff]
      %v3436 = vld [vmem:[%s2320 + $0x10] sm:$0xff]
      %v3437 = vld [vmem:[%s2320 + $0x18] sm:$0xff]
      %v3438 = vld [vmem:[%s2320 + $0x20] sm:$0xff]
      %v3439 = vld [vmem:[%s2320 + $0x28] sm:$0xff]
      %v3440 = vld [vmem:[%s2320 + $0x30] sm:$0xff]
      %v3441 = vld [vmem:[%s2320 + $0x38] sm:$0xff]
      %v3442 = vld [vmem:[%s2320 + $0x40] sm:$0xff]
      %v3443 = vld [vmem:[%s2320 + $0x48] sm:$0xff]
      %v3444 = vld [vmem:[%s2320 + $0x50] sm:$0xff]
      %v3445 = vld [vmem:[%s2320 + $0x58] sm:$0xff]
      %v3446 = vld [vmem:[%s2320 + $0x60] sm:$0xff]
      %v3447 = vld [vmem:[%s2320 + $0x68] sm:$0xff]
      %v3448 = vld [vmem:[%s2320 + $0x70] sm:$0xff]
      %v3449 = vld [vmem:[%s2320 + $0x78] sm:$0xff]
      %v3450 = vld [vmem:[#allocation3] sm:$0xff]
      %v3451 = vld [vmem:[#allocation3 + $0x8] sm:$0xff]
      %v3452 = vld [vmem:[#allocation3 + $0x10] sm:$0xff]
      %v3453 = vld [vmem:[#allocation3 + $0x18] sm:$0xff]
      %v3454 = vld [vmem:[#allocation3 + $0x20] sm:$0xff]
      %v3455 = vld [vmem:[#allocation3 + $0x28] sm:$0xff]
      %v3456 = vld [vmem:[#allocation3 + $0x30] sm:$0xff]
      %v3457 = vld [vmem:[#allocation3 + $0x38] sm:$0xff]
      %v3458 = vld [vmem:[#allocation3 + $0x40] sm:$0xff]
      %v3459 = vld [vmem:[#allocation3 + $0x48] sm:$0xff]
      %v3460 = vld [vmem:[#allocation3 + $0x50] sm:$0xff]
      %v3461 = vld [vmem:[#allocation3 + $0x58] sm:$0xff]
      %v3462 = vld [vmem:[#allocation3 + $0x60] sm:$0xff]
      %v3463 = vld [vmem:[#allocation3 + $0x68] sm:$0xff]
      %v3464 = vld [vmem:[#allocation3 + $0x70] sm:$0xff]
      %v3465 = vld [vmem:[#allocation3 + $0x78] sm:$0xff]
      %v3466 = vld [vmem:[#allocation3 + $0x80] sm:$0xff]
      %v3467 = vld [vmem:[#allocation3 + $0x88] sm:$0xff]
      %v3468 = vld [vmem:[#allocation3 + $0x90] sm:$0xff]
      %v3469 = vld [vmem:[#allocation3 + $0x98] sm:$0xff]
      %v3470 = vld [vmem:[#allocation3 + $0xa0] sm:$0xff]
      %v3471 = vld [vmem:[#allocation3 + $0xa8] sm:$0xff]
      %v3472 = vld [vmem:[#allocation3 + $0xb0] sm:$0xff]
      %v3473 = vld [vmem:[#allocation3 + $0xb8] sm:$0xff]
      %v3474 = vld [vmem:[#allocation3 + $0xc0] sm:$0xff]
      %v3475 = vld [vmem:[#allocation3 + $0xc8] sm:$0xff]
      %v3476 = vld [vmem:[#allocation3 + $0xd0] sm:$0xff]
      %v3477 = vld [vmem:[#allocation3 + $0xd8] sm:$0xff]
      %v3478 = vld [vmem:[#allocation3 + $0xe0] sm:$0xff]
      %v3479 = vld [vmem:[#allocation3 + $0xe8] sm:$0xff]
      %v3480 = vld [vmem:[#allocation3 + $0xf0] sm:$0xff]
      %v3481 = vld [vmem:[#allocation3 + $0xf8] sm:$0xff]
      %s3482 = scalar_lea.vmem %s3, 12
      %v3483 = vld [vmem:[%s3482] sm:$0x3]
      %v3485 = vsel %vm526, %v3434, 0
      %v3488 = vsel %vm526, %v3435, 0
      %v3491 = vsel %vm526, %v3436, 0
      %v3494 = vsel %vm526, %v3437, 0
      %v3497 = vsel %vm526, %v3438, 0
      %v3500 = vsel %vm526, %v3439, 0
      %v3503 = vsel %vm526, %v3440, 0
      %v3506 = vsel %vm526, %v3441, 0
      %v3509 = vsel %vm526, %v3442, 0
      %v3512 = vsel %vm526, %v3443, 0
      %v3515 = vsel %vm526, %v3444, 0
      %v3518 = vsel %vm526, %v3445, 0
      %v3521 = vsel %vm526, %v3446, 0
      %v3524 = vsel %vm526, %v3447, 0
      %v3527 = vsel %vm526, %v3448, 0
      %v3530 = vsel %vm526, %v3449, 0
      %v3533 = vsel %vm1438, %v3483, 0
      %3535 = vmatprep.subr.bf16.mxu0 0
      %3536 = vmatpush1.bf16.msra.mxu0 %v3533
      %3537 = vmatprep.subr.bf16.mxu0 0
      %3538 = vmatpush1.bf16.msra.mxu0 0
      %3539 = vmatprep.subr.bf16.mxu0 0
      %3540 = vmatpush1.bf16.msra.mxu0 0
      %3541 = vmatprep.subr.bf16.mxu0 0
      %3542 = vmatpush1.bf16.msra.mxu0 0
      %3543 = vmatprep.subr.bf16.mxu0 0
      %3544 = vmatpush1.bf16.msra.mxu0 0
      %3545 = vmatprep.subr.bf16.mxu0 0
      %3546 = vmatpush1.bf16.msra.mxu0 0
      %3547 = vmatprep.subr.bf16.mxu0 0
      %3548 = vmatpush1.bf16.msra.mxu0 0
      %3549 = vmatprep.subr.bf16.mxu0 0
      %3550 = vmatpush1.bf16.msra.mxu0 0
      %3551 = vmatprep.subr.bf16.mxu0 0
      %3552 = vmatpush1.bf16.msra.mxu0 0
      %3553 = vmatprep.subr.bf16.mxu0 0
      %3554 = vmatpush1.bf16.msra.mxu0 0
      %3555 = vmatprep.subr.bf16.mxu0 0
      %3556 = vmatpush1.bf16.msra.mxu0 0
      %3557 = vmatprep.subr.bf16.mxu0 0
      %3558 = vmatpush1.bf16.msra.mxu0 0
      %3559 = vmatprep.subr.bf16.mxu0 0
      %3560 = vmatpush1.bf16.msra.mxu0 0
      %3561 = vmatprep.subr.bf16.mxu0 0
      %3562 = vmatpush1.bf16.msra.mxu0 0
      %3563 = vmatprep.subr.bf16.mxu0 0
      %3564 = vmatpush1.bf16.msra.mxu0 0
      %3565 = vmatprep.subr.bf16.mxu0 0
      %3566 = vmatpush1.bf16.msra.mxu0 0
      %3567 = vmatprep.mubr.bf16.mxu0 0
      %3568 = vmatmul.mubr.bf16.gmra.mrb[0].mxu0 %v3485
      %v3569 = vpop.f32.mrb[0].mxu0
      %v3570 = vadd.f32 0.0, %v3569
      %v3571 = vpop.f32.mrb[0].mxu0
      %v3572 = vpop.f32.mrb[0].mxu0
      %v3573 = vadd.f32 0.0, %v3572
      %v3574 = vpop.f32.mrb[0].mxu0
      %3575 = vmatprep.mubr.bf16.mxu0 0
      %3576 = vmatmul.mubr.bf16.gmra.mrb[0].mxu0 %v3488
      %v3577 = vpop.f32.mrb[0].mxu0
      %v3578 = vadd.f32 0.0, %v3577
      %v3579 = vpop.f32.mrb[0].mxu0
      %v3580 = vpop.f32.mrb[0].mxu0
      %v3581 = vadd.f32 0.0, %v3580
      %v3582 = vpop.f32.mrb[0].mxu0
      %3583 = vmatprep.mubr.bf16.mxu0 0
      %3584 = vmatmul.mubr.bf16.gmra.mrb[0].mxu0 %v3491
      %v3585 = vpop.f32.mrb[0].mxu0
      %v3586 = vadd.f32 0.0, %v3585
      %v3587 = vpop.f32.mrb[0].mxu0
      %v3588 = vpop.f32.mrb[0].mxu0
      %v3589 = vadd.f32 0.0, %v3588
      %v3590 = vpop.f32.mrb[0].mxu0
      %3591 = vmatprep.mubr.bf16.mxu0 0
      %3592 = vmatmul.mubr.bf16.gmra.mrb[0].mxu0 %v3494
      %v3593 = vpop.f32.mrb[0].mxu0
      %v3594 = vadd.f32 0.0, %v3593
      %v3595 = vpop.f32.mrb[0].mxu0
      %v3596 = vpop.f32.mrb[0].mxu0
      %v3597 = vadd.f32 0.0, %v3596
      %v3598 = vpop.f32.mrb[0].mxu0
      %3599 = vmatprep.mubr.bf16.mxu0 0
      %3600 = vmatmul.mubr.bf16.gmra.mrb[0].mxu0 %v3497
      %v3601 = vpop.f32.mrb[0].mxu0
      %v3602 = vadd.f32 0.0, %v3601
      %v3603 = vpop.f32.mrb[0].mxu0
      %v3604 = vpop.f32.mrb[0].mxu0
      %v3605 = vadd.f32 0.0, %v3604
      %v3606 = vpop.f32.mrb[0].mxu0
      %3607 = vmatprep.mubr.bf16.mxu0 0
      %3608 = vmatmul.mubr.bf16.gmra.mrb[0].mxu0 %v3500
      %v3609 = vpop.f32.mrb[0].mxu0
      %v3610 = vadd.f32 0.0, %v3609
      %v3611 = vpop.f32.mrb[0].mxu0
      %v3612 = vpop.f32.mrb[0].mxu0
      %v3613 = vadd.f32 0.0, %v3612
      %v3614 = vpop.f32.mrb[0].mxu0
      %3615 = vmatprep.mubr.bf16.mxu0 0
      %3616 = vmatmul.mubr.bf16.gmra.mrb[0].mxu0 %v3503
      %v3617 = vpop.f32.mrb[0].mxu0
      %v3618 = vadd.f32 0.0, %v3617
      %v3619 = vpop.f32.mrb[0].mxu0
      %v3620 = vpop.f32.mrb[0].mxu0
      %v3621 = vadd.f32 0.0, %v3620
      %v3622 = vpop.f32.mrb[0].mxu0
      %3623 = vmatprep.mubr.bf16.mxu0 0
      %3624 = vmatmul.mubr.bf16.gmra.mrb[0].mxu0 %v3506
      %v3625 = vpop.f32.mrb[0].mxu0
      %v3626 = vadd.f32 0.0, %v3625
      %v3627 = vpop.f32.mrb[0].mxu0
      %v3628 = vpop.f32.mrb[0].mxu0
      %v3629 = vadd.f32 0.0, %v3628
      %v3630 = vpop.f32.mrb[0].mxu0
      %3631 = vmatprep.mubr.bf16.mxu0 0
      %3632 = vmatmul.mubr.bf16.gmra.mrb[0].mxu0 %v3509
      %v3633 = vpop.f32.mrb[0].mxu0
      %v3634 = vadd.f32 0.0, %v3633
      %v3635 = vpop.f32.mrb[0].mxu0
      %v3636 = vpop.f32.mrb[0].mxu0
      %v3637 = vadd.f32 0.0, %v3636
      %v3638 = vpop.f32.mrb[0].mxu0
      %3639 = vmatprep.mubr.bf16.mxu0 0
      %3640 = vmatmul.mubr.bf16.gmra.mrb[0].mxu0 %v3512
      %v3641 = vpop.f32.mrb[0].mxu0
      %v3642 = vadd.f32 0.0, %v3641
      %v3643 = vpop.f32.mrb[0].mxu0
      %v3644 = vpop.f32.mrb[0].mxu0
      %v3645 = vadd.f32 0.0, %v3644
      %v3646 = vpop.f32.mrb[0].mxu0
      %3647 = vmatprep.mubr.bf16.mxu0 0
      %3648 = vmatmul.mubr.bf16.gmra.mrb[0].mxu0 %v3515
      %v3649 = vpop.f32.mrb[0].mxu0
      %v3650 = vadd.f32 0.0, %v3649
      %v3651 = vpop.f32.mrb[0].mxu0
      %v3652 = vpop.f32.mrb[0].mxu0
      %v3653 = vadd.f32 0.0, %v3652
      %v3654 = vpop.f32.mrb[0].mxu0
      %3655 = vmatprep.mubr.bf16.mxu0 0
      %3656 = vmatmul.mubr.bf16.gmra.mrb[0].mxu0 %v3518
      %v3657 = vpop.f32.mrb[0].mxu0
      %v3658 = vadd.f32 0.0, %v3657
      %v3659 = vpop.f32.mrb[0].mxu0
      %v3660 = vpop.f32.mrb[0].mxu0
      %v3661 = vadd.f32 0.0, %v3660
      %v3662 = vpop.f32.mrb[0].mxu0
      %3663 = vmatprep.mubr.bf16.mxu0 0
      %3664 = vmatmul.mubr.bf16.gmra.mrb[0].mxu0 %v3521
      %v3665 = vpop.f32.mrb[0].mxu0
      %v3666 = vadd.f32 0.0, %v3665
      %v3667 = vpop.f32.mrb[0].mxu0
      %v3668 = vpop.f32.mrb[0].mxu0
      %v3669 = vadd.f32 0.0, %v3668
      %v3670 = vpop.f32.mrb[0].mxu0
      %3671 = vmatprep.mubr.bf16.mxu0 0
      %3672 = vmatmul.mubr.bf16.gmra.mrb[0].mxu0 %v3524
      %v3673 = vpop.f32.mrb[0].mxu0
      %v3674 = vadd.f32 0.0, %v3673
      %v3675 = vpop.f32.mrb[0].mxu0
      %v3676 = vpop.f32.mrb[0].mxu0
      %v3677 = vadd.f32 0.0, %v3676
      %v3678 = vpop.f32.mrb[0].mxu0
      %3679 = vmatprep.mubr.bf16.mxu0 0
      %3680 = vmatmul.mubr.bf16.gmra.mrb[0].mxu0 %v3527
      %v3681 = vpop.f32.mrb[0].mxu0
      %v3682 = vadd.f32 0.0, %v3681
      %v3683 = vpop.f32.mrb[0].mxu0
      %v3684 = vpop.f32.mrb[0].mxu0
      %v3685 = vadd.f32 0.0, %v3684
      %v3686 = vpop.f32.mrb[0].mxu0
      %3687 = vmatprep.mubr.bf16.mxu0 0
      %3688 = vmatmul.mubr.bf16.gmra.mrb[0].mxu0 %v3530
      %v3689 = vpop.f32.mrb[0].mxu0
      %v3690 = vadd.f32 0.0, %v3689
      %v3691 = vpop.f32.mrb[0].mxu0
      %v3692 = vpop.f32.mrb[0].mxu0
      %v3693 = vadd.f32 0.0, %v3692
      %v3694 = vpop.f32.mrb[0].mxu0
      %3695 = vdwg.mxu0
      %v3696 = vadd.f32 %v3450, %v3570
      %v3697 = vadd.f32 %v3451, %v3573
      %v3698 = vadd.f32 %v3452, %v3578
      %v3699 = vadd.f32 %v3453, %v3581
      %v3700 = vadd.f32 %v3454, %v3586
      %v3701 = vadd.f32 %v3455, %v3589
      %v3702 = vadd.f32 %v3456, %v3594
      %v3703 = vadd.f32 %v3457, %v3597
      %v3704 = vadd.f32 %v3458, %v3602
      %v3705 = vadd.f32 %v3459, %v3605
      %v3706 = vadd.f32 %v3460, %v3610
      %v3707 = vadd.f32 %v3461, %v3613
      %v3708 = vadd.f32 %v3462, %v3618
      %v3709 = vadd.f32 %v3463, %v3621
      %v3710 = vadd.f32 %v3464, %v3626
      %v3711 = vadd.f32 %v3465, %v3629
      %v3712 = vadd.f32 %v3466, %v3634
      %v3713 = vadd.f32 %v3467, %v3637
      %v3714 = vadd.f32 %v3468, %v3642
      %v3715 = vadd.f32 %v3469, %v3645
      %v3716 = vadd.f32 %v3470, %v3650
      %v3717 = vadd.f32 %v3471, %v3653
      %v3718 = vadd.f32 %v3472, %v3658
      %v3719 = vadd.f32 %v3473, %v3661
      %v3720 = vadd.f32 %v3474, %v3666
      %v3721 = vadd.f32 %v3475, %v3669
      %v3722 = vadd.f32 %v3476, %v3674
      %v3723 = vadd.f32 %v3477, %v3677
      %v3724 = vadd.f32 %v3478, %v3682
      %v3725 = vadd.f32 %v3479, %v3685
      %v3726 = vadd.f32 %v3480, %v3690
      %v3727 = vadd.f32 %v3481, %v3693
      %3728 = vst [vmem:[#allocation3] sm:$0xff] %v3696
      %3729 = vst [vmem:[#allocation3 + $0x8] sm:$0xff] %v3697
      %3730 = vst [vmem:[#allocation3 + $0x10] sm:$0xff] %v3698
      %3731 = vst [vmem:[#allocation3 + $0x18] sm:$0xff] %v3699
      %3732 = vst [vmem:[#allocation3 + $0x20] sm:$0xff] %v3700
      %3733 = vst [vmem:[#allocation3 + $0x28] sm:$0xff] %v3701
      %3734 = vst [vmem:[#allocation3 + $0x30] sm:$0xff] %v3702
      %3735 = vst [vmem:[#allocation3 + $0x38] sm:$0xff] %v3703
      %3736 = vst [vmem:[#allocation3 + $0x40] sm:$0xff] %v3704
      %3737 = vst [vmem:[#allocation3 + $0x48] sm:$0xff] %v3705
      %3738 = vst [vmem:[#allocation3 + $0x50] sm:$0xff] %v3706
      %3739 = vst [vmem:[#allocation3 + $0x58] sm:$0xff] %v3707
      %3740 = vst [vmem:[#allocation3 + $0x60] sm:$0xff] %v3708
      %3741 = vst [vmem:[#allocation3 + $0x68] sm:$0xff] %v3709
      %3742 = vst [vmem:[#allocation3 + $0x70] sm:$0xff] %v3710
      %3743 = vst [vmem:[#allocation3 + $0x78] sm:$0xff] %v3711
      %3744 = vst [vmem:[#allocation3 + $0x80] sm:$0xff] %v3712
      %3745 = vst [vmem:[#allocation3 + $0x88] sm:$0xff] %v3713
      %3746 = vst [vmem:[#allocation3 + $0x90] sm:$0xff] %v3714
      %3747 = vst [vmem:[#allocation3 + $0x98] sm:$0xff] %v3715
      %3748 = vst [vmem:[#allocation3 + $0xa0] sm:$0xff] %v3716
      %3749 = vst [vmem:[#allocation3 + $0xa8] sm:$0xff] %v3717
      %3750 = vst [vmem:[#allocation3 + $0xb0] sm:$0xff] %v3718
      %3751 = vst [vmem:[#allocation3 + $0xb8] sm:$0xff] %v3719
      %3752 = vst [vmem:[#allocation3 + $0xc0] sm:$0xff] %v3720
      %3753 = vst [vmem:[#allocation3 + $0xc8] sm:$0xff] %v3721
      %3754 = vst [vmem:[#allocation3 + $0xd0] sm:$0xff] %v3722
      %3755 = vst [vmem:[#allocation3 + $0xd8] sm:$0xff] %v3723
      %3756 = vst [vmem:[#allocation3 + $0xe0] sm:$0xff] %v3724
      %3757 = vst [vmem:[#allocation3 + $0xe8] sm:$0xff] %v3725
      %3758 = vst [vmem:[#allocation3 + $0xf0] sm:$0xff] %v3726
      %3759 = vst [vmem:[#allocation3 + $0xf8] sm:$0xff] %v3727
      %s3760 = scalar_lea.vmem [#allocation2], 296
      %v3761 = vld [vmem:[%s3760] sm:$0xff]
      %v3762 = vld [vmem:[%s3760 + $0x8] sm:$0xff]
      %v3763 = vld [vmem:[%s3760 + $0x10] sm:$0xff]
      %v3764 = vld [vmem:[%s3760 + $0x18] sm:$0xff]
      %v3765 = vld [vmem:[%s3760 + $0x20] sm:$0xff]
      %v3766 = vld [vmem:[%s3760 + $0x28] sm:$0xff]
      %v3767 = vld [vmem:[%s3760 + $0x30] sm:$0xff]
      %v3768 = vld [vmem:[%s3760 + $0x38] sm:$0xff]
      %v3769 = vld [vmem:[%s3760 + $0x40] sm:$0xff]
      %v3770 = vld [vmem:[%s3760 + $0x48] sm:$0xff]
      %v3771 = vld [vmem:[%s3760 + $0x50] sm:$0xff]
      %v3772 = vld [vmem:[%s3760 + $0x58] sm:$0xff]
      %v3773 = vld [vmem:[%s3760 + $0x60] sm:$0xff]
      %v3774 = vld [vmem:[%s3760 + $0x68] sm:$0xff]
      %v3775 = vld [vmem:[%s3760 + $0x70] sm:$0xff]
      %v3776 = vld [vmem:[%s3760 + $0x78] sm:$0xff]
      %v3777 = vld [vmem:[#allocation3] sm:$0xff]
      %v3778 = vld [vmem:[#allocation3 + $0x8] sm:$0xff]
      %v3779 = vld [vmem:[#allocation3 + $0x10] sm:$0xff]
      %v3780 = vld [vmem:[#allocation3 + $0x18] sm:$0xff]
      %v3781 = vld [vmem:[#allocation3 + $0x20] sm:$0xff]
      %v3782 = vld [vmem:[#allocation3 + $0x28] sm:$0xff]
      %v3783 = vld [vmem:[#allocation3 + $0x30] sm:$0xff]
      %v3784 = vld [vmem:[#allocation3 + $0x38] sm:$0xff]
      %v3785 = vld [vmem:[#allocation3 + $0x40] sm:$0xff]
      %v3786 = vld [vmem:[#allocation3 + $0x48] sm:$0xff]
      %v3787 = vld [vmem:[#allocation3 + $0x50] sm:$0xff]
      %v3788 = vld [vmem:[#allocation3 + $0x58] sm:$0xff]
      %v3789 = vld [vmem:[#allocation3 + $0x60] sm:$0xff]
      %v3790 = vld [vmem:[#allocation3 + $0x68] sm:$0xff]
      %v3791 = vld [vmem:[#allocation3 + $0x70] sm:$0xff]
      %v3792 = vld [vmem:[#allocation3 + $0x78] sm:$0xff]
      %v3793 = vld [vmem:[#allocation3 + $0x80] sm:$0xff]
      %v3794 = vld [vmem:[#allocation3 + $0x88] sm:$0xff]
      %v3795 = vld [vmem:[#allocation3 + $0x90] sm:$0xff]
      %v3796 = vld [vmem:[#allocation3 + $0x98] sm:$0xff]
      %v3797 = vld [vmem:[#allocation3 + $0xa0] sm:$0xff]
      %v3798 = vld [vmem:[#allocation3 + $0xa8] sm:$0xff]
      %v3799 = vld [vmem:[#allocation3 + $0xb0] sm:$0xff]
      %v3800 = vld [vmem:[#allocation3 + $0xb8] sm:$0xff]
      %v3801 = vld [vmem:[#allocation3 + $0xc0] sm:$0xff]
      %v3802 = vld [vmem:[#allocation3 + $0xc8] sm:$0xff]
      %v3803 = vld [vmem:[#allocation3 + $0xd0] sm:$0xff]
      %v3804 = vld [vmem:[#allocation3 + $0xd8] sm:$0xff]
      %v3805 = vld [vmem:[#allocation3 + $0xe0] sm:$0xff]
      %v3806 = vld [vmem:[#allocation3 + $0xe8] sm:$0xff]
      %v3807 = vld [vmem:[#allocation3 + $0xf0] sm:$0xff]
      %v3808 = vld [vmem:[#allocation3 + $0xf8] sm:$0xff]
      %s3809 = scalar_lea.vmem %s3, 14
      %v3810 = vld [vmem:[%s3809] sm:$0x3]
      %v3812 = vsel %vm526, %v3761, 0
      %v3815 = vsel %vm526, %v3762, 0
      %v3818 = vsel %vm526, %v3763, 0
      %v3821 = vsel %vm526, %v3764, 0
      %v3824 = vsel %vm526, %v3765, 0
      %v3827 = vsel %vm526, %v3766, 0
      %v3830 = vsel %vm526, %v3767, 0
      %v3833 = vsel %vm526, %v3768, 0
      %v3836 = vsel %vm526, %v3769, 0
      %v3839 = vsel %vm526, %v3770, 0
      %v3842 = vsel %vm526, %v3771, 0
      %v3845 = vsel %vm526, %v3772, 0
      %v3848 = vsel %vm526, %v3773, 0
      %v3851 = vsel %vm526, %v3774, 0
      %v3854 = vsel %vm526, %v3775, 0
      %v3857 = vsel %vm526, %v3776, 0
      %v3860 = vsel %vm1438, %v3810, 0
      %3862 = vmatprep.subr.bf16.mxu0 0
      %3863 = vmatpush1.bf16.msra.mxu0 %v3860
      %3864 = vmatprep.subr.bf16.mxu0 0
      %3865 = vmatpush1.bf16.msra.mxu0 0
      %3866 = vmatprep.subr.bf16.mxu0 0
      %3867 = vmatpush1.bf16.msra.mxu0 0
      %3868 = vmatprep.subr.bf16.mxu0 0
      %3869 = vmatpush1.bf16.msra.mxu0 0
      %3870 = vmatprep.subr.bf16.mxu0 0
      %3871 = vmatpush1.bf16.msra.mxu0 0
      %3872 = vmatprep.subr.bf16.mxu0 0
      %3873 = vmatpush1.bf16.msra.mxu0 0
      %3874 = vmatprep.subr.bf16.mxu0 0
      %3875 = vmatpush1.bf16.msra.mxu0 0
      %3876 = vmatprep.subr.bf16.mxu0 0
      %3877 = vmatpush1.bf16.msra.mxu0 0
      %3878 = vmatprep.subr.bf16.mxu0 0
      %3879 = vmatpush1.bf16.msra.mxu0 0
      %3880 = vmatprep.subr.bf16.mxu0 0
      %3881 = vmatpush1.bf16.msra.mxu0 0
      %3882 = vmatprep.subr.bf16.mxu0 0
      %3883 = vmatpush1.bf16.msra.mxu0 0
      %3884 = vmatprep.subr.bf16.mxu0 0
      %3885 = vmatpush1.bf16.msra.mxu0 0
      %3886 = vmatprep.subr.bf16.mxu0 0
      %3887 = vmatpush1.bf16.msra.mxu0 0
      %3888 = vmatprep.subr.bf16.mxu0 0
      %3889 = vmatpush1.bf16.msra.mxu0 0
      %3890 = vmatprep.subr.bf16.mxu0 0
      %3891 = vmatpush1.bf16.msra.mxu0 0
      %3892 = vmatprep.subr.bf16.mxu0 0
      %3893 = vmatpush1.bf16.msra.mxu0 0
      %3894 = vmatprep.mubr.bf16.mxu0 0
      %3895 = vmatmul.mubr.bf16.gmra.mrb[0].mxu0 %v3812
      %v3896 = vpop.f32.mrb[0].mxu0
      %v3897 = vadd.f32 0.0, %v3896
      %v3898 = vpop.f32.mrb[0].mxu0
      %v3899 = vpop.f32.mrb[0].mxu0
      %v3900 = vadd.f32 0.0, %v3899
      %v3901 = vpop.f32.mrb[0].mxu0
      %3902 = vmatprep.mubr.bf16.mxu0 0
      %3903 = vmatmul.mubr.bf16.gmra.mrb[0].mxu0 %v3815
      %v3904 = vpop.f32.mrb[0].mxu0
      %v3905 = vadd.f32 0.0, %v3904
      %v3906 = vpop.f32.mrb[0].mxu0
      %v3907 = vpop.f32.mrb[0].mxu0
      %v3908 = vadd.f32 0.0, %v3907
      %v3909 = vpop.f32.mrb[0].mxu0
      %3910 = vmatprep.mubr.bf16.mxu0 0
      %3911 = vmatmul.mubr.bf16.gmra.mrb[0].mxu0 %v3818
      %v3912 = vpop.f32.mrb[0].mxu0
      %v3913 = vadd.f32 0.0, %v3912
      %v3914 = vpop.f32.mrb[0].mxu0
      %v3915 = vpop.f32.mrb[0].mxu0
      %v3916 = vadd.f32 0.0, %v3915
      %v3917 = vpop.f32.mrb[0].mxu0
      %3918 = vmatprep.mubr.bf16.mxu0 0
      %3919 = vmatmul.mubr.bf16.gmra.mrb[0].mxu0 %v3821
      %v3920 = vpop.f32.mrb[0].mxu0
      %v3921 = vadd.f32 0.0, %v3920
      %v3922 = vpop.f32.mrb[0].mxu0
      %v3923 = vpop.f32.mrb[0].mxu0
      %v3924 = vadd.f32 0.0, %v3923
      %v3925 = vpop.f32.mrb[0].mxu0
      %3926 = vmatprep.mubr.bf16.mxu0 0
      %3927 = vmatmul.mubr.bf16.gmra.mrb[0].mxu0 %v3824
      %v3928 = vpop.f32.mrb[0].mxu0
      %v3929 = vadd.f32 0.0, %v3928
      %v3930 = vpop.f32.mrb[0].mxu0
      %v3931 = vpop.f32.mrb[0].mxu0
      %v3932 = vadd.f32 0.0, %v3931
      %v3933 = vpop.f32.mrb[0].mxu0
      %3934 = vmatprep.mubr.bf16.mxu0 0
      %3935 = vmatmul.mubr.bf16.gmra.mrb[0].mxu0 %v3827
      %v3936 = vpop.f32.mrb[0].mxu0
      %v3937 = vadd.f32 0.0, %v3936
      %v3938 = vpop.f32.mrb[0].mxu0
      %v3939 = vpop.f32.mrb[0].mxu0
      %v3940 = vadd.f32 0.0, %v3939
      %v3941 = vpop.f32.mrb[0].mxu0
      %3942 = vmatprep.mubr.bf16.mxu0 0
      %3943 = vmatmul.mubr.bf16.gmra.mrb[0].mxu0 %v3830
      %v3944 = vpop.f32.mrb[0].mxu0
      %v3945 = vadd.f32 0.0, %v3944
      %v3946 = vpop.f32.mrb[0].mxu0
      %v3947 = vpop.f32.mrb[0].mxu0
      %v3948 = vadd.f32 0.0, %v3947
      %v3949 = vpop.f32.mrb[0].mxu0
      %3950 = vmatprep.mubr.bf16.mxu0 0
      %3951 = vmatmul.mubr.bf16.gmra.mrb[0].mxu0 %v3833
      %v3952 = vpop.f32.mrb[0].mxu0
      %v3953 = vadd.f32 0.0, %v3952
      %v3954 = vpop.f32.mrb[0].mxu0
      %v3955 = vpop.f32.mrb[0].mxu0
      %v3956 = vadd.f32 0.0, %v3955
      %v3957 = vpop.f32.mrb[0].mxu0
      %3958 = vmatprep.mubr.bf16.mxu0 0
      %3959 = vmatmul.mubr.bf16.gmra.mrb[0].mxu0 %v3836
      %v3960 = vpop.f32.mrb[0].mxu0
      %v3961 = vadd.f32 0.0, %v3960
      %v3962 = vpop.f32.mrb[0].mxu0
      %v3963 = vpop.f32.mrb[0].mxu0
      %v3964 = vadd.f32 0.0, %v3963
      %v3965 = vpop.f32.mrb[0].mxu0
      %3966 = vmatprep.mubr.bf16.mxu0 0
      %3967 = vmatmul.mubr.bf16.gmra.mrb[0].mxu0 %v3839
      %v3968 = vpop.f32.mrb[0].mxu0
      %v3969 = vadd.f32 0.0, %v3968
      %v3970 = vpop.f32.mrb[0].mxu0
      %v3971 = vpop.f32.mrb[0].mxu0
      %v3972 = vadd.f32 0.0, %v3971
      %v3973 = vpop.f32.mrb[0].mxu0
      %3974 = vmatprep.mubr.bf16.mxu0 0
      %3975 = vmatmul.mubr.bf16.gmra.mrb[0].mxu0 %v3842
      %v3976 = vpop.f32.mrb[0].mxu0
      %v3977 = vadd.f32 0.0, %v3976
      %v3978 = vpop.f32.mrb[0].mxu0
      %v3979 = vpop.f32.mrb[0].mxu0
      %v3980 = vadd.f32 0.0, %v3979
      %v3981 = vpop.f32.mrb[0].mxu0
      %3982 = vmatprep.mubr.bf16.mxu0 0
      %3983 = vmatmul.mubr.bf16.gmra.mrb[0].mxu0 %v3845
      %v3984 = vpop.f32.mrb[0].mxu0
      %v3985 = vadd.f32 0.0, %v3984
      %v3986 = vpop.f32.mrb[0].mxu0
      %v3987 = vpop.f32.mrb[0].mxu0
      %v3988 = vadd.f32 0.0, %v3987
      %v3989 = vpop.f32.mrb[0].mxu0
      %3990 = vmatprep.mubr.bf16.mxu0 0
      %3991 = vmatmul.mubr.bf16.gmra.mrb[0].mxu0 %v3848
      %v3992 = vpop.f32.mrb[0].mxu0
      %v3993 = vadd.f32 0.0, %v3992
      %v3994 = vpop.f32.mrb[0].mxu0
      %v3995 = vpop.f32.mrb[0].mxu0
      %v3996 = vadd.f32 0.0, %v3995
      %v3997 = vpop.f32.mrb[0].mxu0
      %3998 = vmatprep.mubr.bf16.mxu0 0
      %3999 = vmatmul.mubr.bf16.gmra.mrb[0].mxu0 %v3851
      %v4000 = vpop.f32.mrb[0].mxu0
      %v4001 = vadd.f32 0.0, %v4000
      %v4002 = vpop.f32.mrb[0].mxu0
      %v4003 = vpop.f32.mrb[0].mxu0
      %v4004 = vadd.f32 0.0, %v4003
      %v4005 = vpop.f32.mrb[0].mxu0
      %4006 = vmatprep.mubr.bf16.mxu0 0
      %4007 = vmatmul.mubr.bf16.gmra.mrb[0].mxu0 %v3854
      %v4008 = vpop.f32.mrb[0].mxu0
      %v4009 = vadd.f32 0.0, %v4008
      %v4010 = vpop.f32.mrb[0].mxu0
      %v4011 = vpop.f32.mrb[0].mxu0
      %v4012 = vadd.f32 0.0, %v4011
      %v4013 = vpop.f32.mrb[0].mxu0
      %4014 = vmatprep.mubr.bf16.mxu0 0
      %4015 = vmatmul.mubr.bf16.gmra.mrb[0].mxu0 %v3857
      %v4016 = vpop.f32.mrb[0].mxu0
      %v4017 = vadd.f32 0.0, %v4016
      %v4018 = vpop.f32.mrb[0].mxu0
      %v4019 = vpop.f32.mrb[0].mxu0
      %v4020 = vadd.f32 0.0, %v4019
      %v4021 = vpop.f32.mrb[0].mxu0
      %4022 = vdwg.mxu0
      %v4023 = vadd.f32 %v3777, %v3897
      %v4024 = vadd.f32 %v3778, %v3900
      %v4025 = vadd.f32 %v3779, %v3905
      %v4026 = vadd.f32 %v3780, %v3908
      %v4027 = vadd.f32 %v3781, %v3913
      %v4028 = vadd.f32 %v3782, %v3916
      %v4029 = vadd.f32 %v3783, %v3921
      %v4030 = vadd.f32 %v3784, %v3924
      %v4031 = vadd.f32 %v3785, %v3929
      %v4032 = vadd.f32 %v3786, %v3932
      %v4033 = vadd.f32 %v3787, %v3937
      %v4034 = vadd.f32 %v3788, %v3940
      %v4035 = vadd.f32 %v3789, %v3945
      %v4036 = vadd.f32 %v3790, %v3948
      %v4037 = vadd.f32 %v3791, %v3953
      %v4038 = vadd.f32 %v3792, %v3956
      %v4039 = vadd.f32 %v3793, %v3961
      %v4040 = vadd.f32 %v3794, %v3964
      %v4041 = vadd.f32 %v3795, %v3969
      %v4042 = vadd.f32 %v3796, %v3972
      %v4043 = vadd.f32 %v3797, %v3977
      %v4044 = vadd.f32 %v3798, %v3980
      %v4045 = vadd.f32 %v3799, %v3985
      %v4046 = vadd.f32 %v3800, %v3988
      %v4047 = vadd.f32 %v3801, %v3993
      %v4048 = vadd.f32 %v3802, %v3996
      %v4049 = vadd.f32 %v3803, %v4001
      %v4050 = vadd.f32 %v3804, %v4004
      %v4051 = vadd.f32 %v3805, %v4009
      %v4052 = vadd.f32 %v3806, %v4012
      %v4053 = vadd.f32 %v3807, %v4017
      %v4054 = vadd.f32 %v3808, %v4020
      %4055 = vst [vmem:[#allocation3] sm:$0xff] %v4023
      %4056 = vst [vmem:[#allocation3 + $0x8] sm:$0xff] %v4024
      %4057 = vst [vmem:[#allocation3 + $0x10] sm:$0xff] %v4025
      %4058 = vst [vmem:[#allocation3 + $0x18] sm:$0xff] %v4026
      %4059 = vst [vmem:[#allocation3 + $0x20] sm:$0xff] %v4027
      %4060 = vst [vmem:[#allocation3 + $0x28] sm:$0xff] %v4028
      %4061 = vst [vmem:[#allocation3 + $0x30] sm:$0xff] %v4029
      %4062 = vst [vmem:[#allocation3 + $0x38] sm:$0xff] %v4030
      %4063 = vst [vmem:[#allocation3 + $0x40] sm:$0xff] %v4031
      %4064 = vst [vmem:[#allocation3 + $0x48] sm:$0xff] %v4032
      %4065 = vst [vmem:[#allocation3 + $0x50] sm:$0xff] %v4033
      %4066 = vst [vmem:[#allocation3 + $0x58] sm:$0xff] %v4034
      %4067 = vst [vmem:[#allocation3 + $0x60] sm:$0xff] %v4035
      %4068 = vst [vmem:[#allocation3 + $0x68] sm:$0xff] %v4036
      %4069 = vst [vmem:[#allocation3 + $0x70] sm:$0xff] %v4037
      %4070 = vst [vmem:[#allocation3 + $0x78] sm:$0xff] %v4038
      %4071 = vst [vmem:[#allocation3 + $0x80] sm:$0xff] %v4039
      %4072 = vst [vmem:[#allocation3 + $0x88] sm:$0xff] %v4040
      %4073 = vst [vmem:[#allocation3 + $0x90] sm:$0xff] %v4041
      %4074 = vst [vmem:[#allocation3 + $0x98] sm:$0xff] %v4042
      %4075 = vst [vmem:[#allocation3 + $0xa0] sm:$0xff] %v4043
      %4076 = vst [vmem:[#allocation3 + $0xa8] sm:$0xff] %v4044
      %4077 = vst [vmem:[#allocation3 + $0xb0] sm:$0xff] %v4045
      %4078 = vst [vmem:[#allocation3 + $0xb8] sm:$0xff] %v4046
      %4079 = vst [vmem:[#allocation3 + $0xc0] sm:$0xff] %v4047
      %4080 = vst [vmem:[#allocation3 + $0xc8] sm:$0xff] %v4048
      %4081 = vst [vmem:[#allocation3 + $0xd0] sm:$0xff] %v4049
      %4082 = vst [vmem:[#allocation3 + $0xd8] sm:$0xff] %v4050
      %4083 = vst [vmem:[#allocation3 + $0xe0] sm:$0xff] %v4051
      %4084 = vst [vmem:[#allocation3 + $0xe8] sm:$0xff] %v4052
      %4085 = vst [vmem:[#allocation3 + $0xf0] sm:$0xff] %v4053
      %4086 = vst [vmem:[#allocation3 + $0xf8] sm:$0xff] %v4054
      %v4087 = vld [vmem:[#allocation3] sm:$0xff]
      %v4088 = vld [vmem:[#allocation3 + $0x8] sm:$0xff]
      %v4089 = vld [vmem:[#allocation3 + $0x10] sm:$0xff]
      %v4090 = vld [vmem:[#allocation3 + $0x18] sm:$0xff]
      %v4091 = vld [vmem:[#allocation3 + $0x20] sm:$0xff]
      %v4092 = vld [vmem:[#allocation3 + $0x28] sm:$0xff]
      %v4093 = vld [vmem:[#allocation3 + $0x30] sm:$0xff]
      %v4094 = vld [vmem:[#allocation3 + $0x38] sm:$0xff]
      %v4095 = vld [vmem:[#allocation3 + $0x40] sm:$0xff]
      %v4096 = vld [vmem:[#allocation3 + $0x48] sm:$0xff]
      %v4097 = vld [vmem:[#allocation3 + $0x50] sm:$0xff]
      %v4098 = vld [vmem:[#allocation3 + $0x58] sm:$0xff]
      %v4099 = vld [vmem:[#allocation3 + $0x60] sm:$0xff]
      %v4100 = vld [vmem:[#allocation3 + $0x68] sm:$0xff]
      %v4101 = vld [vmem:[#allocation3 + $0x70] sm:$0xff]
      %v4102 = vld [vmem:[#allocation3 + $0x78] sm:$0xff]
      %v4103 = vld [vmem:[#allocation3 + $0x80] sm:$0xff]
      %v4104 = vld [vmem:[#allocation3 + $0x88] sm:$0xff]
      %v4105 = vld [vmem:[#allocation3 + $0x90] sm:$0xff]
      %v4106 = vld [vmem:[#allocation3 + $0x98] sm:$0xff]
      %v4107 = vld [vmem:[#allocation3 + $0xa0] sm:$0xff]
      %v4108 = vld [vmem:[#allocation3 + $0xa8] sm:$0xff]
      %v4109 = vld [vmem:[#allocation3 + $0xb0] sm:$0xff]
      %v4110 = vld [vmem:[#allocation3 + $0xb8] sm:$0xff]
      %v4111 = vld [vmem:[#allocation3 + $0xc0] sm:$0xff]
      %v4112 = vld [vmem:[#allocation3 + $0xc8] sm:$0xff]
      %v4113 = vld [vmem:[#allocation3 + $0xd0] sm:$0xff]
      %v4114 = vld [vmem:[#allocation3 + $0xd8] sm:$0xff]
      %v4115 = vld [vmem:[#allocation3 + $0xe0] sm:$0xff]
      %v4116 = vld [vmem:[#allocation3 + $0xe8] sm:$0xff]
      %v4117 = vld [vmem:[#allocation3 + $0xf0] sm:$0xff]
      %v4118 = vld [vmem:[#allocation3 + $0xf8] sm:$0xff]
      %v4119 = vld [vmem:[%s4] sm:$0x1]
      %v4121 = vlaneseq
      %v4122 = vshrl.u32 %v4121, 7
      %v4123 = vsub.s32 0, %v4122
      %v4124 = vrot.slane %v4119, %v4123
      %v4126 = vadd.f32 %v4087, %v4124
      %v4127 = vadd.f32 %v4088, %v4124
      %v4128 = vadd.f32 %v4089, %v4124
      %v4129 = vadd.f32 %v4090, %v4124
      %v4130 = vadd.f32 %v4091, %v4124
      %v4131 = vadd.f32 %v4092, %v4124
      %v4132 = vadd.f32 %v4093, %v4124
      %v4133 = vadd.f32 %v4094, %v4124
      %v4134 = vadd.f32 %v4095, %v4124
      %v4135 = vadd.f32 %v4096, %v4124
      %v4136 = vadd.f32 %v4097, %v4124
      %v4137 = vadd.f32 %v4098, %v4124
      %v4138 = vadd.f32 %v4099, %v4124
      %v4139 = vadd.f32 %v4100, %v4124
      %v4140 = vadd.f32 %v4101, %v4124
      %v4141 = vadd.f32 %v4102, %v4124
      %v4142 = vadd.f32 %v4103, %v4124
      %v4143 = vadd.f32 %v4104, %v4124
      %v4144 = vadd.f32 %v4105, %v4124
      %v4145 = vadd.f32 %v4106, %v4124
      %v4146 = vadd.f32 %v4107, %v4124
      %v4147 = vadd.f32 %v4108, %v4124
      %v4148 = vadd.f32 %v4109, %v4124
      %v4149 = vadd.f32 %v4110, %v4124
      %v4150 = vadd.f32 %v4111, %v4124
      %v4151 = vadd.f32 %v4112, %v4124
      %v4152 = vadd.f32 %v4113, %v4124
      %v4153 = vadd.f32 %v4114, %v4124
      %v4154 = vadd.f32 %v4115, %v4124
      %v4155 = vadd.f32 %v4116, %v4124
      %v4156 = vadd.f32 %v4117, %v4124
      %v4157 = vadd.f32 %v4118, %v4124
      %s4158 = scalar_lea.vmem %s395, 16
      %4159 = vst [vmem:[%s4158] sm:$0xff] %v4126
      %4160 = vst [vmem:[%s4158 + $0x8] sm:$0xff] %v4127
      %4161 = vst [vmem:[%s4158 + $0x40] sm:$0xff] %v4128
      %4162 = vst [vmem:[%s4158 + $0x48] sm:$0xff] %v4129
      %4163 = vst [vmem:[%s4158 + $0x80] sm:$0xff] %v4130
      %4164 = vst [vmem:[%s4158 + $0x88] sm:$0xff] %v4131
      %4165 = vst [vmem:[%s4158 + $0xc0] sm:$0xff] %v4132
      %4166 = vst [vmem:[%s4158 + $0xc8] sm:$0xff] %v4133
      %4167 = vst [vmem:[%s4158 + $0x100] sm:$0xff] %v4134
      %4168 = vst [vmem:[%s4158 + $0x108] sm:$0xff] %v4135
      %4169 = vst [vmem:[%s4158 + $0x140] sm:$0xff] %v4136
      %4170 = vst [vmem:[%s4158 + $0x148] sm:$0xff] %v4137
      %4171 = vst [vmem:[%s4158 + $0x180] sm:$0xff] %v4138
      %4172 = vst [vmem:[%s4158 + $0x188] sm:$0xff] %v4139
      %4173 = vst [vmem:[%s4158 + $0x1c0] sm:$0xff] %v4140
      %4174 = vst [vmem:[%s4158 + $0x1c8] sm:$0xff] %v4141
      %4175 = vst [vmem:[%s4158 + $0x200] sm:$0xff] %v4142
      %4176 = vst [vmem:[%s4158 + $0x208] sm:$0xff] %v4143
      %4177 = vst [vmem:[%s4158 + $0x240] sm:$0xff] %v4144
      %4178 = vst [vmem:[%s4158 + $0x248] sm:$0xff] %v4145
      %4179 = vst [vmem:[%s4158 + $0x280] sm:$0xff] %v4146
      %4180 = vst [vmem:[%s4158 + $0x288] sm:$0xff] %v4147
      %4181 = vst [vmem:[%s4158 + $0x2c0] sm:$0xff] %v4148
      %4182 = vst [vmem:[%s4158 + $0x2c8] sm:$0xff] %v4149
      %4183 = vst [vmem:[%s4158 + $0x300] sm:$0xff] %v4150
      %4184 = vst [vmem:[%s4158 + $0x308] sm:$0xff] %v4151
      %4185 = vst [vmem:[%s4158 + $0x340] sm:$0xff] %v4152
      %4186 = vst [vmem:[%s4158 + $0x348] sm:$0xff] %v4153
      %4187 = vst [vmem:[%s4158 + $0x380] sm:$0xff] %v4154
      %4188 = vst [vmem:[%s4158 + $0x388] sm:$0xff] %v4155
      %4189 = vst [vmem:[%s4158 + $0x3c0] sm:$0xff] %v4156
      %4190 = vst [vmem:[%s4158 + $0x3c8] sm:$0xff] %v4157
      %4191 = vst [vmem:[#allocation3] sm:$0xff] 0.0
      %4192 = vst [vmem:[#allocation3 + $0x8] sm:$0xff] 0.0
      %4193 = vst [vmem:[#allocation3 + $0x10] sm:$0xff] 0.0
      %4194 = vst [vmem:[#allocation3 + $0x18] sm:$0xff] 0.0
      %4195 = vst [vmem:[#allocation3 + $0x20] sm:$0xff] 0.0
      %4196 = vst [vmem:[#allocation3 + $0x28] sm:$0xff] 0.0
      %4197 = vst [vmem:[#allocation3 + $0x30] sm:$0xff] 0.0
      %4198 = vst [vmem:[#allocation3 + $0x38] sm:$0xff] 0.0
      %4199 = vst [vmem:[#allocation3 + $0x40] sm:$0xff] 0.0
      %4200 = vst [vmem:[#allocation3 + $0x48] sm:$0xff] 0.0
      %4201 = vst [vmem:[#allocation3 + $0x50] sm:$0xff] 0.0
      %4202 = vst [vmem:[#allocation3 + $0x58] sm:$0xff] 0.0
      %4203 = vst [vmem:[#allocation3 + $0x60] sm:$0xff] 0.0
      %4204 = vst [vmem:[#allocation3 + $0x68] sm:$0xff] 0.0
      %4205 = vst [vmem:[#allocation3 + $0x70] sm:$0xff] 0.0
      %4206 = vst [vmem:[#allocation3 + $0x78] sm:$0xff] 0.0
      %4207 = vst [vmem:[#allocation3 + $0x80] sm:$0xff] 0.0
      %4208 = vst [vmem:[#allocation3 + $0x88] sm:$0xff] 0.0
      %4209 = vst [vmem:[#allocation3 + $0x90] sm:$0xff] 0.0
      %4210 = vst [vmem:[#allocation3 + $0x98] sm:$0xff] 0.0
      %4211 = vst [vmem:[#allocation3 + $0xa0] sm:$0xff] 0.0
      %4212 = vst [vmem:[#allocation3 + $0xa8] sm:$0xff] 0.0
      %4213 = vst [vmem:[#allocation3 + $0xb0] sm:$0xff] 0.0
      %4214 = vst [vmem:[#allocation3 + $0xb8] sm:$0xff] 0.0
      %4215 = vst [vmem:[#allocation3 + $0xc0] sm:$0xff] 0.0
      %4216 = vst [vmem:[#allocation3 + $0xc8] sm:$0xff] 0.0
      %4217 = vst [vmem:[#allocation3 + $0xd0] sm:$0xff] 0.0
      %4218 = vst [vmem:[#allocation3 + $0xd8] sm:$0xff] 0.0
      %4219 = vst [vmem:[#allocation3 + $0xe0] sm:$0xff] 0.0
      %4220 = vst [vmem:[#allocation3 + $0xe8] sm:$0xff] 0.0
      %4221 = vst [vmem:[#allocation3 + $0xf0] sm:$0xff] 0.0
      %4222 = vst [vmem:[#allocation3 + $0xf8] sm:$0xff] 0.0
      %v4223 = vld [vmem:[%s1993] sm:$0xff]
      %v4224 = vld [vmem:[%s1993 + $0x8] sm:$0xff]
      %v4225 = vld [vmem:[%s1993 + $0x10] sm:$0xff]
      %v4226 = vld [vmem:[%s1993 + $0x18] sm:$0xff]
      %v4227 = vld [vmem:[%s1993 + $0x20] sm:$0xff]
      %v4228 = vld [vmem:[%s1993 + $0x28] sm:$0xff]
      %v4229 = vld [vmem:[%s1993 + $0x30] sm:$0xff]
      %v4230 = vld [vmem:[%s1993 + $0x38] sm:$0xff]
      %v4231 = vld [vmem:[%s1993 + $0x40] sm:$0xff]
      %v4232 = vld [vmem:[%s1993 + $0x48] sm:$0xff]
      %v4233 = vld [vmem:[%s1993 + $0x50] sm:$0xff]
      %v4234 = vld [vmem:[%s1993 + $0x58] sm:$0xff]
      %v4235 = vld [vmem:[%s1993 + $0x60] sm:$0xff]
      %v4236 = vld [vmem:[%s1993 + $0x68] sm:$0xff]
      %v4237 = vld [vmem:[%s1993 + $0x70] sm:$0xff]
      %v4238 = vld [vmem:[%s1993 + $0x78] sm:$0xff]
      %v4239 = vld [vmem:[#allocation3] sm:$0xff]
      %v4240 = vld [vmem:[#allocation3 + $0x8] sm:$0xff]
      %v4241 = vld [vmem:[#allocation3 + $0x10] sm:$0xff]
      %v4242 = vld [vmem:[#allocation3 + $0x18] sm:$0xff]
      %v4243 = vld [vmem:[#allocation3 + $0x20] sm:$0xff]
      %v4244 = vld [vmem:[#allocation3 + $0x28] sm:$0xff]
      %v4245 = vld [vmem:[#allocation3 + $0x30] sm:$0xff]
      %v4246 = vld [vmem:[#allocation3 + $0x38] sm:$0xff]
      %v4247 = vld [vmem:[#allocation3 + $0x40] sm:$0xff]
      %v4248 = vld [vmem:[#allocation3 + $0x48] sm:$0xff]
      %v4249 = vld [vmem:[#allocation3 + $0x50] sm:$0xff]
      %v4250 = vld [vmem:[#allocation3 + $0x58] sm:$0xff]
      %v4251 = vld [vmem:[#allocation3 + $0x60] sm:$0xff]
      %v4252 = vld [vmem:[#allocation3 + $0x68] sm:$0xff]
      %v4253 = vld [vmem:[#allocation3 + $0x70] sm:$0xff]
      %v4254 = vld [vmem:[#allocation3 + $0x78] sm:$0xff]
      %v4255 = vld [vmem:[#allocation3 + $0x80] sm:$0xff]
      %v4256 = vld [vmem:[#allocation3 + $0x88] sm:$0xff]
      %v4257 = vld [vmem:[#allocation3 + $0x90] sm:$0xff]
      %v4258 = vld [vmem:[#allocation3 + $0x98] sm:$0xff]
      %v4259 = vld [vmem:[#allocation3 + $0xa0] sm:$0xff]
      %v4260 = vld [vmem:[#allocation3 + $0xa8] sm:$0xff]
      %v4261 = vld [vmem:[#allocation3 + $0xb0] sm:$0xff]
      %v4262 = vld [vmem:[#allocation3 + $0xb8] sm:$0xff]
      %v4263 = vld [vmem:[#allocation3 + $0xc0] sm:$0xff]
      %v4264 = vld [vmem:[#allocation3 + $0xc8] sm:$0xff]
      %v4265 = vld [vmem:[#allocation3 + $0xd0] sm:$0xff]
      %v4266 = vld [vmem:[#allocation3 + $0xd8] sm:$0xff]
      %v4267 = vld [vmem:[#allocation3 + $0xe0] sm:$0xff]
      %v4268 = vld [vmem:[#allocation3 + $0xe8] sm:$0xff]
      %v4269 = vld [vmem:[#allocation3 + $0xf0] sm:$0xff]
      %v4270 = vld [vmem:[#allocation3 + $0xf8] sm:$0xff]
      %s4271 = scalar_lea.vmem %s3, 16
      %v4272 = vld [vmem:[%s4271] sm:$0x3]
      %v4274 = vsel %vm526, %v4223, 0
      %v4277 = vsel %vm526, %v4224, 0
      %v4280 = vsel %vm526, %v4225, 0
      %v4283 = vsel %vm526, %v4226, 0
      %v4286 = vsel %vm526, %v4227, 0
      %v4289 = vsel %vm526, %v4228, 0
      %v4292 = vsel %vm526, %v4229, 0
      %v4295 = vsel %vm526, %v4230, 0
      %v4298 = vsel %vm526, %v4231, 0
      %v4301 = vsel %vm526, %v4232, 0
      %v4304 = vsel %vm526, %v4233, 0
      %v4307 = vsel %vm526, %v4234, 0
      %v4310 = vsel %vm526, %v4235, 0
      %v4313 = vsel %vm526, %v4236, 0
      %v4316 = vsel %vm526, %v4237, 0
      %v4319 = vsel %vm526, %v4238, 0
      %v4322 = vsel %vm1438, %v4272, 0
      %4324 = vmatprep.subr.bf16.mxu0 0
      %4325 = vmatpush1.bf16.msra.mxu0 %v4322
      %4326 = vmatprep.subr.bf16.mxu0 0
      %4327 = vmatpush1.bf16.msra.mxu0 0
      %4328 = vmatprep.subr.bf16.mxu0 0
      %4329 = vmatpush1.bf16.msra.mxu0 0
      %4330 = vmatprep.subr.bf16.mxu0 0
      %4331 = vmatpush1.bf16.msra.mxu0 0
      %4332 = vmatprep.subr.bf16.mxu0 0
      %4333 = vmatpush1.bf16.msra.mxu0 0
      %4334 = vmatprep.subr.bf16.mxu0 0
      %4335 = vmatpush1.bf16.msra.mxu0 0
      %4336 = vmatprep.subr.bf16.mxu0 0
      %4337 = vmatpush1.bf16.msra.mxu0 0
      %4338 = vmatprep.subr.bf16.mxu0 0
      %4339 = vmatpush1.bf16.msra.mxu0 0
      %4340 = vmatprep.subr.bf16.mxu0 0
      %4341 = vmatpush1.bf16.msra.mxu0 0
      %4342 = vmatprep.subr.bf16.mxu0 0
      %4343 = vmatpush1.bf16.msra.mxu0 0
      %4344 = vmatprep.subr.bf16.mxu0 0
      %4345 = vmatpush1.bf16.msra.mxu0 0
      %4346 = vmatprep.subr.bf16.mxu0 0
      %4347 = vmatpush1.bf16.msra.mxu0 0
      %4348 = vmatprep.subr.bf16.mxu0 0
      %4349 = vmatpush1.bf16.msra.mxu0 0
      %4350 = vmatprep.subr.bf16.mxu0 0
      %4351 = vmatpush1.bf16.msra.mxu0 0
      %4352 = vmatprep.subr.bf16.mxu0 0
      %4353 = vmatpush1.bf16.msra.mxu0 0
      %4354 = vmatprep.subr.bf16.mxu0 0
      %4355 = vmatpush1.bf16.msra.mxu0 0
      %4356 = vmatprep.mubr.bf16.mxu0 0
      %4357 = vmatmul.mubr.bf16.gmra.mrb[0].mxu0 %v4274
      %v4358 = vpop.f32.mrb[0].mxu0
      %v4359 = vadd.f32 0.0, %v4358
      %v4360 = vpop.f32.mrb[0].mxu0
      %v4361 = vpop.f32.mrb[0].mxu0
      %v4362 = vadd.f32 0.0, %v4361
      %v4363 = vpop.f32.mrb[0].mxu0
      %4364 = vmatprep.mubr.bf16.mxu0 0
      %4365 = vmatmul.mubr.bf16.gmra.mrb[0].mxu0 %v4277
      %v4366 = vpop.f32.mrb[0].mxu0
      %v4367 = vadd.f32 0.0, %v4366
      %v4368 = vpop.f32.mrb[0].mxu0
      %v4369 = vpop.f32.mrb[0].mxu0
      %v4370 = vadd.f32 0.0, %v4369
      %v4371 = vpop.f32.mrb[0].mxu0
      %4372 = vmatprep.mubr.bf16.mxu0 0
      %4373 = vmatmul.mubr.bf16.gmra.mrb[0].mxu0 %v4280
      %v4374 = vpop.f32.mrb[0].mxu0
      %v4375 = vadd.f32 0.0, %v4374
      %v4376 = vpop.f32.mrb[0].mxu0
      %v4377 = vpop.f32.mrb[0].mxu0
      %v4378 = vadd.f32 0.0, %v4377
      %v4379 = vpop.f32.mrb[0].mxu0
      %4380 = vmatprep.mubr.bf16.mxu0 0
      %4381 = vmatmul.mubr.bf16.gmra.mrb[0].mxu0 %v4283
      %v4382 = vpop.f32.mrb[0].mxu0
      %v4383 = vadd.f32 0.0, %v4382
      %v4384 = vpop.f32.mrb[0].mxu0
      %v4385 = vpop.f32.mrb[0].mxu0
      %v4386 = vadd.f32 0.0, %v4385
      %v4387 = vpop.f32.mrb[0].mxu0
      %4388 = vmatprep.mubr.bf16.mxu0 0
      %4389 = vmatmul.mubr.bf16.gmra.mrb[0].mxu0 %v4286
      %v4390 = vpop.f32.mrb[0].mxu0
      %v4391 = vadd.f32 0.0, %v4390
      %v4392 = vpop.f32.mrb[0].mxu0
      %v4393 = vpop.f32.mrb[0].mxu0
      %v4394 = vadd.f32 0.0, %v4393
      %v4395 = vpop.f32.mrb[0].mxu0
      %4396 = vmatprep.mubr.bf16.mxu0 0
      %4397 = vmatmul.mubr.bf16.gmra.mrb[0].mxu0 %v4289
      %v4398 = vpop.f32.mrb[0].mxu0
      %v4399 = vadd.f32 0.0, %v4398
      %v4400 = vpop.f32.mrb[0].mxu0
      %v4401 = vpop.f32.mrb[0].mxu0
      %v4402 = vadd.f32 0.0, %v4401
      %v4403 = vpop.f32.mrb[0].mxu0
      %4404 = vmatprep.mubr.bf16.mxu0 0
      %4405 = vmatmul.mubr.bf16.gmra.mrb[0].mxu0 %v4292
      %v4406 = vpop.f32.mrb[0].mxu0
      %v4407 = vadd.f32 0.0, %v4406
      %v4408 = vpop.f32.mrb[0].mxu0
      %v4409 = vpop.f32.mrb[0].mxu0
      %v4410 = vadd.f32 0.0, %v4409
      %v4411 = vpop.f32.mrb[0].mxu0
      %4412 = vmatprep.mubr.bf16.mxu0 0
      %4413 = vmatmul.mubr.bf16.gmra.mrb[0].mxu0 %v4295
      %v4414 = vpop.f32.mrb[0].mxu0
      %v4415 = vadd.f32 0.0, %v4414
      %v4416 = vpop.f32.mrb[0].mxu0
      %v4417 = vpop.f32.mrb[0].mxu0
      %v4418 = vadd.f32 0.0, %v4417
      %v4419 = vpop.f32.mrb[0].mxu0
      %4420 = vmatprep.mubr.bf16.mxu0 0
      %4421 = vmatmul.mubr.bf16.gmra.mrb[0].mxu0 %v4298
      %v4422 = vpop.f32.mrb[0].mxu0
      %v4423 = vadd.f32 0.0, %v4422
      %v4424 = vpop.f32.mrb[0].mxu0
      %v4425 = vpop.f32.mrb[0].mxu0
      %v4426 = vadd.f32 0.0, %v4425
      %v4427 = vpop.f32.mrb[0].mxu0
      %4428 = vmatprep.mubr.bf16.mxu0 0
      %4429 = vmatmul.mubr.bf16.gmra.mrb[0].mxu0 %v4301
      %v4430 = vpop.f32.mrb[0].mxu0
      %v4431 = vadd.f32 0.0, %v4430
      %v4432 = vpop.f32.mrb[0].mxu0
      %v4433 = vpop.f32.mrb[0].mxu0
      %v4434 = vadd.f32 0.0, %v4433
      %v4435 = vpop.f32.mrb[0].mxu0
      %4436 = vmatprep.mubr.bf16.mxu0 0
      %4437 = vmatmul.mubr.bf16.gmra.mrb[0].mxu0 %v4304
      %v4438 = vpop.f32.mrb[0].mxu0
      %v4439 = vadd.f32 0.0, %v4438
      %v4440 = vpop.f32.mrb[0].mxu0
      %v4441 = vpop.f32.mrb[0].mxu0
      %v4442 = vadd.f32 0.0, %v4441
      %v4443 = vpop.f32.mrb[0].mxu0
      %4444 = vmatprep.mubr.bf16.mxu0 0
      %4445 = vmatmul.mubr.bf16.gmra.mrb[0].mxu0 %v4307
      %v4446 = vpop.f32.mrb[0].mxu0
      %v4447 = vadd.f32 0.0, %v4446
      %v4448 = vpop.f32.mrb[0].mxu0
      %v4449 = vpop.f32.mrb[0].mxu0
      %v4450 = vadd.f32 0.0, %v4449
      %v4451 = vpop.f32.mrb[0].mxu0
      %4452 = vmatprep.mubr.bf16.mxu0 0
      %4453 = vmatmul.mubr.bf16.gmra.mrb[0].mxu0 %v4310
      %v4454 = vpop.f32.mrb[0].mxu0
      %v4455 = vadd.f32 0.0, %v4454
      %v4456 = vpop.f32.mrb[0].mxu0
      %v4457 = vpop.f32.mrb[0].mxu0
      %v4458 = vadd.f32 0.0, %v4457
      %v4459 = vpop.f32.mrb[0].mxu0
      %4460 = vmatprep.mubr.bf16.mxu0 0
      %4461 = vmatmul.mubr.bf16.gmra.mrb[0].mxu0 %v4313
      %v4462 = vpop.f32.mrb[0].mxu0
      %v4463 = vadd.f32 0.0, %v4462
      %v4464 = vpop.f32.mrb[0].mxu0
      %v4465 = vpop.f32.mrb[0].mxu0
      %v4466 = vadd.f32 0.0, %v4465
      %v4467 = vpop.f32.mrb[0].mxu0
      %4468 = vmatprep.mubr.bf16.mxu0 0
      %4469 = vmatmul.mubr.bf16.gmra.mrb[0].mxu0 %v4316
      %v4470 = vpop.f32.mrb[0].mxu0
      %v4471 = vadd.f32 0.0, %v4470
      %v4472 = vpop.f32.mrb[0].mxu0
      %v4473 = vpop.f32.mrb[0].mxu0
      %v4474 = vadd.f32 0.0, %v4473
      %v4475 = vpop.f32.mrb[0].mxu0
      %4476 = vmatprep.mubr.bf16.mxu0 0
      %4477 = vmatmul.mubr.bf16.gmra.mrb[0].mxu0 %v4319
      %v4478 = vpop.f32.mrb[0].mxu0
      %v4479 = vadd.f32 0.0, %v4478
      %v4480 = vpop.f32.mrb[0].mxu0
      %v4481 = vpop.f32.mrb[0].mxu0
      %v4482 = vadd.f32 0.0, %v4481
      %v4483 = vpop.f32.mrb[0].mxu0
      %4484 = vdwg.mxu0
      %v4485 = vadd.f32 %v4239, %v4359
      %v4486 = vadd.f32 %v4240, %v4362
      %v4487 = vadd.f32 %v4241, %v4367
      %v4488 = vadd.f32 %v4242, %v4370
      %v4489 = vadd.f32 %v4243, %v4375
      %v4490 = vadd.f32 %v4244, %v4378
      %v4491 = vadd.f32 %v4245, %v4383
      %v4492 = vadd.f32 %v4246, %v4386
      %v4493 = vadd.f32 %v4247, %v4391
      %v4494 = vadd.f32 %v4248, %v4394
      %v4495 = vadd.f32 %v4249, %v4399
      %v4496 = vadd.f32 %v4250, %v4402
      %v4497 = vadd.f32 %v4251, %v4407
      %v4498 = vadd.f32 %v4252, %v4410
      %v4499 = vadd.f32 %v4253, %v4415
      %v4500 = vadd.f32 %v4254, %v4418
      %v4501 = vadd.f32 %v4255, %v4423
      %v4502 = vadd.f32 %v4256, %v4426
      %v4503 = vadd.f32 %v4257, %v4431
      %v4504 = vadd.f32 %v4258, %v4434
      %v4505 = vadd.f32 %v4259, %v4439
      %v4506 = vadd.f32 %v4260, %v4442
      %v4507 = vadd.f32 %v4261, %v4447
      %v4508 = vadd.f32 %v4262, %v4450
      %v4509 = vadd.f32 %v4263, %v4455
      %v4510 = vadd.f32 %v4264, %v4458
      %v4511 = vadd.f32 %v4265, %v4463
      %v4512 = vadd.f32 %v4266, %v4466
      %v4513 = vadd.f32 %v4267, %v4471
      %v4514 = vadd.f32 %v4268, %v4474
      %v4515 = vadd.f32 %v4269, %v4479
      %v4516 = vadd.f32 %v4270, %v4482
      %4517 = vst [vmem:[#allocation3] sm:$0xff] %v4485
      %4518 = vst [vmem:[#allocation3 + $0x8] sm:$0xff] %v4486
      %4519 = vst [vmem:[#allocation3 + $0x10] sm:$0xff] %v4487
      %4520 = vst [vmem:[#allocation3 + $0x18] sm:$0xff] %v4488
      %4521 = vst [vmem:[#allocation3 + $0x20] sm:$0xff] %v4489
      %4522 = vst [vmem:[#allocation3 + $0x28] sm:$0xff] %v4490
      %4523 = vst [vmem:[#allocation3 + $0x30] sm:$0xff] %v4491
      %4524 = vst [vmem:[#allocation3 + $0x38] sm:$0xff] %v4492
      %4525 = vst [vmem:[#allocation3 + $0x40] sm:$0xff] %v4493
      %4526 = vst [vmem:[#allocation3 + $0x48] sm:$0xff] %v4494
      %4527 = vst [vmem:[#allocation3 + $0x50] sm:$0xff] %v4495
      %4528 = vst [vmem:[#allocation3 + $0x58] sm:$0xff] %v4496
      %4529 = vst [vmem:[#allocation3 + $0x60] sm:$0xff] %v4497
      %4530 = vst [vmem:[#allocation3 + $0x68] sm:$0xff] %v4498
      %4531 = vst [vmem:[#allocation3 + $0x70] sm:$0xff] %v4499
      %4532 = vst [vmem:[#allocation3 + $0x78] sm:$0xff] %v4500
      %4533 = vst [vmem:[#allocation3 + $0x80] sm:$0xff] %v4501
      %4534 = vst [vmem:[#allocation3 + $0x88] sm:$0xff] %v4502
      %4535 = vst [vmem:[#allocation3 + $0x90] sm:$0xff] %v4503
      %4536 = vst [vmem:[#allocation3 + $0x98] sm:$0xff] %v4504
      %4537 = vst [vmem:[#allocation3 + $0xa0] sm:$0xff] %v4505
      %4538 = vst [vmem:[#allocation3 + $0xa8] sm:$0xff] %v4506
      %4539 = vst [vmem:[#allocation3 + $0xb0] sm:$0xff] %v4507
      %4540 = vst [vmem:[#allocation3 + $0xb8] sm:$0xff] %v4508
      %4541 = vst [vmem:[#allocation3 + $0xc0] sm:$0xff] %v4509
      %4542 = vst [vmem:[#allocation3 + $0xc8] sm:$0xff] %v4510
      %4543 = vst [vmem:[#allocation3 + $0xd0] sm:$0xff] %v4511
      %4544 = vst [vmem:[#allocation3 + $0xd8] sm:$0xff] %v4512
      %4545 = vst [vmem:[#allocation3 + $0xe0] sm:$0xff] %v4513
      %4546 = vst [vmem:[#allocation3 + $0xe8] sm:$0xff] %v4514
      %4547 = vst [vmem:[#allocation3 + $0xf0] sm:$0xff] %v4515
      %4548 = vst [vmem:[#allocation3 + $0xf8] sm:$0xff] %v4516
      %v4549 = vld [vmem:[%s2320] sm:$0xff]
      %v4550 = vld [vmem:[%s2320 + $0x8] sm:$0xff]
      %v4551 = vld [vmem:[%s2320 + $0x10] sm:$0xff]
      %v4552 = vld [vmem:[%s2320 + $0x18] sm:$0xff]
      %v4553 = vld [vmem:[%s2320 + $0x20] sm:$0xff]
      %v4554 = vld [vmem:[%s2320 + $0x28] sm:$0xff]
      %v4555 = vld [vmem:[%s2320 + $0x30] sm:$0xff]
      %v4556 = vld [vmem:[%s2320 + $0x38] sm:$0xff]
      %v4557 = vld [vmem:[%s2320 + $0x40] sm:$0xff]
      %v4558 = vld [vmem:[%s2320 + $0x48] sm:$0xff]
      %v4559 = vld [vmem:[%s2320 + $0x50] sm:$0xff]
      %v4560 = vld [vmem:[%s2320 + $0x58] sm:$0xff]
      %v4561 = vld [vmem:[%s2320 + $0x60] sm:$0xff]
      %v4562 = vld [vmem:[%s2320 + $0x68] sm:$0xff]
      %v4563 = vld [vmem:[%s2320 + $0x70] sm:$0xff]
      %v4564 = vld [vmem:[%s2320 + $0x78] sm:$0xff]
      %v4565 = vld [vmem:[#allocation3] sm:$0xff]
      %v4566 = vld [vmem:[#allocation3 + $0x8] sm:$0xff]
      %v4567 = vld [vmem:[#allocation3 + $0x10] sm:$0xff]
      %v4568 = vld [vmem:[#allocation3 + $0x18] sm:$0xff]
      %v4569 = vld [vmem:[#allocation3 + $0x20] sm:$0xff]
      %v4570 = vld [vmem:[#allocation3 + $0x28] sm:$0xff]
      %v4571 = vld [vmem:[#allocation3 + $0x30] sm:$0xff]
      %v4572 = vld [vmem:[#allocation3 + $0x38] sm:$0xff]
      %v4573 = vld [vmem:[#allocation3 + $0x40] sm:$0xff]
      %v4574 = vld [vmem:[#allocation3 + $0x48] sm:$0xff]
      %v4575 = vld [vmem:[#allocation3 + $0x50] sm:$0xff]
      %v4576 = vld [vmem:[#allocation3 + $0x58] sm:$0xff]
      %v4577 = vld [vmem:[#allocation3 + $0x60] sm:$0xff]
      %v4578 = vld [vmem:[#allocation3 + $0x68] sm:$0xff]
      %v4579 = vld [vmem:[#allocation3 + $0x70] sm:$0xff]
      %v4580 = vld [vmem:[#allocation3 + $0x78] sm:$0xff]
      %v4581 = vld [vmem:[#allocation3 + $0x80] sm:$0xff]
      %v4582 = vld [vmem:[#allocation3 + $0x88] sm:$0xff]
      %v4583 = vld [vmem:[#allocation3 + $0x90] sm:$0xff]
      %v4584 = vld [vmem:[#allocation3 + $0x98] sm:$0xff]
      %v4585 = vld [vmem:[#allocation3 + $0xa0] sm:$0xff]
      %v4586 = vld [vmem:[#allocation3 + $0xa8] sm:$0xff]
      %v4587 = vld [vmem:[#allocation3 + $0xb0] sm:$0xff]
      %v4588 = vld [vmem:[#allocation3 + $0xb8] sm:$0xff]
      %v4589 = vld [vmem:[#allocation3 + $0xc0] sm:$0xff]
      %v4590 = vld [vmem:[#allocation3 + $0xc8] sm:$0xff]
      %v4591 = vld [vmem:[#allocation3 + $0xd0] sm:$0xff]
      %v4592 = vld [vmem:[#allocation3 + $0xd8] sm:$0xff]
      %v4593 = vld [vmem:[#allocation3 + $0xe0] sm:$0xff]
      %v4594 = vld [vmem:[#allocation3 + $0xe8] sm:$0xff]
      %v4595 = vld [vmem:[#allocation3 + $0xf0] sm:$0xff]
      %v4596 = vld [vmem:[#allocation3 + $0xf8] sm:$0xff]
      %s4597 = scalar_lea.vmem %s3, 18
      %v4598 = vld [vmem:[%s4597] sm:$0x3]
      %v4600 = vsel %vm526, %v4549, 0
      %v4603 = vsel %vm526, %v4550, 0
      %v4606 = vsel %vm526, %v4551, 0
      %v4609 = vsel %vm526, %v4552, 0
      %v4612 = vsel %vm526, %v4553, 0
      %v4615 = vsel %vm526, %v4554, 0
      %v4618 = vsel %vm526, %v4555, 0
      %v4621 = vsel %vm526, %v4556, 0
      %v4624 = vsel %vm526, %v4557, 0
      %v4627 = vsel %vm526, %v4558, 0
      %v4630 = vsel %vm526, %v4559, 0
      %v4633 = vsel %vm526, %v4560, 0
      %v4636 = vsel %vm526, %v4561, 0
      %v4639 = vsel %vm526, %v4562, 0
      %v4642 = vsel %vm526, %v4563, 0
      %v4645 = vsel %vm526, %v4564, 0
      %v4648 = vsel %vm1438, %v4598, 0
      %4650 = vmatprep.subr.bf16.mxu0 0
      %4651 = vmatpush1.bf16.msra.mxu0 %v4648
      %4652 = vmatprep.subr.bf16.mxu0 0
      %4653 = vmatpush1.bf16.msra.mxu0 0
      %4654 = vmatprep.subr.bf16.mxu0 0
      %4655 = vmatpush1.bf16.msra.mxu0 0
      %4656 = vmatprep.subr.bf16.mxu0 0
      %4657 = vmatpush1.bf16.msra.mxu0 0
      %4658 = vmatprep.subr.bf16.mxu0 0
      %4659 = vmatpush1.bf16.msra.mxu0 0
      %4660 = vmatprep.subr.bf16.mxu0 0
      %4661 = vmatpush1.bf16.msra.mxu0 0
      %4662 = vmatprep.subr.bf16.mxu0 0
      %4663 = vmatpush1.bf16.msra.mxu0 0
      %4664 = vmatprep.subr.bf16.mxu0 0
      %4665 = vmatpush1.bf16.msra.mxu0 0
      %4666 = vmatprep.subr.bf16.mxu0 0
      %4667 = vmatpush1.bf16.msra.mxu0 0
      %4668 = vmatprep.subr.bf16.mxu0 0
      %4669 = vmatpush1.bf16.msra.mxu0 0
      %4670 = vmatprep.subr.bf16.mxu0 0
      %4671 = vmatpush1.bf16.msra.mxu0 0
      %4672 = vmatprep.subr.bf16.mxu0 0
      %4673 = vmatpush1.bf16.msra.mxu0 0
      %4674 = vmatprep.subr.bf16.mxu0 0
      %4675 = vmatpush1.bf16.msra.mxu0 0
      %4676 = vmatprep.subr.bf16.mxu0 0
      %4677 = vmatpush1.bf16.msra.mxu0 0
      %4678 = vmatprep.subr.bf16.mxu0 0
      %4679 = vmatpush1.bf16.msra.mxu0 0
      %4680 = vmatprep.subr.bf16.mxu0 0
      %4681 = vmatpush1.bf16.msra.mxu0 0
      %4682 = vmatprep.mubr.bf16.mxu0 0
      %4683 = vmatmul.mubr.bf16.gmra.mrb[0].mxu0 %v4600
      %v4684 = vpop.f32.mrb[0].mxu0
      %v4685 = vadd.f32 0.0, %v4684
      %v4686 = vpop.f32.mrb[0].mxu0
      %v4687 = vpop.f32.mrb[0].mxu0
      %v4688 = vadd.f32 0.0, %v4687
      %v4689 = vpop.f32.mrb[0].mxu0
      %4690 = vmatprep.mubr.bf16.mxu0 0
      %4691 = vmatmul.mubr.bf16.gmra.mrb[0].mxu0 %v4603
      %v4692 = vpop.f32.mrb[0].mxu0
      %v4693 = vadd.f32 0.0, %v4692
      %v4694 = vpop.f32.mrb[0].mxu0
      %v4695 = vpop.f32.mrb[0].mxu0
      %v4696 = vadd.f32 0.0, %v4695
      %v4697 = vpop.f32.mrb[0].mxu0
      %4698 = vmatprep.mubr.bf16.mxu0 0
      %4699 = vmatmul.mubr.bf16.gmra.mrb[0].mxu0 %v4606
      %v4700 = vpop.f32.mrb[0].mxu0
      %v4701 = vadd.f32 0.0, %v4700
      %v4702 = vpop.f32.mrb[0].mxu0
      %v4703 = vpop.f32.mrb[0].mxu0
      %v4704 = vadd.f32 0.0, %v4703
      %v4705 = vpop.f32.mrb[0].mxu0
      %4706 = vmatprep.mubr.bf16.mxu0 0
      %4707 = vmatmul.mubr.bf16.gmra.mrb[0].mxu0 %v4609
      %v4708 = vpop.f32.mrb[0].mxu0
      %v4709 = vadd.f32 0.0, %v4708
      %v4710 = vpop.f32.mrb[0].mxu0
      %v4711 = vpop.f32.mrb[0].mxu0
      %v4712 = vadd.f32 0.0, %v4711
      %v4713 = vpop.f32.mrb[0].mxu0
      %4714 = vmatprep.mubr.bf16.mxu0 0
      %4715 = vmatmul.mubr.bf16.gmra.mrb[0].mxu0 %v4612
      %v4716 = vpop.f32.mrb[0].mxu0
      %v4717 = vadd.f32 0.0, %v4716
      %v4718 = vpop.f32.mrb[0].mxu0
      %v4719 = vpop.f32.mrb[0].mxu0
      %v4720 = vadd.f32 0.0, %v4719
      %v4721 = vpop.f32.mrb[0].mxu0
      %4722 = vmatprep.mubr.bf16.mxu0 0
      %4723 = vmatmul.mubr.bf16.gmra.mrb[0].mxu0 %v4615
      %v4724 = vpop.f32.mrb[0].mxu0
      %v4725 = vadd.f32 0.0, %v4724
      %v4726 = vpop.f32.mrb[0].mxu0
      %v4727 = vpop.f32.mrb[0].mxu0
      %v4728 = vadd.f32 0.0, %v4727
      %v4729 = vpop.f32.mrb[0].mxu0
      %4730 = vmatprep.mubr.bf16.mxu0 0
      %4731 = vmatmul.mubr.bf16.gmra.mrb[0].mxu0 %v4618
      %v4732 = vpop.f32.mrb[0].mxu0
      %v4733 = vadd.f32 0.0, %v4732
      %v4734 = vpop.f32.mrb[0].mxu0
      %v4735 = vpop.f32.mrb[0].mxu0
      %v4736 = vadd.f32 0.0, %v4735
      %v4737 = vpop.f32.mrb[0].mxu0
      %4738 = vmatprep.mubr.bf16.mxu0 0
      %4739 = vmatmul.mubr.bf16.gmra.mrb[0].mxu0 %v4621
      %v4740 = vpop.f32.mrb[0].mxu0
      %v4741 = vadd.f32 0.0, %v4740
      %v4742 = vpop.f32.mrb[0].mxu0
      %v4743 = vpop.f32.mrb[0].mxu0
      %v4744 = vadd.f32 0.0, %v4743
      %v4745 = vpop.f32.mrb[0].mxu0
      %4746 = vmatprep.mubr.bf16.mxu0 0
      %4747 = vmatmul.mubr.bf16.gmra.mrb[0].mxu0 %v4624
      %v4748 = vpop.f32.mrb[0].mxu0
      %v4749 = vadd.f32 0.0, %v4748
      %v4750 = vpop.f32.mrb[0].mxu0
      %v4751 = vpop.f32.mrb[0].mxu0
      %v4752 = vadd.f32 0.0, %v4751
      %v4753 = vpop.f32.mrb[0].mxu0
      %4754 = vmatprep.mubr.bf16.mxu0 0
      %4755 = vmatmul.mubr.bf16.gmra.mrb[0].mxu0 %v4627
      %v4756 = vpop.f32.mrb[0].mxu0
      %v4757 = vadd.f32 0.0, %v4756
      %v4758 = vpop.f32.mrb[0].mxu0
      %v4759 = vpop.f32.mrb[0].mxu0
      %v4760 = vadd.f32 0.0, %v4759
      %v4761 = vpop.f32.mrb[0].mxu0
      %4762 = vmatprep.mubr.bf16.mxu0 0
      %4763 = vmatmul.mubr.bf16.gmra.mrb[0].mxu0 %v4630
      %v4764 = vpop.f32.mrb[0].mxu0
      %v4765 = vadd.f32 0.0, %v4764
      %v4766 = vpop.f32.mrb[0].mxu0
      %v4767 = vpop.f32.mrb[0].mxu0
      %v4768 = vadd.f32 0.0, %v4767
      %v4769 = vpop.f32.mrb[0].mxu0
      %4770 = vmatprep.mubr.bf16.mxu0 0
      %4771 = vmatmul.mubr.bf16.gmra.mrb[0].mxu0 %v4633
      %v4772 = vpop.f32.mrb[0].mxu0
      %v4773 = vadd.f32 0.0, %v4772
      %v4774 = vpop.f32.mrb[0].mxu0
      %v4775 = vpop.f32.mrb[0].mxu0
      %v4776 = vadd.f32 0.0, %v4775
      %v4777 = vpop.f32.mrb[0].mxu0
      %4778 = vmatprep.mubr.bf16.mxu0 0
      %4779 = vmatmul.mubr.bf16.gmra.mrb[0].mxu0 %v4636
      %v4780 = vpop.f32.mrb[0].mxu0
      %v4781 = vadd.f32 0.0, %v4780
      %v4782 = vpop.f32.mrb[0].mxu0
      %v4783 = vpop.f32.mrb[0].mxu0
      %v4784 = vadd.f32 0.0, %v4783
      %v4785 = vpop.f32.mrb[0].mxu0
      %4786 = vmatprep.mubr.bf16.mxu0 0
      %4787 = vmatmul.mubr.bf16.gmra.mrb[0].mxu0 %v4639
      %v4788 = vpop.f32.mrb[0].mxu0
      %v4789 = vadd.f32 0.0, %v4788
      %v4790 = vpop.f32.mrb[0].mxu0
      %v4791 = vpop.f32.mrb[0].mxu0
      %v4792 = vadd.f32 0.0, %v4791
      %v4793 = vpop.f32.mrb[0].mxu0
      %4794 = vmatprep.mubr.bf16.mxu0 0
      %4795 = vmatmul.mubr.bf16.gmra.mrb[0].mxu0 %v4642
      %v4796 = vpop.f32.mrb[0].mxu0
      %v4797 = vadd.f32 0.0, %v4796
      %v4798 = vpop.f32.mrb[0].mxu0
      %v4799 = vpop.f32.mrb[0].mxu0
      %v4800 = vadd.f32 0.0, %v4799
      %v4801 = vpop.f32.mrb[0].mxu0
      %4802 = vmatprep.mubr.bf16.mxu0 0
      %4803 = vmatmul.mubr.bf16.gmra.mrb[0].mxu0 %v4645
      %v4804 = vpop.f32.mrb[0].mxu0
      %v4805 = vadd.f32 0.0, %v4804
      %v4806 = vpop.f32.mrb[0].mxu0
      %v4807 = vpop.f32.mrb[0].mxu0
      %v4808 = vadd.f32 0.0, %v4807
      %v4809 = vpop.f32.mrb[0].mxu0
      %4810 = vdwg.mxu0
      %v4811 = vadd.f32 %v4565, %v4685
      %v4812 = vadd.f32 %v4566, %v4688
      %v4813 = vadd.f32 %v4567, %v4693
      %v4814 = vadd.f32 %v4568, %v4696
      %v4815 = vadd.f32 %v4569, %v4701
      %v4816 = vadd.f32 %v4570, %v4704
      %v4817 = vadd.f32 %v4571, %v4709
      %v4818 = vadd.f32 %v4572, %v4712
      %v4819 = vadd.f32 %v4573, %v4717
      %v4820 = vadd.f32 %v4574, %v4720
      %v4821 = vadd.f32 %v4575, %v4725
      %v4822 = vadd.f32 %v4576, %v4728
      %v4823 = vadd.f32 %v4577, %v4733
      %v4824 = vadd.f32 %v4578, %v4736
      %v4825 = vadd.f32 %v4579, %v4741
      %v4826 = vadd.f32 %v4580, %v4744
      %v4827 = vadd.f32 %v4581, %v4749
      %v4828 = vadd.f32 %v4582, %v4752
      %v4829 = vadd.f32 %v4583, %v4757
      %v4830 = vadd.f32 %v4584, %v4760
      %v4831 = vadd.f32 %v4585, %v4765
      %v4832 = vadd.f32 %v4586, %v4768
      %v4833 = vadd.f32 %v4587, %v4773
      %v4834 = vadd.f32 %v4588, %v4776
      %v4835 = vadd.f32 %v4589, %v4781
      %v4836 = vadd.f32 %v4590, %v4784
      %v4837 = vadd.f32 %v4591, %v4789
      %v4838 = vadd.f32 %v4592, %v4792
      %v4839 = vadd.f32 %v4593, %v4797
      %v4840 = vadd.f32 %v4594, %v4800
      %v4841 = vadd.f32 %v4595, %v4805
      %v4842 = vadd.f32 %v4596, %v4808
      %4843 = vst [vmem:[#allocation3] sm:$0xff] %v4811
      %4844 = vst [vmem:[#allocation3 + $0x8] sm:$0xff] %v4812
      %4845 = vst [vmem:[#allocation3 + $0x10] sm:$0xff] %v4813
      %4846 = vst [vmem:[#allocation3 + $0x18] sm:$0xff] %v4814
      %4847 = vst [vmem:[#allocation3 + $0x20] sm:$0xff] %v4815
      %4848 = vst [vmem:[#allocation3 + $0x28] sm:$0xff] %v4816
      %4849 = vst [vmem:[#allocation3 + $0x30] sm:$0xff] %v4817
      %4850 = vst [vmem:[#allocation3 + $0x38] sm:$0xff] %v4818
      %4851 = vst [vmem:[#allocation3 + $0x40] sm:$0xff] %v4819
      %4852 = vst [vmem:[#allocation3 + $0x48] sm:$0xff] %v4820
      %4853 = vst [vmem:[#allocation3 + $0x50] sm:$0xff] %v4821
      %4854 = vst [vmem:[#allocation3 + $0x58] sm:$0xff] %v4822
      %4855 = vst [vmem:[#allocation3 + $0x60] sm:$0xff] %v4823
      %4856 = vst [vmem:[#allocation3 + $0x68] sm:$0xff] %v4824
      %4857 = vst [vmem:[#allocation3 + $0x70] sm:$0xff] %v4825
      %4858 = vst [vmem:[#allocation3 + $0x78] sm:$0xff] %v4826
      %4859 = vst [vmem:[#allocation3 + $0x80] sm:$0xff] %v4827
      %4860 = vst [vmem:[#allocation3 + $0x88] sm:$0xff] %v4828
      %4861 = vst [vmem:[#allocation3 + $0x90] sm:$0xff] %v4829
      %4862 = vst [vmem:[#allocation3 + $0x98] sm:$0xff] %v4830
      %4863 = vst [vmem:[#allocation3 + $0xa0] sm:$0xff] %v4831
      %4864 = vst [vmem:[#allocation3 + $0xa8] sm:$0xff] %v4832
      %4865 = vst [vmem:[#allocation3 + $0xb0] sm:$0xff] %v4833
      %4866 = vst [vmem:[#allocation3 + $0xb8] sm:$0xff] %v4834
      %4867 = vst [vmem:[#allocation3 + $0xc0] sm:$0xff] %v4835
      %4868 = vst [vmem:[#allocation3 + $0xc8] sm:$0xff] %v4836
      %4869 = vst [vmem:[#allocation3 + $0xd0] sm:$0xff] %v4837
      %4870 = vst [vmem:[#allocation3 + $0xd8] sm:$0xff] %v4838
      %4871 = vst [vmem:[#allocation3 + $0xe0] sm:$0xff] %v4839
      %4872 = vst [vmem:[#allocation3 + $0xe8] sm:$0xff] %v4840
      %4873 = vst [vmem:[#allocation3 + $0xf0] sm:$0xff] %v4841
      %4874 = vst [vmem:[#allocation3 + $0xf8] sm:$0xff] %v4842
      %s4875 = scalar_lea.vmem [#allocation2], 16
      %v4876 = vld [vmem:[%s4875] sm:$0xff]
      %v4877 = vld [vmem:[%s4875 + $0x8] sm:$0xff]
      %v4878 = vld [vmem:[%s4875 + $0x10] sm:$0xff]
      %v4879 = vld [vmem:[%s4875 + $0x18] sm:$0xff]
      %v4880 = vld [vmem:[%s4875 + $0x20] sm:$0xff]
      %v4881 = vld [vmem:[%s4875 + $0x28] sm:$0xff]
      %v4882 = vld [vmem:[%s4875 + $0x30] sm:$0xff]
      %v4883 = vld [vmem:[%s4875 + $0x38] sm:$0xff]
      %v4884 = vld [vmem:[%s4875 + $0x40] sm:$0xff]
      %v4885 = vld [vmem:[%s4875 + $0x48] sm:$0xff]
      %v4886 = vld [vmem:[%s4875 + $0x50] sm:$0xff]
      %v4887 = vld [vmem:[%s4875 + $0x58] sm:$0xff]
      %v4888 = vld [vmem:[%s4875 + $0x60] sm:$0xff]
      %v4889 = vld [vmem:[%s4875 + $0x68] sm:$0xff]
      %v4890 = vld [vmem:[%s4875 + $0x70] sm:$0xff]
      %v4891 = vld [vmem:[%s4875 + $0x78] sm:$0xff]
      %v4892 = vld [vmem:[#allocation3] sm:$0xff]
      %v4893 = vld [vmem:[#allocation3 + $0x8] sm:$0xff]
      %v4894 = vld [vmem:[#allocation3 + $0x10] sm:$0xff]
      %v4895 = vld [vmem:[#allocation3 + $0x18] sm:$0xff]
      %v4896 = vld [vmem:[#allocation3 + $0x20] sm:$0xff]
      %v4897 = vld [vmem:[#allocation3 + $0x28] sm:$0xff]
      %v4898 = vld [vmem:[#allocation3 + $0x30] sm:$0xff]
      %v4899 = vld [vmem:[#allocation3 + $0x38] sm:$0xff]
      %v4900 = vld [vmem:[#allocation3 + $0x40] sm:$0xff]
      %v4901 = vld [vmem:[#allocation3 + $0x48] sm:$0xff]
      %v4902 = vld [vmem:[#allocation3 + $0x50] sm:$0xff]
      %v4903 = vld [vmem:[#allocation3 + $0x58] sm:$0xff]
      %v4904 = vld [vmem:[#allocation3 + $0x60] sm:$0xff]
      %v4905 = vld [vmem:[#allocation3 + $0x68] sm:$0xff]
      %v4906 = vld [vmem:[#allocation3 + $0x70] sm:$0xff]
      %v4907 = vld [vmem:[#allocation3 + $0x78] sm:$0xff]
      %v4908 = vld [vmem:[#allocation3 + $0x80] sm:$0xff]
      %v4909 = vld [vmem:[#allocation3 + $0x88] sm:$0xff]
      %v4910 = vld [vmem:[#allocation3 + $0x90] sm:$0xff]
      %v4911 = vld [vmem:[#allocation3 + $0x98] sm:$0xff]
      %v4912 = vld [vmem:[#allocation3 + $0xa0] sm:$0xff]
      %v4913 = vld [vmem:[#allocation3 + $0xa8] sm:$0xff]
      %v4914 = vld [vmem:[#allocation3 + $0xb0] sm:$0xff]
      %v4915 = vld [vmem:[#allocation3 + $0xb8] sm:$0xff]
      %v4916 = vld [vmem:[#allocation3 + $0xc0] sm:$0xff]
      %v4917 = vld [vmem:[#allocation3 + $0xc8] sm:$0xff]
      %v4918 = vld [vmem:[#allocation3 + $0xd0] sm:$0xff]
      %v4919 = vld [vmem:[#allocation3 + $0xd8] sm:$0xff]
      %v4920 = vld [vmem:[#allocation3 + $0xe0] sm:$0xff]
      %v4921 = vld [vmem:[#allocation3 + $0xe8] sm:$0xff]
      %v4922 = vld [vmem:[#allocation3 + $0xf0] sm:$0xff]
      %v4923 = vld [vmem:[#allocation3 + $0xf8] sm:$0xff]
      %s4924 = scalar_lea.vmem %s3, 24
      %v4925 = vld [vmem:[%s4924] sm:$0x3]
      %v4927 = vsel %vm526, %v4876, 0
      %v4930 = vsel %vm526, %v4877, 0
      %v4933 = vsel %vm526, %v4878, 0
      %v4936 = vsel %vm526, %v4879, 0
      %v4939 = vsel %vm526, %v4880, 0
      %v4942 = vsel %vm526, %v4881, 0
      %v4945 = vsel %vm526, %v4882, 0
      %v4948 = vsel %vm526, %v4883, 0
      %v4951 = vsel %vm526, %v4884, 0
      %v4954 = vsel %vm526, %v4885, 0
      %v4957 = vsel %vm526, %v4886, 0
      %v4960 = vsel %vm526, %v4887, 0
      %v4963 = vsel %vm526, %v4888, 0
      %v4966 = vsel %vm526, %v4889, 0
      %v4969 = vsel %vm526, %v4890, 0
      %v4972 = vsel %vm526, %v4891, 0
      %v4975 = vsel %vm1438, %v4925, 0
      %4977 = vmatprep.subr.bf16.mxu0 0
      %4978 = vmatpush1.bf16.msra.mxu0 %v4975
      %4979 = vmatprep.subr.bf16.mxu0 0
      %4980 = vmatpush1.bf16.msra.mxu0 0
      %4981 = vmatprep.subr.bf16.mxu0 0
      %4982 = vmatpush1.bf16.msra.mxu0 0
      %4983 = vmatprep.subr.bf16.mxu0 0
      %4984 = vmatpush1.bf16.msra.mxu0 0
      %4985 = vmatprep.subr.bf16.mxu0 0
      %4986 = vmatpush1.bf16.msra.mxu0 0
      %4987 = vmatprep.subr.bf16.mxu0 0
      %4988 = vmatpush1.bf16.msra.mxu0 0
      %4989 = vmatprep.subr.bf16.mxu0 0
      %4990 = vmatpush1.bf16.msra.mxu0 0
      %4991 = vmatprep.subr.bf16.mxu0 0
      %4992 = vmatpush1.bf16.msra.mxu0 0
      %4993 = vmatprep.subr.bf16.mxu0 0
      %4994 = vmatpush1.bf16.msra.mxu0 0
      %4995 = vmatprep.subr.bf16.mxu0 0
      %4996 = vmatpush1.bf16.msra.mxu0 0
      %4997 = vmatprep.subr.bf16.mxu0 0
      %4998 = vmatpush1.bf16.msra.mxu0 0
      %4999 = vmatprep.subr.bf16.mxu0 0
      %5000 = vmatpush1.bf16.msra.mxu0 0
      %5001 = vmatprep.subr.bf16.mxu0 0
      %5002 = vmatpush1.bf16.msra.mxu0 0
      %5003 = vmatprep.subr.bf16.mxu0 0
      %5004 = vmatpush1.bf16.msra.mxu0 0
      %5005 = vmatprep.subr.bf16.mxu0 0
      %5006 = vmatpush1.bf16.msra.mxu0 0
      %5007 = vmatprep.subr.bf16.mxu0 0
      %5008 = vmatpush1.bf16.msra.mxu0 0
      %5009 = vmatprep.mubr.bf16.mxu0 0
      %5010 = vmatmul.mubr.bf16.gmra.mrb[0].mxu0 %v4927
      %v5011 = vpop.f32.mrb[0].mxu0
      %v5012 = vadd.f32 0.0, %v5011
      %v5013 = vpop.f32.mrb[0].mxu0
      %v5014 = vpop.f32.mrb[0].mxu0
      %v5015 = vadd.f32 0.0, %v5014
      %v5016 = vpop.f32.mrb[0].mxu0
      %5017 = vmatprep.mubr.bf16.mxu0 0
      %5018 = vmatmul.mubr.bf16.gmra.mrb[0].mxu0 %v4930
      %v5019 = vpop.f32.mrb[0].mxu0
      %v5020 = vadd.f32 0.0, %v5019
      %v5021 = vpop.f32.mrb[0].mxu0
      %v5022 = vpop.f32.mrb[0].mxu0
      %v5023 = vadd.f32 0.0, %v5022
      %v5024 = vpop.f32.mrb[0].mxu0
      %5025 = vmatprep.mubr.bf16.mxu0 0
      %5026 = vmatmul.mubr.bf16.gmra.mrb[0].mxu0 %v4933
      %v5027 = vpop.f32.mrb[0].mxu0
      %v5028 = vadd.f32 0.0, %v5027
      %v5029 = vpop.f32.mrb[0].mxu0
      %v5030 = vpop.f32.mrb[0].mxu0
      %v5031 = vadd.f32 0.0, %v5030
      %v5032 = vpop.f32.mrb[0].mxu0
      %5033 = vmatprep.mubr.bf16.mxu0 0
      %5034 = vmatmul.mubr.bf16.gmra.mrb[0].mxu0 %v4936
      %v5035 = vpop.f32.mrb[0].mxu0
      %v5036 = vadd.f32 0.0, %v5035
      %v5037 = vpop.f32.mrb[0].mxu0
      %v5038 = vpop.f32.mrb[0].mxu0
      %v5039 = vadd.f32 0.0, %v5038
      %v5040 = vpop.f32.mrb[0].mxu0
      %5041 = vmatprep.mubr.bf16.mxu0 0
      %5042 = vmatmul.mubr.bf16.gmra.mrb[0].mxu0 %v4939
      %v5043 = vpop.f32.mrb[0].mxu0
      %v5044 = vadd.f32 0.0, %v5043
      %v5045 = vpop.f32.mrb[0].mxu0
      %v5046 = vpop.f32.mrb[0].mxu0
      %v5047 = vadd.f32 0.0, %v5046
      %v5048 = vpop.f32.mrb[0].mxu0
      %5049 = vmatprep.mubr.bf16.mxu0 0
      %5050 = vmatmul.mubr.bf16.gmra.mrb[0].mxu0 %v4942
      %v5051 = vpop.f32.mrb[0].mxu0
      %v5052 = vadd.f32 0.0, %v5051
      %v5053 = vpop.f32.mrb[0].mxu0
      %v5054 = vpop.f32.mrb[0].mxu0
      %v5055 = vadd.f32 0.0, %v5054
      %v5056 = vpop.f32.mrb[0].mxu0
      %5057 = vmatprep.mubr.bf16.mxu0 0
      %5058 = vmatmul.mubr.bf16.gmra.mrb[0].mxu0 %v4945
      %v5059 = vpop.f32.mrb[0].mxu0
      %v5060 = vadd.f32 0.0, %v5059
      %v5061 = vpop.f32.mrb[0].mxu0
      %v5062 = vpop.f32.mrb[0].mxu0
      %v5063 = vadd.f32 0.0, %v5062
      %v5064 = vpop.f32.mrb[0].mxu0
      %5065 = vmatprep.mubr.bf16.mxu0 0
      %5066 = vmatmul.mubr.bf16.gmra.mrb[0].mxu0 %v4948
      %v5067 = vpop.f32.mrb[0].mxu0
      %v5068 = vadd.f32 0.0, %v5067
      %v5069 = vpop.f32.mrb[0].mxu0
      %v5070 = vpop.f32.mrb[0].mxu0
      %v5071 = vadd.f32 0.0, %v5070
      %v5072 = vpop.f32.mrb[0].mxu0
      %5073 = vmatprep.mubr.bf16.mxu0 0
      %5074 = vmatmul.mubr.bf16.gmra.mrb[0].mxu0 %v4951
      %v5075 = vpop.f32.mrb[0].mxu0
      %v5076 = vadd.f32 0.0, %v5075
      %v5077 = vpop.f32.mrb[0].mxu0
      %v5078 = vpop.f32.mrb[0].mxu0
      %v5079 = vadd.f32 0.0, %v5078
      %v5080 = vpop.f32.mrb[0].mxu0
      %5081 = vmatprep.mubr.bf16.mxu0 0
      %5082 = vmatmul.mubr.bf16.gmra.mrb[0].mxu0 %v4954
      %v5083 = vpop.f32.mrb[0].mxu0
      %v5084 = vadd.f32 0.0, %v5083
      %v5085 = vpop.f32.mrb[0].mxu0
      %v5086 = vpop.f32.mrb[0].mxu0
      %v5087 = vadd.f32 0.0, %v5086
      %v5088 = vpop.f32.mrb[0].mxu0
      %5089 = vmatprep.mubr.bf16.mxu0 0
      %5090 = vmatmul.mubr.bf16.gmra.mrb[0].mxu0 %v4957
      %v5091 = vpop.f32.mrb[0].mxu0
      %v5092 = vadd.f32 0.0, %v5091
      %v5093 = vpop.f32.mrb[0].mxu0
      %v5094 = vpop.f32.mrb[0].mxu0
      %v5095 = vadd.f32 0.0, %v5094
      %v5096 = vpop.f32.mrb[0].mxu0
      %5097 = vmatprep.mubr.bf16.mxu0 0
      %5098 = vmatmul.mubr.bf16.gmra.mrb[0].mxu0 %v4960
      %v5099 = vpop.f32.mrb[0].mxu0
      %v5100 = vadd.f32 0.0, %v5099
      %v5101 = vpop.f32.mrb[0].mxu0
      %v5102 = vpop.f32.mrb[0].mxu0
      %v5103 = vadd.f32 0.0, %v5102
      %v5104 = vpop.f32.mrb[0].mxu0
      %5105 = vmatprep.mubr.bf16.mxu0 0
      %5106 = vmatmul.mubr.bf16.gmra.mrb[0].mxu0 %v4963
      %v5107 = vpop.f32.mrb[0].mxu0
      %v5108 = vadd.f32 0.0, %v5107
      %v5109 = vpop.f32.mrb[0].mxu0
      %v5110 = vpop.f32.mrb[0].mxu0
      %v5111 = vadd.f32 0.0, %v5110
      %v5112 = vpop.f32.mrb[0].mxu0
      %5113 = vmatprep.mubr.bf16.mxu0 0
      %5114 = vmatmul.mubr.bf16.gmra.mrb[0].mxu0 %v4966
      %v5115 = vpop.f32.mrb[0].mxu0
      %v5116 = vadd.f32 0.0, %v5115
      %v5117 = vpop.f32.mrb[0].mxu0
      %v5118 = vpop.f32.mrb[0].mxu0
      %v5119 = vadd.f32 0.0, %v5118
      %v5120 = vpop.f32.mrb[0].mxu0
      %5121 = vmatprep.mubr.bf16.mxu0 0
      %5122 = vmatmul.mubr.bf16.gmra.mrb[0].mxu0 %v4969
      %v5123 = vpop.f32.mrb[0].mxu0
      %v5124 = vadd.f32 0.0, %v5123
      %v5125 = vpop.f32.mrb[0].mxu0
      %v5126 = vpop.f32.mrb[0].mxu0
      %v5127 = vadd.f32 0.0, %v5126
      %v5128 = vpop.f32.mrb[0].mxu0
      %5129 = vmatprep.mubr.bf16.mxu0 0
      %5130 = vmatmul.mubr.bf16.gmra.mrb[0].mxu0 %v4972
      %v5131 = vpop.f32.mrb[0].mxu0
      %v5132 = vadd.f32 0.0, %v5131
      %v5133 = vpop.f32.mrb[0].mxu0
      %v5134 = vpop.f32.mrb[0].mxu0
      %v5135 = vadd.f32 0.0, %v5134
      %v5136 = vpop.f32.mrb[0].mxu0
      %5137 = vdwg.mxu0
      %v5138 = vadd.f32 %v4892, %v5012
      %v5139 = vadd.f32 %v4893, %v5015
      %v5140 = vadd.f32 %v4894, %v5020
      %v5141 = vadd.f32 %v4895, %v5023
      %v5142 = vadd.f32 %v4896, %v5028
      %v5143 = vadd.f32 %v4897, %v5031
      %v5144 = vadd.f32 %v4898, %v5036
      %v5145 = vadd.f32 %v4899, %v5039
      %v5146 = vadd.f32 %v4900, %v5044
      %v5147 = vadd.f32 %v4901, %v5047
      %v5148 = vadd.f32 %v4902, %v5052
      %v5149 = vadd.f32 %v4903, %v5055
      %v5150 = vadd.f32 %v4904, %v5060
      %v5151 = vadd.f32 %v4905, %v5063
      %v5152 = vadd.f32 %v4906, %v5068
      %v5153 = vadd.f32 %v4907, %v5071
      %v5154 = vadd.f32 %v4908, %v5076
      %v5155 = vadd.f32 %v4909, %v5079
      %v5156 = vadd.f32 %v4910, %v5084
      %v5157 = vadd.f32 %v4911, %v5087
      %v5158 = vadd.f32 %v4912, %v5092
      %v5159 = vadd.f32 %v4913, %v5095
      %v5160 = vadd.f32 %v4914, %v5100
      %v5161 = vadd.f32 %v4915, %v5103
      %v5162 = vadd.f32 %v4916, %v5108
      %v5163 = vadd.f32 %v4917, %v5111
      %v5164 = vadd.f32 %v4918, %v5116
      %v5165 = vadd.f32 %v4919, %v5119
      %v5166 = vadd.f32 %v4920, %v5124
      %v5167 = vadd.f32 %v4921, %v5127
      %v5168 = vadd.f32 %v4922, %v5132
      %v5169 = vadd.f32 %v4923, %v5135
      %5170 = vst [vmem:[#allocation3] sm:$0xff] %v5138
      %5171 = vst [vmem:[#allocation3 + $0x8] sm:$0xff] %v5139
      %5172 = vst [vmem:[#allocation3 + $0x10] sm:$0xff] %v5140
      %5173 = vst [vmem:[#allocation3 + $0x18] sm:$0xff] %v5141
      %5174 = vst [vmem:[#allocation3 + $0x20] sm:$0xff] %v5142
      %5175 = vst [vmem:[#allocation3 + $0x28] sm:$0xff] %v5143
      %5176 = vst [vmem:[#allocation3 + $0x30] sm:$0xff] %v5144
      %5177 = vst [vmem:[#allocation3 + $0x38] sm:$0xff] %v5145
      %5178 = vst [vmem:[#allocation3 + $0x40] sm:$0xff] %v5146
      %5179 = vst [vmem:[#allocation3 + $0x48] sm:$0xff] %v5147
      %5180 = vst [vmem:[#allocation3 + $0x50] sm:$0xff] %v5148
      %5181 = vst [vmem:[#allocation3 + $0x58] sm:$0xff] %v5149
      %5182 = vst [vmem:[#allocation3 + $0x60] sm:$0xff] %v5150
      %5183 = vst [vmem:[#allocation3 + $0x68] sm:$0xff] %v5151
      %5184 = vst [vmem:[#allocation3 + $0x70] sm:$0xff] %v5152
      %5185 = vst [vmem:[#allocation3 + $0x78] sm:$0xff] %v5153
      %5186 = vst [vmem:[#allocation3 + $0x80] sm:$0xff] %v5154
      %5187 = vst [vmem:[#allocation3 + $0x88] sm:$0xff] %v5155
      %5188 = vst [vmem:[#allocation3 + $0x90] sm:$0xff] %v5156
      %5189 = vst [vmem:[#allocation3 + $0x98] sm:$0xff] %v5157
      %5190 = vst [vmem:[#allocation3 + $0xa0] sm:$0xff] %v5158
      %5191 = vst [vmem:[#allocation3 + $0xa8] sm:$0xff] %v5159
      %5192 = vst [vmem:[#allocation3 + $0xb0] sm:$0xff] %v5160
      %5193 = vst [vmem:[#allocation3 + $0xb8] sm:$0xff] %v5161
      %5194 = vst [vmem:[#allocation3 + $0xc0] sm:$0xff] %v5162
      %5195 = vst [vmem:[#allocation3 + $0xc8] sm:$0xff] %v5163
      %5196 = vst [vmem:[#allocation3 + $0xd0] sm:$0xff] %v5164
      %5197 = vst [vmem:[#allocation3 + $0xd8] sm:$0xff] %v5165
      %5198 = vst [vmem:[#allocation3 + $0xe0] sm:$0xff] %v5166
      %5199 = vst [vmem:[#allocation3 + $0xe8] sm:$0xff] %v5167
      %5200 = vst [vmem:[#allocation3 + $0xf0] sm:$0xff] %v5168
      %5201 = vst [vmem:[#allocation3 + $0xf8] sm:$0xff] %v5169
      %s5202 = scalar_lea.vmem [#allocation2], 160
      %v5203 = vld [vmem:[%s5202] sm:$0xff]
      %v5204 = vld [vmem:[%s5202 + $0x8] sm:$0xff]
      %v5205 = vld [vmem:[%s5202 + $0x10] sm:$0xff]
      %v5206 = vld [vmem:[%s5202 + $0x18] sm:$0xff]
      %v5207 = vld [vmem:[%s5202 + $0x20] sm:$0xff]
      %v5208 = vld [vmem:[%s5202 + $0x28] sm:$0xff]
      %v5209 = vld [vmem:[%s5202 + $0x30] sm:$0xff]
      %v5210 = vld [vmem:[%s5202 + $0x38] sm:$0xff]
      %v5211 = vld [vmem:[%s5202 + $0x40] sm:$0xff]
      %v5212 = vld [vmem:[%s5202 + $0x48] sm:$0xff]
      %v5213 = vld [vmem:[%s5202 + $0x50] sm:$0xff]
      %v5214 = vld [vmem:[%s5202 + $0x58] sm:$0xff]
      %v5215 = vld [vmem:[%s5202 + $0x60] sm:$0xff]
      %v5216 = vld [vmem:[%s5202 + $0x68] sm:$0xff]
      %v5217 = vld [vmem:[%s5202 + $0x70] sm:$0xff]
      %v5218 = vld [vmem:[%s5202 + $0x78] sm:$0xff]
      %v5219 = vld [vmem:[#allocation3] sm:$0xff]
      %v5220 = vld [vmem:[#allocation3 + $0x8] sm:$0xff]
      %v5221 = vld [vmem:[#allocation3 + $0x10] sm:$0xff]
      %v5222 = vld [vmem:[#allocation3 + $0x18] sm:$0xff]
      %v5223 = vld [vmem:[#allocation3 + $0x20] sm:$0xff]
      %v5224 = vld [vmem:[#allocation3 + $0x28] sm:$0xff]
      %v5225 = vld [vmem:[#allocation3 + $0x30] sm:$0xff]
      %v5226 = vld [vmem:[#allocation3 + $0x38] sm:$0xff]
      %v5227 = vld [vmem:[#allocation3 + $0x40] sm:$0xff]
      %v5228 = vld [vmem:[#allocation3 + $0x48] sm:$0xff]
      %v5229 = vld [vmem:[#allocation3 + $0x50] sm:$0xff]
      %v5230 = vld [vmem:[#allocation3 + $0x58] sm:$0xff]
      %v5231 = vld [vmem:[#allocation3 + $0x60] sm:$0xff]
      %v5232 = vld [vmem:[#allocation3 + $0x68] sm:$0xff]
      %v5233 = vld [vmem:[#allocation3 + $0x70] sm:$0xff]
      %v5234 = vld [vmem:[#allocation3 + $0x78] sm:$0xff]
      %v5235 = vld [vmem:[#allocation3 + $0x80] sm:$0xff]
      %v5236 = vld [vmem:[#allocation3 + $0x88] sm:$0xff]
      %v5237 = vld [vmem:[#allocation3 + $0x90] sm:$0xff]
      %v5238 = vld [vmem:[#allocation3 + $0x98] sm:$0xff]
      %v5239 = vld [vmem:[#allocation3 + $0xa0] sm:$0xff]
      %v5240 = vld [vmem:[#allocation3 + $0xa8] sm:$0xff]
      %v5241 = vld [vmem:[#allocation3 + $0xb0] sm:$0xff]
      %v5242 = vld [vmem:[#allocation3 + $0xb8] sm:$0xff]
      %v5243 = vld [vmem:[#allocation3 + $0xc0] sm:$0xff]
      %v5244 = vld [vmem:[#allocation3 + $0xc8] sm:$0xff]
      %v5245 = vld [vmem:[#allocation3 + $0xd0] sm:$0xff]
      %v5246 = vld [vmem:[#allocation3 + $0xd8] sm:$0xff]
      %v5247 = vld [vmem:[#allocation3 + $0xe0] sm:$0xff]
      %v5248 = vld [vmem:[#allocation3 + $0xe8] sm:$0xff]
      %v5249 = vld [vmem:[#allocation3 + $0xf0] sm:$0xff]
      %v5250 = vld [vmem:[#allocation3 + $0xf8] sm:$0xff]
      %s5251 = scalar_lea.vmem %s3, 26
      %v5252 = vld [vmem:[%s5251] sm:$0x3]
      %v5254 = vsel %vm526, %v5203, 0
      %v5257 = vsel %vm526, %v5204, 0
      %v5260 = vsel %vm526, %v5205, 0
      %v5263 = vsel %vm526, %v5206, 0
      %v5266 = vsel %vm526, %v5207, 0
      %v5269 = vsel %vm526, %v5208, 0
      %v5272 = vsel %vm526, %v5209, 0
      %v5275 = vsel %vm526, %v5210, 0
      %v5278 = vsel %vm526, %v5211, 0
      %v5281 = vsel %vm526, %v5212, 0
      %v5284 = vsel %vm526, %v5213, 0
      %v5287 = vsel %vm526, %v5214, 0
      %v5290 = vsel %vm526, %v5215, 0
      %v5293 = vsel %vm526, %v5216, 0
      %v5296 = vsel %vm526, %v5217, 0
      %v5299 = vsel %vm526, %v5218, 0
      %v5302 = vsel %vm1438, %v5252, 0
      %5304 = vmatprep.subr.bf16.mxu0 0
      %5305 = vmatpush1.bf16.msra.mxu0 %v5302
      %5306 = vmatprep.subr.bf16.mxu0 0
      %5307 = vmatpush1.bf16.msra.mxu0 0
      %5308 = vmatprep.subr.bf16.mxu0 0
      %5309 = vmatpush1.bf16.msra.mxu0 0
      %5310 = vmatprep.subr.bf16.mxu0 0
      %5311 = vmatpush1.bf16.msra.mxu0 0
      %5312 = vmatprep.subr.bf16.mxu0 0
      %5313 = vmatpush1.bf16.msra.mxu0 0
      %5314 = vmatprep.subr.bf16.mxu0 0
      %5315 = vmatpush1.bf16.msra.mxu0 0
      %5316 = vmatprep.subr.bf16.mxu0 0
      %5317 = vmatpush1.bf16.msra.mxu0 0
      %5318 = vmatprep.subr.bf16.mxu0 0
      %5319 = vmatpush1.bf16.msra.mxu0 0
      %5320 = vmatprep.subr.bf16.mxu0 0
      %5321 = vmatpush1.bf16.msra.mxu0 0
      %5322 = vmatprep.subr.bf16.mxu0 0
      %5323 = vmatpush1.bf16.msra.mxu0 0
      %5324 = vmatprep.subr.bf16.mxu0 0
      %5325 = vmatpush1.bf16.msra.mxu0 0
      %5326 = vmatprep.subr.bf16.mxu0 0
      %5327 = vmatpush1.bf16.msra.mxu0 0
      %5328 = vmatprep.subr.bf16.mxu0 0
      %5329 = vmatpush1.bf16.msra.mxu0 0
      %5330 = vmatprep.subr.bf16.mxu0 0
      %5331 = vmatpush1.bf16.msra.mxu0 0
      %5332 = vmatprep.subr.bf16.mxu0 0
      %5333 = vmatpush1.bf16.msra.mxu0 0
      %5334 = vmatprep.subr.bf16.mxu0 0
      %5335 = vmatpush1.bf16.msra.mxu0 0
      %5336 = vmatprep.mubr.bf16.mxu0 0
      %5337 = vmatmul.mubr.bf16.gmra.mrb[0].mxu0 %v5254
      %v5338 = vpop.f32.mrb[0].mxu0
      %v5339 = vadd.f32 0.0, %v5338
      %v5340 = vpop.f32.mrb[0].mxu0
      %v5341 = vpop.f32.mrb[0].mxu0
      %v5342 = vadd.f32 0.0, %v5341
      %v5343 = vpop.f32.mrb[0].mxu0
      %5344 = vmatprep.mubr.bf16.mxu0 0
      %5345 = vmatmul.mubr.bf16.gmra.mrb[0].mxu0 %v5257
      %v5346 = vpop.f32.mrb[0].mxu0
      %v5347 = vadd.f32 0.0, %v5346
      %v5348 = vpop.f32.mrb[0].mxu0
      %v5349 = vpop.f32.mrb[0].mxu0
      %v5350 = vadd.f32 0.0, %v5349
      %v5351 = vpop.f32.mrb[0].mxu0
      %5352 = vmatprep.mubr.bf16.mxu0 0
      %5353 = vmatmul.mubr.bf16.gmra.mrb[0].mxu0 %v5260
      %v5354 = vpop.f32.mrb[0].mxu0
      %v5355 = vadd.f32 0.0, %v5354
      %v5356 = vpop.f32.mrb[0].mxu0
      %v5357 = vpop.f32.mrb[0].mxu0
      %v5358 = vadd.f32 0.0, %v5357
      %v5359 = vpop.f32.mrb[0].mxu0
      %5360 = vmatprep.mubr.bf16.mxu0 0
      %5361 = vmatmul.mubr.bf16.gmra.mrb[0].mxu0 %v5263
      %v5362 = vpop.f32.mrb[0].mxu0
      %v5363 = vadd.f32 0.0, %v5362
      %v5364 = vpop.f32.mrb[0].mxu0
      %v5365 = vpop.f32.mrb[0].mxu0
      %v5366 = vadd.f32 0.0, %v5365
      %v5367 = vpop.f32.mrb[0].mxu0
      %5368 = vmatprep.mubr.bf16.mxu0 0
      %5369 = vmatmul.mubr.bf16.gmra.mrb[0].mxu0 %v5266
      %v5370 = vpop.f32.mrb[0].mxu0
      %v5371 = vadd.f32 0.0, %v5370
      %v5372 = vpop.f32.mrb[0].mxu0
      %v5373 = vpop.f32.mrb[0].mxu0
      %v5374 = vadd.f32 0.0, %v5373
      %v5375 = vpop.f32.mrb[0].mxu0
      %5376 = vmatprep.mubr.bf16.mxu0 0
      %5377 = vmatmul.mubr.bf16.gmra.mrb[0].mxu0 %v5269
      %v5378 = vpop.f32.mrb[0].mxu0
      %v5379 = vadd.f32 0.0, %v5378
      %v5380 = vpop.f32.mrb[0].mxu0
      %v5381 = vpop.f32.mrb[0].mxu0
      %v5382 = vadd.f32 0.0, %v5381
      %v5383 = vpop.f32.mrb[0].mxu0
      %5384 = vmatprep.mubr.bf16.mxu0 0
      %5385 = vmatmul.mubr.bf16.gmra.mrb[0].mxu0 %v5272
      %v5386 = vpop.f32.mrb[0].mxu0
      %v5387 = vadd.f32 0.0, %v5386
      %v5388 = vpop.f32.mrb[0].mxu0
      %v5389 = vpop.f32.mrb[0].mxu0
      %v5390 = vadd.f32 0.0, %v5389
      %v5391 = vpop.f32.mrb[0].mxu0
      %5392 = vmatprep.mubr.bf16.mxu0 0
      %5393 = vmatmul.mubr.bf16.gmra.mrb[0].mxu0 %v5275
      %v5394 = vpop.f32.mrb[0].mxu0
      %v5395 = vadd.f32 0.0, %v5394
      %v5396 = vpop.f32.mrb[0].mxu0
      %v5397 = vpop.f32.mrb[0].mxu0
      %v5398 = vadd.f32 0.0, %v5397
      %v5399 = vpop.f32.mrb[0].mxu0
      %5400 = vmatprep.mubr.bf16.mxu0 0
      %5401 = vmatmul.mubr.bf16.gmra.mrb[0].mxu0 %v5278
      %v5402 = vpop.f32.mrb[0].mxu0
      %v5403 = vadd.f32 0.0, %v5402
      %v5404 = vpop.f32.mrb[0].mxu0
      %v5405 = vpop.f32.mrb[0].mxu0
      %v5406 = vadd.f32 0.0, %v5405
      %v5407 = vpop.f32.mrb[0].mxu0
      %5408 = vmatprep.mubr.bf16.mxu0 0
      %5409 = vmatmul.mubr.bf16.gmra.mrb[0].mxu0 %v5281
      %v5410 = vpop.f32.mrb[0].mxu0
      %v5411 = vadd.f32 0.0, %v5410
      %v5412 = vpop.f32.mrb[0].mxu0
      %v5413 = vpop.f32.mrb[0].mxu0
      %v5414 = vadd.f32 0.0, %v5413
      %v5415 = vpop.f32.mrb[0].mxu0
      %5416 = vmatprep.mubr.bf16.mxu0 0
      %5417 = vmatmul.mubr.bf16.gmra.mrb[0].mxu0 %v5284
      %v5418 = vpop.f32.mrb[0].mxu0
      %v5419 = vadd.f32 0.0, %v5418
      %v5420 = vpop.f32.mrb[0].mxu0
      %v5421 = vpop.f32.mrb[0].mxu0
      %v5422 = vadd.f32 0.0, %v5421
      %v5423 = vpop.f32.mrb[0].mxu0
      %5424 = vmatprep.mubr.bf16.mxu0 0
      %5425 = vmatmul.mubr.bf16.gmra.mrb[0].mxu0 %v5287
      %v5426 = vpop.f32.mrb[0].mxu0
      %v5427 = vadd.f32 0.0, %v5426
      %v5428 = vpop.f32.mrb[0].mxu0
      %v5429 = vpop.f32.mrb[0].mxu0
      %v5430 = vadd.f32 0.0, %v5429
      %v5431 = vpop.f32.mrb[0].mxu0
      %5432 = vmatprep.mubr.bf16.mxu0 0
      %5433 = vmatmul.mubr.bf16.gmra.mrb[0].mxu0 %v5290
      %v5434 = vpop.f32.mrb[0].mxu0
      %v5435 = vadd.f32 0.0, %v5434
      %v5436 = vpop.f32.mrb[0].mxu0
      %v5437 = vpop.f32.mrb[0].mxu0
      %v5438 = vadd.f32 0.0, %v5437
      %v5439 = vpop.f32.mrb[0].mxu0
      %5440 = vmatprep.mubr.bf16.mxu0 0
      %5441 = vmatmul.mubr.bf16.gmra.mrb[0].mxu0 %v5293
      %v5442 = vpop.f32.mrb[0].mxu0
      %v5443 = vadd.f32 0.0, %v5442
      %v5444 = vpop.f32.mrb[0].mxu0
      %v5445 = vpop.f32.mrb[0].mxu0
      %v5446 = vadd.f32 0.0, %v5445
      %v5447 = vpop.f32.mrb[0].mxu0
      %5448 = vmatprep.mubr.bf16.mxu0 0
      %5449 = vmatmul.mubr.bf16.gmra.mrb[0].mxu0 %v5296
      %v5450 = vpop.f32.mrb[0].mxu0
      %v5451 = vadd.f32 0.0, %v5450
      %v5452 = vpop.f32.mrb[0].mxu0
      %v5453 = vpop.f32.mrb[0].mxu0
      %v5454 = vadd.f32 0.0, %v5453
      %v5455 = vpop.f32.mrb[0].mxu0
      %5456 = vmatprep.mubr.bf16.mxu0 0
      %5457 = vmatmul.mubr.bf16.gmra.mrb[0].mxu0 %v5299
      %v5458 = vpop.f32.mrb[0].mxu0
      %v5459 = vadd.f32 0.0, %v5458
      %v5460 = vpop.f32.mrb[0].mxu0
      %v5461 = vpop.f32.mrb[0].mxu0
      %v5462 = vadd.f32 0.0, %v5461
      %v5463 = vpop.f32.mrb[0].mxu0
      %5464 = vdwg.mxu0
      %v5465 = vadd.f32 %v5219, %v5339
      %v5466 = vadd.f32 %v5220, %v5342
      %v5467 = vadd.f32 %v5221, %v5347
      %v5468 = vadd.f32 %v5222, %v5350
      %v5469 = vadd.f32 %v5223, %v5355
      %v5470 = vadd.f32 %v5224, %v5358
      %v5471 = vadd.f32 %v5225, %v5363
      %v5472 = vadd.f32 %v5226, %v5366
      %v5473 = vadd.f32 %v5227, %v5371
      %v5474 = vadd.f32 %v5228, %v5374
      %v5475 = vadd.f32 %v5229, %v5379
      %v5476 = vadd.f32 %v5230, %v5382
      %v5477 = vadd.f32 %v5231, %v5387
      %v5478 = vadd.f32 %v5232, %v5390
      %v5479 = vadd.f32 %v5233, %v5395
      %v5480 = vadd.f32 %v5234, %v5398
      %v5481 = vadd.f32 %v5235, %v5403
      %v5482 = vadd.f32 %v5236, %v5406
      %v5483 = vadd.f32 %v5237, %v5411
      %v5484 = vadd.f32 %v5238, %v5414
      %v5485 = vadd.f32 %v5239, %v5419
      %v5486 = vadd.f32 %v5240, %v5422
      %v5487 = vadd.f32 %v5241, %v5427
      %v5488 = vadd.f32 %v5242, %v5430
      %v5489 = vadd.f32 %v5243, %v5435
      %v5490 = vadd.f32 %v5244, %v5438
      %v5491 = vadd.f32 %v5245, %v5443
      %v5492 = vadd.f32 %v5246, %v5446
      %v5493 = vadd.f32 %v5247, %v5451
      %v5494 = vadd.f32 %v5248, %v5454
      %v5495 = vadd.f32 %v5249, %v5459
      %v5496 = vadd.f32 %v5250, %v5462
      %5497 = vst [vmem:[#allocation3] sm:$0xff] %v5465
      %5498 = vst [vmem:[#allocation3 + $0x8] sm:$0xff] %v5466
      %5499 = vst [vmem:[#allocation3 + $0x10] sm:$0xff] %v5467
      %5500 = vst [vmem:[#allocation3 + $0x18] sm:$0xff] %v5468
      %5501 = vst [vmem:[#allocation3 + $0x20] sm:$0xff] %v5469
      %5502 = vst [vmem:[#allocation3 + $0x28] sm:$0xff] %v5470
      %5503 = vst [vmem:[#allocation3 + $0x30] sm:$0xff] %v5471
      %5504 = vst [vmem:[#allocation3 + $0x38] sm:$0xff] %v5472
      %5505 = vst [vmem:[#allocation3 + $0x40] sm:$0xff] %v5473
      %5506 = vst [vmem:[#allocation3 + $0x48] sm:$0xff] %v5474
      %5507 = vst [vmem:[#allocation3 + $0x50] sm:$0xff] %v5475
      %5508 = vst [vmem:[#allocation3 + $0x58] sm:$0xff] %v5476
      %5509 = vst [vmem:[#allocation3 + $0x60] sm:$0xff] %v5477
      %5510 = vst [vmem:[#allocation3 + $0x68] sm:$0xff] %v5478
      %5511 = vst [vmem:[#allocation3 + $0x70] sm:$0xff] %v5479
      %5512 = vst [vmem:[#allocation3 + $0x78] sm:$0xff] %v5480
      %5513 = vst [vmem:[#allocation3 + $0x80] sm:$0xff] %v5481
      %5514 = vst [vmem:[#allocation3 + $0x88] sm:$0xff] %v5482
      %5515 = vst [vmem:[#allocation3 + $0x90] sm:$0xff] %v5483
      %5516 = vst [vmem:[#allocation3 + $0x98] sm:$0xff] %v5484
      %5517 = vst [vmem:[#allocation3 + $0xa0] sm:$0xff] %v5485
      %5518 = vst [vmem:[#allocation3 + $0xa8] sm:$0xff] %v5486
      %5519 = vst [vmem:[#allocation3 + $0xb0] sm:$0xff] %v5487
      %5520 = vst [vmem:[#allocation3 + $0xb8] sm:$0xff] %v5488
      %5521 = vst [vmem:[#allocation3 + $0xc0] sm:$0xff] %v5489
      %5522 = vst [vmem:[#allocation3 + $0xc8] sm:$0xff] %v5490
      %5523 = vst [vmem:[#allocation3 + $0xd0] sm:$0xff] %v5491
      %5524 = vst [vmem:[#allocation3 + $0xd8] sm:$0xff] %v5492
      %5525 = vst [vmem:[#allocation3 + $0xe0] sm:$0xff] %v5493
      %5526 = vst [vmem:[#allocation3 + $0xe8] sm:$0xff] %v5494
      %5527 = vst [vmem:[#allocation3 + $0xf0] sm:$0xff] %v5495
      %5528 = vst [vmem:[#allocation3 + $0xf8] sm:$0xff] %v5496
      %v5529 = vld [vmem:[#allocation3] sm:$0xff]
      %v5530 = vld [vmem:[#allocation3 + $0x8] sm:$0xff]
      %v5531 = vld [vmem:[#allocation3 + $0x10] sm:$0xff]
      %v5532 = vld [vmem:[#allocation3 + $0x18] sm:$0xff]
      %v5533 = vld [vmem:[#allocation3 + $0x20] sm:$0xff]
      %v5534 = vld [vmem:[#allocation3 + $0x28] sm:$0xff]
      %v5535 = vld [vmem:[#allocation3 + $0x30] sm:$0xff]
      %v5536 = vld [vmem:[#allocation3 + $0x38] sm:$0xff]
      %v5537 = vld [vmem:[#allocation3 + $0x40] sm:$0xff]
      %v5538 = vld [vmem:[#allocation3 + $0x48] sm:$0xff]
      %v5539 = vld [vmem:[#allocation3 + $0x50] sm:$0xff]
      %v5540 = vld [vmem:[#allocation3 + $0x58] sm:$0xff]
      %v5541 = vld [vmem:[#allocation3 + $0x60] sm:$0xff]
      %v5542 = vld [vmem:[#allocation3 + $0x68] sm:$0xff]
      %v5543 = vld [vmem:[#allocation3 + $0x70] sm:$0xff]
      %v5544 = vld [vmem:[#allocation3 + $0x78] sm:$0xff]
      %v5545 = vld [vmem:[#allocation3 + $0x80] sm:$0xff]
      %v5546 = vld [vmem:[#allocation3 + $0x88] sm:$0xff]
      %v5547 = vld [vmem:[#allocation3 + $0x90] sm:$0xff]
      %v5548 = vld [vmem:[#allocation3 + $0x98] sm:$0xff]
      %v5549 = vld [vmem:[#allocation3 + $0xa0] sm:$0xff]
      %v5550 = vld [vmem:[#allocation3 + $0xa8] sm:$0xff]
      %v5551 = vld [vmem:[#allocation3 + $0xb0] sm:$0xff]
      %v5552 = vld [vmem:[#allocation3 + $0xb8] sm:$0xff]
      %v5553 = vld [vmem:[#allocation3 + $0xc0] sm:$0xff]
      %v5554 = vld [vmem:[#allocation3 + $0xc8] sm:$0xff]
      %v5555 = vld [vmem:[#allocation3 + $0xd0] sm:$0xff]
      %v5556 = vld [vmem:[#allocation3 + $0xd8] sm:$0xff]
      %v5557 = vld [vmem:[#allocation3 + $0xe0] sm:$0xff]
      %v5558 = vld [vmem:[#allocation3 + $0xe8] sm:$0xff]
      %v5559 = vld [vmem:[#allocation3 + $0xf0] sm:$0xff]
      %v5560 = vld [vmem:[#allocation3 + $0xf8] sm:$0xff]
      %v5561 = vld [vmem:[%s4] sm:$0x1]
      %v5563 = vlaneseq
      %v5564 = vshrl.u32 %v5563, 7
      %v5565 = vsub.s32 0, %v5564
      %v5566 = vrot.slane %v5561, %v5565
      %v5568 = vadd.f32 %v5529, %v5566
      %v5569 = vadd.f32 %v5530, %v5566
      %v5570 = vadd.f32 %v5531, %v5566
      %v5571 = vadd.f32 %v5532, %v5566
      %v5572 = vadd.f32 %v5533, %v5566
      %v5573 = vadd.f32 %v5534, %v5566
      %v5574 = vadd.f32 %v5535, %v5566
      %v5575 = vadd.f32 %v5536, %v5566
      %v5576 = vadd.f32 %v5537, %v5566
      %v5577 = vadd.f32 %v5538, %v5566
      %v5578 = vadd.f32 %v5539, %v5566
      %v5579 = vadd.f32 %v5540, %v5566
      %v5580 = vadd.f32 %v5541, %v5566
      %v5581 = vadd.f32 %v5542, %v5566
      %v5582 = vadd.f32 %v5543, %v5566
      %v5583 = vadd.f32 %v5544, %v5566
      %v5584 = vadd.f32 %v5545, %v5566
      %v5585 = vadd.f32 %v5546, %v5566
      %v5586 = vadd.f32 %v5547, %v5566
      %v5587 = vadd.f32 %v5548, %v5566
      %v5588 = vadd.f32 %v5549, %v5566
      %v5589 = vadd.f32 %v5550, %v5566
      %v5590 = vadd.f32 %v5551, %v5566
      %v5591 = vadd.f32 %v5552, %v5566
      %v5592 = vadd.f32 %v5553, %v5566
      %v5593 = vadd.f32 %v5554, %v5566
      %v5594 = vadd.f32 %v5555, %v5566
      %v5595 = vadd.f32 %v5556, %v5566
      %v5596 = vadd.f32 %v5557, %v5566
      %v5597 = vadd.f32 %v5558, %v5566
      %v5598 = vadd.f32 %v5559, %v5566
      %v5599 = vadd.f32 %v5560, %v5566
      %s5600 = scalar_lea.vmem %s395, 32
      %5601 = vst [vmem:[%s5600] sm:$0xff] %v5568
      %5602 = vst [vmem:[%s5600 + $0x8] sm:$0xff] %v5569
      %5603 = vst [vmem:[%s5600 + $0x40] sm:$0xff] %v5570
      %5604 = vst [vmem:[%s5600 + $0x48] sm:$0xff] %v5571
      %5605 = vst [vmem:[%s5600 + $0x80] sm:$0xff] %v5572
      %5606 = vst [vmem:[%s5600 + $0x88] sm:$0xff] %v5573
      %5607 = vst [vmem:[%s5600 + $0xc0] sm:$0xff] %v5574
      %5608 = vst [vmem:[%s5600 + $0xc8] sm:$0xff] %v5575
      %5609 = vst [vmem:[%s5600 + $0x100] sm:$0xff] %v5576
      %5610 = vst [vmem:[%s5600 + $0x108] sm:$0xff] %v5577
      %5611 = vst [vmem:[%s5600 + $0x140] sm:$0xff] %v5578
      %5612 = vst [vmem:[%s5600 + $0x148] sm:$0xff] %v5579
      %5613 = vst [vmem:[%s5600 + $0x180] sm:$0xff] %v5580
      %5614 = vst [vmem:[%s5600 + $0x188] sm:$0xff] %v5581
      %5615 = vst [vmem:[%s5600 + $0x1c0] sm:$0xff] %v5582
      %5616 = vst [vmem:[%s5600 + $0x1c8] sm:$0xff] %v5583
      %5617 = vst [vmem:[%s5600 + $0x200] sm:$0xff] %v5584
      %5618 = vst [vmem:[%s5600 + $0x208] sm:$0xff] %v5585
      %5619 = vst [vmem:[%s5600 + $0x240] sm:$0xff] %v5586
      %5620 = vst [vmem:[%s5600 + $0x248] sm:$0xff] %v5587
      %5621 = vst [vmem:[%s5600 + $0x280] sm:$0xff] %v5588
      %5622 = vst [vmem:[%s5600 + $0x288] sm:$0xff] %v5589
      %5623 = vst [vmem:[%s5600 + $0x2c0] sm:$0xff] %v5590
      %5624 = vst [vmem:[%s5600 + $0x2c8] sm:$0xff] %v5591
      %5625 = vst [vmem:[%s5600 + $0x300] sm:$0xff] %v5592
      %5626 = vst [vmem:[%s5600 + $0x308] sm:$0xff] %v5593
      %5627 = vst [vmem:[%s5600 + $0x340] sm:$0xff] %v5594
      %5628 = vst [vmem:[%s5600 + $0x348] sm:$0xff] %v5595
      %5629 = vst [vmem:[%s5600 + $0x380] sm:$0xff] %v5596
      %5630 = vst [vmem:[%s5600 + $0x388] sm:$0xff] %v5597
      %5631 = vst [vmem:[%s5600 + $0x3c0] sm:$0xff] %v5598
      %5632 = vst [vmem:[%s5600 + $0x3c8] sm:$0xff] %v5599
      %5633 = vst [vmem:[#allocation3] sm:$0xff] 0.0
      %5634 = vst [vmem:[#allocation3 + $0x8] sm:$0xff] 0.0
      %5635 = vst [vmem:[#allocation3 + $0x10] sm:$0xff] 0.0
      %5636 = vst [vmem:[#allocation3 + $0x18] sm:$0xff] 0.0
      %5637 = vst [vmem:[#allocation3 + $0x20] sm:$0xff] 0.0
      %5638 = vst [vmem:[#allocation3 + $0x28] sm:$0xff] 0.0
      %5639 = vst [vmem:[#allocation3 + $0x30] sm:$0xff] 0.0
      %5640 = vst [vmem:[#allocation3 + $0x38] sm:$0xff] 0.0
      %5641 = vst [vmem:[#allocation3 + $0x40] sm:$0xff] 0.0
      %5642 = vst [vmem:[#allocation3 + $0x48] sm:$0xff] 0.0
      %5643 = vst [vmem:[#allocation3 + $0x50] sm:$0xff] 0.0
      %5644 = vst [vmem:[#allocation3 + $0x58] sm:$0xff] 0.0
      %5645 = vst [vmem:[#allocation3 + $0x60] sm:$0xff] 0.0
      %5646 = vst [vmem:[#allocation3 + $0x68] sm:$0xff] 0.0
      %5647 = vst [vmem:[#allocation3 + $0x70] sm:$0xff] 0.0
      %5648 = vst [vmem:[#allocation3 + $0x78] sm:$0xff] 0.0
      %5649 = vst [vmem:[#allocation3 + $0x80] sm:$0xff] 0.0
      %5650 = vst [vmem:[#allocation3 + $0x88] sm:$0xff] 0.0
      %5651 = vst [vmem:[#allocation3 + $0x90] sm:$0xff] 0.0
      %5652 = vst [vmem:[#allocation3 + $0x98] sm:$0xff] 0.0
      %5653 = vst [vmem:[#allocation3 + $0xa0] sm:$0xff] 0.0
      %5654 = vst [vmem:[#allocation3 + $0xa8] sm:$0xff] 0.0
      %5655 = vst [vmem:[#allocation3 + $0xb0] sm:$0xff] 0.0
      %5656 = vst [vmem:[#allocation3 + $0xb8] sm:$0xff] 0.0
      %5657 = vst [vmem:[#allocation3 + $0xc0] sm:$0xff] 0.0
      %5658 = vst [vmem:[#allocation3 + $0xc8] sm:$0xff] 0.0
      %5659 = vst [vmem:[#allocation3 + $0xd0] sm:$0xff] 0.0
      %5660 = vst [vmem:[#allocation3 + $0xd8] sm:$0xff] 0.0
      %5661 = vst [vmem:[#allocation3 + $0xe0] sm:$0xff] 0.0
      %5662 = vst [vmem:[#allocation3 + $0xe8] sm:$0xff] 0.0
      %5663 = vst [vmem:[#allocation3 + $0xf0] sm:$0xff] 0.0
      %5664 = vst [vmem:[#allocation3 + $0xf8] sm:$0xff] 0.0
      %v5665 = vld [vmem:[%s2320] sm:$0xff]
      %v5666 = vld [vmem:[%s2320 + $0x8] sm:$0xff]
      %v5667 = vld [vmem:[%s2320 + $0x10] sm:$0xff]
      %v5668 = vld [vmem:[%s2320 + $0x18] sm:$0xff]
      %v5669 = vld [vmem:[%s2320 + $0x20] sm:$0xff]
      %v5670 = vld [vmem:[%s2320 + $0x28] sm:$0xff]
      %v5671 = vld [vmem:[%s2320 + $0x30] sm:$0xff]
      %v5672 = vld [vmem:[%s2320 + $0x38] sm:$0xff]
      %v5673 = vld [vmem:[%s2320 + $0x40] sm:$0xff]
      %v5674 = vld [vmem:[%s2320 + $0x48] sm:$0xff]
      %v5675 = vld [vmem:[%s2320 + $0x50] sm:$0xff]
      %v5676 = vld [vmem:[%s2320 + $0x58] sm:$0xff]
      %v5677 = vld [vmem:[%s2320 + $0x60] sm:$0xff]
      %v5678 = vld [vmem:[%s2320 + $0x68] sm:$0xff]
      %v5679 = vld [vmem:[%s2320 + $0x70] sm:$0xff]
      %v5680 = vld [vmem:[%s2320 + $0x78] sm:$0xff]
      %v5681 = vld [vmem:[#allocation3] sm:$0xff]
      %v5682 = vld [vmem:[#allocation3 + $0x8] sm:$0xff]
      %v5683 = vld [vmem:[#allocation3 + $0x10] sm:$0xff]
      %v5684 = vld [vmem:[#allocation3 + $0x18] sm:$0xff]
      %v5685 = vld [vmem:[#allocation3 + $0x20] sm:$0xff]
      %v5686 = vld [vmem:[#allocation3 + $0x28] sm:$0xff]
      %v5687 = vld [vmem:[#allocation3 + $0x30] sm:$0xff]
      %v5688 = vld [vmem:[#allocation3 + $0x38] sm:$0xff]
      %v5689 = vld [vmem:[#allocation3 + $0x40] sm:$0xff]
      %v5690 = vld [vmem:[#allocation3 + $0x48] sm:$0xff]
      %v5691 = vld [vmem:[#allocation3 + $0x50] sm:$0xff]
      %v5692 = vld [vmem:[#allocation3 + $0x58] sm:$0xff]
      %v5693 = vld [vmem:[#allocation3 + $0x60] sm:$0xff]
      %v5694 = vld [vmem:[#allocation3 + $0x68] sm:$0xff]
      %v5695 = vld [vmem:[#allocation3 + $0x70] sm:$0xff]
      %v5696 = vld [vmem:[#allocation3 + $0x78] sm:$0xff]
      %v5697 = vld [vmem:[#allocation3 + $0x80] sm:$0xff]
      %v5698 = vld [vmem:[#allocation3 + $0x88] sm:$0xff]
      %v5699 = vld [vmem:[#allocation3 + $0x90] sm:$0xff]
      %v5700 = vld [vmem:[#allocation3 + $0x98] sm:$0xff]
      %v5701 = vld [vmem:[#allocation3 + $0xa0] sm:$0xff]
      %v5702 = vld [vmem:[#allocation3 + $0xa8] sm:$0xff]
      %v5703 = vld [vmem:[#allocation3 + $0xb0] sm:$0xff]
      %v5704 = vld [vmem:[#allocation3 + $0xb8] sm:$0xff]
      %v5705 = vld [vmem:[#allocation3 + $0xc0] sm:$0xff]
      %v5706 = vld [vmem:[#allocation3 + $0xc8] sm:$0xff]
      %v5707 = vld [vmem:[#allocation3 + $0xd0] sm:$0xff]
      %v5708 = vld [vmem:[#allocation3 + $0xd8] sm:$0xff]
      %v5709 = vld [vmem:[#allocation3 + $0xe0] sm:$0xff]
      %v5710 = vld [vmem:[#allocation3 + $0xe8] sm:$0xff]
      %v5711 = vld [vmem:[#allocation3 + $0xf0] sm:$0xff]
      %v5712 = vld [vmem:[#allocation3 + $0xf8] sm:$0xff]
      %s5713 = scalar_lea.vmem %s3, 20
      %v5714 = vld [vmem:[%s5713] sm:$0x3]
      %v5716 = vsel %vm526, %v5665, 0
      %v5719 = vsel %vm526, %v5666, 0
      %v5722 = vsel %vm526, %v5667, 0
      %v5725 = vsel %vm526, %v5668, 0
      %v5728 = vsel %vm526, %v5669, 0
      %v5731 = vsel %vm526, %v5670, 0
      %v5734 = vsel %vm526, %v5671, 0
      %v5737 = vsel %vm526, %v5672, 0
      %v5740 = vsel %vm526, %v5673, 0
      %v5743 = vsel %vm526, %v5674, 0
      %v5746 = vsel %vm526, %v5675, 0
      %v5749 = vsel %vm526, %v5676, 0
      %v5752 = vsel %vm526, %v5677, 0
      %v5755 = vsel %vm526, %v5678, 0
      %v5758 = vsel %vm526, %v5679, 0
      %v5761 = vsel %vm526, %v5680, 0
      %v5764 = vsel %vm1438, %v5714, 0
      %5766 = vmatprep.subr.bf16.mxu0 0
      %5767 = vmatpush1.bf16.msra.mxu0 %v5764
      %5768 = vmatprep.subr.bf16.mxu0 0
      %5769 = vmatpush1.bf16.msra.mxu0 0
      %5770 = vmatprep.subr.bf16.mxu0 0
      %5771 = vmatpush1.bf16.msra.mxu0 0
      %5772 = vmatprep.subr.bf16.mxu0 0
      %5773 = vmatpush1.bf16.msra.mxu0 0
      %5774 = vmatprep.subr.bf16.mxu0 0
      %5775 = vmatpush1.bf16.msra.mxu0 0
      %5776 = vmatprep.subr.bf16.mxu0 0
      %5777 = vmatpush1.bf16.msra.mxu0 0
      %5778 = vmatprep.subr.bf16.mxu0 0
      %5779 = vmatpush1.bf16.msra.mxu0 0
      %5780 = vmatprep.subr.bf16.mxu0 0
      %5781 = vmatpush1.bf16.msra.mxu0 0
      %5782 = vmatprep.subr.bf16.mxu0 0
      %5783 = vmatpush1.bf16.msra.mxu0 0
      %5784 = vmatprep.subr.bf16.mxu0 0
      %5785 = vmatpush1.bf16.msra.mxu0 0
      %5786 = vmatprep.subr.bf16.mxu0 0
      %5787 = vmatpush1.bf16.msra.mxu0 0
      %5788 = vmatprep.subr.bf16.mxu0 0
      %5789 = vmatpush1.bf16.msra.mxu0 0
      %5790 = vmatprep.subr.bf16.mxu0 0
      %5791 = vmatpush1.bf16.msra.mxu0 0
      %5792 = vmatprep.subr.bf16.mxu0 0
      %5793 = vmatpush1.bf16.msra.mxu0 0
      %5794 = vmatprep.subr.bf16.mxu0 0
      %5795 = vmatpush1.bf16.msra.mxu0 0
      %5796 = vmatprep.subr.bf16.mxu0 0
      %5797 = vmatpush1.bf16.msra.mxu0 0
      %5798 = vmatprep.mubr.bf16.mxu0 0
      %5799 = vmatmul.mubr.bf16.gmra.mrb[0].mxu0 %v5716
      %v5800 = vpop.f32.mrb[0].mxu0
      %v5801 = vadd.f32 0.0, %v5800
      %v5802 = vpop.f32.mrb[0].mxu0
      %v5803 = vpop.f32.mrb[0].mxu0
      %v5804 = vadd.f32 0.0, %v5803
      %v5805 = vpop.f32.mrb[0].mxu0
      %5806 = vmatprep.mubr.bf16.mxu0 0
      %5807 = vmatmul.mubr.bf16.gmra.mrb[0].mxu0 %v5719
      %v5808 = vpop.f32.mrb[0].mxu0
      %v5809 = vadd.f32 0.0, %v5808
      %v5810 = vpop.f32.mrb[0].mxu0
      %v5811 = vpop.f32.mrb[0].mxu0
      %v5812 = vadd.f32 0.0, %v5811
      %v5813 = vpop.f32.mrb[0].mxu0
      %5814 = vmatprep.mubr.bf16.mxu0 0
      %5815 = vmatmul.mubr.bf16.gmra.mrb[0].mxu0 %v5722
      %v5816 = vpop.f32.mrb[0].mxu0
      %v5817 = vadd.f32 0.0, %v5816
      %v5818 = vpop.f32.mrb[0].mxu0
      %v5819 = vpop.f32.mrb[0].mxu0
      %v5820 = vadd.f32 0.0, %v5819
      %v5821 = vpop.f32.mrb[0].mxu0
      %5822 = vmatprep.mubr.bf16.mxu0 0
      %5823 = vmatmul.mubr.bf16.gmra.mrb[0].mxu0 %v5725
      %v5824 = vpop.f32.mrb[0].mxu0
      %v5825 = vadd.f32 0.0, %v5824
      %v5826 = vpop.f32.mrb[0].mxu0
      %v5827 = vpop.f32.mrb[0].mxu0
      %v5828 = vadd.f32 0.0, %v5827
      %v5829 = vpop.f32.mrb[0].mxu0
      %5830 = vmatprep.mubr.bf16.mxu0 0
      %5831 = vmatmul.mubr.bf16.gmra.mrb[0].mxu0 %v5728
      %v5832 = vpop.f32.mrb[0].mxu0
      %v5833 = vadd.f32 0.0, %v5832
      %v5834 = vpop.f32.mrb[0].mxu0
      %v5835 = vpop.f32.mrb[0].mxu0
      %v5836 = vadd.f32 0.0, %v5835
      %v5837 = vpop.f32.mrb[0].mxu0
      %5838 = vmatprep.mubr.bf16.mxu0 0
      %5839 = vmatmul.mubr.bf16.gmra.mrb[0].mxu0 %v5731
      %v5840 = vpop.f32.mrb[0].mxu0
      %v5841 = vadd.f32 0.0, %v5840
      %v5842 = vpop.f32.mrb[0].mxu0
      %v5843 = vpop.f32.mrb[0].mxu0
      %v5844 = vadd.f32 0.0, %v5843
      %v5845 = vpop.f32.mrb[0].mxu0
      %5846 = vmatprep.mubr.bf16.mxu0 0
      %5847 = vmatmul.mubr.bf16.gmra.mrb[0].mxu0 %v5734
      %v5848 = vpop.f32.mrb[0].mxu0
      %v5849 = vadd.f32 0.0, %v5848
      %v5850 = vpop.f32.mrb[0].mxu0
      %v5851 = vpop.f32.mrb[0].mxu0
      %v5852 = vadd.f32 0.0, %v5851
      %v5853 = vpop.f32.mrb[0].mxu0
      %5854 = vmatprep.mubr.bf16.mxu0 0
      %5855 = vmatmul.mubr.bf16.gmra.mrb[0].mxu0 %v5737
      %v5856 = vpop.f32.mrb[0].mxu0
      %v5857 = vadd.f32 0.0, %v5856
      %v5858 = vpop.f32.mrb[0].mxu0
      %v5859 = vpop.f32.mrb[0].mxu0
      %v5860 = vadd.f32 0.0, %v5859
      %v5861 = vpop.f32.mrb[0].mxu0
      %5862 = vmatprep.mubr.bf16.mxu0 0
      %5863 = vmatmul.mubr.bf16.gmra.mrb[0].mxu0 %v5740
      %v5864 = vpop.f32.mrb[0].mxu0
      %v5865 = vadd.f32 0.0, %v5864
      %v5866 = vpop.f32.mrb[0].mxu0
      %v5867 = vpop.f32.mrb[0].mxu0
      %v5868 = vadd.f32 0.0, %v5867
      %v5869 = vpop.f32.mrb[0].mxu0
      %5870 = vmatprep.mubr.bf16.mxu0 0
      %5871 = vmatmul.mubr.bf16.gmra.mrb[0].mxu0 %v5743
      %v5872 = vpop.f32.mrb[0].mxu0
      %v5873 = vadd.f32 0.0, %v5872
      %v5874 = vpop.f32.mrb[0].mxu0
      %v5875 = vpop.f32.mrb[0].mxu0
      %v5876 = vadd.f32 0.0, %v5875
      %v5877 = vpop.f32.mrb[0].mxu0
      %5878 = vmatprep.mubr.bf16.mxu0 0
      %5879 = vmatmul.mubr.bf16.gmra.mrb[0].mxu0 %v5746
      %v5880 = vpop.f32.mrb[0].mxu0
      %v5881 = vadd.f32 0.0, %v5880
      %v5882 = vpop.f32.mrb[0].mxu0
      %v5883 = vpop.f32.mrb[0].mxu0
      %v5884 = vadd.f32 0.0, %v5883
      %v5885 = vpop.f32.mrb[0].mxu0
      %5886 = vmatprep.mubr.bf16.mxu0 0
      %5887 = vmatmul.mubr.bf16.gmra.mrb[0].mxu0 %v5749
      %v5888 = vpop.f32.mrb[0].mxu0
      %v5889 = vadd.f32 0.0, %v5888
      %v5890 = vpop.f32.mrb[0].mxu0
      %v5891 = vpop.f32.mrb[0].mxu0
      %v5892 = vadd.f32 0.0, %v5891
      %v5893 = vpop.f32.mrb[0].mxu0
      %5894 = vmatprep.mubr.bf16.mxu0 0
      %5895 = vmatmul.mubr.bf16.gmra.mrb[0].mxu0 %v5752
      %v5896 = vpop.f32.mrb[0].mxu0
      %v5897 = vadd.f32 0.0, %v5896
      %v5898 = vpop.f32.mrb[0].mxu0
      %v5899 = vpop.f32.mrb[0].mxu0
      %v5900 = vadd.f32 0.0, %v5899
      %v5901 = vpop.f32.mrb[0].mxu0
      %5902 = vmatprep.mubr.bf16.mxu0 0
      %5903 = vmatmul.mubr.bf16.gmra.mrb[0].mxu0 %v5755
      %v5904 = vpop.f32.mrb[0].mxu0
      %v5905 = vadd.f32 0.0, %v5904
      %v5906 = vpop.f32.mrb[0].mxu0
      %v5907 = vpop.f32.mrb[0].mxu0
      %v5908 = vadd.f32 0.0, %v5907
      %v5909 = vpop.f32.mrb[0].mxu0
      %5910 = vmatprep.mubr.bf16.mxu0 0
      %5911 = vmatmul.mubr.bf16.gmra.mrb[0].mxu0 %v5758
      %v5912 = vpop.f32.mrb[0].mxu0
      %v5913 = vadd.f32 0.0, %v5912
      %v5914 = vpop.f32.mrb[0].mxu0
      %v5915 = vpop.f32.mrb[0].mxu0
      %v5916 = vadd.f32 0.0, %v5915
      %v5917 = vpop.f32.mrb[0].mxu0
      %5918 = vmatprep.mubr.bf16.mxu0 0
      %5919 = vmatmul.mubr.bf16.gmra.mrb[0].mxu0 %v5761
      %v5920 = vpop.f32.mrb[0].mxu0
      %v5921 = vadd.f32 0.0, %v5920
      %v5922 = vpop.f32.mrb[0].mxu0
      %v5923 = vpop.f32.mrb[0].mxu0
      %v5924 = vadd.f32 0.0, %v5923
      %v5925 = vpop.f32.mrb[0].mxu0
      %5926 = vdwg.mxu0
      %v5927 = vadd.f32 %v5681, %v5801
      %v5928 = vadd.f32 %v5682, %v5804
      %v5929 = vadd.f32 %v5683, %v5809
      %v5930 = vadd.f32 %v5684, %v5812
      %v5931 = vadd.f32 %v5685, %v5817
      %v5932 = vadd.f32 %v5686, %v5820
      %v5933 = vadd.f32 %v5687, %v5825
      %v5934 = vadd.f32 %v5688, %v5828
      %v5935 = vadd.f32 %v5689, %v5833
      %v5936 = vadd.f32 %v5690, %v5836
      %v5937 = vadd.f32 %v5691, %v5841
      %v5938 = vadd.f32 %v5692, %v5844
      %v5939 = vadd.f32 %v5693, %v5849
      %v5940 = vadd.f32 %v5694, %v5852
      %v5941 = vadd.f32 %v5695, %v5857
      %v5942 = vadd.f32 %v5696, %v5860
      %v5943 = vadd.f32 %v5697, %v5865
      %v5944 = vadd.f32 %v5698, %v5868
      %v5945 = vadd.f32 %v5699, %v5873
      %v5946 = vadd.f32 %v5700, %v5876
      %v5947 = vadd.f32 %v5701, %v5881
      %v5948 = vadd.f32 %v5702, %v5884
      %v5949 = vadd.f32 %v5703, %v5889
      %v5950 = vadd.f32 %v5704, %v5892
      %v5951 = vadd.f32 %v5705, %v5897
      %v5952 = vadd.f32 %v5706, %v5900
      %v5953 = vadd.f32 %v5707, %v5905
      %v5954 = vadd.f32 %v5708, %v5908
      %v5955 = vadd.f32 %v5709, %v5913
      %v5956 = vadd.f32 %v5710, %v5916
      %v5957 = vadd.f32 %v5711, %v5921
      %v5958 = vadd.f32 %v5712, %v5924
      %5959 = vst [vmem:[#allocation3] sm:$0xff] %v5927
      %5960 = vst [vmem:[#allocation3 + $0x8] sm:$0xff] %v5928
      %5961 = vst [vmem:[#allocation3 + $0x10] sm:$0xff] %v5929
      %5962 = vst [vmem:[#allocation3 + $0x18] sm:$0xff] %v5930
      %5963 = vst [vmem:[#allocation3 + $0x20] sm:$0xff] %v5931
      %5964 = vst [vmem:[#allocation3 + $0x28] sm:$0xff] %v5932
      %5965 = vst [vmem:[#allocation3 + $0x30] sm:$0xff] %v5933
      %5966 = vst [vmem:[#allocation3 + $0x38] sm:$0xff] %v5934
      %5967 = vst [vmem:[#allocation3 + $0x40] sm:$0xff] %v5935
      %5968 = vst [vmem:[#allocation3 + $0x48] sm:$0xff] %v5936
      %5969 = vst [vmem:[#allocation3 + $0x50] sm:$0xff] %v5937
      %5970 = vst [vmem:[#allocation3 + $0x58] sm:$0xff] %v5938
      %5971 = vst [vmem:[#allocation3 + $0x60] sm:$0xff] %v5939
      %5972 = vst [vmem:[#allocation3 + $0x68] sm:$0xff] %v5940
      %5973 = vst [vmem:[#allocation3 + $0x70] sm:$0xff] %v5941
      %5974 = vst [vmem:[#allocation3 + $0x78] sm:$0xff] %v5942
      %5975 = vst [vmem:[#allocation3 + $0x80] sm:$0xff] %v5943
      %5976 = vst [vmem:[#allocation3 + $0x88] sm:$0xff] %v5944
      %5977 = vst [vmem:[#allocation3 + $0x90] sm:$0xff] %v5945
      %5978 = vst [vmem:[#allocation3 + $0x98] sm:$0xff] %v5946
      %5979 = vst [vmem:[#allocation3 + $0xa0] sm:$0xff] %v5947
      %5980 = vst [vmem:[#allocation3 + $0xa8] sm:$0xff] %v5948
      %5981 = vst [vmem:[#allocation3 + $0xb0] sm:$0xff] %v5949
      %5982 = vst [vmem:[#allocation3 + $0xb8] sm:$0xff] %v5950
      %5983 = vst [vmem:[#allocation3 + $0xc0] sm:$0xff] %v5951
      %5984 = vst [vmem:[#allocation3 + $0xc8] sm:$0xff] %v5952
      %5985 = vst [vmem:[#allocation3 + $0xd0] sm:$0xff] %v5953
      %5986 = vst [vmem:[#allocation3 + $0xd8] sm:$0xff] %v5954
      %5987 = vst [vmem:[#allocation3 + $0xe0] sm:$0xff] %v5955
      %5988 = vst [vmem:[#allocation3 + $0xe8] sm:$0xff] %v5956
      %5989 = vst [vmem:[#allocation3 + $0xf0] sm:$0xff] %v5957
      %5990 = vst [vmem:[#allocation3 + $0xf8] sm:$0xff] %v5958
      %v5991 = vld [vmem:[%s3760] sm:$0xff]
      %v5992 = vld [vmem:[%s3760 + $0x8] sm:$0xff]
      %v5993 = vld [vmem:[%s3760 + $0x10] sm:$0xff]
      %v5994 = vld [vmem:[%s3760 + $0x18] sm:$0xff]
      %v5995 = vld [vmem:[%s3760 + $0x20] sm:$0xff]
      %v5996 = vld [vmem:[%s3760 + $0x28] sm:$0xff]
      %v5997 = vld [vmem:[%s3760 + $0x30] sm:$0xff]
      %v5998 = vld [vmem:[%s3760 + $0x38] sm:$0xff]
      %v5999 = vld [vmem:[%s3760 + $0x40] sm:$0xff]
      %v6000 = vld [vmem:[%s3760 + $0x48] sm:$0xff]
      %v6001 = vld [vmem:[%s3760 + $0x50] sm:$0xff]
      %v6002 = vld [vmem:[%s3760 + $0x58] sm:$0xff]
      %v6003 = vld [vmem:[%s3760 + $0x60] sm:$0xff]
      %v6004 = vld [vmem:[%s3760 + $0x68] sm:$0xff]
      %v6005 = vld [vmem:[%s3760 + $0x70] sm:$0xff]
      %v6006 = vld [vmem:[%s3760 + $0x78] sm:$0xff]
      %v6007 = vld [vmem:[#allocation3] sm:$0xff]
      %v6008 = vld [vmem:[#allocation3 + $0x8] sm:$0xff]
      %v6009 = vld [vmem:[#allocation3 + $0x10] sm:$0xff]
      %v6010 = vld [vmem:[#allocation3 + $0x18] sm:$0xff]
      %v6011 = vld [vmem:[#allocation3 + $0x20] sm:$0xff]
      %v6012 = vld [vmem:[#allocation3 + $0x28] sm:$0xff]
      %v6013 = vld [vmem:[#allocation3 + $0x30] sm:$0xff]
      %v6014 = vld [vmem:[#allocation3 + $0x38] sm:$0xff]
      %v6015 = vld [vmem:[#allocation3 + $0x40] sm:$0xff]
      %v6016 = vld [vmem:[#allocation3 + $0x48] sm:$0xff]
      %v6017 = vld [vmem:[#allocation3 + $0x50] sm:$0xff]
      %v6018 = vld [vmem:[#allocation3 + $0x58] sm:$0xff]
      %v6019 = vld [vmem:[#allocation3 + $0x60] sm:$0xff]
      %v6020 = vld [vmem:[#allocation3 + $0x68] sm:$0xff]
      %v6021 = vld [vmem:[#allocation3 + $0x70] sm:$0xff]
      %v6022 = vld [vmem:[#allocation3 + $0x78] sm:$0xff]
      %v6023 = vld [vmem:[#allocation3 + $0x80] sm:$0xff]
      %v6024 = vld [vmem:[#allocation3 + $0x88] sm:$0xff]
      %v6025 = vld [vmem:[#allocation3 + $0x90] sm:$0xff]
      %v6026 = vld [vmem:[#allocation3 + $0x98] sm:$0xff]
      %v6027 = vld [vmem:[#allocation3 + $0xa0] sm:$0xff]
      %v6028 = vld [vmem:[#allocation3 + $0xa8] sm:$0xff]
      %v6029 = vld [vmem:[#allocation3 + $0xb0] sm:$0xff]
      %v6030 = vld [vmem:[#allocation3 + $0xb8] sm:$0xff]
      %v6031 = vld [vmem:[#allocation3 + $0xc0] sm:$0xff]
      %v6032 = vld [vmem:[#allocation3 + $0xc8] sm:$0xff]
      %v6033 = vld [vmem:[#allocation3 + $0xd0] sm:$0xff]
      %v6034 = vld [vmem:[#allocation3 + $0xd8] sm:$0xff]
      %v6035 = vld [vmem:[#allocation3 + $0xe0] sm:$0xff]
      %v6036 = vld [vmem:[#allocation3 + $0xe8] sm:$0xff]
      %v6037 = vld [vmem:[#allocation3 + $0xf0] sm:$0xff]
      %v6038 = vld [vmem:[#allocation3 + $0xf8] sm:$0xff]
      %s6039 = scalar_lea.vmem %s3, 22
      %v6040 = vld [vmem:[%s6039] sm:$0x3]
      %v6042 = vsel %vm526, %v5991, 0
      %v6045 = vsel %vm526, %v5992, 0
      %v6048 = vsel %vm526, %v5993, 0
      %v6051 = vsel %vm526, %v5994, 0
      %v6054 = vsel %vm526, %v5995, 0
      %v6057 = vsel %vm526, %v5996, 0
      %v6060 = vsel %vm526, %v5997, 0
      %v6063 = vsel %vm526, %v5998, 0
      %v6066 = vsel %vm526, %v5999, 0
      %v6069 = vsel %vm526, %v6000, 0
      %v6072 = vsel %vm526, %v6001, 0
      %v6075 = vsel %vm526, %v6002, 0
      %v6078 = vsel %vm526, %v6003, 0
      %v6081 = vsel %vm526, %v6004, 0
      %v6084 = vsel %vm526, %v6005, 0
      %v6087 = vsel %vm526, %v6006, 0
      %v6090 = vsel %vm1438, %v6040, 0
      %6092 = vmatprep.subr.bf16.mxu0 0
      %6093 = vmatpush1.bf16.msra.mxu0 %v6090
      %6094 = vmatprep.subr.bf16.mxu0 0
      %6095 = vmatpush1.bf16.msra.mxu0 0
      %6096 = vmatprep.subr.bf16.mxu0 0
      %6097 = vmatpush1.bf16.msra.mxu0 0
      %6098 = vmatprep.subr.bf16.mxu0 0
      %6099 = vmatpush1.bf16.msra.mxu0 0
      %6100 = vmatprep.subr.bf16.mxu0 0
      %6101 = vmatpush1.bf16.msra.mxu0 0
      %6102 = vmatprep.subr.bf16.mxu0 0
      %6103 = vmatpush1.bf16.msra.mxu0 0
      %6104 = vmatprep.subr.bf16.mxu0 0
      %6105 = vmatpush1.bf16.msra.mxu0 0
      %6106 = vmatprep.subr.bf16.mxu0 0
      %6107 = vmatpush1.bf16.msra.mxu0 0
      %6108 = vmatprep.subr.bf16.mxu0 0
      %6109 = vmatpush1.bf16.msra.mxu0 0
      %6110 = vmatprep.subr.bf16.mxu0 0
      %6111 = vmatpush1.bf16.msra.mxu0 0
      %6112 = vmatprep.subr.bf16.mxu0 0
      %6113 = vmatpush1.bf16.msra.mxu0 0
      %6114 = vmatprep.subr.bf16.mxu0 0
      %6115 = vmatpush1.bf16.msra.mxu0 0
      %6116 = vmatprep.subr.bf16.mxu0 0
      %6117 = vmatpush1.bf16.msra.mxu0 0
      %6118 = vmatprep.subr.bf16.mxu0 0
      %6119 = vmatpush1.bf16.msra.mxu0 0
      %6120 = vmatprep.subr.bf16.mxu0 0
      %6121 = vmatpush1.bf16.msra.mxu0 0
      %6122 = vmatprep.subr.bf16.mxu0 0
      %6123 = vmatpush1.bf16.msra.mxu0 0
      %6124 = vmatprep.mubr.bf16.mxu0 0
      %6125 = vmatmul.mubr.bf16.gmra.mrb[0].mxu0 %v6042
      %v6126 = vpop.f32.mrb[0].mxu0
      %v6127 = vadd.f32 0.0, %v6126
      %v6128 = vpop.f32.mrb[0].mxu0
      %v6129 = vpop.f32.mrb[0].mxu0
      %v6130 = vadd.f32 0.0, %v6129
      %v6131 = vpop.f32.mrb[0].mxu0
      %6132 = vmatprep.mubr.bf16.mxu0 0
      %6133 = vmatmul.mubr.bf16.gmra.mrb[0].mxu0 %v6045
      %v6134 = vpop.f32.mrb[0].mxu0
      %v6135 = vadd.f32 0.0, %v6134
      %v6136 = vpop.f32.mrb[0].mxu0
      %v6137 = vpop.f32.mrb[0].mxu0
      %v6138 = vadd.f32 0.0, %v6137
      %v6139 = vpop.f32.mrb[0].mxu0
      %6140 = vmatprep.mubr.bf16.mxu0 0
      %6141 = vmatmul.mubr.bf16.gmra.mrb[0].mxu0 %v6048
      %v6142 = vpop.f32.mrb[0].mxu0
      %v6143 = vadd.f32 0.0, %v6142
      %v6144 = vpop.f32.mrb[0].mxu0
      %v6145 = vpop.f32.mrb[0].mxu0
      %v6146 = vadd.f32 0.0, %v6145
      %v6147 = vpop.f32.mrb[0].mxu0
      %6148 = vmatprep.mubr.bf16.mxu0 0
      %6149 = vmatmul.mubr.bf16.gmra.mrb[0].mxu0 %v6051
      %v6150 = vpop.f32.mrb[0].mxu0
      %v6151 = vadd.f32 0.0, %v6150
      %v6152 = vpop.f32.mrb[0].mxu0
      %v6153 = vpop.f32.mrb[0].mxu0
      %v6154 = vadd.f32 0.0, %v6153
      %v6155 = vpop.f32.mrb[0].mxu0
      %6156 = vmatprep.mubr.bf16.mxu0 0
      %6157 = vmatmul.mubr.bf16.gmra.mrb[0].mxu0 %v6054
      %v6158 = vpop.f32.mrb[0].mxu0
      %v6159 = vadd.f32 0.0, %v6158
      %v6160 = vpop.f32.mrb[0].mxu0
      %v6161 = vpop.f32.mrb[0].mxu0
      %v6162 = vadd.f32 0.0, %v6161
      %v6163 = vpop.f32.mrb[0].mxu0
      %6164 = vmatprep.mubr.bf16.mxu0 0
      %6165 = vmatmul.mubr.bf16.gmra.mrb[0].mxu0 %v6057
      %v6166 = vpop.f32.mrb[0].mxu0
      %v6167 = vadd.f32 0.0, %v6166
      %v6168 = vpop.f32.mrb[0].mxu0
      %v6169 = vpop.f32.mrb[0].mxu0
      %v6170 = vadd.f32 0.0, %v6169
      %v6171 = vpop.f32.mrb[0].mxu0
      %6172 = vmatprep.mubr.bf16.mxu0 0
      %6173 = vmatmul.mubr.bf16.gmra.mrb[0].mxu0 %v6060
      %v6174 = vpop.f32.mrb[0].mxu0
      %v6175 = vadd.f32 0.0, %v6174
      %v6176 = vpop.f32.mrb[0].mxu0
      %v6177 = vpop.f32.mrb[0].mxu0
      %v6178 = vadd.f32 0.0, %v6177
      %v6179 = vpop.f32.mrb[0].mxu0
      %6180 = vmatprep.mubr.bf16.mxu0 0
      %6181 = vmatmul.mubr.bf16.gmra.mrb[0].mxu0 %v6063
      %v6182 = vpop.f32.mrb[0].mxu0
      %v6183 = vadd.f32 0.0, %v6182
      %v6184 = vpop.f32.mrb[0].mxu0
      %v6185 = vpop.f32.mrb[0].mxu0
      %v6186 = vadd.f32 0.0, %v6185
      %v6187 = vpop.f32.mrb[0].mxu0
      %6188 = vmatprep.mubr.bf16.mxu0 0
      %6189 = vmatmul.mubr.bf16.gmra.mrb[0].mxu0 %v6066
      %v6190 = vpop.f32.mrb[0].mxu0
      %v6191 = vadd.f32 0.0, %v6190
      %v6192 = vpop.f32.mrb[0].mxu0
      %v6193 = vpop.f32.mrb[0].mxu0
      %v6194 = vadd.f32 0.0, %v6193
      %v6195 = vpop.f32.mrb[0].mxu0
      %6196 = vmatprep.mubr.bf16.mxu0 0
      %6197 = vmatmul.mubr.bf16.gmra.mrb[0].mxu0 %v6069
      %v6198 = vpop.f32.mrb[0].mxu0
      %v6199 = vadd.f32 0.0, %v6198
      %v6200 = vpop.f32.mrb[0].mxu0
      %v6201 = vpop.f32.mrb[0].mxu0
      %v6202 = vadd.f32 0.0, %v6201
      %v6203 = vpop.f32.mrb[0].mxu0
      %6204 = vmatprep.mubr.bf16.mxu0 0
      %6205 = vmatmul.mubr.bf16.gmra.mrb[0].mxu0 %v6072
      %v6206 = vpop.f32.mrb[0].mxu0
      %v6207 = vadd.f32 0.0, %v6206
      %v6208 = vpop.f32.mrb[0].mxu0
      %v6209 = vpop.f32.mrb[0].mxu0
      %v6210 = vadd.f32 0.0, %v6209
      %v6211 = vpop.f32.mrb[0].mxu0
      %6212 = vmatprep.mubr.bf16.mxu0 0
      %6213 = vmatmul.mubr.bf16.gmra.mrb[0].mxu0 %v6075
      %v6214 = vpop.f32.mrb[0].mxu0
      %v6215 = vadd.f32 0.0, %v6214
      %v6216 = vpop.f32.mrb[0].mxu0
      %v6217 = vpop.f32.mrb[0].mxu0
      %v6218 = vadd.f32 0.0, %v6217
      %v6219 = vpop.f32.mrb[0].mxu0
      %6220 = vmatprep.mubr.bf16.mxu0 0
      %6221 = vmatmul.mubr.bf16.gmra.mrb[0].mxu0 %v6078
      %v6222 = vpop.f32.mrb[0].mxu0
      %v6223 = vadd.f32 0.0, %v6222
      %v6224 = vpop.f32.mrb[0].mxu0
      %v6225 = vpop.f32.mrb[0].mxu0
      %v6226 = vadd.f32 0.0, %v6225
      %v6227 = vpop.f32.mrb[0].mxu0
      %6228 = vmatprep.mubr.bf16.mxu0 0
      %6229 = vmatmul.mubr.bf16.gmra.mrb[0].mxu0 %v6081
      %v6230 = vpop.f32.mrb[0].mxu0
      %v6231 = vadd.f32 0.0, %v6230
      %v6232 = vpop.f32.mrb[0].mxu0
      %v6233 = vpop.f32.mrb[0].mxu0
      %v6234 = vadd.f32 0.0, %v6233
      %v6235 = vpop.f32.mrb[0].mxu0
      %6236 = vmatprep.mubr.bf16.mxu0 0
      %6237 = vmatmul.mubr.bf16.gmra.mrb[0].mxu0 %v6084
      %v6238 = vpop.f32.mrb[0].mxu0
      %v6239 = vadd.f32 0.0, %v6238
      %v6240 = vpop.f32.mrb[0].mxu0
      %v6241 = vpop.f32.mrb[0].mxu0
      %v6242 = vadd.f32 0.0, %v6241
      %v6243 = vpop.f32.mrb[0].mxu0
      %6244 = vmatprep.mubr.bf16.mxu0 0
      %6245 = vmatmul.mubr.bf16.gmra.mrb[0].mxu0 %v6087
      %v6246 = vpop.f32.mrb[0].mxu0
      %v6247 = vadd.f32 0.0, %v6246
      %v6248 = vpop.f32.mrb[0].mxu0
      %v6249 = vpop.f32.mrb[0].mxu0
      %v6250 = vadd.f32 0.0, %v6249
      %v6251 = vpop.f32.mrb[0].mxu0
      %6252 = vdwg.mxu0
      %v6253 = vadd.f32 %v6007, %v6127
      %v6254 = vadd.f32 %v6008, %v6130
      %v6255 = vadd.f32 %v6009, %v6135
      %v6256 = vadd.f32 %v6010, %v6138
      %v6257 = vadd.f32 %v6011, %v6143
      %v6258 = vadd.f32 %v6012, %v6146
      %v6259 = vadd.f32 %v6013, %v6151
      %v6260 = vadd.f32 %v6014, %v6154
      %v6261 = vadd.f32 %v6015, %v6159
      %v6262 = vadd.f32 %v6016, %v6162
      %v6263 = vadd.f32 %v6017, %v6167
      %v6264 = vadd.f32 %v6018, %v6170
      %v6265 = vadd.f32 %v6019, %v6175
      %v6266 = vadd.f32 %v6020, %v6178
      %v6267 = vadd.f32 %v6021, %v6183
      %v6268 = vadd.f32 %v6022, %v6186
      %v6269 = vadd.f32 %v6023, %v6191
      %v6270 = vadd.f32 %v6024, %v6194
      %v6271 = vadd.f32 %v6025, %v6199
      %v6272 = vadd.f32 %v6026, %v6202
      %v6273 = vadd.f32 %v6027, %v6207
      %v6274 = vadd.f32 %v6028, %v6210
      %v6275 = vadd.f32 %v6029, %v6215
      %v6276 = vadd.f32 %v6030, %v6218
      %v6277 = vadd.f32 %v6031, %v6223
      %v6278 = vadd.f32 %v6032, %v6226
      %v6279 = vadd.f32 %v6033, %v6231
      %v6280 = vadd.f32 %v6034, %v6234
      %v6281 = vadd.f32 %v6035, %v6239
      %v6282 = vadd.f32 %v6036, %v6242
      %v6283 = vadd.f32 %v6037, %v6247
      %v6284 = vadd.f32 %v6038, %v6250
      %6285 = vst [vmem:[#allocation3] sm:$0xff] %v6253
      %6286 = vst [vmem:[#allocation3 + $0x8] sm:$0xff] %v6254
      %6287 = vst [vmem:[#allocation3 + $0x10] sm:$0xff] %v6255
      %6288 = vst [vmem:[#allocation3 + $0x18] sm:$0xff] %v6256
      %6289 = vst [vmem:[#allocation3 + $0x20] sm:$0xff] %v6257
      %6290 = vst [vmem:[#allocation3 + $0x28] sm:$0xff] %v6258
      %6291 = vst [vmem:[#allocation3 + $0x30] sm:$0xff] %v6259
      %6292 = vst [vmem:[#allocation3 + $0x38] sm:$0xff] %v6260
      %6293 = vst [vmem:[#allocation3 + $0x40] sm:$0xff] %v6261
      %6294 = vst [vmem:[#allocation3 + $0x48] sm:$0xff] %v6262
      %6295 = vst [vmem:[#allocation3 + $0x50] sm:$0xff] %v6263
      %6296 = vst [vmem:[#allocation3 + $0x58] sm:$0xff] %v6264
      %6297 = vst [vmem:[#allocation3 + $0x60] sm:$0xff] %v6265
      %6298 = vst [vmem:[#allocation3 + $0x68] sm:$0xff] %v6266
      %6299 = vst [vmem:[#allocation3 + $0x70] sm:$0xff] %v6267
      %6300 = vst [vmem:[#allocation3 + $0x78] sm:$0xff] %v6268
      %6301 = vst [vmem:[#allocation3 + $0x80] sm:$0xff] %v6269
      %6302 = vst [vmem:[#allocation3 + $0x88] sm:$0xff] %v6270
      %6303 = vst [vmem:[#allocation3 + $0x90] sm:$0xff] %v6271
      %6304 = vst [vmem:[#allocation3 + $0x98] sm:$0xff] %v6272
      %6305 = vst [vmem:[#allocation3 + $0xa0] sm:$0xff] %v6273
      %6306 = vst [vmem:[#allocation3 + $0xa8] sm:$0xff] %v6274
      %6307 = vst [vmem:[#allocation3 + $0xb0] sm:$0xff] %v6275
      %6308 = vst [vmem:[#allocation3 + $0xb8] sm:$0xff] %v6276
      %6309 = vst [vmem:[#allocation3 + $0xc0] sm:$0xff] %v6277
      %6310 = vst [vmem:[#allocation3 + $0xc8] sm:$0xff] %v6278
      %6311 = vst [vmem:[#allocation3 + $0xd0] sm:$0xff] %v6279
      %6312 = vst [vmem:[#allocation3 + $0xd8] sm:$0xff] %v6280
      %6313 = vst [vmem:[#allocation3 + $0xe0] sm:$0xff] %v6281
      %6314 = vst [vmem:[#allocation3 + $0xe8] sm:$0xff] %v6282
      %6315 = vst [vmem:[#allocation3 + $0xf0] sm:$0xff] %v6283
      %6316 = vst [vmem:[#allocation3 + $0xf8] sm:$0xff] %v6284
      %v6317 = vld [vmem:[%s5202] sm:$0xff]
      %v6318 = vld [vmem:[%s5202 + $0x8] sm:$0xff]
      %v6319 = vld [vmem:[%s5202 + $0x10] sm:$0xff]
      %v6320 = vld [vmem:[%s5202 + $0x18] sm:$0xff]
      %v6321 = vld [vmem:[%s5202 + $0x20] sm:$0xff]
      %v6322 = vld [vmem:[%s5202 + $0x28] sm:$0xff]
      %v6323 = vld [vmem:[%s5202 + $0x30] sm:$0xff]
      %v6324 = vld [vmem:[%s5202 + $0x38] sm:$0xff]
      %v6325 = vld [vmem:[%s5202 + $0x40] sm:$0xff]
      %v6326 = vld [vmem:[%s5202 + $0x48] sm:$0xff]
      %v6327 = vld [vmem:[%s5202 + $0x50] sm:$0xff]
      %v6328 = vld [vmem:[%s5202 + $0x58] sm:$0xff]
      %v6329 = vld [vmem:[%s5202 + $0x60] sm:$0xff]
      %v6330 = vld [vmem:[%s5202 + $0x68] sm:$0xff]
      %v6331 = vld [vmem:[%s5202 + $0x70] sm:$0xff]
      %v6332 = vld [vmem:[%s5202 + $0x78] sm:$0xff]
      %v6333 = vld [vmem:[#allocation3] sm:$0xff]
      %v6334 = vld [vmem:[#allocation3 + $0x8] sm:$0xff]
      %v6335 = vld [vmem:[#allocation3 + $0x10] sm:$0xff]
      %v6336 = vld [vmem:[#allocation3 + $0x18] sm:$0xff]
      %v6337 = vld [vmem:[#allocation3 + $0x20] sm:$0xff]
      %v6338 = vld [vmem:[#allocation3 + $0x28] sm:$0xff]
      %v6339 = vld [vmem:[#allocation3 + $0x30] sm:$0xff]
      %v6340 = vld [vmem:[#allocation3 + $0x38] sm:$0xff]
      %v6341 = vld [vmem:[#allocation3 + $0x40] sm:$0xff]
      %v6342 = vld [vmem:[#allocation3 + $0x48] sm:$0xff]
      %v6343 = vld [vmem:[#allocation3 + $0x50] sm:$0xff]
      %v6344 = vld [vmem:[#allocation3 + $0x58] sm:$0xff]
      %v6345 = vld [vmem:[#allocation3 + $0x60] sm:$0xff]
      %v6346 = vld [vmem:[#allocation3 + $0x68] sm:$0xff]
      %v6347 = vld [vmem:[#allocation3 + $0x70] sm:$0xff]
      %v6348 = vld [vmem:[#allocation3 + $0x78] sm:$0xff]
      %v6349 = vld [vmem:[#allocation3 + $0x80] sm:$0xff]
      %v6350 = vld [vmem:[#allocation3 + $0x88] sm:$0xff]
      %v6351 = vld [vmem:[#allocation3 + $0x90] sm:$0xff]
      %v6352 = vld [vmem:[#allocation3 + $0x98] sm:$0xff]
      %v6353 = vld [vmem:[#allocation3 + $0xa0] sm:$0xff]
      %v6354 = vld [vmem:[#allocation3 + $0xa8] sm:$0xff]
      %v6355 = vld [vmem:[#allocation3 + $0xb0] sm:$0xff]
      %v6356 = vld [vmem:[#allocation3 + $0xb8] sm:$0xff]
      %v6357 = vld [vmem:[#allocation3 + $0xc0] sm:$0xff]
      %v6358 = vld [vmem:[#allocation3 + $0xc8] sm:$0xff]
      %v6359 = vld [vmem:[#allocation3 + $0xd0] sm:$0xff]
      %v6360 = vld [vmem:[#allocation3 + $0xd8] sm:$0xff]
      %v6361 = vld [vmem:[#allocation3 + $0xe0] sm:$0xff]
      %v6362 = vld [vmem:[#allocation3 + $0xe8] sm:$0xff]
      %v6363 = vld [vmem:[#allocation3 + $0xf0] sm:$0xff]
      %v6364 = vld [vmem:[#allocation3 + $0xf8] sm:$0xff]
      %s6365 = scalar_lea.vmem %s3, 28
      %v6366 = vld [vmem:[%s6365] sm:$0x3]
      %v6368 = vsel %vm526, %v6317, 0
      %v6371 = vsel %vm526, %v6318, 0
      %v6374 = vsel %vm526, %v6319, 0
      %v6377 = vsel %vm526, %v6320, 0
      %v6380 = vsel %vm526, %v6321, 0
      %v6383 = vsel %vm526, %v6322, 0
      %v6386 = vsel %vm526, %v6323, 0
      %v6389 = vsel %vm526, %v6324, 0
      %v6392 = vsel %vm526, %v6325, 0
      %v6395 = vsel %vm526, %v6326, 0
      %v6398 = vsel %vm526, %v6327, 0
      %v6401 = vsel %vm526, %v6328, 0
      %v6404 = vsel %vm526, %v6329, 0
      %v6407 = vsel %vm526, %v6330, 0
      %v6410 = vsel %vm526, %v6331, 0
      %v6413 = vsel %vm526, %v6332, 0
      %v6416 = vsel %vm1438, %v6366, 0
      %6418 = vmatprep.subr.bf16.mxu0 0
      %6419 = vmatpush1.bf16.msra.mxu0 %v6416
      %6420 = vmatprep.subr.bf16.mxu0 0
      %6421 = vmatpush1.bf16.msra.mxu0 0
      %6422 = vmatprep.subr.bf16.mxu0 0
      %6423 = vmatpush1.bf16.msra.mxu0 0
      %6424 = vmatprep.subr.bf16.mxu0 0
      %6425 = vmatpush1.bf16.msra.mxu0 0
      %6426 = vmatprep.subr.bf16.mxu0 0
      %6427 = vmatpush1.bf16.msra.mxu0 0
      %6428 = vmatprep.subr.bf16.mxu0 0
      %6429 = vmatpush1.bf16.msra.mxu0 0
      %6430 = vmatprep.subr.bf16.mxu0 0
      %6431 = vmatpush1.bf16.msra.mxu0 0
      %6432 = vmatprep.subr.bf16.mxu0 0
      %6433 = vmatpush1.bf16.msra.mxu0 0
      %6434 = vmatprep.subr.bf16.mxu0 0
      %6435 = vmatpush1.bf16.msra.mxu0 0
      %6436 = vmatprep.subr.bf16.mxu0 0
      %6437 = vmatpush1.bf16.msra.mxu0 0
      %6438 = vmatprep.subr.bf16.mxu0 0
      %6439 = vmatpush1.bf16.msra.mxu0 0
      %6440 = vmatprep.subr.bf16.mxu0 0
      %6441 = vmatpush1.bf16.msra.mxu0 0
      %6442 = vmatprep.subr.bf16.mxu0 0
      %6443 = vmatpush1.bf16.msra.mxu0 0
      %6444 = vmatprep.subr.bf16.mxu0 0
      %6445 = vmatpush1.bf16.msra.mxu0 0
      %6446 = vmatprep.subr.bf16.mxu0 0
      %6447 = vmatpush1.bf16.msra.mxu0 0
      %6448 = vmatprep.subr.bf16.mxu0 0
      %6449 = vmatpush1.bf16.msra.mxu0 0
      %6450 = vmatprep.mubr.bf16.mxu0 0
      %6451 = vmatmul.mubr.bf16.gmra.mrb[0].mxu0 %v6368
      %v6452 = vpop.f32.mrb[0].mxu0
      %v6453 = vadd.f32 0.0, %v6452
      %v6454 = vpop.f32.mrb[0].mxu0
      %v6455 = vpop.f32.mrb[0].mxu0
      %v6456 = vadd.f32 0.0, %v6455
      %v6457 = vpop.f32.mrb[0].mxu0
      %6458 = vmatprep.mubr.bf16.mxu0 0
      %6459 = vmatmul.mubr.bf16.gmra.mrb[0].mxu0 %v6371
      %v6460 = vpop.f32.mrb[0].mxu0
      %v6461 = vadd.f32 0.0, %v6460
      %v6462 = vpop.f32.mrb[0].mxu0
      %v6463 = vpop.f32.mrb[0].mxu0
      %v6464 = vadd.f32 0.0, %v6463
      %v6465 = vpop.f32.mrb[0].mxu0
      %6466 = vmatprep.mubr.bf16.mxu0 0
      %6467 = vmatmul.mubr.bf16.gmra.mrb[0].mxu0 %v6374
      %v6468 = vpop.f32.mrb[0].mxu0
      %v6469 = vadd.f32 0.0, %v6468
      %v6470 = vpop.f32.mrb[0].mxu0
      %v6471 = vpop.f32.mrb[0].mxu0
      %v6472 = vadd.f32 0.0, %v6471
      %v6473 = vpop.f32.mrb[0].mxu0
      %6474 = vmatprep.mubr.bf16.mxu0 0
      %6475 = vmatmul.mubr.bf16.gmra.mrb[0].mxu0 %v6377
      %v6476 = vpop.f32.mrb[0].mxu0
      %v6477 = vadd.f32 0.0, %v6476
      %v6478 = vpop.f32.mrb[0].mxu0
      %v6479 = vpop.f32.mrb[0].mxu0
      %v6480 = vadd.f32 0.0, %v6479
      %v6481 = vpop.f32.mrb[0].mxu0
      %6482 = vmatprep.mubr.bf16.mxu0 0
      %6483 = vmatmul.mubr.bf16.gmra.mrb[0].mxu0 %v6380
      %v6484 = vpop.f32.mrb[0].mxu0
      %v6485 = vadd.f32 0.0, %v6484
      %v6486 = vpop.f32.mrb[0].mxu0
      %v6487 = vpop.f32.mrb[0].mxu0
      %v6488 = vadd.f32 0.0, %v6487
      %v6489 = vpop.f32.mrb[0].mxu0
      %6490 = vmatprep.mubr.bf16.mxu0 0
      %6491 = vmatmul.mubr.bf16.gmra.mrb[0].mxu0 %v6383
      %v6492 = vpop.f32.mrb[0].mxu0
      %v6493 = vadd.f32 0.0, %v6492
      %v6494 = vpop.f32.mrb[0].mxu0
      %v6495 = vpop.f32.mrb[0].mxu0
      %v6496 = vadd.f32 0.0, %v6495
      %v6497 = vpop.f32.mrb[0].mxu0
      %6498 = vmatprep.mubr.bf16.mxu0 0
      %6499 = vmatmul.mubr.bf16.gmra.mrb[0].mxu0 %v6386
      %v6500 = vpop.f32.mrb[0].mxu0
      %v6501 = vadd.f32 0.0, %v6500
      %v6502 = vpop.f32.mrb[0].mxu0
      %v6503 = vpop.f32.mrb[0].mxu0
      %v6504 = vadd.f32 0.0, %v6503
      %v6505 = vpop.f32.mrb[0].mxu0
      %6506 = vmatprep.mubr.bf16.mxu0 0
      %6507 = vmatmul.mubr.bf16.gmra.mrb[0].mxu0 %v6389
      %v6508 = vpop.f32.mrb[0].mxu0
      %v6509 = vadd.f32 0.0, %v6508
      %v6510 = vpop.f32.mrb[0].mxu0
      %v6511 = vpop.f32.mrb[0].mxu0
      %v6512 = vadd.f32 0.0, %v6511
      %v6513 = vpop.f32.mrb[0].mxu0
      %6514 = vmatprep.mubr.bf16.mxu0 0
      %6515 = vmatmul.mubr.bf16.gmra.mrb[0].mxu0 %v6392
      %v6516 = vpop.f32.mrb[0].mxu0
      %v6517 = vadd.f32 0.0, %v6516
      %v6518 = vpop.f32.mrb[0].mxu0
      %v6519 = vpop.f32.mrb[0].mxu0
      %v6520 = vadd.f32 0.0, %v6519
      %v6521 = vpop.f32.mrb[0].mxu0
      %6522 = vmatprep.mubr.bf16.mxu0 0
      %6523 = vmatmul.mubr.bf16.gmra.mrb[0].mxu0 %v6395
      %v6524 = vpop.f32.mrb[0].mxu0
      %v6525 = vadd.f32 0.0, %v6524
      %v6526 = vpop.f32.mrb[0].mxu0
      %v6527 = vpop.f32.mrb[0].mxu0
      %v6528 = vadd.f32 0.0, %v6527
      %v6529 = vpop.f32.mrb[0].mxu0
      %6530 = vmatprep.mubr.bf16.mxu0 0
      %6531 = vmatmul.mubr.bf16.gmra.mrb[0].mxu0 %v6398
      %v6532 = vpop.f32.mrb[0].mxu0
      %v6533 = vadd.f32 0.0, %v6532
      %v6534 = vpop.f32.mrb[0].mxu0
      %v6535 = vpop.f32.mrb[0].mxu0
      %v6536 = vadd.f32 0.0, %v6535
      %v6537 = vpop.f32.mrb[0].mxu0
      %6538 = vmatprep.mubr.bf16.mxu0 0
      %6539 = vmatmul.mubr.bf16.gmra.mrb[0].mxu0 %v6401
      %v6540 = vpop.f32.mrb[0].mxu0
      %v6541 = vadd.f32 0.0, %v6540
      %v6542 = vpop.f32.mrb[0].mxu0
      %v6543 = vpop.f32.mrb[0].mxu0
      %v6544 = vadd.f32 0.0, %v6543
      %v6545 = vpop.f32.mrb[0].mxu0
      %6546 = vmatprep.mubr.bf16.mxu0 0
      %6547 = vmatmul.mubr.bf16.gmra.mrb[0].mxu0 %v6404
      %v6548 = vpop.f32.mrb[0].mxu0
      %v6549 = vadd.f32 0.0, %v6548
      %v6550 = vpop.f32.mrb[0].mxu0
      %v6551 = vpop.f32.mrb[0].mxu0
      %v6552 = vadd.f32 0.0, %v6551
      %v6553 = vpop.f32.mrb[0].mxu0
      %6554 = vmatprep.mubr.bf16.mxu0 0
      %6555 = vmatmul.mubr.bf16.gmra.mrb[0].mxu0 %v6407
      %v6556 = vpop.f32.mrb[0].mxu0
      %v6557 = vadd.f32 0.0, %v6556
      %v6558 = vpop.f32.mrb[0].mxu0
      %v6559 = vpop.f32.mrb[0].mxu0
      %v6560 = vadd.f32 0.0, %v6559
      %v6561 = vpop.f32.mrb[0].mxu0
      %6562 = vmatprep.mubr.bf16.mxu0 0
      %6563 = vmatmul.mubr.bf16.gmra.mrb[0].mxu0 %v6410
      %v6564 = vpop.f32.mrb[0].mxu0
      %v6565 = vadd.f32 0.0, %v6564
      %v6566 = vpop.f32.mrb[0].mxu0
      %v6567 = vpop.f32.mrb[0].mxu0
      %v6568 = vadd.f32 0.0, %v6567
      %v6569 = vpop.f32.mrb[0].mxu0
      %6570 = vmatprep.mubr.bf16.mxu0 0
      %6571 = vmatmul.mubr.bf16.gmra.mrb[0].mxu0 %v6413
      %v6572 = vpop.f32.mrb[0].mxu0
      %v6573 = vadd.f32 0.0, %v6572
      %v6574 = vpop.f32.mrb[0].mxu0
      %v6575 = vpop.f32.mrb[0].mxu0
      %v6576 = vadd.f32 0.0, %v6575
      %v6577 = vpop.f32.mrb[0].mxu0
      %6578 = vdwg.mxu0
      %v6579 = vadd.f32 %v6333, %v6453
      %v6580 = vadd.f32 %v6334, %v6456
      %v6581 = vadd.f32 %v6335, %v6461
      %v6582 = vadd.f32 %v6336, %v6464
      %v6583 = vadd.f32 %v6337, %v6469
      %v6584 = vadd.f32 %v6338, %v6472
      %v6585 = vadd.f32 %v6339, %v6477
      %v6586 = vadd.f32 %v6340, %v6480
      %v6587 = vadd.f32 %v6341, %v6485
      %v6588 = vadd.f32 %v6342, %v6488
      %v6589 = vadd.f32 %v6343, %v6493
      %v6590 = vadd.f32 %v6344, %v6496
      %v6591 = vadd.f32 %v6345, %v6501
      %v6592 = vadd.f32 %v6346, %v6504
      %v6593 = vadd.f32 %v6347, %v6509
      %v6594 = vadd.f32 %v6348, %v6512
      %v6595 = vadd.f32 %v6349, %v6517
      %v6596 = vadd.f32 %v6350, %v6520
      %v6597 = vadd.f32 %v6351, %v6525
      %v6598 = vadd.f32 %v6352, %v6528
      %v6599 = vadd.f32 %v6353, %v6533
      %v6600 = vadd.f32 %v6354, %v6536
      %v6601 = vadd.f32 %v6355, %v6541
      %v6602 = vadd.f32 %v6356, %v6544
      %v6603 = vadd.f32 %v6357, %v6549
      %v6604 = vadd.f32 %v6358, %v6552
      %v6605 = vadd.f32 %v6359, %v6557
      %v6606 = vadd.f32 %v6360, %v6560
      %v6607 = vadd.f32 %v6361, %v6565
      %v6608 = vadd.f32 %v6362, %v6568
      %v6609 = vadd.f32 %v6363, %v6573
      %v6610 = vadd.f32 %v6364, %v6576
      %6611 = vst [vmem:[#allocation3] sm:$0xff] %v6579
      %6612 = vst [vmem:[#allocation3 + $0x8] sm:$0xff] %v6580
      %6613 = vst [vmem:[#allocation3 + $0x10] sm:$0xff] %v6581
      %6614 = vst [vmem:[#allocation3 + $0x18] sm:$0xff] %v6582
      %6615 = vst [vmem:[#allocation3 + $0x20] sm:$0xff] %v6583
      %6616 = vst [vmem:[#allocation3 + $0x28] sm:$0xff] %v6584
      %6617 = vst [vmem:[#allocation3 + $0x30] sm:$0xff] %v6585
      %6618 = vst [vmem:[#allocation3 + $0x38] sm:$0xff] %v6586
      %6619 = vst [vmem:[#allocation3 + $0x40] sm:$0xff] %v6587
      %6620 = vst [vmem:[#allocation3 + $0x48] sm:$0xff] %v6588
      %6621 = vst [vmem:[#allocation3 + $0x50] sm:$0xff] %v6589
      %6622 = vst [vmem:[#allocation3 + $0x58] sm:$0xff] %v6590
      %6623 = vst [vmem:[#allocation3 + $0x60] sm:$0xff] %v6591
      %6624 = vst [vmem:[#allocation3 + $0x68] sm:$0xff] %v6592
      %6625 = vst [vmem:[#allocation3 + $0x70] sm:$0xff] %v6593
      %6626 = vst [vmem:[#allocation3 + $0x78] sm:$0xff] %v6594
      %6627 = vst [vmem:[#allocation3 + $0x80] sm:$0xff] %v6595
      %6628 = vst [vmem:[#allocation3 + $0x88] sm:$0xff] %v6596
      %6629 = vst [vmem:[#allocation3 + $0x90] sm:$0xff] %v6597
      %6630 = vst [vmem:[#allocation3 + $0x98] sm:$0xff] %v6598
      %6631 = vst [vmem:[#allocation3 + $0xa0] sm:$0xff] %v6599
      %6632 = vst [vmem:[#allocation3 + $0xa8] sm:$0xff] %v6600
      %6633 = vst [vmem:[#allocation3 + $0xb0] sm:$0xff] %v6601
      %6634 = vst [vmem:[#allocation3 + $0xb8] sm:$0xff] %v6602
      %6635 = vst [vmem:[#allocation3 + $0xc0] sm:$0xff] %v6603
      %6636 = vst [vmem:[#allocation3 + $0xc8] sm:$0xff] %v6604
      %6637 = vst [vmem:[#allocation3 + $0xd0] sm:$0xff] %v6605
      %6638 = vst [vmem:[#allocation3 + $0xd8] sm:$0xff] %v6606
      %6639 = vst [vmem:[#allocation3 + $0xe0] sm:$0xff] %v6607
      %6640 = vst [vmem:[#allocation3 + $0xe8] sm:$0xff] %v6608
      %6641 = vst [vmem:[#allocation3 + $0xf0] sm:$0xff] %v6609
      %6642 = vst [vmem:[#allocation3 + $0xf8] sm:$0xff] %v6610
      %s6643 = scalar_lea.vmem [#allocation2], 304
      %v6644 = vld [vmem:[%s6643] sm:$0xff]
      %v6645 = vld [vmem:[%s6643 + $0x8] sm:$0xff]
      %v6646 = vld [vmem:[%s6643 + $0x10] sm:$0xff]
      %v6647 = vld [vmem:[%s6643 + $0x18] sm:$0xff]
      %v6648 = vld [vmem:[%s6643 + $0x20] sm:$0xff]
      %v6649 = vld [vmem:[%s6643 + $0x28] sm:$0xff]
      %v6650 = vld [vmem:[%s6643 + $0x30] sm:$0xff]
      %v6651 = vld [vmem:[%s6643 + $0x38] sm:$0xff]
      %v6652 = vld [vmem:[%s6643 + $0x40] sm:$0xff]
      %v6653 = vld [vmem:[%s6643 + $0x48] sm:$0xff]
      %v6654 = vld [vmem:[%s6643 + $0x50] sm:$0xff]
      %v6655 = vld [vmem:[%s6643 + $0x58] sm:$0xff]
      %v6656 = vld [vmem:[%s6643 + $0x60] sm:$0xff]
      %v6657 = vld [vmem:[%s6643 + $0x68] sm:$0xff]
      %v6658 = vld [vmem:[%s6643 + $0x70] sm:$0xff]
      %v6659 = vld [vmem:[%s6643 + $0x78] sm:$0xff]
      %v6660 = vld [vmem:[#allocation3] sm:$0xff]
      %v6661 = vld [vmem:[#allocation3 + $0x8] sm:$0xff]
      %v6662 = vld [vmem:[#allocation3 + $0x10] sm:$0xff]
      %v6663 = vld [vmem:[#allocation3 + $0x18] sm:$0xff]
      %v6664 = vld [vmem:[#allocation3 + $0x20] sm:$0xff]
      %v6665 = vld [vmem:[#allocation3 + $0x28] sm:$0xff]
      %v6666 = vld [vmem:[#allocation3 + $0x30] sm:$0xff]
      %v6667 = vld [vmem:[#allocation3 + $0x38] sm:$0xff]
      %v6668 = vld [vmem:[#allocation3 + $0x40] sm:$0xff]
      %v6669 = vld [vmem:[#allocation3 + $0x48] sm:$0xff]
      %v6670 = vld [vmem:[#allocation3 + $0x50] sm:$0xff]
      %v6671 = vld [vmem:[#allocation3 + $0x58] sm:$0xff]
      %v6672 = vld [vmem:[#allocation3 + $0x60] sm:$0xff]
      %v6673 = vld [vmem:[#allocation3 + $0x68] sm:$0xff]
      %v6674 = vld [vmem:[#allocation3 + $0x70] sm:$0xff]
      %v6675 = vld [vmem:[#allocation3 + $0x78] sm:$0xff]
      %v6676 = vld [vmem:[#allocation3 + $0x80] sm:$0xff]
      %v6677 = vld [vmem:[#allocation3 + $0x88] sm:$0xff]
      %v6678 = vld [vmem:[#allocation3 + $0x90] sm:$0xff]
      %v6679 = vld [vmem:[#allocation3 + $0x98] sm:$0xff]
      %v6680 = vld [vmem:[#allocation3 + $0xa0] sm:$0xff]
      %v6681 = vld [vmem:[#allocation3 + $0xa8] sm:$0xff]
      %v6682 = vld [vmem:[#allocation3 + $0xb0] sm:$0xff]
      %v6683 = vld [vmem:[#allocation3 + $0xb8] sm:$0xff]
      %v6684 = vld [vmem:[#allocation3 + $0xc0] sm:$0xff]
      %v6685 = vld [vmem:[#allocation3 + $0xc8] sm:$0xff]
      %v6686 = vld [vmem:[#allocation3 + $0xd0] sm:$0xff]
      %v6687 = vld [vmem:[#allocation3 + $0xd8] sm:$0xff]
      %v6688 = vld [vmem:[#allocation3 + $0xe0] sm:$0xff]
      %v6689 = vld [vmem:[#allocation3 + $0xe8] sm:$0xff]
      %v6690 = vld [vmem:[#allocation3 + $0xf0] sm:$0xff]
      %v6691 = vld [vmem:[#allocation3 + $0xf8] sm:$0xff]
      %s6692 = scalar_lea.vmem %s3, 30
      %v6693 = vld [vmem:[%s6692] sm:$0x3]
      %v6695 = vsel %vm526, %v6644, 0
      %v6698 = vsel %vm526, %v6645, 0
      %v6701 = vsel %vm526, %v6646, 0
      %v6704 = vsel %vm526, %v6647, 0
      %v6707 = vsel %vm526, %v6648, 0
      %v6710 = vsel %vm526, %v6649, 0
      %v6713 = vsel %vm526, %v6650, 0
      %v6716 = vsel %vm526, %v6651, 0
      %v6719 = vsel %vm526, %v6652, 0
      %v6722 = vsel %vm526, %v6653, 0
      %v6725 = vsel %vm526, %v6654, 0
      %v6728 = vsel %vm526, %v6655, 0
      %v6731 = vsel %vm526, %v6656, 0
      %v6734 = vsel %vm526, %v6657, 0
      %v6737 = vsel %vm526, %v6658, 0
      %v6740 = vsel %vm526, %v6659, 0
      %v6743 = vsel %vm1438, %v6693, 0
      %6745 = vmatprep.subr.bf16.mxu0 0
      %6746 = vmatpush1.bf16.msra.mxu0 %v6743
      %6747 = vmatprep.subr.bf16.mxu0 0
      %6748 = vmatpush1.bf16.msra.mxu0 0
      %6749 = vmatprep.subr.bf16.mxu0 0
      %6750 = vmatpush1.bf16.msra.mxu0 0
      %6751 = vmatprep.subr.bf16.mxu0 0
      %6752 = vmatpush1.bf16.msra.mxu0 0
      %6753 = vmatprep.subr.bf16.mxu0 0
      %6754 = vmatpush1.bf16.msra.mxu0 0
      %6755 = vmatprep.subr.bf16.mxu0 0
      %6756 = vmatpush1.bf16.msra.mxu0 0
      %6757 = vmatprep.subr.bf16.mxu0 0
      %6758 = vmatpush1.bf16.msra.mxu0 0
      %6759 = vmatprep.subr.bf16.mxu0 0
      %6760 = vmatpush1.bf16.msra.mxu0 0
      %6761 = vmatprep.subr.bf16.mxu0 0
      %6762 = vmatpush1.bf16.msra.mxu0 0
      %6763 = vmatprep.subr.bf16.mxu0 0
      %6764 = vmatpush1.bf16.msra.mxu0 0
      %6765 = vmatprep.subr.bf16.mxu0 0
      %6766 = vmatpush1.bf16.msra.mxu0 0
      %6767 = vmatprep.subr.bf16.mxu0 0
      %6768 = vmatpush1.bf16.msra.mxu0 0
      %6769 = vmatprep.subr.bf16.mxu0 0
      %6770 = vmatpush1.bf16.msra.mxu0 0
      %6771 = vmatprep.subr.bf16.mxu0 0
      %6772 = vmatpush1.bf16.msra.mxu0 0
      %6773 = vmatprep.subr.bf16.mxu0 0
      %6774 = vmatpush1.bf16.msra.mxu0 0
      %6775 = vmatprep.subr.bf16.mxu0 0
      %6776 = vmatpush1.bf16.msra.mxu0 0
      %6777 = vmatprep.mubr.bf16.mxu0 0
      %6778 = vmatmul.mubr.bf16.gmra.mrb[0].mxu0 %v6695
      %v6779 = vpop.f32.mrb[0].mxu0
      %v6780 = vadd.f32 0.0, %v6779
      %v6781 = vpop.f32.mrb[0].mxu0
      %v6782 = vpop.f32.mrb[0].mxu0
      %v6783 = vadd.f32 0.0, %v6782
      %v6784 = vpop.f32.mrb[0].mxu0
      %6785 = vmatprep.mubr.bf16.mxu0 0
      %6786 = vmatmul.mubr.bf16.gmra.mrb[0].mxu0 %v6698
      %v6787 = vpop.f32.mrb[0].mxu0
      %v6788 = vadd.f32 0.0, %v6787
      %v6789 = vpop.f32.mrb[0].mxu0
      %v6790 = vpop.f32.mrb[0].mxu0
      %v6791 = vadd.f32 0.0, %v6790
      %v6792 = vpop.f32.mrb[0].mxu0
      %6793 = vmatprep.mubr.bf16.mxu0 0
      %6794 = vmatmul.mubr.bf16.gmra.mrb[0].mxu0 %v6701
      %v6795 = vpop.f32.mrb[0].mxu0
      %v6796 = vadd.f32 0.0, %v6795
      %v6797 = vpop.f32.mrb[0].mxu0
      %v6798 = vpop.f32.mrb[0].mxu0
      %v6799 = vadd.f32 0.0, %v6798
      %v6800 = vpop.f32.mrb[0].mxu0
      %6801 = vmatprep.mubr.bf16.mxu0 0
      %6802 = vmatmul.mubr.bf16.gmra.mrb[0].mxu0 %v6704
      %v6803 = vpop.f32.mrb[0].mxu0
      %v6804 = vadd.f32 0.0, %v6803
      %v6805 = vpop.f32.mrb[0].mxu0
      %v6806 = vpop.f32.mrb[0].mxu0
      %v6807 = vadd.f32 0.0, %v6806
      %v6808 = vpop.f32.mrb[0].mxu0
      %6809 = vmatprep.mubr.bf16.mxu0 0
      %6810 = vmatmul.mubr.bf16.gmra.mrb[0].mxu0 %v6707
      %v6811 = vpop.f32.mrb[0].mxu0
      %v6812 = vadd.f32 0.0, %v6811
      %v6813 = vpop.f32.mrb[0].mxu0
      %v6814 = vpop.f32.mrb[0].mxu0
      %v6815 = vadd.f32 0.0, %v6814
      %v6816 = vpop.f32.mrb[0].mxu0
      %6817 = vmatprep.mubr.bf16.mxu0 0
      %6818 = vmatmul.mubr.bf16.gmra.mrb[0].mxu0 %v6710
      %v6819 = vpop.f32.mrb[0].mxu0
      %v6820 = vadd.f32 0.0, %v6819
      %v6821 = vpop.f32.mrb[0].mxu0
      %v6822 = vpop.f32.mrb[0].mxu0
      %v6823 = vadd.f32 0.0, %v6822
      %v6824 = vpop.f32.mrb[0].mxu0
      %6825 = vmatprep.mubr.bf16.mxu0 0
      %6826 = vmatmul.mubr.bf16.gmra.mrb[0].mxu0 %v6713
      %v6827 = vpop.f32.mrb[0].mxu0
      %v6828 = vadd.f32 0.0, %v6827
      %v6829 = vpop.f32.mrb[0].mxu0
      %v6830 = vpop.f32.mrb[0].mxu0
      %v6831 = vadd.f32 0.0, %v6830
      %v6832 = vpop.f32.mrb[0].mxu0
      %6833 = vmatprep.mubr.bf16.mxu0 0
      %6834 = vmatmul.mubr.bf16.gmra.mrb[0].mxu0 %v6716
      %v6835 = vpop.f32.mrb[0].mxu0
      %v6836 = vadd.f32 0.0, %v6835
      %v6837 = vpop.f32.mrb[0].mxu0
      %v6838 = vpop.f32.mrb[0].mxu0
      %v6839 = vadd.f32 0.0, %v6838
      %v6840 = vpop.f32.mrb[0].mxu0
      %6841 = vmatprep.mubr.bf16.mxu0 0
      %6842 = vmatmul.mubr.bf16.gmra.mrb[0].mxu0 %v6719
      %v6843 = vpop.f32.mrb[0].mxu0
      %v6844 = vadd.f32 0.0, %v6843
      %v6845 = vpop.f32.mrb[0].mxu0
      %v6846 = vpop.f32.mrb[0].mxu0
      %v6847 = vadd.f32 0.0, %v6846
      %v6848 = vpop.f32.mrb[0].mxu0
      %6849 = vmatprep.mubr.bf16.mxu0 0
      %6850 = vmatmul.mubr.bf16.gmra.mrb[0].mxu0 %v6722
      %v6851 = vpop.f32.mrb[0].mxu0
      %v6852 = vadd.f32 0.0, %v6851
      %v6853 = vpop.f32.mrb[0].mxu0
      %v6854 = vpop.f32.mrb[0].mxu0
      %v6855 = vadd.f32 0.0, %v6854
      %v6856 = vpop.f32.mrb[0].mxu0
      %6857 = vmatprep.mubr.bf16.mxu0 0
      %6858 = vmatmul.mubr.bf16.gmra.mrb[0].mxu0 %v6725
      %v6859 = vpop.f32.mrb[0].mxu0
      %v6860 = vadd.f32 0.0, %v6859
      %v6861 = vpop.f32.mrb[0].mxu0
      %v6862 = vpop.f32.mrb[0].mxu0
      %v6863 = vadd.f32 0.0, %v6862
      %v6864 = vpop.f32.mrb[0].mxu0
      %6865 = vmatprep.mubr.bf16.mxu0 0
      %6866 = vmatmul.mubr.bf16.gmra.mrb[0].mxu0 %v6728
      %v6867 = vpop.f32.mrb[0].mxu0
      %v6868 = vadd.f32 0.0, %v6867
      %v6869 = vpop.f32.mrb[0].mxu0
      %v6870 = vpop.f32.mrb[0].mxu0
      %v6871 = vadd.f32 0.0, %v6870
      %v6872 = vpop.f32.mrb[0].mxu0
      %6873 = vmatprep.mubr.bf16.mxu0 0
      %6874 = vmatmul.mubr.bf16.gmra.mrb[0].mxu0 %v6731
      %v6875 = vpop.f32.mrb[0].mxu0
      %v6876 = vadd.f32 0.0, %v6875
      %v6877 = vpop.f32.mrb[0].mxu0
      %v6878 = vpop.f32.mrb[0].mxu0
      %v6879 = vadd.f32 0.0, %v6878
      %v6880 = vpop.f32.mrb[0].mxu0
      %6881 = vmatprep.mubr.bf16.mxu0 0
      %6882 = vmatmul.mubr.bf16.gmra.mrb[0].mxu0 %v6734
      %v6883 = vpop.f32.mrb[0].mxu0
      %v6884 = vadd.f32 0.0, %v6883
      %v6885 = vpop.f32.mrb[0].mxu0
      %v6886 = vpop.f32.mrb[0].mxu0
      %v6887 = vadd.f32 0.0, %v6886
      %v6888 = vpop.f32.mrb[0].mxu0
      %6889 = vmatprep.mubr.bf16.mxu0 0
      %6890 = vmatmul.mubr.bf16.gmra.mrb[0].mxu0 %v6737
      %v6891 = vpop.f32.mrb[0].mxu0
      %v6892 = vadd.f32 0.0, %v6891
      %v6893 = vpop.f32.mrb[0].mxu0
      %v6894 = vpop.f32.mrb[0].mxu0
      %v6895 = vadd.f32 0.0, %v6894
      %v6896 = vpop.f32.mrb[0].mxu0
      %6897 = vmatprep.mubr.bf16.mxu0 0
      %6898 = vmatmul.mubr.bf16.gmra.mrb[0].mxu0 %v6740
      %v6899 = vpop.f32.mrb[0].mxu0
      %v6900 = vadd.f32 0.0, %v6899
      %v6901 = vpop.f32.mrb[0].mxu0
      %v6902 = vpop.f32.mrb[0].mxu0
      %v6903 = vadd.f32 0.0, %v6902
      %v6904 = vpop.f32.mrb[0].mxu0
      %6905 = vdwg.mxu0
      %v6906 = vadd.f32 %v6660, %v6780
      %v6907 = vadd.f32 %v6661, %v6783
      %v6908 = vadd.f32 %v6662, %v6788
      %v6909 = vadd.f32 %v6663, %v6791
      %v6910 = vadd.f32 %v6664, %v6796
      %v6911 = vadd.f32 %v6665, %v6799
      %v6912 = vadd.f32 %v6666, %v6804
      %v6913 = vadd.f32 %v6667, %v6807
      %v6914 = vadd.f32 %v6668, %v6812
      %v6915 = vadd.f32 %v6669, %v6815
      %v6916 = vadd.f32 %v6670, %v6820
      %v6917 = vadd.f32 %v6671, %v6823
      %v6918 = vadd.f32 %v6672, %v6828
      %v6919 = vadd.f32 %v6673, %v6831
      %v6920 = vadd.f32 %v6674, %v6836
      %v6921 = vadd.f32 %v6675, %v6839
      %v6922 = vadd.f32 %v6676, %v6844
      %v6923 = vadd.f32 %v6677, %v6847
      %v6924 = vadd.f32 %v6678, %v6852
      %v6925 = vadd.f32 %v6679, %v6855
      %v6926 = vadd.f32 %v6680, %v6860
      %v6927 = vadd.f32 %v6681, %v6863
      %v6928 = vadd.f32 %v6682, %v6868
      %v6929 = vadd.f32 %v6683, %v6871
      %v6930 = vadd.f32 %v6684, %v6876
      %v6931 = vadd.f32 %v6685, %v6879
      %v6932 = vadd.f32 %v6686, %v6884
      %v6933 = vadd.f32 %v6687, %v6887
      %v6934 = vadd.f32 %v6688, %v6892
      %v6935 = vadd.f32 %v6689, %v6895
      %v6936 = vadd.f32 %v6690, %v6900
      %v6937 = vadd.f32 %v6691, %v6903
      %6938 = vst [vmem:[#allocation3] sm:$0xff] %v6906
      %6939 = vst [vmem:[#allocation3 + $0x8] sm:$0xff] %v6907
      %6940 = vst [vmem:[#allocation3 + $0x10] sm:$0xff] %v6908
      %6941 = vst [vmem:[#allocation3 + $0x18] sm:$0xff] %v6909
      %6942 = vst [vmem:[#allocation3 + $0x20] sm:$0xff] %v6910
      %6943 = vst [vmem:[#allocation3 + $0x28] sm:$0xff] %v6911
      %6944 = vst [vmem:[#allocation3 + $0x30] sm:$0xff] %v6912
      %6945 = vst [vmem:[#allocation3 + $0x38] sm:$0xff] %v6913
      %6946 = vst [vmem:[#allocation3 + $0x40] sm:$0xff] %v6914
      %6947 = vst [vmem:[#allocation3 + $0x48] sm:$0xff] %v6915
      %6948 = vst [vmem:[#allocation3 + $0x50] sm:$0xff] %v6916
      %6949 = vst [vmem:[#allocation3 + $0x58] sm:$0xff] %v6917
      %6950 = vst [vmem:[#allocation3 + $0x60] sm:$0xff] %v6918
      %6951 = vst [vmem:[#allocation3 + $0x68] sm:$0xff] %v6919
      %6952 = vst [vmem:[#allocation3 + $0x70] sm:$0xff] %v6920
      %6953 = vst [vmem:[#allocation3 + $0x78] sm:$0xff] %v6921
      %6954 = vst [vmem:[#allocation3 + $0x80] sm:$0xff] %v6922
      %6955 = vst [vmem:[#allocation3 + $0x88] sm:$0xff] %v6923
      %6956 = vst [vmem:[#allocation3 + $0x90] sm:$0xff] %v6924
      %6957 = vst [vmem:[#allocation3 + $0x98] sm:$0xff] %v6925
      %6958 = vst [vmem:[#allocation3 + $0xa0] sm:$0xff] %v6926
      %6959 = vst [vmem:[#allocation3 + $0xa8] sm:$0xff] %v6927
      %6960 = vst [vmem:[#allocation3 + $0xb0] sm:$0xff] %v6928
      %6961 = vst [vmem:[#allocation3 + $0xb8] sm:$0xff] %v6929
      %6962 = vst [vmem:[#allocation3 + $0xc0] sm:$0xff] %v6930
      %6963 = vst [vmem:[#allocation3 + $0xc8] sm:$0xff] %v6931
      %6964 = vst [vmem:[#allocation3 + $0xd0] sm:$0xff] %v6932
      %6965 = vst [vmem:[#allocation3 + $0xd8] sm:$0xff] %v6933
      %6966 = vst [vmem:[#allocation3 + $0xe0] sm:$0xff] %v6934
      %6967 = vst [vmem:[#allocation3 + $0xe8] sm:$0xff] %v6935
      %6968 = vst [vmem:[#allocation3 + $0xf0] sm:$0xff] %v6936
      %6969 = vst [vmem:[#allocation3 + $0xf8] sm:$0xff] %v6937
      %v6970 = vld [vmem:[#allocation3] sm:$0xff]
      %v6971 = vld [vmem:[#allocation3 + $0x8] sm:$0xff]
      %v6972 = vld [vmem:[#allocation3 + $0x10] sm:$0xff]
      %v6973 = vld [vmem:[#allocation3 + $0x18] sm:$0xff]
      %v6974 = vld [vmem:[#allocation3 + $0x20] sm:$0xff]
      %v6975 = vld [vmem:[#allocation3 + $0x28] sm:$0xff]
      %v6976 = vld [vmem:[#allocation3 + $0x30] sm:$0xff]
      %v6977 = vld [vmem:[#allocation3 + $0x38] sm:$0xff]
      %v6978 = vld [vmem:[#allocation3 + $0x40] sm:$0xff]
      %v6979 = vld [vmem:[#allocation3 + $0x48] sm:$0xff]
      %v6980 = vld [vmem:[#allocation3 + $0x50] sm:$0xff]
      %v6981 = vld [vmem:[#allocation3 + $0x58] sm:$0xff]
      %v6982 = vld [vmem:[#allocation3 + $0x60] sm:$0xff]
      %v6983 = vld [vmem:[#allocation3 + $0x68] sm:$0xff]
      %v6984 = vld [vmem:[#allocation3 + $0x70] sm:$0xff]
      %v6985 = vld [vmem:[#allocation3 + $0x78] sm:$0xff]
      %v6986 = vld [vmem:[#allocation3 + $0x80] sm:$0xff]
      %v6987 = vld [vmem:[#allocation3 + $0x88] sm:$0xff]
      %v6988 = vld [vmem:[#allocation3 + $0x90] sm:$0xff]
      %v6989 = vld [vmem:[#allocation3 + $0x98] sm:$0xff]
      %v6990 = vld [vmem:[#allocation3 + $0xa0] sm:$0xff]
      %v6991 = vld [vmem:[#allocation3 + $0xa8] sm:$0xff]
      %v6992 = vld [vmem:[#allocation3 + $0xb0] sm:$0xff]
      %v6993 = vld [vmem:[#allocation3 + $0xb8] sm:$0xff]
      %v6994 = vld [vmem:[#allocation3 + $0xc0] sm:$0xff]
      %v6995 = vld [vmem:[#allocation3 + $0xc8] sm:$0xff]
      %v6996 = vld [vmem:[#allocation3 + $0xd0] sm:$0xff]
      %v6997 = vld [vmem:[#allocation3 + $0xd8] sm:$0xff]
      %v6998 = vld [vmem:[#allocation3 + $0xe0] sm:$0xff]
      %v6999 = vld [vmem:[#allocation3 + $0xe8] sm:$0xff]
      %v7000 = vld [vmem:[#allocation3 + $0xf0] sm:$0xff]
      %v7001 = vld [vmem:[#allocation3 + $0xf8] sm:$0xff]
      %v7002 = vld [vmem:[%s4] sm:$0x1]
      %v7004 = vlaneseq
      %v7005 = vshrl.u32 %v7004, 7
      %v7006 = vsub.s32 0, %v7005
      %v7007 = vrot.slane %v7002, %v7006
      %v7009 = vadd.f32 %v6970, %v7007
      %v7010 = vadd.f32 %v6971, %v7007
      %v7011 = vadd.f32 %v6972, %v7007
      %v7012 = vadd.f32 %v6973, %v7007
      %v7013 = vadd.f32 %v6974, %v7007
      %v7014 = vadd.f32 %v6975, %v7007
      %v7015 = vadd.f32 %v6976, %v7007
      %v7016 = vadd.f32 %v6977, %v7007
      %v7017 = vadd.f32 %v6978, %v7007
      %v7018 = vadd.f32 %v6979, %v7007
      %v7019 = vadd.f32 %v6980, %v7007
      %v7020 = vadd.f32 %v6981, %v7007
      %v7021 = vadd.f32 %v6982, %v7007
      %v7022 = vadd.f32 %v6983, %v7007
      %v7023 = vadd.f32 %v6984, %v7007
      %v7024 = vadd.f32 %v6985, %v7007
      %v7025 = vadd.f32 %v6986, %v7007
      %v7026 = vadd.f32 %v6987, %v7007
      %v7027 = vadd.f32 %v6988, %v7007
      %v7028 = vadd.f32 %v6989, %v7007
      %v7029 = vadd.f32 %v6990, %v7007
      %v7030 = vadd.f32 %v6991, %v7007
      %v7031 = vadd.f32 %v6992, %v7007
      %v7032 = vadd.f32 %v6993, %v7007
      %v7033 = vadd.f32 %v6994, %v7007
      %v7034 = vadd.f32 %v6995, %v7007
      %v7035 = vadd.f32 %v6996, %v7007
      %v7036 = vadd.f32 %v6997, %v7007
      %v7037 = vadd.f32 %v6998, %v7007
      %v7038 = vadd.f32 %v6999, %v7007
      %v7039 = vadd.f32 %v7000, %v7007
      %v7040 = vadd.f32 %v7001, %v7007
      %s7041 = scalar_lea.vmem %s395, 48
      %7042 = vst [vmem:[%s7041] sm:$0xff] %v7009
      %7043 = vst [vmem:[%s7041 + $0x8] sm:$0xff] %v7010
      %7044 = vst [vmem:[%s7041 + $0x40] sm:$0xff] %v7011
      %7045 = vst [vmem:[%s7041 + $0x48] sm:$0xff] %v7012
      %7046 = vst [vmem:[%s7041 + $0x80] sm:$0xff] %v7013
      %7047 = vst [vmem:[%s7041 + $0x88] sm:$0xff] %v7014
      %7048 = vst [vmem:[%s7041 + $0xc0] sm:$0xff] %v7015
      %7049 = vst [vmem:[%s7041 + $0xc8] sm:$0xff] %v7016
      %7050 = vst [vmem:[%s7041 + $0x100] sm:$0xff] %v7017
      %7051 = vst [vmem:[%s7041 + $0x108] sm:$0xff] %v7018
      %7052 = vst [vmem:[%s7041 + $0x140] sm:$0xff] %v7019
      %7053 = vst [vmem:[%s7041 + $0x148] sm:$0xff] %v7020
      %7054 = vst [vmem:[%s7041 + $0x180] sm:$0xff] %v7021
      %7055 = vst [vmem:[%s7041 + $0x188] sm:$0xff] %v7022
      %7056 = vst [vmem:[%s7041 + $0x1c0] sm:$0xff] %v7023
      %7057 = vst [vmem:[%s7041 + $0x1c8] sm:$0xff] %v7024
      %7058 = vst [vmem:[%s7041 + $0x200] sm:$0xff] %v7025
      %7059 = vst [vmem:[%s7041 + $0x208] sm:$0xff] %v7026
      %7060 = vst [vmem:[%s7041 + $0x240] sm:$0xff] %v7027
      %7061 = vst [vmem:[%s7041 + $0x248] sm:$0xff] %v7028
      %7062 = vst [vmem:[%s7041 + $0x280] sm:$0xff] %v7029
      %7063 = vst [vmem:[%s7041 + $0x288] sm:$0xff] %v7030
      %7064 = vst [vmem:[%s7041 + $0x2c0] sm:$0xff] %v7031
      %7065 = vst [vmem:[%s7041 + $0x2c8] sm:$0xff] %v7032
      %7066 = vst [vmem:[%s7041 + $0x300] sm:$0xff] %v7033
      %7067 = vst [vmem:[%s7041 + $0x308] sm:$0xff] %v7034
      %7068 = vst [vmem:[%s7041 + $0x340] sm:$0xff] %v7035
      %7069 = vst [vmem:[%s7041 + $0x348] sm:$0xff] %v7036
      %7070 = vst [vmem:[%s7041 + $0x380] sm:$0xff] %v7037
      %7071 = vst [vmem:[%s7041 + $0x388] sm:$0xff] %v7038
      %7072 = vst [vmem:[%s7041 + $0x3c0] sm:$0xff] %v7039
      %7073 = vst [vmem:[%s7041 + $0x3c8] sm:$0xff] %v7040
      %s7074 = smul.u32 16, %s21
      %p7075 = scmp.lt.s32.totalorder %s20, 1
      %s7076 = scalar_select %p7075, %s20, 1
      %p7077 = scmp.lt.s32.totalorder %s7074, 15
      %s7078 = scalar_select %p7077, %s7074, 15
      %s7079 = smul.addr %s7078, 8
      %s7080 = smul.addr %s7076, 128
      %s7081 = sadd.s32 %s7079, %s7080
      %s7082 = smul.addr %s7081, 8
      %s7083 = scalar_lea.vmem %s5, %s7082
      // Predicated region
      $region41: #{upsample_conv_transpose2d.1} parent=39 // pred_check
        %p7084 = pneg %p184
      $region42: #{upsample_conv_transpose2d.1} parent=39 // pred_check_branch
        %7086 = sbr.rel (%p7084) target = $region44
      $region43: #{upsample_conv_transpose2d.1} parent=39 // pred_region
        %s7087 = smul.u32 16, %s21
      $region44: #{upsample_conv_transpose2d.1} parent=39 // pred_fallthru
        _
    $region40: #{upsample_conv_transpose2d.1} parent=5 // pred_fallthru
      _
    %p7088 = scmp.le.s32.totalorder 2, %s11
    // Predicated region
    $region45: #{upsample_conv_transpose2d.1} parent=5 // pred_check
      %p7089 = pneg %p7088
    $region46: #{upsample_conv_transpose2d.1} parent=5 // pred_check_branch
      %7091 = sbr.rel (%p7089) target = $region48
    $region47: #{upsample_conv_transpose2d.1} parent=5 // pred_region
      %s7092 = ssub.s32 %s11, 2
      // Predicated region
      $region49: #{upsample_conv_transpose2d.1} parent=47 // pred_check
        %p7093 = pneg %p190
      $region50: #{upsample_conv_transpose2d.1} parent=47 // pred_check_branch
        %7095 = sbr.rel (%p7093) target = $region52
      $region51: #{upsample_conv_transpose2d.1} parent=47 // pred_region
        %s7096 = smul.u32 16, %s23
        %p7097 = scmp.lt.s32.totalorder %s22, 1
        %s7098 = scalar_select %p7097, %s22, 1
        %p7099 = scmp.lt.s32.totalorder %s7096, 15
        %s7100 = scalar_select %p7099, %s7096, 15
        %s7101 = smul.addr %s7100, 8
        %s7102 = smul.addr %s7098, 128
        %s7103 = sadd.s32 %s7101, %s7102
        %s7104 = smul.addr %s7103, 8
        %s7105 = scalar_lea.vmem %s5, %s7104
      $region52: #{upsample_conv_transpose2d.1} parent=47 // pred_fallthru
        _
    $region48: #{upsample_conv_transpose2d.1} parent=5 // pred_fallthru
      _
  $region6: #{upsample_conv_transpose2d.1} parent=0 // loop_footer
    %s15 = sadd.s32 1, %s11
  $region7: #{upsample_conv_transpose2d.1} parent=0 // loop_footer_branch
    %10 = sbr.rel target = $region3
  $region8: #{upsample_conv_transpose2d.1} parent=0 // loop_exit
    _

</llo_original>
